<compile_context>
chip_gen: v5e
topology: v5e:2x2
jax: 0.10.0
libtpu: 0.0.40
codegen_flags: <defaults>
</compile_context>

<pallas_src>
import jax
import jax.numpy as jnp
from jax.experimental import pallas as pl
from jax.experimental.pallas import tpu as pltpu

EPS = 1e-5  # nn.InstanceNorm2d default eps


# ---------------------------------------------------------------------------
# Fused ResBlock kernel (one grid step per `B` batch samples)
# ---------------------------------------------------------------------------
def _make_resblock_kernel(B, H, W, C, MC):
    """B: samples per grid step; H,W,C: NHWC dims; MC: rows per M-chunk (mult of W)."""
    HW = H * W
    RW = MC // W            # image rows per M-chunk
    NCH = HW // MC          # number of M-chunks
    HALO = W                # one padded image row (flattened) above / below
    inv_hw = 1.0 / float(HW)

    def kernel(x_ref, w1_ref, w2_ref, o_ref, slab_ref, y_ref):
        # x_ref   : [B, H, W, C]        fp32   raw (unpadded) input block
        # w1_ref  : [9, C, C]           bf16   conv1 taps, layout [ky*3+kx, cin, cout]
        # w2_ref  : [9, C, C]           bf16   conv2 taps
        # o_ref   : [B, H, W, C]        fp32   output
        # slab_ref: [3, HW + 2W, C]     bf16   column-shifted tap slabs (reused by both convs)
        # y_ref   : [HW, C]             fp32   raw conv output (reused by both convs)

        # Loop-invariant masks marking image-column boundaries after a +-1 flat-row
        # roll (MC is a multiple of W, so chunk-local row % W == global row % W).
        wpos = jax.lax.broadcasted_iota(jnp.int32, (MC, C), 0) % W
        left_edge = wpos == 0           # w == 0     -> zero after shift "down"
        right_edge = wpos == W - 1      # w == W - 1 -> zero after shift "up"

        def write_slab_chunk(ci, body):
            """body: [MC, C] fp32 rows (h, w) of the *unpadded* image, row-major."""
            r0 = HALO + ci * MC
            # kx = 1 (center): as-is.
            slab_ref[1, r0:r0 + MC, :] = body.astype(jnp.bfloat16)
            # kx = 0 needs x[h, w-1]: roll flat rows down by one, zero w == 0.
            down = pltpu.roll(body, shift=1, axis=0)
            slab_ref[0, r0:r0 + MC, :] = jnp.where(left_edge, 0.0, down).astype(jnp.bfloat16)
            # kx = 2 needs x[h, w+1]: roll flat rows up by one, zero w == W-1.
            up = pltpu.roll(body, shift=MC - 1, axis=0)   # == roll by -1
            slab_ref[2, r0:r0 + MC, :] = jnp.where(right_edge, 0.0, up).astype(jnp.bfloat16)

        def conv_from_slabs(w_ref):
            """9-tap 3x3 conv from the slabs; raw output -> y_ref; returns (mean, rstd)."""
            s_sum = jnp.zeros((1, C), jnp.float32)
            s_sq = jnp.zeros((1, C), jnp.float32)
            for ci in range(NCH):
                r0 = ci * MC
                acc = None                                  # register accumulation
                for ky in range(3):
                    for kx in range(3):
                        # aligned, address-only slice: offset = ky*W + r0 (mult of W)
                        lhs = slab_ref[kx, ky * W + r0:ky * W + r0 + MC, :]
                        d = jnp.dot(lhs, w_ref[ky * 3 + kx],
                                    preferred_element_type=jnp.float32)
                        acc = d if acc is None else acc + d
                y_ref[r0:r0 + MC, :] = acc                  # single store per chunk
                s_sum = s_sum + jnp.sum(acc, axis=0, keepdims=True)
                s_sq = s_sq + jnp.sum(acc * acc, axis=0, keepdims=True)
            mu = s_sum * inv_hw
            # One-pass variance (clamped at 0).  Switch to two-pass if accuracy ever
            # regresses - everything is already resident in VMEM.
            var = jnp.maximum(s_sq * inv_hw - mu * mu, 0.0)
            return mu, jax.lax.rsqrt(var + EPS)

        # Zero only the slab halo rows (top / bottom padded image row), once per
        # grid step; the body writes below never touch them.
        zhalo = jnp.zeros((HALO, C), jnp.bfloat16)
        for kx in range(3):
            slab_ref[kx, 0:HALO, :] = zhalo
            slab_ref[kx, HALO + HW:HALO + HW + HALO, :] = zhalo

        for b in range(B):
            # ---- conv1: slabs straight from the unpadded input block --------------
            for ci in range(NCH):
                xc = x_ref[b, ci * RW:(ci + 1) * RW, :, :].reshape(MC, C)
                write_slab_chunk(ci, xc)
            mu1, rstd1 = conv_from_slabs(w1_ref)

            # ---- InstanceNorm + ReLU fused into the conv2 slab build --------------
            for ci in range(NCH):
                h1 = jnp.maximum((y_ref[ci * MC:(ci + 1) * MC, :] - mu1) * rstd1, 0.0)
                write_slab_chunk(ci, h1)
            mu2, rstd2 = conv_from_slabs(w2_ref)

            # ---- InstanceNorm + residual add (exact fp32), store ------------------
            for ci in range(NCH):
                yn = (y_ref[ci * MC:(ci + 1) * MC, :] - mu2) * rstd2
                xres = x_ref[b, ci * RW:(ci + 1) * RW, :, :].reshape(MC, C)
                o_ref[b, ci * RW:(ci + 1) * RW, :, :] = (yn + xres).reshape(RW, W, C)

    return kernel


# ---------------------------------------------------------------------------
# One-time parameter preparation (hoisted out of the forward pass)
# ---------------------------------------------------------------------------
def prepare_params(w1_oihw, w2_oihw):
    """PyTorch conv weight [Cout, Cin, 3, 3] -> [9, Cin, Cout] bf16 (tap = ky*3+kx).

    Conv biases are intentionally dropped: they cancel exactly inside
    InstanceNorm2d(affine=False)."""
    def prep(w):
        cout, cin, kh, kw = w.shape
        assert (kh, kw) == (3, 3)
        return jnp.transpose(w, (2, 3, 1, 0)).reshape(kh * kw, cin, cout).astype(jnp.bfloat16)

    return {"w1": prep(w1_oihw), "w2": prep(w2_oihw)}


# ---------------------------------------------------------------------------
# Forward wrapper (NCHW in / NCHW out, like the PyTorch module)
# ---------------------------------------------------------------------------
def resblock_forward(x_nchw, params, *, samples_per_step=1):
    N, C, H, W = x_nchw.shape
    assert params["w1"].shape == (9, C, C), "in_ch must equal out_ch for the residual add"
    assert W % 8 == 0, "W must be a multiple of 8 for the free [H,W,C]->[H*W,C] collapse"
    B = samples_per_step
    assert N % B == 0

    # M-chunk: largest multiple of W that divides HW and is <= ~128 rows, so the
    # fp32 register accumulator stays at <= ~16 vregs.
    rw = max(1, min(H, 128 // W)) if W <= 128 else 1
    while H % rw:
        rw -= 1
    MC = rw * W

    # Only the layout change remains outside the kernel (no pad materialization).
    x_nhwc = jnp.transpose(x_nchw, (0, 2, 3, 1)).astype(jnp.float32)

    kernel = _make_resblock_kernel(B, H, W, C, MC)
    out_nhwc = pl.pallas_call(
        kernel,
        out_shape=jax.ShapeDtypeStruct((N, H, W, C), jnp.float32),
        grid_spec=pltpu.PrefetchScalarGridSpec(
            num_scalar_prefetch=0,
            grid=(N // B,),
            in_specs=[
                pl.BlockSpec((B, H, W, C), lambda n: (n, 0, 0, 0)),
                pl.BlockSpec((9, C, C), lambda n: (0, 0, 0)),   # resident weights
                pl.BlockSpec((9, C, C), lambda n: (0, 0, 0)),
            ],
            out_specs=pl.BlockSpec((B, H, W, C), lambda n: (n, 0, 0, 0)),
            scratch_shapes=[
                pltpu.VMEM((3, H * W + 2 * W, C), jnp.bfloat16),  # column-shifted tap slabs
                pltpu.VMEM((H * W, C), jnp.float32),              # raw conv output
            ],
        ),
        compiler_params=pltpu.CompilerParams(
            dimension_semantics=("parallel",),      # even N keeps both v7x TCs busy
            vmem_limit_bytes=32 * 1024 * 1024,      # explicit; actual use < 1 MiB
        ),
    )(x_nhwc, params["w1"], params["w2"])

    return jnp.transpose(out_nhwc, (0, 3, 1, 2))    # back to NCHW


# ---------------------------------------------------------------------------
# Pure-JAX reference (same semantics as the PyTorch ResBlock, *with* conv biases
# to demonstrate that dropping them in the kernel is exact).
# ---------------------------------------------------------------------------
def resblock_reference(x, w1, b1, w2, b2):
    def conv(h, w, b):
        y = jax.lax.conv_general_dilated(
            h, w, window_strides=(1, 1), padding=((1, 1), (1, 1)),
            dimension_numbers=("NCHW", "OIHW", "NCHW"))
        return y + b[None, :, None, None]

    def inorm(h):
        mu = jnp.mean(h, axis=(2, 3), keepdims=True)
        var = jnp.mean((h - mu) ** 2, axis=(2, 3), keepdims=True)
        return (h - mu) * jax.lax.rsqrt(var + EPS)

    h = jax.nn.relu(inorm(conv(x, w1, b1)))
    h = inorm(conv(h, w2, b2))
    return h + x


if __name__ == "__main__":
    # residual add requires in_ch == out_ch; W multiple of 8.
    N, C, H, W = 2, 64, 16, 16
    key = jax.random.PRNGKey(0)
    kx_, k1, k2, kb1, kb2 = jax.random.split(key, 5)
    x = jax.random.normal(kx_, (N, C, H, W), dtype=jnp.float32)
    scale = 1.0 / jnp.sqrt(jnp.float32(9 * C))
    w1 = jax.random.normal(k1, (C, C, 3, 3), dtype=jnp.float32) * scale
    w2 = jax.random.normal(k2, (C, C, 3, 3), dtype=jnp.float32) * scale
    b1 = jax.random.normal(kb1, (C,), dtype=jnp.float32) * 0.1
    b2 = jax.random.normal(kb2, (C,), dtype=jnp.float32) * 0.1

    params = prepare_params(w1, w2)                 # one-time weight prep (biases cancel)
    out = jax.block_until_ready(resblock_forward(x, params))

    ref = jax.block_until_ready(resblock_reference(x, w1, b1, w2, b2))
    assert out.shape == (N, C, H, W)
    max_err = float(jnp.max(jnp.abs(out - ref)))
    assert max_err < 5e-2, f"max abs error too large: {max_err}"
    print("KERNEL_OK")
</pallas_src>

<mosaic_0001>
module attributes {stable_mosaic.version = 11 : i64} {
  func.func @kernel(%arg0: i32, %arg1: memref<1x16x16x64xf32, #tpu.memory_space<vmem>>, %arg2: memref<9x64x64xbf16, #tpu.memory_space<vmem>>, %arg3: memref<9x64x64xbf16, #tpu.memory_space<vmem>>, %arg4: memref<1x16x16x64xf32, #tpu.memory_space<vmem>>, %arg5: memref<3x288x64xbf16, #tpu.memory_space<vmem>>, %arg6: memref<256x64xf32, #tpu.memory_space<vmem>>) attributes {dimension_semantics = [#tpu.dimension_semantics<parallel>], iteration_bounds = array<i64: 2>, scalar_prefetch = 0 : i64, scratch_operands = 2 : i64, tpu.core_type = #tpu.core_type<tc>, window_params = [{transform_indices = @transform_0, window_bounds = array<i64: 1, 16, 16, 64>}, {pipeline_mode = #tpu.pipeline_mode<synchronous>, transform_indices = @transform_1, window_bounds = array<i64: 9, 64, 64>}, {pipeline_mode = #tpu.pipeline_mode<synchronous>, transform_indices = @transform_2, window_bounds = array<i64: 9, 64, 64>}, {transform_indices = @transform_3, window_bounds = array<i64: 1, 16, 16, 64>}]} {
    %0 = tpu.iota {dimensions = array<i32: 0>} : vector<128x64xi32>
    %c16_i32 = arith.constant 16 : i32
    %c0_i32 = arith.constant 0 : i32
    %1 = arith.cmpi eq, %c16_i32, %c0_i32 : i32
    %c1_i32 = arith.constant 1 : i32
    %2 = arith.select %1, %c1_i32, %c16_i32 : i32
    %3 = vector.broadcast %2 : i32 to vector<128x64xi32>
    %4 = arith.remsi %0, %3 : vector<128x64xi32>
    %c0_i32_0 = arith.constant 0 : i32
    %5 = vector.broadcast %c0_i32_0 : i32 to vector<128x64xi32>
    %6 = arith.cmpi ne, %4, %5 : vector<128x64xi32>
    %c0_i32_1 = arith.constant 0 : i32
    %7 = vector.broadcast %c0_i32_1 : i32 to vector<128x64xi32>
    %8 = arith.cmpi slt, %4, %7 : vector<128x64xi32>
    %c0_i32_2 = arith.constant 0 : i32
    %9 = arith.cmpi slt, %2, %c0_i32_2 : i32
    %10 = vector.broadcast %9 : i1 to vector<128x64xi1>
    %11 = vector.broadcast %10 : vector<128x64xi1> to vector<128x64xi1>
    %12 = arith.xori %8, %11 : vector<128x64xi1>
    %13 = arith.andi %12, %6 : vector<128x64xi1>
    %14 = vector.broadcast %2 : i32 to vector<128x64xi32>
    %15 = arith.addi %4, %14 : vector<128x64xi32>
    %16 = arith.select %13, %15, %4 : vector<128x64xi1>, vector<128x64xi32>
    %c0_i32_3 = arith.constant 0 : i32
    %17 = vector.broadcast %c0_i32_3 : i32 to vector<128x64xi32>
    %18 = arith.cmpi eq, %16, %17 : vector<128x64xi32>
    %c15_i32 = arith.constant 15 : i32
    %19 = vector.broadcast %c15_i32 : i32 to vector<128x64xi32>
    %20 = arith.cmpi eq, %16, %19 : vector<128x64xi32>
    %cst = arith.constant 0.000000e+00 : bf16
    %21 = vector.broadcast %cst : bf16 to vector<16x64xbf16>
    %c0 = arith.constant 0 : index
    %c0_4 = arith.constant 0 : index
    %c0_5 = arith.constant 0 : index
    %22 = vector.load %arg5[%c0, %c0_4, %c0_5] : memref<3x288x64xbf16, #tpu.memory_space<vmem>>, vector<1x16x64xbf16>
    %23 = vector.shape_cast %22 : vector<1x16x64xbf16> to vector<16x64xbf16>
    %24 = vector.shape_cast %21 : vector<16x64xbf16> to vector<1x16x64xbf16>
    tpu.vector_store %arg5[%c0, %c0_4, %c0_5], %24 {strides = array<i32>} : memref<3x288x64xbf16, #tpu.memory_space<vmem>>, vector<1x16x64xbf16>,
    %c0_6 = arith.constant 0 : index
    %c272 = arith.constant 272 : index
    %c0_7 = arith.constant 0 : index
    %25 = vector.load %arg5[%c0_6, %c272, %c0_7] : memref<3x288x64xbf16, #tpu.memory_space<vmem>>, vector<1x16x64xbf16>
    %26 = vector.shape_cast %25 : vector<1x16x64xbf16> to vector<16x64xbf16>
    %27 = vector.shape_cast %21 : vector<16x64xbf16> to vector<1x16x64xbf16>
    tpu.vector_store %arg5[%c0_6, %c272, %c0_7], %27 {strides = array<i32>} : memref<3x288x64xbf16, #tpu.memory_space<vmem>>, vector<1x16x64xbf16>,
    %c1 = arith.constant 1 : index
    %c0_8 = arith.constant 0 : index
    %c0_9 = arith.constant 0 : index
    %28 = vector.load %arg5[%c1, %c0_8, %c0_9] : memref<3x288x64xbf16, #tpu.memory_space<vmem>>, vector<1x16x64xbf16>
    %29 = vector.shape_cast %28 : vector<1x16x64xbf16> to vector<16x64xbf16>
    %30 = vector.shape_cast %21 : vector<16x64xbf16> to vector<1x16x64xbf16>
    tpu.vector_store %arg5[%c1, %c0_8, %c0_9], %30 {strides = array<i32>} : memref<3x288x64xbf16, #tpu.memory_space<vmem>>, vector<1x16x64xbf16>,
    %c1_10 = arith.constant 1 : index
    %c272_11 = arith.constant 272 : index
    %c0_12 = arith.constant 0 : index
    %31 = vector.load %arg5[%c1_10, %c272_11, %c0_12] : memref<3x288x64xbf16, #tpu.memory_space<vmem>>, vector<1x16x64xbf16>
    %32 = vector.shape_cast %31 : vector<1x16x64xbf16> to vector<16x64xbf16>
    %33 = vector.shape_cast %21 : vector<16x64xbf16> to vector<1x16x64xbf16>
    tpu.vector_store %arg5[%c1_10, %c272_11, %c0_12], %33 {strides = array<i32>} : memref<3x288x64xbf16, #tpu.memory_space<vmem>>, vector<1x16x64xbf16>,
    %c2 = arith.constant 2 : index
    %c0_13 = arith.constant 0 : index
    %c0_14 = arith.constant 0 : index
    %34 = vector.load %arg5[%c2, %c0_13, %c0_14] : memref<3x288x64xbf16, #tpu.memory_space<vmem>>, vector<1x16x64xbf16>
    %35 = vector.shape_cast %34 : vector<1x16x64xbf16> to vector<16x64xbf16>
    %36 = vector.shape_cast %21 : vector<16x64xbf16> to vector<1x16x64xbf16>
    tpu.vector_store %arg5[%c2, %c0_13, %c0_14], %36 {strides = array<i32>} : memref<3x288x64xbf16, #tpu.memory_space<vmem>>, vector<1x16x64xbf16>,
    %c2_15 = arith.constant 2 : index
    %c272_16 = arith.constant 272 : index
    %c0_17 = arith.constant 0 : index
    %37 = vector.load %arg5[%c2_15, %c272_16, %c0_17] : memref<3x288x64xbf16, #tpu.memory_space<vmem>>, vector<1x16x64xbf16>
    %38 = vector.shape_cast %37 : vector<1x16x64xbf16> to vector<16x64xbf16>
    %39 = vector.shape_cast %21 : vector<16x64xbf16> to vector<1x16x64xbf16>
    tpu.vector_store %arg5[%c2_15, %c272_16, %c0_17], %39 {strides = array<i32>} : memref<3x288x64xbf16, #tpu.memory_space<vmem>>, vector<1x16x64xbf16>,
    %c0_18 = arith.constant 0 : index
    %c0_19 = arith.constant 0 : index
    %c0_20 = arith.constant 0 : index
    %c0_21 = arith.constant 0 : index
    %40 = vector.load %arg1[%c0_18, %c0_19, %c0_20, %c0_21] : memref<1x16x16x64xf32, #tpu.memory_space<vmem>>, vector<1x8x16x64xf32>
    %41 = vector.shape_cast %40 : vector<1x8x16x64xf32> to vector<8x16x64xf32>
    %42 = vector.shape_cast %41 : vector<8x16x64xf32> to vector<128x64xf32>
    %43 = arith.truncf %42 : vector<128x64xf32> to vector<128x64xbf16>
    %c1_22 = arith.constant 1 : index
    %c16 = arith.constant 16 : index
    %c0_23 = arith.constant 0 : index
    %44 = vector.load %arg5[%c1_22, %c16, %c0_23] : memref<3x288x64xbf16, #tpu.memory_space<vmem>>, vector<1x128x64xbf16>
    %45 = vector.shape_cast %44 : vector<1x128x64xbf16> to vector<128x64xbf16>
    %46 = vector.shape_cast %43 : vector<128x64xbf16> to vector<1x128x64xbf16>
    tpu.vector_store %arg5[%c1_22, %c16, %c0_23], %46 {strides = array<i32>} : memref<3x288x64xbf16, #tpu.memory_space<vmem>>, vector<1x128x64xbf16>,
    %c1_i32_24 = arith.constant 1 : i32
    %47 = tpu.dynamic_rotate %42 by %c1_i32_24 dim 0 : vector<128x64xf32>, i32 -> vector<128x64xf32>
    %cst_25 = arith.constant 0.000000e+00 : f32
    %48 = vector.broadcast %cst_25 : f32 to vector<128x64xf32>
    %49 = arith.select %18, %48, %47 : vector<128x64xi1>, vector<128x64xf32>
    %50 = arith.truncf %49 : vector<128x64xf32> to vector<128x64xbf16>
    %c0_26 = arith.constant 0 : index
    %c16_27 = arith.constant 16 : index
    %c0_28 = arith.constant 0 : index
    %51 = vector.load %arg5[%c0_26, %c16_27, %c0_28] : memref<3x288x64xbf16, #tpu.memory_space<vmem>>, vector<1x128x64xbf16>
    %52 = vector.shape_cast %51 : vector<1x128x64xbf16> to vector<128x64xbf16>
    %53 = vector.shape_cast %50 : vector<128x64xbf16> to vector<1x128x64xbf16>
    tpu.vector_store %arg5[%c0_26, %c16_27, %c0_28], %53 {strides = array<i32>} : memref<3x288x64xbf16, #tpu.memory_space<vmem>>, vector<1x128x64xbf16>,
    %c127_i32 = arith.constant 127 : i32
    %54 = tpu.dynamic_rotate %42 by %c127_i32 dim 0 : vector<128x64xf32>, i32 -> vector<128x64xf32>
    %cst_29 = arith.constant 0.000000e+00 : f32
    %55 = vector.broadcast %cst_29 : f32 to vector<128x64xf32>
    %56 = arith.select %20, %55, %54 : vector<128x64xi1>, vector<128x64xf32>
    %57 = arith.truncf %56 : vector<128x64xf32> to vector<128x64xbf16>
    %c2_30 = arith.constant 2 : index
    %c16_31 = arith.constant 16 : index
    %c0_32 = arith.constant 0 : index
    %58 = vector.load %arg5[%c2_30, %c16_31, %c0_32] : memref<3x288x64xbf16, #tpu.memory_space<vmem>>, vector<1x128x64xbf16>
    %59 = vector.shape_cast %58 : vector<1x128x64xbf16> to vector<128x64xbf16>
    %60 = vector.shape_cast %57 : vector<128x64xbf16> to vector<1x128x64xbf16>
    tpu.vector_store %arg5[%c2_30, %c16_31, %c0_32], %60 {strides = array<i32>} : memref<3x288x64xbf16, #tpu.memory_space<vmem>>, vector<1x128x64xbf16>,
    %c0_33 = arith.constant 0 : index
    %c8 = arith.constant 8 : index
    %c0_34 = arith.constant 0 : index
    %c0_35 = arith.constant 0 : index
    %61 = vector.load %arg1[%c0_33, %c8, %c0_34, %c0_35] : memref<1x16x16x64xf32, #tpu.memory_space<vmem>>, vector<1x8x16x64xf32>
    %62 = vector.shape_cast %61 : vector<1x8x16x64xf32> to vector<8x16x64xf32>
    %63 = vector.shape_cast %62 : vector<8x16x64xf32> to vector<128x64xf32>
    %64 = arith.truncf %63 : vector<128x64xf32> to vector<128x64xbf16>
    %c1_36 = arith.constant 1 : index
    %c144 = arith.constant 144 : index
    %c0_37 = arith.constant 0 : index
    %65 = vector.load %arg5[%c1_36, %c144, %c0_37] : memref<3x288x64xbf16, #tpu.memory_space<vmem>>, vector<1x128x64xbf16>
    %66 = vector.shape_cast %65 : vector<1x128x64xbf16> to vector<128x64xbf16>
    %67 = vector.shape_cast %64 : vector<128x64xbf16> to vector<1x128x64xbf16>
    tpu.vector_store %arg5[%c1_36, %c144, %c0_37], %67 {strides = array<i32>} : memref<3x288x64xbf16, #tpu.memory_space<vmem>>, vector<1x128x64xbf16>,
    %c1_i32_38 = arith.constant 1 : i32
    %68 = tpu.dynamic_rotate %63 by %c1_i32_38 dim 0 : vector<128x64xf32>, i32 -> vector<128x64xf32>
    %cst_39 = arith.constant 0.000000e+00 : f32
    %69 = vector.broadcast %cst_39 : f32 to vector<128x64xf32>
    %70 = arith.select %18, %69, %68 : vector<128x64xi1>, vector<128x64xf32>
    %71 = arith.truncf %70 : vector<128x64xf32> to vector<128x64xbf16>
    %c0_40 = arith.constant 0 : index
    %c144_41 = arith.constant 144 : index
    %c0_42 = arith.constant 0 : index
    %72 = vector.load %arg5[%c0_40, %c144_41, %c0_42] : memref<3x288x64xbf16, #tpu.memory_space<vmem>>, vector<1x128x64xbf16>
    %73 = vector.shape_cast %72 : vector<1x128x64xbf16> to vector<128x64xbf16>
    %74 = vector.shape_cast %71 : vector<128x64xbf16> to vector<1x128x64xbf16>
    tpu.vector_store %arg5[%c0_40, %c144_41, %c0_42], %74 {strides = array<i32>} : memref<3x288x64xbf16, #tpu.memory_space<vmem>>, vector<1x128x64xbf16>,
    %c127_i32_43 = arith.constant 127 : i32
    %75 = tpu.dynamic_rotate %63 by %c127_i32_43 dim 0 : vector<128x64xf32>, i32 -> vector<128x64xf32>
    %cst_44 = arith.constant 0.000000e+00 : f32
    %76 = vector.broadcast %cst_44 : f32 to vector<128x64xf32>
    %77 = arith.select %20, %76, %75 : vector<128x64xi1>, vector<128x64xf32>
    %78 = arith.truncf %77 : vector<128x64xf32> to vector<128x64xbf16>
    %c2_45 = arith.constant 2 : index
    %c144_46 = arith.constant 144 : index
    %c0_47 = arith.constant 0 : index
    %79 = vector.load %arg5[%c2_45, %c144_46, %c0_47] : memref<3x288x64xbf16, #tpu.memory_space<vmem>>, vector<1x128x64xbf16>
    %80 = vector.shape_cast %79 : vector<1x128x64xbf16> to vector<128x64xbf16>
    %81 = vector.shape_cast %78 : vector<128x64xbf16> to vector<1x128x64xbf16>
    tpu.vector_store %arg5[%c2_45, %c144_46, %c0_47], %81 {strides = array<i32>} : memref<3x288x64xbf16, #tpu.memory_space<vmem>>, vector<1x128x64xbf16>,
    %cst_48 = arith.constant 0.000000e+00 : f32
    %82 = vector.broadcast %cst_48 : f32 to vector<1x64xf32>
    %cst_49 = arith.constant 0.000000e+00 : f32
    %83 = vector.broadcast %cst_49 : f32 to vector<1x64xf32>
    %c0_50 = arith.constant 0 : index
    %c0_51 = arith.constant 0 : index
    %c0_52 = arith.constant 0 : index
    %84 = vector.load %arg5[%c0_50, %c0_51, %c0_52] : memref<3x288x64xbf16, #tpu.memory_space<vmem>>, vector<1x128x64xbf16>
    %85 = vector.shape_cast %84 : vector<1x128x64xbf16> to vector<128x64xbf16>
    %c0_53 = arith.constant 0 : index
    %c0_54 = arith.constant 0 : index
    %c0_55 = arith.constant 0 : index
    %86 = vector.load %arg2[%c0_53, %c0_54, %c0_55] : memref<9x64x64xbf16, #tpu.memory_space<vmem>>, vector<1x64x64xbf16>
    %87 = vector.shape_cast %86 : vector<1x64x64xbf16> to vector<64x64xbf16>
    %cst_56 = arith.constant dense<0.000000e+00> : vector<128x64xf32>
    %88 = tpu.matmul %85, %87, %cst_56 {dimension_numbers = #tpu.dot_dimension_numbers<[1], [0], [0], [1], [0, 0, 1, 1], [], []>} : vector<128x64xbf16>, vector<64x64xbf16>, vector<128x64xf32> -> vector<128x64xf32>
    %c1_57 = arith.constant 1 : index
    %c0_58 = arith.constant 0 : index
    %c0_59 = arith.constant 0 : index
    %89 = vector.load %arg5[%c1_57, %c0_58, %c0_59] : memref<3x288x64xbf16, #tpu.memory_space<vmem>>, vector<1x128x64xbf16>
    %90 = vector.shape_cast %89 : vector<1x128x64xbf16> to vector<128x64xbf16>
    %c1_60 = arith.constant 1 : index
    %c0_61 = arith.constant 0 : index
    %c0_62 = arith.constant 0 : index
    %91 = vector.load %arg2[%c1_60, %c0_61, %c0_62] : memref<9x64x64xbf16, #tpu.memory_space<vmem>>, vector<1x64x64xbf16>
    %92 = vector.shape_cast %91 : vector<1x64x64xbf16> to vector<64x64xbf16>
    %cst_63 = arith.constant dense<0.000000e+00> : vector<128x64xf32>
    %93 = tpu.matmul %90, %92, %cst_63 {dimension_numbers = #tpu.dot_dimension_numbers<[1], [0], [0], [1], [0, 0, 1, 1], [], []>} : vector<128x64xbf16>, vector<64x64xbf16>, vector<128x64xf32> -> vector<128x64xf32>
    %94 = arith.addf %88, %93 : vector<128x64xf32>
    %c2_64 = arith.constant 2 : index
    %c0_65 = arith.constant 0 : index
    %c0_66 = arith.constant 0 : index
    %95 = vector.load %arg5[%c2_64, %c0_65, %c0_66] : memref<3x288x64xbf16, #tpu.memory_space<vmem>>, vector<1x128x64xbf16>
    %96 = vector.shape_cast %95 : vector<1x128x64xbf16> to vector<128x64xbf16>
    %c2_67 = arith.constant 2 : index
    %c0_68 = arith.constant 0 : index
    %c0_69 = arith.constant 0 : index
    %97 = vector.load %arg2[%c2_67, %c0_68, %c0_69] : memref<9x64x64xbf16, #tpu.memory_space<vmem>>, vector<1x64x64xbf16>
    %98 = vector.shape_cast %97 : vector<1x64x64xbf16> to vector<64x64xbf16>
    %cst_70 = arith.constant dense<0.000000e+00> : vector<128x64xf32>
    %99 = tpu.matmul %96, %98, %cst_70 {dimension_numbers = #tpu.dot_dimension_numbers<[1], [0], [0], [1], [0, 0, 1, 1], [], []>} : vector<128x64xbf16>, vector<64x64xbf16>, vector<128x64xf32> -> vector<128x64xf32>
    %100 = arith.addf %94, %99 : vector<128x64xf32>
    %c0_71 = arith.constant 0 : index
    %c16_72 = arith.constant 16 : index
    %c0_73 = arith.constant 0 : index
    %101 = vector.load %arg5[%c0_71, %c16_72, %c0_73] : memref<3x288x64xbf16, #tpu.memory_space<vmem>>, vector<1x128x64xbf16>
    %102 = vector.shape_cast %101 : vector<1x128x64xbf16> to vector<128x64xbf16>
    %c3 = arith.constant 3 : index
    %c0_74 = arith.constant 0 : index
    %c0_75 = arith.constant 0 : index
    %103 = vector.load %arg2[%c3, %c0_74, %c0_75] : memref<9x64x64xbf16, #tpu.memory_space<vmem>>, vector<1x64x64xbf16>
    %104 = vector.shape_cast %103 : vector<1x64x64xbf16> to vector<64x64xbf16>
    %cst_76 = arith.constant dense<0.000000e+00> : vector<128x64xf32>
    %105 = tpu.matmul %102, %104, %cst_76 {dimension_numbers = #tpu.dot_dimension_numbers<[1], [0], [0], [1], [0, 0, 1, 1], [], []>} : vector<128x64xbf16>, vector<64x64xbf16>, vector<128x64xf32> -> vector<128x64xf32>
    %106 = arith.addf %100, %105 : vector<128x64xf32>
    %c1_77 = arith.constant 1 : index
    %c16_78 = arith.constant 16 : index
    %c0_79 = arith.constant 0 : index
    %107 = vector.load %arg5[%c1_77, %c16_78, %c0_79] : memref<3x288x64xbf16, #tpu.memory_space<vmem>>, vector<1x128x64xbf16>
    %108 = vector.shape_cast %107 : vector<1x128x64xbf16> to vector<128x64xbf16>
    %c4 = arith.constant 4 : index
    %c0_80 = arith.constant 0 : index
    %c0_81 = arith.constant 0 : index
    %109 = vector.load %arg2[%c4, %c0_80, %c0_81] : memref<9x64x64xbf16, #tpu.memory_space<vmem>>, vector<1x64x64xbf16>
    %110 = vector.shape_cast %109 : vector<1x64x64xbf16> to vector<64x64xbf16>
    %cst_82 = arith.constant dense<0.000000e+00> : vector<128x64xf32>
    %111 = tpu.matmul %108, %110, %cst_82 {dimension_numbers = #tpu.dot_dimension_numbers<[1], [0], [0], [1], [0, 0, 1, 1], [], []>} : vector<128x64xbf16>, vector<64x64xbf16>, vector<128x64xf32> -> vector<128x64xf32>
    %112 = arith.addf %106, %111 : vector<128x64xf32>
    %c2_83 = arith.constant 2 : index
    %c16_84 = arith.constant 16 : index
    %c0_85 = arith.constant 0 : index
    %113 = vector.load %arg5[%c2_83, %c16_84, %c0_85] : memref<3x288x64xbf16, #tpu.memory_space<vmem>>, vector<1x128x64xbf16>
    %114 = vector.shape_cast %113 : vector<1x128x64xbf16> to vector<128x64xbf16>
    %c5 = arith.constant 5 : index
    %c0_86 = arith.constant 0 : index
    %c0_87 = arith.constant 0 : index
    %115 = vector.load %arg2[%c5, %c0_86, %c0_87] : memref<9x64x64xbf16, #tpu.memory_space<vmem>>, vector<1x64x64xbf16>
    %116 = vector.shape_cast %115 : vector<1x64x64xbf16> to vector<64x64xbf16>
    %cst_88 = arith.constant dense<0.000000e+00> : vector<128x64xf32>
    %117 = tpu.matmul %114, %116, %cst_88 {dimension_numbers = #tpu.dot_dimension_numbers<[1], [0], [0], [1], [0, 0, 1, 1], [], []>} : vector<128x64xbf16>, vector<64x64xbf16>, vector<128x64xf32> -> vector<128x64xf32>
    %118 = arith.addf %112, %117 : vector<128x64xf32>
    %c0_89 = arith.constant 0 : index
    %c32 = arith.constant 32 : index
    %c0_90 = arith.constant 0 : index
    %119 = vector.load %arg5[%c0_89, %c32, %c0_90] : memref<3x288x64xbf16, #tpu.memory_space<vmem>>, vector<1x128x64xbf16>
    %120 = vector.shape_cast %119 : vector<1x128x64xbf16> to vector<128x64xbf16>
    %c6 = arith.constant 6 : index
    %c0_91 = arith.constant 0 : index
    %c0_92 = arith.constant 0 : index
    %121 = vector.load %arg2[%c6, %c0_91, %c0_92] : memref<9x64x64xbf16, #tpu.memory_space<vmem>>, vector<1x64x64xbf16>
    %122 = vector.shape_cast %121 : vector<1x64x64xbf16> to vector<64x64xbf16>
    %cst_93 = arith.constant dense<0.000000e+00> : vector<128x64xf32>
    %123 = tpu.matmul %120, %122, %cst_93 {dimension_numbers = #tpu.dot_dimension_numbers<[1], [0], [0], [1], [0, 0, 1, 1], [], []>} : vector<128x64xbf16>, vector<64x64xbf16>, vector<128x64xf32> -> vector<128x64xf32>
    %124 = arith.addf %118, %123 : vector<128x64xf32>
    %c1_94 = arith.constant 1 : index
    %c32_95 = arith.constant 32 : index
    %c0_96 = arith.constant 0 : index
    %125 = vector.load %arg5[%c1_94, %c32_95, %c0_96] : memref<3x288x64xbf16, #tpu.memory_space<vmem>>, vector<1x128x64xbf16>
    %126 = vector.shape_cast %125 : vector<1x128x64xbf16> to vector<128x64xbf16>
    %c7 = arith.constant 7 : index
    %c0_97 = arith.constant 0 : index
    %c0_98 = arith.constant 0 : index
    %127 = vector.load %arg2[%c7, %c0_97, %c0_98] : memref<9x64x64xbf16, #tpu.memory_space<vmem>>, vector<1x64x64xbf16>
    %128 = vector.shape_cast %127 : vector<1x64x64xbf16> to vector<64x64xbf16>
    %cst_99 = arith.constant dense<0.000000e+00> : vector<128x64xf32>
    %129 = tpu.matmul %126, %128, %cst_99 {dimension_numbers = #tpu.dot_dimension_numbers<[1], [0], [0], [1], [0, 0, 1, 1], [], []>} : vector<128x64xbf16>, vector<64x64xbf16>, vector<128x64xf32> -> vector<128x64xf32>
    %130 = arith.addf %124, %129 : vector<128x64xf32>
    %c2_100 = arith.constant 2 : index
    %c32_101 = arith.constant 32 : index
    %c0_102 = arith.constant 0 : index
    %131 = vector.load %arg5[%c2_100, %c32_101, %c0_102] : memref<3x288x64xbf16, #tpu.memory_space<vmem>>, vector<1x128x64xbf16>
    %132 = vector.shape_cast %131 : vector<1x128x64xbf16> to vector<128x64xbf16>
    %c8_103 = arith.constant 8 : index
    %c0_104 = arith.constant 0 : index
    %c0_105 = arith.constant 0 : index
    %133 = vector.load %arg2[%c8_103, %c0_104, %c0_105] : memref<9x64x64xbf16, #tpu.memory_space<vmem>>, vector<1x64x64xbf16>
    %134 = vector.shape_cast %133 : vector<1x64x64xbf16> to vector<64x64xbf16>
    %cst_106 = arith.constant dense<0.000000e+00> : vector<128x64xf32>
    %135 = tpu.matmul %132, %134, %cst_106 {dimension_numbers = #tpu.dot_dimension_numbers<[1], [0], [0], [1], [0, 0, 1, 1], [], []>} : vector<128x64xbf16>, vector<64x64xbf16>, vector<128x64xf32> -> vector<128x64xf32>
    %136 = arith.addf %130, %135 : vector<128x64xf32>
    %c0_107 = arith.constant 0 : index
    %c0_108 = arith.constant 0 : index
    %137 = vector.load %arg6[%c0_107, %c0_108] : memref<256x64xf32, #tpu.memory_space<vmem>>, vector<128x64xf32>
    tpu.vector_store %arg6[%c0_107, %c0_108], %136 {strides = array<i32>} : memref<256x64xf32, #tpu.memory_space<vmem>>, vector<128x64xf32>,
    %cst_109 = arith.constant dense<0.000000e+00> : vector<64xf32>
    %138 = vector.multi_reduction <add>, %136, %cst_109 [0] : vector<128x64xf32> to vector<64xf32>
    %139 = vector.shape_cast %138 : vector<64xf32> to vector<1x64xf32>
    %140 = arith.addf %82, %139 : vector<1x64xf32>
    %141 = arith.mulf %136, %136 : vector<128x64xf32>
    %cst_110 = arith.constant dense<0.000000e+00> : vector<64xf32>
    %142 = vector.multi_reduction <add>, %141, %cst_110 [0] : vector<128x64xf32> to vector<64xf32>
    %143 = vector.shape_cast %142 : vector<64xf32> to vector<1x64xf32>
    %144 = arith.addf %83, %143 : vector<1x64xf32>
    %c0_111 = arith.constant 0 : index
    %c128 = arith.constant 128 : index
    %c0_112 = arith.constant 0 : index
    %145 = vector.load %arg5[%c0_111, %c128, %c0_112] : memref<3x288x64xbf16, #tpu.memory_space<vmem>>, vector<1x128x64xbf16>
    %146 = vector.shape_cast %145 : vector<1x128x64xbf16> to vector<128x64xbf16>
    %c0_113 = arith.constant 0 : index
    %c0_114 = arith.constant 0 : index
    %c0_115 = arith.constant 0 : index
    %147 = vector.load %arg2[%c0_113, %c0_114, %c0_115] : memref<9x64x64xbf16, #tpu.memory_space<vmem>>, vector<1x64x64xbf16>
    %148 = vector.shape_cast %147 : vector<1x64x64xbf16> to vector<64x64xbf16>
    %cst_116 = arith.constant dense<0.000000e+00> : vector<128x64xf32>
    %149 = tpu.matmul %146, %148, %cst_116 {dimension_numbers = #tpu.dot_dimension_numbers<[1], [0], [0], [1], [0, 0, 1, 1], [], []>} : vector<128x64xbf16>, vector<64x64xbf16>, vector<128x64xf32> -> vector<128x64xf32>
    %c1_117 = arith.constant 1 : index
    %c128_118 = arith.constant 128 : index
    %c0_119 = arith.constant 0 : index
    %150 = vector.load %arg5[%c1_117, %c128_118, %c0_119] : memref<3x288x64xbf16, #tpu.memory_space<vmem>>, vector<1x128x64xbf16>
    %151 = vector.shape_cast %150 : vector<1x128x64xbf16> to vector<128x64xbf16>
    %c1_120 = arith.constant 1 : index
    %c0_121 = arith.constant 0 : index
    %c0_122 = arith.constant 0 : index
    %152 = vector.load %arg2[%c1_120, %c0_121, %c0_122] : memref<9x64x64xbf16, #tpu.memory_space<vmem>>, vector<1x64x64xbf16>
    %153 = vector.shape_cast %152 : vector<1x64x64xbf16> to vector<64x64xbf16>
    %cst_123 = arith.constant dense<0.000000e+00> : vector<128x64xf32>
    %154 = tpu.matmul %151, %153, %cst_123 {dimension_numbers = #tpu.dot_dimension_numbers<[1], [0], [0], [1], [0, 0, 1, 1], [], []>} : vector<128x64xbf16>, vector<64x64xbf16>, vector<128x64xf32> -> vector<128x64xf32>
    %155 = arith.addf %149, %154 : vector<128x64xf32>
    %c2_124 = arith.constant 2 : index
    %c128_125 = arith.constant 128 : index
    %c0_126 = arith.constant 0 : index
    %156 = vector.load %arg5[%c2_124, %c128_125, %c0_126] : memref<3x288x64xbf16, #tpu.memory_space<vmem>>, vector<1x128x64xbf16>
    %157 = vector.shape_cast %156 : vector<1x128x64xbf16> to vector<128x64xbf16>
    %c2_127 = arith.constant 2 : index
    %c0_128 = arith.constant 0 : index
    %c0_129 = arith.constant 0 : index
    %158 = vector.load %arg2[%c2_127, %c0_128, %c0_129] : memref<9x64x64xbf16, #tpu.memory_space<vmem>>, vector<1x64x64xbf16>
    %159 = vector.shape_cast %158 : vector<1x64x64xbf16> to vector<64x64xbf16>
    %cst_130 = arith.constant dense<0.000000e+00> : vector<128x64xf32>
    %160 = tpu.matmul %157, %159, %cst_130 {dimension_numbers = #tpu.dot_dimension_numbers<[1], [0], [0], [1], [0, 0, 1, 1], [], []>} : vector<128x64xbf16>, vector<64x64xbf16>, vector<128x64xf32> -> vector<128x64xf32>
    %161 = arith.addf %155, %160 : vector<128x64xf32>
    %c0_131 = arith.constant 0 : index
    %c144_132 = arith.constant 144 : index
    %c0_133 = arith.constant 0 : index
    %162 = vector.load %arg5[%c0_131, %c144_132, %c0_133] : memref<3x288x64xbf16, #tpu.memory_space<vmem>>, vector<1x128x64xbf16>
    %163 = vector.shape_cast %162 : vector<1x128x64xbf16> to vector<128x64xbf16>
    %c3_134 = arith.constant 3 : index
    %c0_135 = arith.constant 0 : index
    %c0_136 = arith.constant 0 : index
    %164 = vector.load %arg2[%c3_134, %c0_135, %c0_136] : memref<9x64x64xbf16, #tpu.memory_space<vmem>>, vector<1x64x64xbf16>
    %165 = vector.shape_cast %164 : vector<1x64x64xbf16> to vector<64x64xbf16>
    %cst_137 = arith.constant dense<0.000000e+00> : vector<128x64xf32>
    %166 = tpu.matmul %163, %165, %cst_137 {dimension_numbers = #tpu.dot_dimension_numbers<[1], [0], [0], [1], [0, 0, 1, 1], [], []>} : vector<128x64xbf16>, vector<64x64xbf16>, vector<128x64xf32> -> vector<128x64xf32>
    %167 = arith.addf %161, %166 : vector<128x64xf32>
    %c1_138 = arith.constant 1 : index
    %c144_139 = arith.constant 144 : index
    %c0_140 = arith.constant 0 : index
    %168 = vector.load %arg5[%c1_138, %c144_139, %c0_140] : memref<3x288x64xbf16, #tpu.memory_space<vmem>>, vector<1x128x64xbf16>
    %169 = vector.shape_cast %168 : vector<1x128x64xbf16> to vector<128x64xbf16>
    %c4_141 = arith.constant 4 : index
    %c0_142 = arith.constant 0 : index
    %c0_143 = arith.constant 0 : index
    %170 = vector.load %arg2[%c4_141, %c0_142, %c0_143] : memref<9x64x64xbf16, #tpu.memory_space<vmem>>, vector<1x64x64xbf16>
    %171 = vector.shape_cast %170 : vector<1x64x64xbf16> to vector<64x64xbf16>
    %cst_144 = arith.constant dense<0.000000e+00> : vector<128x64xf32>
    %172 = tpu.matmul %169, %171, %cst_144 {dimension_numbers = #tpu.dot_dimension_numbers<[1], [0], [0], [1], [0, 0, 1, 1], [], []>} : vector<128x64xbf16>, vector<64x64xbf16>, vector<128x64xf32> -> vector<128x64xf32>
    %173 = arith.addf %167, %172 : vector<128x64xf32>
    %c2_145 = arith.constant 2 : index
    %c144_146 = arith.constant 144 : index
    %c0_147 = arith.constant 0 : index
    %174 = vector.load %arg5[%c2_145, %c144_146, %c0_147] : memref<3x288x64xbf16, #tpu.memory_space<vmem>>, vector<1x128x64xbf16>
    %175 = vector.shape_cast %174 : vector<1x128x64xbf16> to vector<128x64xbf16>
    %c5_148 = arith.constant 5 : index
    %c0_149 = arith.constant 0 : index
    %c0_150 = arith.constant 0 : index
    %176 = vector.load %arg2[%c5_148, %c0_149, %c0_150] : memref<9x64x64xbf16, #tpu.memory_space<vmem>>, vector<1x64x64xbf16>
    %177 = vector.shape_cast %176 : vector<1x64x64xbf16> to vector<64x64xbf16>
    %cst_151 = arith.constant dense<0.000000e+00> : vector<128x64xf32>
    %178 = tpu.matmul %175, %177, %cst_151 {dimension_numbers = #tpu.dot_dimension_numbers<[1], [0], [0], [1], [0, 0, 1, 1], [], []>} : vector<128x64xbf16>, vector<64x64xbf16>, vector<128x64xf32> -> vector<128x64xf32>
    %179 = arith.addf %173, %178 : vector<128x64xf32>
    %c0_152 = arith.constant 0 : index
    %c160 = arith.constant 160 : index
    %c0_153 = arith.constant 0 : index
    %180 = vector.load %arg5[%c0_152, %c160, %c0_153] : memref<3x288x64xbf16, #tpu.memory_space<vmem>>, vector<1x128x64xbf16>
    %181 = vector.shape_cast %180 : vector<1x128x64xbf16> to vector<128x64xbf16>
    %c6_154 = arith.constant 6 : index
    %c0_155 = arith.constant 0 : index
    %c0_156 = arith.constant 0 : index
    %182 = vector.load %arg2[%c6_154, %c0_155, %c0_156] : memref<9x64x64xbf16, #tpu.memory_space<vmem>>, vector<1x64x64xbf16>
    %183 = vector.shape_cast %182 : vector<1x64x64xbf16> to vector<64x64xbf16>
    %cst_157 = arith.constant dense<0.000000e+00> : vector<128x64xf32>
    %184 = tpu.matmul %181, %183, %cst_157 {dimension_numbers = #tpu.dot_dimension_numbers<[1], [0], [0], [1], [0, 0, 1, 1], [], []>} : vector<128x64xbf16>, vector<64x64xbf16>, vector<128x64xf32> -> vector<128x64xf32>
    %185 = arith.addf %179, %184 : vector<128x64xf32>
    %c1_158 = arith.constant 1 : index
    %c160_159 = arith.constant 160 : index
    %c0_160 = arith.constant 0 : index
    %186 = vector.load %arg5[%c1_158, %c160_159, %c0_160] : memref<3x288x64xbf16, #tpu.memory_space<vmem>>, vector<1x128x64xbf16>
    %187 = vector.shape_cast %186 : vector<1x128x64xbf16> to vector<128x64xbf16>
    %c7_161 = arith.constant 7 : index
    %c0_162 = arith.constant 0 : index
    %c0_163 = arith.constant 0 : index
    %188 = vector.load %arg2[%c7_161, %c0_162, %c0_163] : memref<9x64x64xbf16, #tpu.memory_space<vmem>>, vector<1x64x64xbf16>
    %189 = vector.shape_cast %188 : vector<1x64x64xbf16> to vector<64x64xbf16>
    %cst_164 = arith.constant dense<0.000000e+00> : vector<128x64xf32>
    %190 = tpu.matmul %187, %189, %cst_164 {dimension_numbers = #tpu.dot_dimension_numbers<[1], [0], [0], [1], [0, 0, 1, 1], [], []>} : vector<128x64xbf16>, vector<64x64xbf16>, vector<128x64xf32> -> vector<128x64xf32>
    %191 = arith.addf %185, %190 : vector<128x64xf32>
    %c2_165 = arith.constant 2 : index
    %c160_166 = arith.constant 160 : index
    %c0_167 = arith.constant 0 : index
    %192 = vector.load %arg5[%c2_165, %c160_166, %c0_167] : memref<3x288x64xbf16, #tpu.memory_space<vmem>>, vector<1x128x64xbf16>
    %193 = vector.shape_cast %192 : vector<1x128x64xbf16> to vector<128x64xbf16>
    %c8_168 = arith.constant 8 : index
    %c0_169 = arith.constant 0 : index
    %c0_170 = arith.constant 0 : index
    %194 = vector.load %arg2[%c8_168, %c0_169, %c0_170] : memref<9x64x64xbf16, #tpu.memory_space<vmem>>, vector<1x64x64xbf16>
    %195 = vector.shape_cast %194 : vector<1x64x64xbf16> to vector<64x64xbf16>
    %cst_171 = arith.constant dense<0.000000e+00> : vector<128x64xf32>
    %196 = tpu.matmul %193, %195, %cst_171 {dimension_numbers = #tpu.dot_dimension_numbers<[1], [0], [0], [1], [0, 0, 1, 1], [], []>} : vector<128x64xbf16>, vector<64x64xbf16>, vector<128x64xf32> -> vector<128x64xf32>
    %197 = arith.addf %191, %196 : vector<128x64xf32>
    %c128_172 = arith.constant 128 : index
    %c0_173 = arith.constant 0 : index
    %198 = vector.load %arg6[%c128_172, %c0_173] : memref<256x64xf32, #tpu.memory_space<vmem>>, vector<128x64xf32>
    tpu.vector_store %arg6[%c128_172, %c0_173], %197 {strides = array<i32>} : memref<256x64xf32, #tpu.memory_space<vmem>>, vector<128x64xf32>,
    %cst_174 = arith.constant dense<0.000000e+00> : vector<64xf32>
    %199 = vector.multi_reduction <add>, %197, %cst_174 [0] : vector<128x64xf32> to vector<64xf32>
    %200 = vector.shape_cast %199 : vector<64xf32> to vector<1x64xf32>
    %201 = arith.addf %140, %200 : vector<1x64xf32>
    %202 = arith.mulf %197, %197 : vector<128x64xf32>
    %cst_175 = arith.constant dense<0.000000e+00> : vector<64xf32>
    %203 = vector.multi_reduction <add>, %202, %cst_175 [0] : vector<128x64xf32> to vector<64xf32>
    %204 = vector.shape_cast %203 : vector<64xf32> to vector<1x64xf32>
    %205 = arith.addf %144, %204 : vector<1x64xf32>
    %cst_176 = arith.constant 3.906250e-03 : f32
    %206 = vector.broadcast %cst_176 : f32 to vector<1x64xf32>
    %207 = arith.mulf %201, %206 : vector<1x64xf32>
    %cst_177 = arith.constant 3.906250e-03 : f32
    %208 = vector.broadcast %cst_177 : f32 to vector<1x64xf32>
    %209 = arith.mulf %205, %208 : vector<1x64xf32>
    %210 = arith.mulf %207, %207 : vector<1x64xf32>
    %211 = arith.subf %209, %210 : vector<1x64xf32>
    %cst_178 = arith.constant 0.000000e+00 : f32
    %212 = vector.broadcast %cst_178 : f32 to vector<1x64xf32>
    %213 = arith.maximumf %211, %212 : vector<1x64xf32>
    %cst_179 = arith.constant 9.99999974E-6 : f32
    %214 = vector.broadcast %cst_179 : f32 to vector<1x64xf32>
    %215 = arith.addf %213, %214 : vector<1x64xf32>
    %216 = math.rsqrt %215 : vector<1x64xf32>
    %c0_180 = arith.constant 0 : index
    %c0_181 = arith.constant 0 : index
    %217 = vector.load %arg6[%c0_180, %c0_181] : memref<256x64xf32, #tpu.memory_space<vmem>>, vector<128x64xf32>
    %218 = vector.broadcast %207 : vector<1x64xf32> to vector<128x64xf32>
    %219 = arith.subf %217, %218 : vector<128x64xf32>
    %220 = vector.broadcast %216 : vector<1x64xf32> to vector<128x64xf32>
    %221 = arith.mulf %219, %220 : vector<128x64xf32>
    %cst_182 = arith.constant 0.000000e+00 : f32
    %222 = vector.broadcast %cst_182 : f32 to vector<128x64xf32>
    %223 = arith.maximumf %221, %222 : vector<128x64xf32>
    %224 = arith.truncf %223 : vector<128x64xf32> to vector<128x64xbf16>
    %c1_183 = arith.constant 1 : index
    %c16_184 = arith.constant 16 : index
    %c0_185 = arith.constant 0 : index
    %225 = vector.load %arg5[%c1_183, %c16_184, %c0_185] : memref<3x288x64xbf16, #tpu.memory_space<vmem>>, vector<1x128x64xbf16>
    %226 = vector.shape_cast %225 : vector<1x128x64xbf16> to vector<128x64xbf16>
    %227 = vector.shape_cast %224 : vector<128x64xbf16> to vector<1x128x64xbf16>
    tpu.vector_store %arg5[%c1_183, %c16_184, %c0_185], %227 {strides = array<i32>} : memref<3x288x64xbf16, #tpu.memory_space<vmem>>, vector<1x128x64xbf16>,
    %c1_i32_186 = arith.constant 1 : i32
    %228 = tpu.dynamic_rotate %223 by %c1_i32_186 dim 0 : vector<128x64xf32>, i32 -> vector<128x64xf32>
    %cst_187 = arith.constant 0.000000e+00 : f32
    %229 = vector.broadcast %cst_187 : f32 to vector<128x64xf32>
    %230 = arith.select %18, %229, %228 : vector<128x64xi1>, vector<128x64xf32>
    %231 = arith.truncf %230 : vector<128x64xf32> to vector<128x64xbf16>
    %c0_188 = arith.constant 0 : index
    %c16_189 = arith.constant 16 : index
    %c0_190 = arith.constant 0 : index
    %232 = vector.load %arg5[%c0_188, %c16_189, %c0_190] : memref<3x288x64xbf16, #tpu.memory_space<vmem>>, vector<1x128x64xbf16>
    %233 = vector.shape_cast %232 : vector<1x128x64xbf16> to vector<128x64xbf16>
    %234 = vector.shape_cast %231 : vector<128x64xbf16> to vector<1x128x64xbf16>
    tpu.vector_store %arg5[%c0_188, %c16_189, %c0_190], %234 {strides = array<i32>} : memref<3x288x64xbf16, #tpu.memory_space<vmem>>, vector<1x128x64xbf16>,
    %c127_i32_191 = arith.constant 127 : i32
    %235 = tpu.dynamic_rotate %223 by %c127_i32_191 dim 0 : vector<128x64xf32>, i32 -> vector<128x64xf32>
    %cst_192 = arith.constant 0.000000e+00 : f32
    %236 = vector.broadcast %cst_192 : f32 to vector<128x64xf32>
    %237 = arith.select %20, %236, %235 : vector<128x64xi1>, vector<128x64xf32>
    %238 = arith.truncf %237 : vector<128x64xf32> to vector<128x64xbf16>
    %c2_193 = arith.constant 2 : index
    %c16_194 = arith.constant 16 : index
    %c0_195 = arith.constant 0 : index
    %239 = vector.load %arg5[%c2_193, %c16_194, %c0_195] : memref<3x288x64xbf16, #tpu.memory_space<vmem>>, vector<1x128x64xbf16>
    %240 = vector.shape_cast %239 : vector<1x128x64xbf16> to vector<128x64xbf16>
    %241 = vector.shape_cast %238 : vector<128x64xbf16> to vector<1x128x64xbf16>
    tpu.vector_store %arg5[%c2_193, %c16_194, %c0_195], %241 {strides = array<i32>} : memref<3x288x64xbf16, #tpu.memory_space<vmem>>, vector<1x128x64xbf16>,
    %c128_196 = arith.constant 128 : index
    %c0_197 = arith.constant 0 : index
    %242 = vector.load %arg6[%c128_196, %c0_197] : memref<256x64xf32, #tpu.memory_space<vmem>>, vector<128x64xf32>
    %243 = vector.broadcast %207 : vector<1x64xf32> to vector<128x64xf32>
    %244 = arith.subf %242, %243 : vector<128x64xf32>
    %245 = vector.broadcast %216 : vector<1x64xf32> to vector<128x64xf32>
    %246 = arith.mulf %244, %245 : vector<128x64xf32>
    %cst_198 = arith.constant 0.000000e+00 : f32
    %247 = vector.broadcast %cst_198 : f32 to vector<128x64xf32>
    %248 = arith.maximumf %246, %247 : vector<128x64xf32>
    %249 = arith.truncf %248 : vector<128x64xf32> to vector<128x64xbf16>
    %c1_199 = arith.constant 1 : index
    %c144_200 = arith.constant 144 : index
    %c0_201 = arith.constant 0 : index
    %250 = vector.load %arg5[%c1_199, %c144_200, %c0_201] : memref<3x288x64xbf16, #tpu.memory_space<vmem>>, vector<1x128x64xbf16>
    %251 = vector.shape_cast %250 : vector<1x128x64xbf16> to vector<128x64xbf16>
    %252 = vector.shape_cast %249 : vector<128x64xbf16> to vector<1x128x64xbf16>
    tpu.vector_store %arg5[%c1_199, %c144_200, %c0_201], %252 {strides = array<i32>} : memref<3x288x64xbf16, #tpu.memory_space<vmem>>, vector<1x128x64xbf16>,
    %c1_i32_202 = arith.constant 1 : i32
    %253 = tpu.dynamic_rotate %248 by %c1_i32_202 dim 0 : vector<128x64xf32>, i32 -> vector<128x64xf32>
    %cst_203 = arith.constant 0.000000e+00 : f32
    %254 = vector.broadcast %cst_203 : f32 to vector<128x64xf32>
    %255 = arith.select %18, %254, %253 : vector<128x64xi1>, vector<128x64xf32>
    %256 = arith.truncf %255 : vector<128x64xf32> to vector<128x64xbf16>
    %c0_204 = arith.constant 0 : index
    %c144_205 = arith.constant 144 : index
    %c0_206 = arith.constant 0 : index
    %257 = vector.load %arg5[%c0_204, %c144_205, %c0_206] : memref<3x288x64xbf16, #tpu.memory_space<vmem>>, vector<1x128x64xbf16>
    %258 = vector.shape_cast %257 : vector<1x128x64xbf16> to vector<128x64xbf16>
    %259 = vector.shape_cast %256 : vector<128x64xbf16> to vector<1x128x64xbf16>
    tpu.vector_store %arg5[%c0_204, %c144_205, %c0_206], %259 {strides = array<i32>} : memref<3x288x64xbf16, #tpu.memory_space<vmem>>, vector<1x128x64xbf16>,
    %c127_i32_207 = arith.constant 127 : i32
    %260 = tpu.dynamic_rotate %248 by %c127_i32_207 dim 0 : vector<128x64xf32>, i32 -> vector<128x64xf32>
    %cst_208 = arith.constant 0.000000e+00 : f32
    %261 = vector.broadcast %cst_208 : f32 to vector<128x64xf32>
    %262 = arith.select %20, %261, %260 : vector<128x64xi1>, vector<128x64xf32>
    %263 = arith.truncf %262 : vector<128x64xf32> to vector<128x64xbf16>
    %c2_209 = arith.constant 2 : index
    %c144_210 = arith.constant 144 : index
    %c0_211 = arith.constant 0 : index
    %264 = vector.load %arg5[%c2_209, %c144_210, %c0_211] : memref<3x288x64xbf16, #tpu.memory_space<vmem>>, vector<1x128x64xbf16>
    %265 = vector.shape_cast %264 : vector<1x128x64xbf16> to vector<128x64xbf16>
    %266 = vector.shape_cast %263 : vector<128x64xbf16> to vector<1x128x64xbf16>
    tpu.vector_store %arg5[%c2_209, %c144_210, %c0_211], %266 {strides = array<i32>} : memref<3x288x64xbf16, #tpu.memory_space<vmem>>, vector<1x128x64xbf16>,
    %cst_212 = arith.constant 0.000000e+00 : f32
    %267 = vector.broadcast %cst_212 : f32 to vector<1x64xf32>
    %cst_213 = arith.constant 0.000000e+00 : f32
    %268 = vector.broadcast %cst_213 : f32 to vector<1x64xf32>
    %c0_214 = arith.constant 0 : index
    %c0_215 = arith.constant 0 : index
    %c0_216 = arith.constant 0 : index
    %269 = vector.load %arg5[%c0_214, %c0_215, %c0_216] : memref<3x288x64xbf16, #tpu.memory_space<vmem>>, vector<1x128x64xbf16>
    %270 = vector.shape_cast %269 : vector<1x128x64xbf16> to vector<128x64xbf16>
    %c0_217 = arith.constant 0 : index
    %c0_218 = arith.constant 0 : index
    %c0_219 = arith.constant 0 : index
    %271 = vector.load %arg3[%c0_217, %c0_218, %c0_219] : memref<9x64x64xbf16, #tpu.memory_space<vmem>>, vector<1x64x64xbf16>
    %272 = vector.shape_cast %271 : vector<1x64x64xbf16> to vector<64x64xbf16>
    %cst_220 = arith.constant dense<0.000000e+00> : vector<128x64xf32>
    %273 = tpu.matmul %270, %272, %cst_220 {dimension_numbers = #tpu.dot_dimension_numbers<[1], [0], [0], [1], [0, 0, 1, 1], [], []>} : vector<128x64xbf16>, vector<64x64xbf16>, vector<128x64xf32> -> vector<128x64xf32>
    %c1_221 = arith.constant 1 : index
    %c0_222 = arith.constant 0 : index
    %c0_223 = arith.constant 0 : index
    %274 = vector.load %arg5[%c1_221, %c0_222, %c0_223] : memref<3x288x64xbf16, #tpu.memory_space<vmem>>, vector<1x128x64xbf16>
    %275 = vector.shape_cast %274 : vector<1x128x64xbf16> to vector<128x64xbf16>
    %c1_224 = arith.constant 1 : index
    %c0_225 = arith.constant 0 : index
    %c0_226 = arith.constant 0 : index
    %276 = vector.load %arg3[%c1_224, %c0_225, %c0_226] : memref<9x64x64xbf16, #tpu.memory_space<vmem>>, vector<1x64x64xbf16>
    %277 = vector.shape_cast %276 : vector<1x64x64xbf16> to vector<64x64xbf16>
    %cst_227 = arith.constant dense<0.000000e+00> : vector<128x64xf32>
    %278 = tpu.matmul %275, %277, %cst_227 {dimension_numbers = #tpu.dot_dimension_numbers<[1], [0], [0], [1], [0, 0, 1, 1], [], []>} : vector<128x64xbf16>, vector<64x64xbf16>, vector<128x64xf32> -> vector<128x64xf32>
    %279 = arith.addf %273, %278 : vector<128x64xf32>
    %c2_228 = arith.constant 2 : index
    %c0_229 = arith.constant 0 : index
    %c0_230 = arith.constant 0 : index
    %280 = vector.load %arg5[%c2_228, %c0_229, %c0_230] : memref<3x288x64xbf16, #tpu.memory_space<vmem>>, vector<1x128x64xbf16>
    %281 = vector.shape_cast %280 : vector<1x128x64xbf16> to vector<128x64xbf16>
    %c2_231 = arith.constant 2 : index
    %c0_232 = arith.constant 0 : index
    %c0_233 = arith.constant 0 : index
    %282 = vector.load %arg3[%c2_231, %c0_232, %c0_233] : memref<9x64x64xbf16, #tpu.memory_space<vmem>>, vector<1x64x64xbf16>
    %283 = vector.shape_cast %282 : vector<1x64x64xbf16> to vector<64x64xbf16>
    %cst_234 = arith.constant dense<0.000000e+00> : vector<128x64xf32>
    %284 = tpu.matmul %281, %283, %cst_234 {dimension_numbers = #tpu.dot_dimension_numbers<[1], [0], [0], [1], [0, 0, 1, 1], [], []>} : vector<128x64xbf16>, vector<64x64xbf16>, vector<128x64xf32> -> vector<128x64xf32>
    %285 = arith.addf %279, %284 : vector<128x64xf32>
    %c0_235 = arith.constant 0 : index
    %c16_236 = arith.constant 16 : index
    %c0_237 = arith.constant 0 : index
    %286 = vector.load %arg5[%c0_235, %c16_236, %c0_237] : memref<3x288x64xbf16, #tpu.memory_space<vmem>>, vector<1x128x64xbf16>
    %287 = vector.shape_cast %286 : vector<1x128x64xbf16> to vector<128x64xbf16>
    %c3_238 = arith.constant 3 : index
    %c0_239 = arith.constant 0 : index
    %c0_240 = arith.constant 0 : index
    %288 = vector.load %arg3[%c3_238, %c0_239, %c0_240] : memref<9x64x64xbf16, #tpu.memory_space<vmem>>, vector<1x64x64xbf16>
    %289 = vector.shape_cast %288 : vector<1x64x64xbf16> to vector<64x64xbf16>
    %cst_241 = arith.constant dense<0.000000e+00> : vector<128x64xf32>
    %290 = tpu.matmul %287, %289, %cst_241 {dimension_numbers = #tpu.dot_dimension_numbers<[1], [0], [0], [1], [0, 0, 1, 1], [], []>} : vector<128x64xbf16>, vector<64x64xbf16>, vector<128x64xf32> -> vector<128x64xf32>
    %291 = arith.addf %285, %290 : vector<128x64xf32>
    %c1_242 = arith.constant 1 : index
    %c16_243 = arith.constant 16 : index
    %c0_244 = arith.constant 0 : index
    %292 = vector.load %arg5[%c1_242, %c16_243, %c0_244] : memref<3x288x64xbf16, #tpu.memory_space<vmem>>, vector<1x128x64xbf16>
    %293 = vector.shape_cast %292 : vector<1x128x64xbf16> to vector<128x64xbf16>
    %c4_245 = arith.constant 4 : index
    %c0_246 = arith.constant 0 : index
    %c0_247 = arith.constant 0 : index
    %294 = vector.load %arg3[%c4_245, %c0_246, %c0_247] : memref<9x64x64xbf16, #tpu.memory_space<vmem>>, vector<1x64x64xbf16>
    %295 = vector.shape_cast %294 : vector<1x64x64xbf16> to vector<64x64xbf16>
    %cst_248 = arith.constant dense<0.000000e+00> : vector<128x64xf32>
    %296 = tpu.matmul %293, %295, %cst_248 {dimension_numbers = #tpu.dot_dimension_numbers<[1], [0], [0], [1], [0, 0, 1, 1], [], []>} : vector<128x64xbf16>, vector<64x64xbf16>, vector<128x64xf32> -> vector<128x64xf32>
    %297 = arith.addf %291, %296 : vector<128x64xf32>
    %c2_249 = arith.constant 2 : index
    %c16_250 = arith.constant 16 : index
    %c0_251 = arith.constant 0 : index
    %298 = vector.load %arg5[%c2_249, %c16_250, %c0_251] : memref<3x288x64xbf16, #tpu.memory_space<vmem>>, vector<1x128x64xbf16>
    %299 = vector.shape_cast %298 : vector<1x128x64xbf16> to vector<128x64xbf16>
    %c5_252 = arith.constant 5 : index
    %c0_253 = arith.constant 0 : index
    %c0_254 = arith.constant 0 : index
    %300 = vector.load %arg3[%c5_252, %c0_253, %c0_254] : memref<9x64x64xbf16, #tpu.memory_space<vmem>>, vector<1x64x64xbf16>
    %301 = vector.shape_cast %300 : vector<1x64x64xbf16> to vector<64x64xbf16>
    %cst_255 = arith.constant dense<0.000000e+00> : vector<128x64xf32>
    %302 = tpu.matmul %299, %301, %cst_255 {dimension_numbers = #tpu.dot_dimension_numbers<[1], [0], [0], [1], [0, 0, 1, 1], [], []>} : vector<128x64xbf16>, vector<64x64xbf16>, vector<128x64xf32> -> vector<128x64xf32>
    %303 = arith.addf %297, %302 : vector<128x64xf32>
    %c0_256 = arith.constant 0 : index
    %c32_257 = arith.constant 32 : index
    %c0_258 = arith.constant 0 : index
    %304 = vector.load %arg5[%c0_256, %c32_257, %c0_258] : memref<3x288x64xbf16, #tpu.memory_space<vmem>>, vector<1x128x64xbf16>
    %305 = vector.shape_cast %304 : vector<1x128x64xbf16> to vector<128x64xbf16>
    %c6_259 = arith.constant 6 : index
    %c0_260 = arith.constant 0 : index
    %c0_261 = arith.constant 0 : index
    %306 = vector.load %arg3[%c6_259, %c0_260, %c0_261] : memref<9x64x64xbf16, #tpu.memory_space<vmem>>, vector<1x64x64xbf16>
    %307 = vector.shape_cast %306 : vector<1x64x64xbf16> to vector<64x64xbf16>
    %cst_262 = arith.constant dense<0.000000e+00> : vector<128x64xf32>
    %308 = tpu.matmul %305, %307, %cst_262 {dimension_numbers = #tpu.dot_dimension_numbers<[1], [0], [0], [1], [0, 0, 1, 1], [], []>} : vector<128x64xbf16>, vector<64x64xbf16>, vector<128x64xf32> -> vector<128x64xf32>
    %309 = arith.addf %303, %308 : vector<128x64xf32>
    %c1_263 = arith.constant 1 : index
    %c32_264 = arith.constant 32 : index
    %c0_265 = arith.constant 0 : index
    %310 = vector.load %arg5[%c1_263, %c32_264, %c0_265] : memref<3x288x64xbf16, #tpu.memory_space<vmem>>, vector<1x128x64xbf16>
    %311 = vector.shape_cast %310 : vector<1x128x64xbf16> to vector<128x64xbf16>
    %c7_266 = arith.constant 7 : index
    %c0_267 = arith.constant 0 : index
    %c0_268 = arith.constant 0 : index
    %312 = vector.load %arg3[%c7_266, %c0_267, %c0_268] : memref<9x64x64xbf16, #tpu.memory_space<vmem>>, vector<1x64x64xbf16>
    %313 = vector.shape_cast %312 : vector<1x64x64xbf16> to vector<64x64xbf16>
    %cst_269 = arith.constant dense<0.000000e+00> : vector<128x64xf32>
    %314 = tpu.matmul %311, %313, %cst_269 {dimension_numbers = #tpu.dot_dimension_numbers<[1], [0], [0], [1], [0, 0, 1, 1], [], []>} : vector<128x64xbf16>, vector<64x64xbf16>, vector<128x64xf32> -> vector<128x64xf32>
    %315 = arith.addf %309, %314 : vector<128x64xf32>
    %c2_270 = arith.constant 2 : index
    %c32_271 = arith.constant 32 : index
    %c0_272 = arith.constant 0 : index
    %316 = vector.load %arg5[%c2_270, %c32_271, %c0_272] : memref<3x288x64xbf16, #tpu.memory_space<vmem>>, vector<1x128x64xbf16>
    %317 = vector.shape_cast %316 : vector<1x128x64xbf16> to vector<128x64xbf16>
    %c8_273 = arith.constant 8 : index
    %c0_274 = arith.constant 0 : index
    %c0_275 = arith.constant 0 : index
    %318 = vector.load %arg3[%c8_273, %c0_274, %c0_275] : memref<9x64x64xbf16, #tpu.memory_space<vmem>>, vector<1x64x64xbf16>
    %319 = vector.shape_cast %318 : vector<1x64x64xbf16> to vector<64x64xbf16>
    %cst_276 = arith.constant dense<0.000000e+00> : vector<128x64xf32>
    %320 = tpu.matmul %317, %319, %cst_276 {dimension_numbers = #tpu.dot_dimension_numbers<[1], [0], [0], [1], [0, 0, 1, 1], [], []>} : vector<128x64xbf16>, vector<64x64xbf16>, vector<128x64xf32> -> vector<128x64xf32>
    %321 = arith.addf %315, %320 : vector<128x64xf32>
    %c0_277 = arith.constant 0 : index
    %c0_278 = arith.constant 0 : index
    %322 = vector.load %arg6[%c0_277, %c0_278] : memref<256x64xf32, #tpu.memory_space<vmem>>, vector<128x64xf32>
    tpu.vector_store %arg6[%c0_277, %c0_278], %321 {strides = array<i32>} : memref<256x64xf32, #tpu.memory_space<vmem>>, vector<128x64xf32>,
    %cst_279 = arith.constant dense<0.000000e+00> : vector<64xf32>
    %323 = vector.multi_reduction <add>, %321, %cst_279 [0] : vector<128x64xf32> to vector<64xf32>
    %324 = vector.shape_cast %323 : vector<64xf32> to vector<1x64xf32>
    %325 = arith.addf %267, %324 : vector<1x64xf32>
    %326 = arith.mulf %321, %321 : vector<128x64xf32>
    %cst_280 = arith.constant dense<0.000000e+00> : vector<64xf32>
    %327 = vector.multi_reduction <add>, %326, %cst_280 [0] : vector<128x64xf32> to vector<64xf32>
    %328 = vector.shape_cast %327 : vector<64xf32> to vector<1x64xf32>
    %329 = arith.addf %268, %328 : vector<1x64xf32>
    %c0_281 = arith.constant 0 : index
    %c128_282 = arith.constant 128 : index
    %c0_283 = arith.constant 0 : index
    %330 = vector.load %arg5[%c0_281, %c128_282, %c0_283] : memref<3x288x64xbf16, #tpu.memory_space<vmem>>, vector<1x128x64xbf16>
    %331 = vector.shape_cast %330 : vector<1x128x64xbf16> to vector<128x64xbf16>
    %c0_284 = arith.constant 0 : index
    %c0_285 = arith.constant 0 : index
    %c0_286 = arith.constant 0 : index
    %332 = vector.load %arg3[%c0_284, %c0_285, %c0_286] : memref<9x64x64xbf16, #tpu.memory_space<vmem>>, vector<1x64x64xbf16>
    %333 = vector.shape_cast %332 : vector<1x64x64xbf16> to vector<64x64xbf16>
    %cst_287 = arith.constant dense<0.000000e+00> : vector<128x64xf32>
    %334 = tpu.matmul %331, %333, %cst_287 {dimension_numbers = #tpu.dot_dimension_numbers<[1], [0], [0], [1], [0, 0, 1, 1], [], []>} : vector<128x64xbf16>, vector<64x64xbf16>, vector<128x64xf32> -> vector<128x64xf32>
    %c1_288 = arith.constant 1 : index
    %c128_289 = arith.constant 128 : index
    %c0_290 = arith.constant 0 : index
    %335 = vector.load %arg5[%c1_288, %c128_289, %c0_290] : memref<3x288x64xbf16, #tpu.memory_space<vmem>>, vector<1x128x64xbf16>
    %336 = vector.shape_cast %335 : vector<1x128x64xbf16> to vector<128x64xbf16>
    %c1_291 = arith.constant 1 : index
    %c0_292 = arith.constant 0 : index
    %c0_293 = arith.constant 0 : index
    %337 = vector.load %arg3[%c1_291, %c0_292, %c0_293] : memref<9x64x64xbf16, #tpu.memory_space<vmem>>, vector<1x64x64xbf16>
    %338 = vector.shape_cast %337 : vector<1x64x64xbf16> to vector<64x64xbf16>
    %cst_294 = arith.constant dense<0.000000e+00> : vector<128x64xf32>
    %339 = tpu.matmul %336, %338, %cst_294 {dimension_numbers = #tpu.dot_dimension_numbers<[1], [0], [0], [1], [0, 0, 1, 1], [], []>} : vector<128x64xbf16>, vector<64x64xbf16>, vector<128x64xf32> -> vector<128x64xf32>
    %340 = arith.addf %334, %339 : vector<128x64xf32>
    %c2_295 = arith.constant 2 : index
    %c128_296 = arith.constant 128 : index
    %c0_297 = arith.constant 0 : index
    %341 = vector.load %arg5[%c2_295, %c128_296, %c0_297] : memref<3x288x64xbf16, #tpu.memory_space<vmem>>, vector<1x128x64xbf16>
    %342 = vector.shape_cast %341 : vector<1x128x64xbf16> to vector<128x64xbf16>
    %c2_298 = arith.constant 2 : index
    %c0_299 = arith.constant 0 : index
    %c0_300 = arith.constant 0 : index
    %343 = vector.load %arg3[%c2_298, %c0_299, %c0_300] : memref<9x64x64xbf16, #tpu.memory_space<vmem>>, vector<1x64x64xbf16>
    %344 = vector.shape_cast %343 : vector<1x64x64xbf16> to vector<64x64xbf16>
    %cst_301 = arith.constant dense<0.000000e+00> : vector<128x64xf32>
    %345 = tpu.matmul %342, %344, %cst_301 {dimension_numbers = #tpu.dot_dimension_numbers<[1], [0], [0], [1], [0, 0, 1, 1], [], []>} : vector<128x64xbf16>, vector<64x64xbf16>, vector<128x64xf32> -> vector<128x64xf32>
    %346 = arith.addf %340, %345 : vector<128x64xf32>
    %c0_302 = arith.constant 0 : index
    %c144_303 = arith.constant 144 : index
    %c0_304 = arith.constant 0 : index
    %347 = vector.load %arg5[%c0_302, %c144_303, %c0_304] : memref<3x288x64xbf16, #tpu.memory_space<vmem>>, vector<1x128x64xbf16>
    %348 = vector.shape_cast %347 : vector<1x128x64xbf16> to vector<128x64xbf16>
    %c3_305 = arith.constant 3 : index
    %c0_306 = arith.constant 0 : index
    %c0_307 = arith.constant 0 : index
    %349 = vector.load %arg3[%c3_305, %c0_306, %c0_307] : memref<9x64x64xbf16, #tpu.memory_space<vmem>>, vector<1x64x64xbf16>
    %350 = vector.shape_cast %349 : vector<1x64x64xbf16> to vector<64x64xbf16>
    %cst_308 = arith.constant dense<0.000000e+00> : vector<128x64xf32>
    %351 = tpu.matmul %348, %350, %cst_308 {dimension_numbers = #tpu.dot_dimension_numbers<[1], [0], [0], [1], [0, 0, 1, 1], [], []>} : vector<128x64xbf16>, vector<64x64xbf16>, vector<128x64xf32> -> vector<128x64xf32>
    %352 = arith.addf %346, %351 : vector<128x64xf32>
    %c1_309 = arith.constant 1 : index
    %c144_310 = arith.constant 144 : index
    %c0_311 = arith.constant 0 : index
    %353 = vector.load %arg5[%c1_309, %c144_310, %c0_311] : memref<3x288x64xbf16, #tpu.memory_space<vmem>>, vector<1x128x64xbf16>
    %354 = vector.shape_cast %353 : vector<1x128x64xbf16> to vector<128x64xbf16>
    %c4_312 = arith.constant 4 : index
    %c0_313 = arith.constant 0 : index
    %c0_314 = arith.constant 0 : index
    %355 = vector.load %arg3[%c4_312, %c0_313, %c0_314] : memref<9x64x64xbf16, #tpu.memory_space<vmem>>, vector<1x64x64xbf16>
    %356 = vector.shape_cast %355 : vector<1x64x64xbf16> to vector<64x64xbf16>
    %cst_315 = arith.constant dense<0.000000e+00> : vector<128x64xf32>
    %357 = tpu.matmul %354, %356, %cst_315 {dimension_numbers = #tpu.dot_dimension_numbers<[1], [0], [0], [1], [0, 0, 1, 1], [], []>} : vector<128x64xbf16>, vector<64x64xbf16>, vector<128x64xf32> -> vector<128x64xf32>
    %358 = arith.addf %352, %357 : vector<128x64xf32>
    %c2_316 = arith.constant 2 : index
    %c144_317 = arith.constant 144 : index
    %c0_318 = arith.constant 0 : index
    %359 = vector.load %arg5[%c2_316, %c144_317, %c0_318] : memref<3x288x64xbf16, #tpu.memory_space<vmem>>, vector<1x128x64xbf16>
    %360 = vector.shape_cast %359 : vector<1x128x64xbf16> to vector<128x64xbf16>
    %c5_319 = arith.constant 5 : index
    %c0_320 = arith.constant 0 : index
    %c0_321 = arith.constant 0 : index
    %361 = vector.load %arg3[%c5_319, %c0_320, %c0_321] : memref<9x64x64xbf16, #tpu.memory_space<vmem>>, vector<1x64x64xbf16>
    %362 = vector.shape_cast %361 : vector<1x64x64xbf16> to vector<64x64xbf16>
    %cst_322 = arith.constant dense<0.000000e+00> : vector<128x64xf32>
    %363 = tpu.matmul %360, %362, %cst_322 {dimension_numbers = #tpu.dot_dimension_numbers<[1], [0], [0], [1], [0, 0, 1, 1], [], []>} : vector<128x64xbf16>, vector<64x64xbf16>, vector<128x64xf32> -> vector<128x64xf32>
    %364 = arith.addf %358, %363 : vector<128x64xf32>
    %c0_323 = arith.constant 0 : index
    %c160_324 = arith.constant 160 : index
    %c0_325 = arith.constant 0 : index
    %365 = vector.load %arg5[%c0_323, %c160_324, %c0_325] : memref<3x288x64xbf16, #tpu.memory_space<vmem>>, vector<1x128x64xbf16>
    %366 = vector.shape_cast %365 : vector<1x128x64xbf16> to vector<128x64xbf16>
    %c6_326 = arith.constant 6 : index
    %c0_327 = arith.constant 0 : index
    %c0_328 = arith.constant 0 : index
    %367 = vector.load %arg3[%c6_326, %c0_327, %c0_328] : memref<9x64x64xbf16, #tpu.memory_space<vmem>>, vector<1x64x64xbf16>
    %368 = vector.shape_cast %367 : vector<1x64x64xbf16> to vector<64x64xbf16>
    %cst_329 = arith.constant dense<0.000000e+00> : vector<128x64xf32>
    %369 = tpu.matmul %366, %368, %cst_329 {dimension_numbers = #tpu.dot_dimension_numbers<[1], [0], [0], [1], [0, 0, 1, 1], [], []>} : vector<128x64xbf16>, vector<64x64xbf16>, vector<128x64xf32> -> vector<128x64xf32>
    %370 = arith.addf %364, %369 : vector<128x64xf32>
    %c1_330 = arith.constant 1 : index
    %c160_331 = arith.constant 160 : index
    %c0_332 = arith.constant 0 : index
    %371 = vector.load %arg5[%c1_330, %c160_331, %c0_332] : memref<3x288x64xbf16, #tpu.memory_space<vmem>>, vector<1x128x64xbf16>
    %372 = vector.shape_cast %371 : vector<1x128x64xbf16> to vector<128x64xbf16>
    %c7_333 = arith.constant 7 : index
    %c0_334 = arith.constant 0 : index
    %c0_335 = arith.constant 0 : index
    %373 = vector.load %arg3[%c7_333, %c0_334, %c0_335] : memref<9x64x64xbf16, #tpu.memory_space<vmem>>, vector<1x64x64xbf16>
    %374 = vector.shape_cast %373 : vector<1x64x64xbf16> to vector<64x64xbf16>
    %cst_336 = arith.constant dense<0.000000e+00> : vector<128x64xf32>
    %375 = tpu.matmul %372, %374, %cst_336 {dimension_numbers = #tpu.dot_dimension_numbers<[1], [0], [0], [1], [0, 0, 1, 1], [], []>} : vector<128x64xbf16>, vector<64x64xbf16>, vector<128x64xf32> -> vector<128x64xf32>
    %376 = arith.addf %370, %375 : vector<128x64xf32>
    %c2_337 = arith.constant 2 : index
    %c160_338 = arith.constant 160 : index
    %c0_339 = arith.constant 0 : index
    %377 = vector.load %arg5[%c2_337, %c160_338, %c0_339] : memref<3x288x64xbf16, #tpu.memory_space<vmem>>, vector<1x128x64xbf16>
    %378 = vector.shape_cast %377 : vector<1x128x64xbf16> to vector<128x64xbf16>
    %c8_340 = arith.constant 8 : index
    %c0_341 = arith.constant 0 : index
    %c0_342 = arith.constant 0 : index
    %379 = vector.load %arg3[%c8_340, %c0_341, %c0_342] : memref<9x64x64xbf16, #tpu.memory_space<vmem>>, vector<1x64x64xbf16>
    %380 = vector.shape_cast %379 : vector<1x64x64xbf16> to vector<64x64xbf16>
    %cst_343 = arith.constant dense<0.000000e+00> : vector<128x64xf32>
    %381 = tpu.matmul %378, %380, %cst_343 {dimension_numbers = #tpu.dot_dimension_numbers<[1], [0], [0], [1], [0, 0, 1, 1], [], []>} : vector<128x64xbf16>, vector<64x64xbf16>, vector<128x64xf32> -> vector<128x64xf32>
    %382 = arith.addf %376, %381 : vector<128x64xf32>
    %c128_344 = arith.constant 128 : index
    %c0_345 = arith.constant 0 : index
    %383 = vector.load %arg6[%c128_344, %c0_345] : memref<256x64xf32, #tpu.memory_space<vmem>>, vector<128x64xf32>
    tpu.vector_store %arg6[%c128_344, %c0_345], %382 {strides = array<i32>} : memref<256x64xf32, #tpu.memory_space<vmem>>, vector<128x64xf32>,
    %cst_346 = arith.constant dense<0.000000e+00> : vector<64xf32>
    %384 = vector.multi_reduction <add>, %382, %cst_346 [0] : vector<128x64xf32> to vector<64xf32>
    %385 = vector.shape_cast %384 : vector<64xf32> to vector<1x64xf32>
    %386 = arith.addf %325, %385 : vector<1x64xf32>
    %387 = arith.mulf %382, %382 : vector<128x64xf32>
    %cst_347 = arith.constant dense<0.000000e+00> : vector<64xf32>
    %388 = vector.multi_reduction <add>, %387, %cst_347 [0] : vector<128x64xf32> to vector<64xf32>
    %389 = vector.shape_cast %388 : vector<64xf32> to vector<1x64xf32>
    %390 = arith.addf %329, %389 : vector<1x64xf32>
    %cst_348 = arith.constant 3.906250e-03 : f32
    %391 = vector.broadcast %cst_348 : f32 to vector<1x64xf32>
    %392 = arith.mulf %386, %391 : vector<1x64xf32>
    %cst_349 = arith.constant 3.906250e-03 : f32
    %393 = vector.broadcast %cst_349 : f32 to vector<1x64xf32>
    %394 = arith.mulf %390, %393 : vector<1x64xf32>
    %395 = arith.mulf %392, %392 : vector<1x64xf32>
    %396 = arith.subf %394, %395 : vector<1x64xf32>
    %cst_350 = arith.constant 0.000000e+00 : f32
    %397 = vector.broadcast %cst_350 : f32 to vector<1x64xf32>
    %398 = arith.maximumf %396, %397 : vector<1x64xf32>
    %cst_351 = arith.constant 9.99999974E-6 : f32
    %399 = vector.broadcast %cst_351 : f32 to vector<1x64xf32>
    %400 = arith.addf %398, %399 : vector<1x64xf32>
    %401 = math.rsqrt %400 : vector<1x64xf32>
    %c0_352 = arith.constant 0 : index
    %c0_353 = arith.constant 0 : index
    %402 = vector.load %arg6[%c0_352, %c0_353] : memref<256x64xf32, #tpu.memory_space<vmem>>, vector<128x64xf32>
    %403 = vector.broadcast %392 : vector<1x64xf32> to vector<128x64xf32>
    %404 = arith.subf %402, %403 : vector<128x64xf32>
    %405 = vector.broadcast %401 : vector<1x64xf32> to vector<128x64xf32>
    %406 = arith.mulf %404, %405 : vector<128x64xf32>
    %c0_354 = arith.constant 0 : index
    %c0_355 = arith.constant 0 : index
    %c0_356 = arith.constant 0 : index
    %c0_357 = arith.constant 0 : index
    %407 = vector.load %arg1[%c0_354, %c0_355, %c0_356, %c0_357] : memref<1x16x16x64xf32, #tpu.memory_space<vmem>>, vector<1x8x16x64xf32>
    %408 = vector.shape_cast %407 : vector<1x8x16x64xf32> to vector<8x16x64xf32>
    %409 = vector.shape_cast %408 : vector<8x16x64xf32> to vector<128x64xf32>
    %410 = arith.addf %406, %409 : vector<128x64xf32>
    %411 = vector.shape_cast %410 : vector<128x64xf32> to vector<8x16x64xf32>
    %c0_358 = arith.constant 0 : index
    %c0_359 = arith.constant 0 : index
    %c0_360 = arith.constant 0 : index
    %c0_361 = arith.constant 0 : index
    %412 = vector.load %arg4[%c0_358, %c0_359, %c0_360, %c0_361] : memref<1x16x16x64xf32, #tpu.memory_space<vmem>>, vector<1x8x16x64xf32>
    %413 = vector.shape_cast %412 : vector<1x8x16x64xf32> to vector<8x16x64xf32>
    %414 = vector.shape_cast %411 : vector<8x16x64xf32> to vector<1x8x16x64xf32>
    tpu.vector_store %arg4[%c0_358, %c0_359, %c0_360, %c0_361], %414 {strides = array<i32>} : memref<1x16x16x64xf32, #tpu.memory_space<vmem>>, vector<1x8x16x64xf32>,
    %c128_362 = arith.constant 128 : index
    %c0_363 = arith.constant 0 : index
    %415 = vector.load %arg6[%c128_362, %c0_363] : memref<256x64xf32, #tpu.memory_space<vmem>>, vector<128x64xf32>
    %416 = vector.broadcast %392 : vector<1x64xf32> to vector<128x64xf32>
    %417 = arith.subf %415, %416 : vector<128x64xf32>
    %418 = vector.broadcast %401 : vector<1x64xf32> to vector<128x64xf32>
    %419 = arith.mulf %417, %418 : vector<128x64xf32>
    %c0_364 = arith.constant 0 : index
    %c8_365 = arith.constant 8 : index
    %c0_366 = arith.constant 0 : index
    %c0_367 = arith.constant 0 : index
    %420 = vector.load %arg1[%c0_364, %c8_365, %c0_366, %c0_367] : memref<1x16x16x64xf32, #tpu.memory_space<vmem>>, vector<1x8x16x64xf32>
    %421 = vector.shape_cast %420 : vector<1x8x16x64xf32> to vector<8x16x64xf32>
    %422 = vector.shape_cast %421 : vector<8x16x64xf32> to vector<128x64xf32>
    %423 = arith.addf %419, %422 : vector<128x64xf32>
    %424 = vector.shape_cast %423 : vector<128x64xf32> to vector<8x16x64xf32>
    %c0_368 = arith.constant 0 : index
    %c8_369 = arith.constant 8 : index
    %c0_370 = arith.constant 0 : index
    %c0_371 = arith.constant 0 : index
    %425 = vector.load %arg4[%c0_368, %c8_369, %c0_370, %c0_371] : memref<1x16x16x64xf32, #tpu.memory_space<vmem>>, vector<1x8x16x64xf32>
    %426 = vector.shape_cast %425 : vector<1x8x16x64xf32> to vector<8x16x64xf32>
    %427 = vector.shape_cast %424 : vector<8x16x64xf32> to vector<1x8x16x64xf32>
    tpu.vector_store %arg4[%c0_368, %c8_369, %c0_370, %c0_371], %427 {strides = array<i32>} : memref<1x16x16x64xf32, #tpu.memory_space<vmem>>, vector<1x8x16x64xf32>,
    return
  }
  func.func @transform_0(%arg0: i32) -> (i32, i32, i32, i32) {
    %c0_i32 = arith.constant 0 : i32
    %c0_i32_0 = arith.constant 0 : i32
    %c0_i32_1 = arith.constant 0 : i32
    %c0_i32_2 = arith.constant 0 : i32
    return %arg0, %c0_i32, %c0_i32_0, %c0_i32_1 : i32, i32, i32, i32
  }
  func.func @transform_1(%arg0: i32) -> (i32, i32, i32) {
    %c0_i32 = arith.constant 0 : i32
    %c0_i32_0 = arith.constant 0 : i32
    %c0_i32_1 = arith.constant 0 : i32
    %c0_i32_2 = arith.constant 0 : i32
    return %c0_i32, %c0_i32_0, %c0_i32_1 : i32, i32, i32
  }
  func.func @transform_2(%arg0: i32) -> (i32, i32, i32) {
    %c0_i32 = arith.constant 0 : i32
    %c0_i32_0 = arith.constant 0 : i32
    %c0_i32_1 = arith.constant 0 : i32
    %c0_i32_2 = arith.constant 0 : i32
    return %c0_i32, %c0_i32_0, %c0_i32_1 : i32, i32, i32
  }
  func.func @transform_3(%arg0: i32) -> (i32, i32, i32, i32) {
    %c0_i32 = arith.constant 0 : i32
    %c0_i32_0 = arith.constant 0 : i32
    %c0_i32_1 = arith.constant 0 : i32
    %c0_i32_2 = arith.constant 0 : i32
    return %arg0, %c0_i32, %c0_i32_0, %c0_i32_1 : i32, i32, i32, i32
  }
}

</mosaic_0001>

<llo_original>
// kernel: tpu_custom_call.1
$region0: #{tpu_custom_call.1}
  #allocation0 [shape = 'u32[]', space=smem, size = 0x4, offset = 0x4, fixed_abs, tag = 'smem constant byte address 0x4 - core index']
  #allocation1 [shape = 'u32[72,128]{1,0:T(1,128)}', space=vmem, size = 0x9000, scoped, tag = 'internal scratch']
  #allocation2 [shape = 'bf16[3,288,64]{2,1,0:T(8,128)(2,1)}', space=vmem, size = 0x36000, scoped, tag = 'scratch operand']
  #allocation3 [shape = 'f32[256,64]{1,0:T(8,128)}', space=vmem, size = 0x20000, scoped, tag = 'scratch operand']
  %s0 = inlined_call_operand.hbm [shape: f32[2,16,16,64], index: 0, kind: input, shape index: {}]
  %s1 = inlined_call_operand.hbm [shape: bf16[9,64,64], index: 1, kind: input, shape index: {}]
  %s2 = inlined_call_operand.hbm [shape: bf16[9,64,64], index: 2, kind: input, shape index: {}]
  %s3 = inlined_call_operand.hbm [shape: f32[2,16,16,64], index: 3, kind: output, shape index: {}]
  %s4 = sld [smem:[#allocation0]]
  $region57: #{tpu_custom_call.1} parent=0
    _
  %s6 = ssub.s32 1, %s4
  %s7 = scalar_select 0, %s6, %s4
  $region1: #{tpu_custom_call.1} parent=0
    #allocation4 [shape = 'u8[262144]{0}', space=vmem, size = 0x40000, scoped, tag = 'input window, operand 0']
    #allocation5 [shape = 's32[2]{0}', space=sflag, size = 0x8, scoped, tag = 'scoped memory for tpu_custom_call.1']
    #allocation6 [shape = 's32[2]{0}', space=sflag, size = 0x8, scoped, tag = 'scoped memory for tpu_custom_call.1']
    #allocation7 [shape = 'u8[147456]{0}', space=vmem, size = 0x24000, scoped, tag = 'input window, operand 1, single buffered']
    #allocation8 [shape = 's32[1]{0}', space=sflag, size = 0x4, scoped, tag = 'scoped memory for tpu_custom_call.1']
    #allocation9 [shape = 'u8[147456]{0}', space=vmem, size = 0x24000, scoped, tag = 'input window, operand 2, single buffered']
    #allocation10 [shape = 'u8[262144]{0}', space=vmem, size = 0x40000, scoped, tag = 'output window, operand 0']
    %8 = vsyncpa [#allocation5], 0
    %s9 = scalar_lea.sflag [#allocation5], 1
    %10 = vsyncpa %s9, 0
    %11 = vsyncpa [#allocation8], 0
    %12 = vsyncpa [#allocation6], 0
    %s13 = scalar_lea.sflag [#allocation6], 1
    %14 = vsyncpa %s13, 0
    loop: start=0, step=1, limit=4
    $region2: #{tpu_custom_call.1} parent=1 // loop_pre_header
      _
    $region3: #{tpu_custom_call.1} parent=1 // loop_header
      %s16 = sphi 0, %s20
      %p17 = scmp.ge.s32.totalorder %s16, 4
      %s26 = sphi 0, %s28
      %s29 = sphi 0, %s26
      %s30 = sphi 0, %s29
      %s46 = sphi 0, %s30
      %s50 = sphi 0, %s50
      %s52 = sphi 0, %s50
      %s53 = sphi 0, %s52
      %s67 = sphi 0, %s53
      %s71 = sphi 0, %s71
      %s73 = sphi 0, %s71
      %s74 = sphi 0, %s73
      %s88 = sphi 0, %s74
      %s94 = sphi 0, %s96
      %s97 = sphi 0, %s94
      %s98 = sphi 0, %s97
      %s114 = sphi 0, %s98
    $region4: #{tpu_custom_call.1} parent=1 // loop_header_branch
      %19 = sbr.rel (%p17) target = $region8
    $region5: #{tpu_custom_call.1} parent=1 // loop_body
      %s21 = ssub.s32 %s16, 1
      %s22 = ssub.s32 %s16, 2
      %s23 = sadd.s32 %s16, 1
      %s24 = ssub.s32 %s16, %s23
      %p25 = scmp.eq.s32.totalorder %s24, 0
      %s27 = sadd.s32 %s26, 1
      %s28 = scalar_select %p25, %s26, %s27
      %p31 = pneg %p25
      %p32 = scmp.eq.s32.totalorder %s16, 1
      %p33 = por %p31, %p32
      %p34 = scmp.ne.s32.totalorder %s26, %s29
      %p35 = scmp.eq.s32.totalorder %s16, 0
      %p36 = por %p34, %p35
      %p37 = scmp.ne.s32.totalorder %s26, %s29
      %p38 = scmp.eq.s32.totalorder %s21, 1
      %p39 = por %p37, %p38
      %p40 = scmp.ne.s32.totalorder %s29, %s30
      %p41 = scmp.eq.s32.totalorder %s21, 0
      %p42 = por %p40, %p41
      %p43 = scmp.ne.s32.totalorder %s29, %s30
      %p44 = scmp.eq.s32.totalorder %s22, 1
      %p45 = por %p43, %p44
      %p47 = scmp.ne.s32.totalorder %s30, %s46
      %p48 = scmp.eq.s32.totalorder %s22, 0
      %p49 = por %p47, %p48
      %s51 = sadd.s32 %s50, 1
      %p54 = scmp.eq.s32.totalorder %s16, 1
      %p55 = scmp.ne.s32.totalorder %s50, %s52
      %p56 = scmp.eq.s32.totalorder %s16, 0
      %p57 = por %p55, %p56
      %p58 = scmp.ne.s32.totalorder %s50, %s52
      %p59 = scmp.eq.s32.totalorder %s21, 1
      %p60 = por %p58, %p59
      %p61 = scmp.ne.s32.totalorder %s52, %s53
      %p62 = scmp.eq.s32.totalorder %s21, 0
      %p63 = por %p61, %p62
      %p64 = scmp.ne.s32.totalorder %s52, %s53
      %p65 = scmp.eq.s32.totalorder %s22, 1
      %p66 = por %p64, %p65
      %p68 = scmp.ne.s32.totalorder %s53, %s67
      %p69 = scmp.eq.s32.totalorder %s22, 0
      %p70 = por %p68, %p69
      %s72 = sadd.s32 %s71, 1
      %p75 = scmp.eq.s32.totalorder %s16, 1
      %p76 = scmp.ne.s32.totalorder %s71, %s73
      %p77 = scmp.eq.s32.totalorder %s16, 0
      %p78 = por %p76, %p77
      %p79 = scmp.ne.s32.totalorder %s71, %s73
      %p80 = scmp.eq.s32.totalorder %s21, 1
      %p81 = por %p79, %p80
      %p82 = scmp.ne.s32.totalorder %s73, %s74
      %p83 = scmp.eq.s32.totalorder %s21, 0
      %p84 = por %p82, %p83
      %p85 = scmp.ne.s32.totalorder %s73, %s74
      %p86 = scmp.eq.s32.totalorder %s22, 1
      %p87 = por %p85, %p86
      %p89 = scmp.ne.s32.totalorder %s74, %s88
      %p90 = scmp.eq.s32.totalorder %s22, 0
      %p91 = por %p89, %p90
      %s92 = ssub.s32 %s16, %s23
      %p93 = scmp.eq.s32.totalorder %s92, 0
      %s95 = sadd.s32 %s94, 1
      %s96 = scalar_select %p93, %s94, %s95
      %p99 = pneg %p93
      %p100 = scmp.eq.s32.totalorder %s16, 1
      %p101 = por %p99, %p100
      %p102 = scmp.ne.s32.totalorder %s94, %s97
      %p103 = scmp.eq.s32.totalorder %s16, 0
      %p104 = por %p102, %p103
      %p105 = scmp.ne.s32.totalorder %s94, %s97
      %p106 = scmp.eq.s32.totalorder %s21, 1
      %p107 = por %p105, %p106
      %p108 = scmp.ne.s32.totalorder %s97, %s98
      %p109 = scmp.eq.s32.totalorder %s21, 0
      %p110 = por %p108, %p109
      %p111 = scmp.ne.s32.totalorder %s97, %s98
      %p112 = scmp.eq.s32.totalorder %s22, 1
      %p113 = por %p111, %p112
      %p115 = scmp.ne.s32.totalorder %s98, %s114
      %p116 = scmp.eq.s32.totalorder %s22, 0
      %p117 = por %p115, %p116
      %p118 = scmp.le.s32.totalorder 1, %s16
      %p119 = scmp.lt.s32.totalorder %s16, 3
      %p120 = pnand %p118, %p119
      %p121 = pneg %p120
      // Predicated region
      $region9: #{tpu_custom_call.1} parent=5 // pred_check
        _
      $region10: #{tpu_custom_call.1} parent=5 // pred_check_branch
        %123 = sbr.rel (%p120) target = $region12
      $region11: #{tpu_custom_call.1} parent=5 // pred_region
        %s124 = ssub.s32 %s16, 1
        // Predicated region
        $region13: #{tpu_custom_call.1} parent=11 // pred_check
          %p125 = pneg %p63
        $region14: #{tpu_custom_call.1} parent=11 // pred_check_branch
          %127 = sbr.rel (%p125) target = $region16
        $region15: #{tpu_custom_call.1} parent=11 // pred_region
          %129 = vsyncadd [#allocation8], 0
          %s130 = sshll.u32 %s1, 4
          %s131 = int_to_ptr.hbm [resolvable:$true] %s130
          %s132 = sshll.u32 [#allocation7], 4
          %s133 = int_to_ptr.vmem [resolvable:$true] %s132
          %138 = dma.hbm_to_vmem [thread:$0]  %s131, 4608, %s133, [#allocation8], 64, 64, 4
        $region16: #{tpu_custom_call.1} parent=11 // pred_fallthru
          _
        // Predicated region
        $region17: #{tpu_custom_call.1} parent=11 // pred_check
          %p139 = pneg %p84
        $region18: #{tpu_custom_call.1} parent=11 // pred_check_branch
          %141 = sbr.rel (%p139) target = $region20
        $region19: #{tpu_custom_call.1} parent=11 // pred_region
          %143 = vsyncadd [#allocation8], 0
          %s144 = sshll.u32 %s2, 4
          %s145 = int_to_ptr.hbm [resolvable:$true] %s144
          %s146 = sshll.u32 [#allocation9], 4
          %s147 = int_to_ptr.vmem [resolvable:$true] %s146
          %152 = dma.hbm_to_vmem [thread:$0]  %s145, 4608, %s147, [#allocation8], 64, 64, 4
        $region20: #{tpu_custom_call.1} parent=11 // pred_fallthru
          _
      $region12: #{tpu_custom_call.1} parent=5 // pred_fallthru
        _
      %p153 = scmp.lt.s32.totalorder %s16, 2
      // Predicated region
      $region21: #{tpu_custom_call.1} parent=5 // pred_check
        %p154 = pneg %p153
      $region22: #{tpu_custom_call.1} parent=5 // pred_check_branch
        %156 = sbr.rel (%p154) target = $region24
      $region23: #{tpu_custom_call.1} parent=5 // pred_region
        // Predicated region
        $region25: #{tpu_custom_call.1} parent=23 // pred_check
          %p157 = pneg %p36
        $region26: #{tpu_custom_call.1} parent=23 // pred_check_branch
          %159 = sbr.rel (%p157) target = $region28
        $region27: #{tpu_custom_call.1} parent=23 // pred_region
          %s160 = sand.u32 %s26, 1
          %s161 = scalar_lea.sflag [#allocation5], %s160
          %s162 = sand.u32 %s26, 1
          %s163 = smul.addr %s162, 256
          %s164 = scalar_lea.vmem [#allocation4], %s163
          %166 = vsyncadd %s161, 0
          %s167 = smul.addr %s16, 32
          %s168 = smul.addr %s167, 8
          %s169 = scalar_lea.hbm %s0, %s168
          %s170 = sshll.u32 %s169, 4
          %s171 = int_to_ptr.hbm [resolvable:$true] %s170
          %s172 = sshll.u32 %s164, 4
          %s173 = int_to_ptr.vmem [resolvable:$true] %s172
          %178 = dma.hbm_to_vmem [thread:$0]  %s171, 4096, %s173, %s161, 128, 128, 8
        $region28: #{tpu_custom_call.1} parent=23 // pred_fallthru
          _
      $region24: #{tpu_custom_call.1} parent=5 // pred_fallthru
        _
      %p179 = scmp.le.s32.totalorder 1, %s16
      %p180 = scmp.lt.s32.totalorder %s16, 3
      %p181 = pnand %p179, %p180
      %p182 = pneg %p181
      // Predicated region
      $region29: #{tpu_custom_call.1} parent=5 // pred_check
        _
      $region30: #{tpu_custom_call.1} parent=5 // pred_check_branch
        %184 = sbr.rel (%p181) target = $region32
      $region31: #{tpu_custom_call.1} parent=5 // pred_region
        %s185 = ssub.s32 %s16, 1
        %s186 = sand.u32 %s29, 1
        %s187 = scalar_lea.sflag [#allocation5], %s186
        %s188 = sand.u32 %s29, 1
        %s189 = smul.addr %s188, 256
        %s190 = scalar_lea.vmem [#allocation4], %s189
        // Predicated region
        $region33: #{tpu_custom_call.1} parent=31 // pred_check
          %p191 = pneg %p42
        $region34: #{tpu_custom_call.1} parent=31 // pred_check_branch
          %193 = sbr.rel (%p191) target = $region36
        $region35: #{tpu_custom_call.1} parent=31 // pred_region
          %195 = dma.done %s187, 4096
        $region36: #{tpu_custom_call.1} parent=31 // pred_fallthru
          _
        // Predicated region
        $region37: #{tpu_custom_call.1} parent=31 // pred_check
          %p196 = pneg %p63
        $region38: #{tpu_custom_call.1} parent=31 // pred_check_branch
          %198 = sbr.rel (%p196) target = $region40
        $region39: #{tpu_custom_call.1} parent=31 // pred_region
          %200 = dma.done [#allocation8], 4608
        $region40: #{tpu_custom_call.1} parent=31 // pred_fallthru
          _
        // Predicated region
        $region41: #{tpu_custom_call.1} parent=31 // pred_check
          %p201 = pneg %p84
        $region42: #{tpu_custom_call.1} parent=31 // pred_check_branch
          %203 = sbr.rel (%p201) target = $region44
        $region43: #{tpu_custom_call.1} parent=31 // pred_region
          %205 = dma.done [#allocation8], 4608
        $region44: #{tpu_custom_call.1} parent=31 // pred_fallthru
          _
        %s206 = sand.u32 %s29, 1
        %s207 = scalar_lea.sflag [#allocation5], %s206
        %s208 = sand.u32 %s29, 1
        %s209 = smul.addr %s208, 256
        %s210 = scalar_lea.vmem [#allocation4], %s209
        %p211 = pneg %p42
        %p212 = pneg %p39
        %p213 = pneg %p63
        %p214 = pneg %p60
        %p215 = pneg %p84
        %p216 = pneg %p81
        %p217 = pneg %p110
        %p218 = pneg %p107
        %s219 = sand.u32 %s97, 1
        %s220 = scalar_lea.sflag [#allocation6], %s219
        %s221 = sand.u32 %s97, 1
        %s222 = smul.addr %s221, 256
        %s223 = scalar_lea.vmem [#allocation10], %s222
        %v225 = vlaneseq
        %v226 = vshrl.u32 %v225, 7
        %v227 = vadd.s32 %v226, 8
        %v228 = vadd.s32 %v226, 16
        %v229 = vadd.s32 %v226, 24
        %v230 = vadd.s32 %v226, 32
        %v231 = vadd.s32 %v226, 40
        %v232 = vadd.s32 %v226, 48
        %v233 = vadd.s32 %v226, 56
        %v234 = vadd.s32 %v226, 64
        %v235 = vadd.s32 %v226, 72
        %v236 = vadd.s32 %v226, 80
        %v237 = vadd.s32 %v226, 88
        %v238 = vadd.s32 %v226, 96
        %v239 = vadd.s32 %v226, 104
        %v240 = vadd.s32 %v226, 112
        %v241 = vadd.s32 %v226, 120
        %vm242 = vcmp.lt.s32.totalorder %v226, 0
        %v243 = vsub.s32 0, %v226
        %v244 = vsel %vm242, %v243, %v226
        %v245 = vshrl.u32 %v244, 4
        %v246 = vand.u32 %v244, 15
        %v247 = vsub.s32 0, %v246
        %v248 = vsel %vm242, %v247, %v246
        %vm249 = vcmp.lt.s32.totalorder %v227, 0
        %v250 = vsub.s32 0, %v227
        %v251 = vsel %vm249, %v250, %v227
        %v252 = vshrl.u32 %v251, 4
        %v253 = vand.u32 %v251, 15
        %v254 = vsub.s32 0, %v253
        %v255 = vsel %vm249, %v254, %v253
        %vm256 = vcmp.lt.s32.totalorder %v228, 0
        %v257 = vsub.s32 0, %v228
        %v258 = vsel %vm256, %v257, %v228
        %v259 = vshrl.u32 %v258, 4
        %v260 = vand.u32 %v258, 15
        %v261 = vsub.s32 0, %v260
        %v262 = vsel %vm256, %v261, %v260
        %vm263 = vcmp.lt.s32.totalorder %v229, 0
        %v264 = vsub.s32 0, %v229
        %v265 = vsel %vm263, %v264, %v229
        %v266 = vshrl.u32 %v265, 4
        %v267 = vand.u32 %v265, 15
        %v268 = vsub.s32 0, %v267
        %v269 = vsel %vm263, %v268, %v267
        %vm270 = vcmp.lt.s32.totalorder %v230, 0
        %v271 = vsub.s32 0, %v230
        %v272 = vsel %vm270, %v271, %v230
        %v273 = vshrl.u32 %v272, 4
        %v274 = vand.u32 %v272, 15
        %v275 = vsub.s32 0, %v274
        %v276 = vsel %vm270, %v275, %v274
        %vm277 = vcmp.lt.s32.totalorder %v231, 0
        %v278 = vsub.s32 0, %v231
        %v279 = vsel %vm277, %v278, %v231
        %v280 = vshrl.u32 %v279, 4
        %v281 = vand.u32 %v279, 15
        %v282 = vsub.s32 0, %v281
        %v283 = vsel %vm277, %v282, %v281
        %vm284 = vcmp.lt.s32.totalorder %v232, 0
        %v285 = vsub.s32 0, %v232
        %v286 = vsel %vm284, %v285, %v232
        %v287 = vshrl.u32 %v286, 4
        %v288 = vand.u32 %v286, 15
        %v289 = vsub.s32 0, %v288
        %v290 = vsel %vm284, %v289, %v288
        %vm291 = vcmp.lt.s32.totalorder %v233, 0
        %v292 = vsub.s32 0, %v233
        %v293 = vsel %vm291, %v292, %v233
        %v294 = vshrl.u32 %v293, 4
        %v295 = vand.u32 %v293, 15
        %v296 = vsub.s32 0, %v295
        %v297 = vsel %vm291, %v296, %v295
        %vm298 = vcmp.lt.s32.totalorder %v234, 0
        %v299 = vsub.s32 0, %v234
        %v300 = vsel %vm298, %v299, %v234
        %v301 = vshrl.u32 %v300, 4
        %v302 = vand.u32 %v300, 15
        %v303 = vsub.s32 0, %v302
        %v304 = vsel %vm298, %v303, %v302
        %vm305 = vcmp.lt.s32.totalorder %v235, 0
        %v306 = vsub.s32 0, %v235
        %v307 = vsel %vm305, %v306, %v235
        %v308 = vshrl.u32 %v307, 4
        %v309 = vand.u32 %v307, 15
        %v310 = vsub.s32 0, %v309
        %v311 = vsel %vm305, %v310, %v309
        %vm312 = vcmp.lt.s32.totalorder %v236, 0
        %v313 = vsub.s32 0, %v236
        %v314 = vsel %vm312, %v313, %v236
        %v315 = vshrl.u32 %v314, 4
        %v316 = vand.u32 %v314, 15
        %v317 = vsub.s32 0, %v316
        %v318 = vsel %vm312, %v317, %v316
        %vm319 = vcmp.lt.s32.totalorder %v237, 0
        %v320 = vsub.s32 0, %v237
        %v321 = vsel %vm319, %v320, %v237
        %v322 = vshrl.u32 %v321, 4
        %v323 = vand.u32 %v321, 15
        %v324 = vsub.s32 0, %v323
        %v325 = vsel %vm319, %v324, %v323
        %vm326 = vcmp.lt.s32.totalorder %v238, 0
        %v327 = vsub.s32 0, %v238
        %v328 = vsel %vm326, %v327, %v238
        %v329 = vshrl.u32 %v328, 4
        %v330 = vand.u32 %v328, 15
        %v331 = vsub.s32 0, %v330
        %v332 = vsel %vm326, %v331, %v330
        %vm333 = vcmp.lt.s32.totalorder %v239, 0
        %v334 = vsub.s32 0, %v239
        %v335 = vsel %vm333, %v334, %v239
        %v336 = vshrl.u32 %v335, 4
        %v337 = vand.u32 %v335, 15
        %v338 = vsub.s32 0, %v337
        %v339 = vsel %vm333, %v338, %v337
        %vm340 = vcmp.lt.s32.totalorder %v240, 0
        %v341 = vsub.s32 0, %v240
        %v342 = vsel %vm340, %v341, %v240
        %v343 = vshrl.u32 %v342, 4
        %v344 = vand.u32 %v342, 15
        %v345 = vsub.s32 0, %v344
        %v346 = vsel %vm340, %v345, %v344
        %vm347 = vcmp.lt.s32.totalorder %v241, 0
        %v348 = vsub.s32 0, %v241
        %v349 = vsel %vm347, %v348, %v241
        %v350 = vshrl.u32 %v349, 4
        %v351 = vand.u32 %v349, 15
        %v352 = vsub.s32 0, %v351
        %v353 = vsel %vm347, %v352, %v351
        %vm354 = vcmp.ne.s32.totalorder %v248, 0
        %vm355 = vcmp.ne.s32.totalorder %v255, 0
        %vm356 = vcmp.ne.s32.totalorder %v262, 0
        %vm357 = vcmp.ne.s32.totalorder %v269, 0
        %vm358 = vcmp.ne.s32.totalorder %v276, 0
        %vm359 = vcmp.ne.s32.totalorder %v283, 0
        %vm360 = vcmp.ne.s32.totalorder %v290, 0
        %vm361 = vcmp.ne.s32.totalorder %v297, 0
        %vm362 = vcmp.ne.s32.totalorder %v304, 0
        %vm363 = vcmp.ne.s32.totalorder %v311, 0
        %vm364 = vcmp.ne.s32.totalorder %v318, 0
        %vm365 = vcmp.ne.s32.totalorder %v325, 0
        %vm366 = vcmp.ne.s32.totalorder %v332, 0
        %vm367 = vcmp.ne.s32.totalorder %v339, 0
        %vm368 = vcmp.ne.s32.totalorder %v346, 0
        %vm369 = vcmp.ne.s32.totalorder %v353, 0
        %vm370 = vcmp.lt.s32.totalorder %v248, 0
        %vm371 = vcmp.lt.s32.totalorder %v255, 0
        %vm372 = vcmp.lt.s32.totalorder %v262, 0
        %vm373 = vcmp.lt.s32.totalorder %v269, 0
        %vm374 = vcmp.lt.s32.totalorder %v276, 0
        %vm375 = vcmp.lt.s32.totalorder %v283, 0
        %vm376 = vcmp.lt.s32.totalorder %v290, 0
        %vm377 = vcmp.lt.s32.totalorder %v297, 0
        %vm378 = vcmp.lt.s32.totalorder %v304, 0
        %vm379 = vcmp.lt.s32.totalorder %v311, 0
        %vm380 = vcmp.lt.s32.totalorder %v318, 0
        %vm381 = vcmp.lt.s32.totalorder %v325, 0
        %vm382 = vcmp.lt.s32.totalorder %v332, 0
        %vm383 = vcmp.lt.s32.totalorder %v339, 0
        %vm384 = vcmp.lt.s32.totalorder %v346, 0
        %vm385 = vcmp.lt.s32.totalorder %v353, 0
        %vm386 = vmand %vm370, %vm354
        %vm387 = vmand %vm371, %vm355
        %vm388 = vmand %vm372, %vm356
        %vm389 = vmand %vm373, %vm357
        %vm390 = vmand %vm374, %vm358
        %vm391 = vmand %vm375, %vm359
        %vm392 = vmand %vm376, %vm360
        %vm393 = vmand %vm377, %vm361
        %vm394 = vmand %vm378, %vm362
        %vm395 = vmand %vm379, %vm363
        %vm396 = vmand %vm380, %vm364
        %vm397 = vmand %vm381, %vm365
        %vm398 = vmand %vm382, %vm366
        %vm399 = vmand %vm383, %vm367
        %vm400 = vmand %vm384, %vm368
        %vm401 = vmand %vm385, %vm369
        %v402 = vadd.s32 %v248, 16
        %v403 = vadd.s32 %v255, 16
        %v404 = vadd.s32 %v262, 16
        %v405 = vadd.s32 %v269, 16
        %v406 = vadd.s32 %v276, 16
        %v407 = vadd.s32 %v283, 16
        %v408 = vadd.s32 %v290, 16
        %v409 = vadd.s32 %v297, 16
        %v410 = vadd.s32 %v304, 16
        %v411 = vadd.s32 %v311, 16
        %v412 = vadd.s32 %v318, 16
        %v413 = vadd.s32 %v325, 16
        %v414 = vadd.s32 %v332, 16
        %v415 = vadd.s32 %v339, 16
        %v416 = vadd.s32 %v346, 16
        %v417 = vadd.s32 %v353, 16
        %v418 = vsel %vm386, %v402, %v248
        %v419 = vsel %vm387, %v403, %v255
        %v420 = vsel %vm388, %v404, %v262
        %v421 = vsel %vm389, %v405, %v269
        %v422 = vsel %vm390, %v406, %v276
        %v423 = vsel %vm391, %v407, %v283
        %v424 = vsel %vm392, %v408, %v290
        %v425 = vsel %vm393, %v409, %v297
        %v426 = vsel %vm394, %v410, %v304
        %v427 = vsel %vm395, %v411, %v311
        %v428 = vsel %vm396, %v412, %v318
        %v429 = vsel %vm397, %v413, %v325
        %v430 = vsel %vm398, %v414, %v332
        %v431 = vsel %vm399, %v415, %v339
        %v432 = vsel %vm400, %v416, %v346
        %v433 = vsel %vm401, %v417, %v353
        %vm434 = vcmp.eq.s32.totalorder %v418, 0
        %vm435 = vcmp.eq.s32.totalorder %v419, 0
        %vm436 = vcmp.eq.s32.totalorder %v420, 0
        %vm437 = vcmp.eq.s32.totalorder %v421, 0
        %vm438 = vcmp.eq.s32.totalorder %v422, 0
        %vm439 = vcmp.eq.s32.totalorder %v423, 0
        %vm440 = vcmp.eq.s32.totalorder %v424, 0
        %vm441 = vcmp.eq.s32.totalorder %v425, 0
        %vm442 = vcmp.eq.s32.totalorder %v426, 0
        %vm443 = vcmp.eq.s32.totalorder %v427, 0
        %vm444 = vcmp.eq.s32.totalorder %v428, 0
        %vm445 = vcmp.eq.s32.totalorder %v429, 0
        %vm446 = vcmp.eq.s32.totalorder %v430, 0
        %vm447 = vcmp.eq.s32.totalorder %v431, 0
        %vm448 = vcmp.eq.s32.totalorder %v432, 0
        %vm449 = vcmp.eq.s32.totalorder %v433, 0
        %vm450 = vcmp.eq.s32.totalorder %v418, 15
        %vm451 = vcmp.eq.s32.totalorder %v419, 15
        %vm452 = vcmp.eq.s32.totalorder %v420, 15
        %vm453 = vcmp.eq.s32.totalorder %v421, 15
        %vm454 = vcmp.eq.s32.totalorder %v422, 15
        %vm455 = vcmp.eq.s32.totalorder %v423, 15
        %vm456 = vcmp.eq.s32.totalorder %v424, 15
        %vm457 = vcmp.eq.s32.totalorder %v425, 15
        %vm458 = vcmp.eq.s32.totalorder %v426, 15
        %vm459 = vcmp.eq.s32.totalorder %v427, 15
        %vm460 = vcmp.eq.s32.totalorder %v428, 15
        %vm461 = vcmp.eq.s32.totalorder %v429, 15
        %vm462 = vcmp.eq.s32.totalorder %v430, 15
        %vm463 = vcmp.eq.s32.totalorder %v431, 15
        %vm464 = vcmp.eq.s32.totalorder %v432, 15
        %vm465 = vcmp.eq.s32.totalorder %v433, 15
        %vm466 = vcmask 519168
        %467 = vst.msk [vmem:[#allocation2] sm:$0xf] %vm466, 0
        %468 = vst.msk [vmem:[#allocation2 + $0x4] sm:$0xf] %vm466, 0
        %469 = vst.msk [vmem:[#allocation2 + $0x88] sm:$0xf] %vm466, 0
        %470 = vst.msk [vmem:[#allocation2 + $0x8c] sm:$0xf] %vm466, 0
        %s471 = scalar_lea.vmem [#allocation2], 144
        %472 = vst.msk [vmem:[%s471] sm:$0xf] %vm466, 0
        %473 = vst.msk [vmem:[%s471 + $0x4] sm:$0xf] %vm466, 0
        %474 = vst.msk [vmem:[%s471 + $0x88] sm:$0xf] %vm466, 0
        %475 = vst.msk [vmem:[%s471 + $0x8c] sm:$0xf] %vm466, 0
        %s476 = scalar_lea.vmem [#allocation2], 288
        %477 = vst.msk [vmem:[%s476] sm:$0xf] %vm466, 0
        %478 = vst.msk [vmem:[%s476 + $0x4] sm:$0xf] %vm466, 0
        %479 = vst.msk [vmem:[%s476 + $0x88] sm:$0xf] %vm466, 0
        %480 = vst.msk [vmem:[%s476 + $0x8c] sm:$0xf] %vm466, 0
        %v481 = vld [vmem:[%s190] sm:$0xff]
        %v482 = vld [vmem:[%s190 + $0x8] sm:$0xff]
        %v483 = vld [vmem:[%s190 + $0x10] sm:$0xff]
        %v484 = vld [vmem:[%s190 + $0x18] sm:$0xff]
        %v485 = vld [vmem:[%s190 + $0x20] sm:$0xff]
        %v486 = vld [vmem:[%s190 + $0x28] sm:$0xff]
        %v487 = vld [vmem:[%s190 + $0x30] sm:$0xff]
        %v488 = vld [vmem:[%s190 + $0x38] sm:$0xff]
        %v489 = vld [vmem:[%s190 + $0x40] sm:$0xff]
        %v490 = vld [vmem:[%s190 + $0x48] sm:$0xff]
        %v491 = vld [vmem:[%s190 + $0x50] sm:$0xff]
        %v492 = vld [vmem:[%s190 + $0x58] sm:$0xff]
        %v493 = vld [vmem:[%s190 + $0x60] sm:$0xff]
        %v494 = vld [vmem:[%s190 + $0x68] sm:$0xff]
        %v495 = vld [vmem:[%s190 + $0x70] sm:$0xff]
        %v496 = vld [vmem:[%s190 + $0x78] sm:$0xff]
        %v497 = vpack.c.bf16 %v481, %v481
        %v498 = vpack.c.bf16 %v482, %v482
        %v499 = vpack.c.bf16 %v483, %v483
        %v500 = vpack.c.bf16 %v484, %v484
        %v501 = vpack.c.bf16 %v485, %v485
        %v502 = vpack.c.bf16 %v486, %v486
        %v503 = vpack.c.bf16 %v487, %v487
        %v504 = vpack.c.bf16 %v488, %v488
        %v505 = vpack.c.bf16 %v489, %v489
        %v506 = vpack.c.bf16 %v490, %v490
        %v507 = vpack.c.bf16 %v491, %v491
        %v508 = vpack.c.bf16 %v492, %v492
        %v509 = vpack.c.bf16 %v493, %v493
        %v510 = vpack.c.bf16 %v494, %v494
        %v511 = vpack.c.bf16 %v495, %v495
        %v512 = vpack.c.bf16 %v496, %v496
        %513 = vst.msk [vmem:[%s471 + $0x8] sm:$0xf] %vm466, %v497
        %514 = vst.msk [vmem:[%s471 + $0xc] sm:$0xf] %vm466, %v498
        %515 = vst.msk [vmem:[%s471 + $0x10] sm:$0xf] %vm466, %v499
        %516 = vst.msk [vmem:[%s471 + $0x14] sm:$0xf] %vm466, %v500
        %517 = vst.msk [vmem:[%s471 + $0x18] sm:$0xf] %vm466, %v501
        %518 = vst.msk [vmem:[%s471 + $0x1c] sm:$0xf] %vm466, %v502
        %519 = vst.msk [vmem:[%s471 + $0x20] sm:$0xf] %vm466, %v503
        %520 = vst.msk [vmem:[%s471 + $0x24] sm:$0xf] %vm466, %v504
        %521 = vst.msk [vmem:[%s471 + $0x28] sm:$0xf] %vm466, %v505
        %522 = vst.msk [vmem:[%s471 + $0x2c] sm:$0xf] %vm466, %v506
        %523 = vst.msk [vmem:[%s471 + $0x30] sm:$0xf] %vm466, %v507
        %524 = vst.msk [vmem:[%s471 + $0x34] sm:$0xf] %vm466, %v508
        %525 = vst.msk [vmem:[%s471 + $0x38] sm:$0xf] %vm466, %v509
        %526 = vst.msk [vmem:[%s471 + $0x3c] sm:$0xf] %vm466, %v510
        %527 = vst.msk [vmem:[%s471 + $0x40] sm:$0xf] %vm466, %v511
        %528 = vst.msk [vmem:[%s471 + $0x44] sm:$0xf] %vm466, %v512
        %v529 = vrot.slane %v481, 7
        %v530 = vrot.slane %v482, 7
        %v531 = vrot.slane %v483, 7
        %v532 = vrot.slane %v484, 7
        %v533 = vrot.slane %v485, 7
        %v534 = vrot.slane %v486, 7
        %v535 = vrot.slane %v487, 7
        %v536 = vrot.slane %v488, 7
        %v537 = vrot.slane %v489, 7
        %v538 = vrot.slane %v490, 7
        %v539 = vrot.slane %v491, 7
        %v540 = vrot.slane %v492, 7
        %v541 = vrot.slane %v493, 7
        %v542 = vrot.slane %v494, 7
        %v543 = vrot.slane %v495, 7
        %v544 = vrot.slane %v496, 7
        %vm545 = vcmp.lt.s32.totalorder %v226, 1
        %v546 = vsel %vm545, %v543, %v544
        %v547 = vsel %vm545, %v542, %v543
        %v548 = vsel %vm545, %v541, %v542
        %v549 = vsel %vm545, %v540, %v541
        %v550 = vsel %vm545, %v539, %v540
        %v551 = vsel %vm545, %v538, %v539
        %v552 = vsel %vm545, %v537, %v538
        %v553 = vsel %vm545, %v536, %v537
        %v554 = vsel %vm545, %v535, %v536
        %v555 = vsel %vm545, %v534, %v535
        %v556 = vsel %vm545, %v533, %v534
        %v557 = vsel %vm545, %v532, %v533
        %v558 = vsel %vm545, %v531, %v532
        %v559 = vsel %vm545, %v530, %v531
        %v560 = vsel %vm545, %v529, %v530
        %v561 = vsel %vm545, %v544, %v529
        %v562 = vsel %vm434, 0.0, %v561
        %v563 = vsel %vm435, 0.0, %v560
        %v564 = vsel %vm436, 0.0, %v559
        %v565 = vsel %vm437, 0.0, %v558
        %v566 = vsel %vm438, 0.0, %v557
        %v567 = vsel %vm439, 0.0, %v556
        %v568 = vsel %vm440, 0.0, %v555
        %v569 = vsel %vm441, 0.0, %v554
        %v570 = vsel %vm442, 0.0, %v553
        %v571 = vsel %vm443, 0.0, %v552
        %v572 = vsel %vm444, 0.0, %v551
        %v573 = vsel %vm445, 0.0, %v550
        %v574 = vsel %vm446, 0.0, %v549
        %v575 = vsel %vm447, 0.0, %v548
        %v576 = vsel %vm448, 0.0, %v547
        %v577 = vsel %vm449, 0.0, %v546
        %v578 = vpack.c.bf16 %v562, %v562
        %v579 = vpack.c.bf16 %v563, %v563
        %v580 = vpack.c.bf16 %v564, %v564
        %v581 = vpack.c.bf16 %v565, %v565
        %v582 = vpack.c.bf16 %v566, %v566
        %v583 = vpack.c.bf16 %v567, %v567
        %v584 = vpack.c.bf16 %v568, %v568
        %v585 = vpack.c.bf16 %v569, %v569
        %v586 = vpack.c.bf16 %v570, %v570
        %v587 = vpack.c.bf16 %v571, %v571
        %v588 = vpack.c.bf16 %v572, %v572
        %v589 = vpack.c.bf16 %v573, %v573
        %v590 = vpack.c.bf16 %v574, %v574
        %v591 = vpack.c.bf16 %v575, %v575
        %v592 = vpack.c.bf16 %v576, %v576
        %v593 = vpack.c.bf16 %v577, %v577
        %594 = vst.msk [vmem:[#allocation2 + $0x8] sm:$0xf] %vm466, %v578
        %595 = vst.msk [vmem:[#allocation2 + $0xc] sm:$0xf] %vm466, %v579
        %596 = vst.msk [vmem:[#allocation2 + $0x10] sm:$0xf] %vm466, %v580
        %597 = vst.msk [vmem:[#allocation2 + $0x14] sm:$0xf] %vm466, %v581
        %598 = vst.msk [vmem:[#allocation2 + $0x18] sm:$0xf] %vm466, %v582
        %599 = vst.msk [vmem:[#allocation2 + $0x1c] sm:$0xf] %vm466, %v583
        %600 = vst.msk [vmem:[#allocation2 + $0x20] sm:$0xf] %vm466, %v584
        %601 = vst.msk [vmem:[#allocation2 + $0x24] sm:$0xf] %vm466, %v585
        %602 = vst.msk [vmem:[#allocation2 + $0x28] sm:$0xf] %vm466, %v586
        %603 = vst.msk [vmem:[#allocation2 + $0x2c] sm:$0xf] %vm466, %v587
        %604 = vst.msk [vmem:[#allocation2 + $0x30] sm:$0xf] %vm466, %v588
        %605 = vst.msk [vmem:[#allocation2 + $0x34] sm:$0xf] %vm466, %v589
        %606 = vst.msk [vmem:[#allocation2 + $0x38] sm:$0xf] %vm466, %v590
        %607 = vst.msk [vmem:[#allocation2 + $0x3c] sm:$0xf] %vm466, %v591
        %608 = vst.msk [vmem:[#allocation2 + $0x40] sm:$0xf] %vm466, %v592
        %609 = vst.msk [vmem:[#allocation2 + $0x44] sm:$0xf] %vm466, %v593
        %v610 = vrot.slane %v481, 1
        %v611 = vrot.slane %v482, 1
        %v612 = vrot.slane %v483, 1
        %v613 = vrot.slane %v484, 1
        %v614 = vrot.slane %v485, 1
        %v615 = vrot.slane %v486, 1
        %v616 = vrot.slane %v487, 1
        %v617 = vrot.slane %v488, 1
        %v618 = vrot.slane %v489, 1
        %v619 = vrot.slane %v490, 1
        %v620 = vrot.slane %v491, 1
        %v621 = vrot.slane %v492, 1
        %v622 = vrot.slane %v493, 1
        %v623 = vrot.slane %v494, 1
        %v624 = vrot.slane %v495, 1
        %v625 = vrot.slane %v496, 1
        %vm626 = vcmp.lt.s32.totalorder %v226, 7
        %v627 = vsel %vm626, %v624, %v625
        %v628 = vsel %vm626, %v623, %v624
        %v629 = vsel %vm626, %v622, %v623
        %v630 = vsel %vm626, %v621, %v622
        %v631 = vsel %vm626, %v620, %v621
        %v632 = vsel %vm626, %v619, %v620
        %v633 = vsel %vm626, %v618, %v619
        %v634 = vsel %vm626, %v617, %v618
        %v635 = vsel %vm626, %v616, %v617
        %v636 = vsel %vm626, %v615, %v616
        %v637 = vsel %vm626, %v614, %v615
        %v638 = vsel %vm626, %v613, %v614
        %v639 = vsel %vm626, %v612, %v613
        %v640 = vsel %vm626, %v611, %v612
        %v641 = vsel %vm626, %v610, %v611
        %v642 = vsel %vm626, %v625, %v610
        %v643 = vsel %vm450, 0.0, %v641
        %v644 = vsel %vm451, 0.0, %v640
        %v645 = vsel %vm452, 0.0, %v639
        %v646 = vsel %vm453, 0.0, %v638
        %v647 = vsel %vm454, 0.0, %v637
        %v648 = vsel %vm455, 0.0, %v636
        %v649 = vsel %vm456, 0.0, %v635
        %v650 = vsel %vm457, 0.0, %v634
        %v651 = vsel %vm458, 0.0, %v633
        %v652 = vsel %vm459, 0.0, %v632
        %v653 = vsel %vm460, 0.0, %v631
        %v654 = vsel %vm461, 0.0, %v630
        %v655 = vsel %vm462, 0.0, %v629
        %v656 = vsel %vm463, 0.0, %v628
        %v657 = vsel %vm464, 0.0, %v627
        %v658 = vsel %vm465, 0.0, %v642
        %v659 = vpack.c.bf16 %v643, %v643
        %v660 = vpack.c.bf16 %v644, %v644
        %v661 = vpack.c.bf16 %v645, %v645
        %v662 = vpack.c.bf16 %v646, %v646
        %v663 = vpack.c.bf16 %v647, %v647
        %v664 = vpack.c.bf16 %v648, %v648
        %v665 = vpack.c.bf16 %v649, %v649
        %v666 = vpack.c.bf16 %v650, %v650
        %v667 = vpack.c.bf16 %v651, %v651
        %v668 = vpack.c.bf16 %v652, %v652
        %v669 = vpack.c.bf16 %v653, %v653
        %v670 = vpack.c.bf16 %v654, %v654
        %v671 = vpack.c.bf16 %v655, %v655
        %v672 = vpack.c.bf16 %v656, %v656
        %v673 = vpack.c.bf16 %v657, %v657
        %v674 = vpack.c.bf16 %v658, %v658
        %675 = vst.msk [vmem:[%s476 + $0x8] sm:$0xf] %vm466, %v659
        %676 = vst.msk [vmem:[%s476 + $0xc] sm:$0xf] %vm466, %v660
        %677 = vst.msk [vmem:[%s476 + $0x10] sm:$0xf] %vm466, %v661
        %678 = vst.msk [vmem:[%s476 + $0x14] sm:$0xf] %vm466, %v662
        %679 = vst.msk [vmem:[%s476 + $0x18] sm:$0xf] %vm466, %v663
        %680 = vst.msk [vmem:[%s476 + $0x1c] sm:$0xf] %vm466, %v664
        %681 = vst.msk [vmem:[%s476 + $0x20] sm:$0xf] %vm466, %v665
        %682 = vst.msk [vmem:[%s476 + $0x24] sm:$0xf] %vm466, %v666
        %683 = vst.msk [vmem:[%s476 + $0x28] sm:$0xf] %vm466, %v667
        %684 = vst.msk [vmem:[%s476 + $0x2c] sm:$0xf] %vm466, %v668
        %685 = vst.msk [vmem:[%s476 + $0x30] sm:$0xf] %vm466, %v669
        %686 = vst.msk [vmem:[%s476 + $0x34] sm:$0xf] %vm466, %v670
        %687 = vst.msk [vmem:[%s476 + $0x38] sm:$0xf] %vm466, %v671
        %688 = vst.msk [vmem:[%s476 + $0x3c] sm:$0xf] %vm466, %v672
        %689 = vst.msk [vmem:[%s476 + $0x40] sm:$0xf] %vm466, %v673
        %690 = vst.msk [vmem:[%s476 + $0x44] sm:$0xf] %vm466, %v674
        %s691 = scalar_lea.vmem %s190, 128 [#allocation4]
        %v692 = vld [vmem:[%s691] sm:$0xff]
        %v693 = vld [vmem:[%s691 + $0x8] sm:$0xff]
        %v694 = vld [vmem:[%s691 + $0x10] sm:$0xff]
        %v695 = vld [vmem:[%s691 + $0x18] sm:$0xff]
        %v696 = vld [vmem:[%s691 + $0x20] sm:$0xff]
        %v697 = vld [vmem:[%s691 + $0x28] sm:$0xff]
        %v698 = vld [vmem:[%s691 + $0x30] sm:$0xff]
        %v699 = vld [vmem:[%s691 + $0x38] sm:$0xff]
        %v700 = vld [vmem:[%s691 + $0x40] sm:$0xff]
        %v701 = vld [vmem:[%s691 + $0x48] sm:$0xff]
        %v702 = vld [vmem:[%s691 + $0x50] sm:$0xff]
        %v703 = vld [vmem:[%s691 + $0x58] sm:$0xff]
        %v704 = vld [vmem:[%s691 + $0x60] sm:$0xff]
        %v705 = vld [vmem:[%s691 + $0x68] sm:$0xff]
        %v706 = vld [vmem:[%s691 + $0x70] sm:$0xff]
        %v707 = vld [vmem:[%s691 + $0x78] sm:$0xff]
        %v708 = vpack.c.bf16 %v692, %v692
        %v709 = vpack.c.bf16 %v693, %v693
        %v710 = vpack.c.bf16 %v694, %v694
        %v711 = vpack.c.bf16 %v695, %v695
        %v712 = vpack.c.bf16 %v696, %v696
        %v713 = vpack.c.bf16 %v697, %v697
        %v714 = vpack.c.bf16 %v698, %v698
        %v715 = vpack.c.bf16 %v699, %v699
        %v716 = vpack.c.bf16 %v700, %v700
        %v717 = vpack.c.bf16 %v701, %v701
        %v718 = vpack.c.bf16 %v702, %v702
        %v719 = vpack.c.bf16 %v703, %v703
        %v720 = vpack.c.bf16 %v704, %v704
        %v721 = vpack.c.bf16 %v705, %v705
        %v722 = vpack.c.bf16 %v706, %v706
        %v723 = vpack.c.bf16 %v707, %v707
        %724 = vst.msk [vmem:[%s471 + $0x48] sm:$0xf] %vm466, %v708
        %725 = vst.msk [vmem:[%s471 + $0x4c] sm:$0xf] %vm466, %v709
        %726 = vst.msk [vmem:[%s471 + $0x50] sm:$0xf] %vm466, %v710
        %727 = vst.msk [vmem:[%s471 + $0x54] sm:$0xf] %vm466, %v711
        %728 = vst.msk [vmem:[%s471 + $0x58] sm:$0xf] %vm466, %v712
        %729 = vst.msk [vmem:[%s471 + $0x5c] sm:$0xf] %vm466, %v713
        %730 = vst.msk [vmem:[%s471 + $0x60] sm:$0xf] %vm466, %v714
        %731 = vst.msk [vmem:[%s471 + $0x64] sm:$0xf] %vm466, %v715
        %732 = vst.msk [vmem:[%s471 + $0x68] sm:$0xf] %vm466, %v716
        %733 = vst.msk [vmem:[%s471 + $0x6c] sm:$0xf] %vm466, %v717
        %734 = vst.msk [vmem:[%s471 + $0x70] sm:$0xf] %vm466, %v718
        %735 = vst.msk [vmem:[%s471 + $0x74] sm:$0xf] %vm466, %v719
        %736 = vst.msk [vmem:[%s471 + $0x78] sm:$0xf] %vm466, %v720
        %737 = vst.msk [vmem:[%s471 + $0x7c] sm:$0xf] %vm466, %v721
        %738 = vst.msk [vmem:[%s471 + $0x80] sm:$0xf] %vm466, %v722
        %739 = vst.msk [vmem:[%s471 + $0x84] sm:$0xf] %vm466, %v723
        %v740 = vrot.slane %v692, 7
        %v741 = vrot.slane %v693, 7
        %v742 = vrot.slane %v694, 7
        %v743 = vrot.slane %v695, 7
        %v744 = vrot.slane %v696, 7
        %v745 = vrot.slane %v697, 7
        %v746 = vrot.slane %v698, 7
        %v747 = vrot.slane %v699, 7
        %v748 = vrot.slane %v700, 7
        %v749 = vrot.slane %v701, 7
        %v750 = vrot.slane %v702, 7
        %v751 = vrot.slane %v703, 7
        %v752 = vrot.slane %v704, 7
        %v753 = vrot.slane %v705, 7
        %v754 = vrot.slane %v706, 7
        %v755 = vrot.slane %v707, 7
        %v756 = vsel %vm545, %v754, %v755
        %v757 = vsel %vm545, %v753, %v754
        %v758 = vsel %vm545, %v752, %v753
        %v759 = vsel %vm545, %v751, %v752
        %v760 = vsel %vm545, %v750, %v751
        %v761 = vsel %vm545, %v749, %v750
        %v762 = vsel %vm545, %v748, %v749
        %v763 = vsel %vm545, %v747, %v748
        %v764 = vsel %vm545, %v746, %v747
        %v765 = vsel %vm545, %v745, %v746
        %v766 = vsel %vm545, %v744, %v745
        %v767 = vsel %vm545, %v743, %v744
        %v768 = vsel %vm545, %v742, %v743
        %v769 = vsel %vm545, %v741, %v742
        %v770 = vsel %vm545, %v740, %v741
        %v771 = vsel %vm545, %v755, %v740
        %v772 = vsel %vm434, 0.0, %v771
        %v773 = vsel %vm435, 0.0, %v770
        %v774 = vsel %vm436, 0.0, %v769
        %v775 = vsel %vm437, 0.0, %v768
        %v776 = vsel %vm438, 0.0, %v767
        %v777 = vsel %vm439, 0.0, %v766
        %v778 = vsel %vm440, 0.0, %v765
        %v779 = vsel %vm441, 0.0, %v764
        %v780 = vsel %vm442, 0.0, %v763
        %v781 = vsel %vm443, 0.0, %v762
        %v782 = vsel %vm444, 0.0, %v761
        %v783 = vsel %vm445, 0.0, %v760
        %v784 = vsel %vm446, 0.0, %v759
        %v785 = vsel %vm447, 0.0, %v758
        %v786 = vsel %vm448, 0.0, %v757
        %v787 = vsel %vm449, 0.0, %v756
        %v788 = vpack.c.bf16 %v772, %v772
        %v789 = vpack.c.bf16 %v773, %v773
        %v790 = vpack.c.bf16 %v774, %v774
        %v791 = vpack.c.bf16 %v775, %v775
        %v792 = vpack.c.bf16 %v776, %v776
        %v793 = vpack.c.bf16 %v777, %v777
        %v794 = vpack.c.bf16 %v778, %v778
        %v795 = vpack.c.bf16 %v779, %v779
        %v796 = vpack.c.bf16 %v780, %v780
        %v797 = vpack.c.bf16 %v781, %v781
        %v798 = vpack.c.bf16 %v782, %v782
        %v799 = vpack.c.bf16 %v783, %v783
        %v800 = vpack.c.bf16 %v784, %v784
        %v801 = vpack.c.bf16 %v785, %v785
        %v802 = vpack.c.bf16 %v786, %v786
        %v803 = vpack.c.bf16 %v787, %v787
        %804 = vst.msk [vmem:[#allocation2 + $0x48] sm:$0xf] %vm466, %v788
        %805 = vst.msk [vmem:[#allocation2 + $0x4c] sm:$0xf] %vm466, %v789
        %806 = vst.msk [vmem:[#allocation2 + $0x50] sm:$0xf] %vm466, %v790
        %807 = vst.msk [vmem:[#allocation2 + $0x54] sm:$0xf] %vm466, %v791
        %808 = vst.msk [vmem:[#allocation2 + $0x58] sm:$0xf] %vm466, %v792
        %809 = vst.msk [vmem:[#allocation2 + $0x5c] sm:$0xf] %vm466, %v793
        %810 = vst.msk [vmem:[#allocation2 + $0x60] sm:$0xf] %vm466, %v794
        %811 = vst.msk [vmem:[#allocation2 + $0x64] sm:$0xf] %vm466, %v795
        %812 = vst.msk [vmem:[#allocation2 + $0x68] sm:$0xf] %vm466, %v796
        %813 = vst.msk [vmem:[#allocation2 + $0x6c] sm:$0xf] %vm466, %v797
        %814 = vst.msk [vmem:[#allocation2 + $0x70] sm:$0xf] %vm466, %v798
        %815 = vst.msk [vmem:[#allocation2 + $0x74] sm:$0xf] %vm466, %v799
        %816 = vst.msk [vmem:[#allocation2 + $0x78] sm:$0xf] %vm466, %v800
        %817 = vst.msk [vmem:[#allocation2 + $0x7c] sm:$0xf] %vm466, %v801
        %818 = vst.msk [vmem:[#allocation2 + $0x80] sm:$0xf] %vm466, %v802
        %819 = vst.msk [vmem:[#allocation2 + $0x84] sm:$0xf] %vm466, %v803
        %v820 = vrot.slane %v692, 1
        %v821 = vrot.slane %v693, 1
        %v822 = vrot.slane %v694, 1
        %v823 = vrot.slane %v695, 1
        %v824 = vrot.slane %v696, 1
        %v825 = vrot.slane %v697, 1
        %v826 = vrot.slane %v698, 1
        %v827 = vrot.slane %v699, 1
        %v828 = vrot.slane %v700, 1
        %v829 = vrot.slane %v701, 1
        %v830 = vrot.slane %v702, 1
        %v831 = vrot.slane %v703, 1
        %v832 = vrot.slane %v704, 1
        %v833 = vrot.slane %v705, 1
        %v834 = vrot.slane %v706, 1
        %v835 = vrot.slane %v707, 1
        %v836 = vsel %vm626, %v834, %v835
        %v837 = vsel %vm626, %v833, %v834
        %v838 = vsel %vm626, %v832, %v833
        %v839 = vsel %vm626, %v831, %v832
        %v840 = vsel %vm626, %v830, %v831
        %v841 = vsel %vm626, %v829, %v830
        %v842 = vsel %vm626, %v828, %v829
        %v843 = vsel %vm626, %v827, %v828
        %v844 = vsel %vm626, %v826, %v827
        %v845 = vsel %vm626, %v825, %v826
        %v846 = vsel %vm626, %v824, %v825
        %v847 = vsel %vm626, %v823, %v824
        %v848 = vsel %vm626, %v822, %v823
        %v849 = vsel %vm626, %v821, %v822
        %v850 = vsel %vm626, %v820, %v821
        %v851 = vsel %vm626, %v835, %v820
        %v852 = vsel %vm450, 0.0, %v850
        %v853 = vsel %vm451, 0.0, %v849
        %v854 = vsel %vm452, 0.0, %v848
        %v855 = vsel %vm453, 0.0, %v847
        %v856 = vsel %vm454, 0.0, %v846
        %v857 = vsel %vm455, 0.0, %v845
        %v858 = vsel %vm456, 0.0, %v844
        %v859 = vsel %vm457, 0.0, %v843
        %v860 = vsel %vm458, 0.0, %v842
        %v861 = vsel %vm459, 0.0, %v841
        %v862 = vsel %vm460, 0.0, %v840
        %v863 = vsel %vm461, 0.0, %v839
        %v864 = vsel %vm462, 0.0, %v838
        %v865 = vsel %vm463, 0.0, %v837
        %v866 = vsel %vm464, 0.0, %v836
        %v867 = vsel %vm465, 0.0, %v851
        %v868 = vpack.c.bf16 %v852, %v852
        %v869 = vpack.c.bf16 %v853, %v853
        %v870 = vpack.c.bf16 %v854, %v854
        %v871 = vpack.c.bf16 %v855, %v855
        %v872 = vpack.c.bf16 %v856, %v856
        %v873 = vpack.c.bf16 %v857, %v857
        %v874 = vpack.c.bf16 %v858, %v858
        %v875 = vpack.c.bf16 %v859, %v859
        %v876 = vpack.c.bf16 %v860, %v860
        %v877 = vpack.c.bf16 %v861, %v861
        %v878 = vpack.c.bf16 %v862, %v862
        %v879 = vpack.c.bf16 %v863, %v863
        %v880 = vpack.c.bf16 %v864, %v864
        %v881 = vpack.c.bf16 %v865, %v865
        %v882 = vpack.c.bf16 %v866, %v866
        %v883 = vpack.c.bf16 %v867, %v867
        %884 = vst.msk [vmem:[%s476 + $0x48] sm:$0xf] %vm466, %v868
        %885 = vst.msk [vmem:[%s476 + $0x4c] sm:$0xf] %vm466, %v869
        %886 = vst.msk [vmem:[%s476 + $0x50] sm:$0xf] %vm466, %v870
        %887 = vst.msk [vmem:[%s476 + $0x54] sm:$0xf] %vm466, %v871
        %888 = vst.msk [vmem:[%s476 + $0x58] sm:$0xf] %vm466, %v872
        %889 = vst.msk [vmem:[%s476 + $0x5c] sm:$0xf] %vm466, %v873
        %890 = vst.msk [vmem:[%s476 + $0x60] sm:$0xf] %vm466, %v874
        %891 = vst.msk [vmem:[%s476 + $0x64] sm:$0xf] %vm466, %v875
        %892 = vst.msk [vmem:[%s476 + $0x68] sm:$0xf] %vm466, %v876
        %893 = vst.msk [vmem:[%s476 + $0x6c] sm:$0xf] %vm466, %v877
        %894 = vst.msk [vmem:[%s476 + $0x70] sm:$0xf] %vm466, %v878
        %895 = vst.msk [vmem:[%s476 + $0x74] sm:$0xf] %vm466, %v879
        %896 = vst.msk [vmem:[%s476 + $0x78] sm:$0xf] %vm466, %v880
        %897 = vst.msk [vmem:[%s476 + $0x7c] sm:$0xf] %vm466, %v881
        %898 = vst.msk [vmem:[%s476 + $0x80] sm:$0xf] %vm466, %v882
        %899 = vst.msk [vmem:[%s476 + $0x84] sm:$0xf] %vm466, %v883
        %v900 = vld [vmem:[#allocation2] sm:$0xf]
        %v901 = vld [vmem:[#allocation2 + $0x4] sm:$0xf]
        %v902 = vld [vmem:[#allocation2 + $0x8] sm:$0xf]
        %v903 = vld [vmem:[#allocation2 + $0xc] sm:$0xf]
        %v904 = vld [vmem:[#allocation2 + $0x10] sm:$0xf]
        %v905 = vld [vmem:[#allocation2 + $0x14] sm:$0xf]
        %v906 = vld [vmem:[#allocation2 + $0x18] sm:$0xf]
        %v907 = vld [vmem:[#allocation2 + $0x1c] sm:$0xf]
        %v908 = vld [vmem:[#allocation2 + $0x20] sm:$0xf]
        %v909 = vld [vmem:[#allocation2 + $0x24] sm:$0xf]
        %v910 = vld [vmem:[#allocation2 + $0x28] sm:$0xf]
        %v911 = vld [vmem:[#allocation2 + $0x2c] sm:$0xf]
        %v912 = vld [vmem:[#allocation2 + $0x30] sm:$0xf]
        %v913 = vld [vmem:[#allocation2 + $0x34] sm:$0xf]
        %v914 = vld [vmem:[#allocation2 + $0x38] sm:$0xf]
        %v915 = vld [vmem:[#allocation2 + $0x3c] sm:$0xf]
        %v916 = vld [vmem:[#allocation7] sm:$0xf]
        %v917 = vld [vmem:[#allocation7 + $0x4] sm:$0xf]
        %v918 = vld [vmem:[#allocation7 + $0x8] sm:$0xf]
        %v919 = vld [vmem:[#allocation7 + $0xc] sm:$0xf]
        %v920 = vld [vmem:[#allocation7 + $0x10] sm:$0xf]
        %v921 = vld [vmem:[#allocation7 + $0x14] sm:$0xf]
        %v922 = vld [vmem:[#allocation7 + $0x18] sm:$0xf]
        %v923 = vld [vmem:[#allocation7 + $0x1c] sm:$0xf]
        %v924 = vld [vmem:[%s471] sm:$0xf]
        %v925 = vld [vmem:[%s471 + $0x4] sm:$0xf]
        %v926 = vld [vmem:[%s471 + $0x8] sm:$0xf]
        %v927 = vld [vmem:[%s471 + $0xc] sm:$0xf]
        %v928 = vld [vmem:[%s471 + $0x10] sm:$0xf]
        %v929 = vld [vmem:[%s471 + $0x14] sm:$0xf]
        %v930 = vld [vmem:[%s471 + $0x18] sm:$0xf]
        %v931 = vld [vmem:[%s471 + $0x1c] sm:$0xf]
        %v932 = vld [vmem:[%s471 + $0x20] sm:$0xf]
        %v933 = vld [vmem:[%s471 + $0x24] sm:$0xf]
        %v934 = vld [vmem:[%s471 + $0x28] sm:$0xf]
        %v935 = vld [vmem:[%s471 + $0x2c] sm:$0xf]
        %v936 = vld [vmem:[%s471 + $0x30] sm:$0xf]
        %v937 = vld [vmem:[%s471 + $0x34] sm:$0xf]
        %v938 = vld [vmem:[%s471 + $0x38] sm:$0xf]
        %v939 = vld [vmem:[%s471 + $0x3c] sm:$0xf]
        %s940 = scalar_lea.vmem [#allocation7], 32
        %v941 = vld [vmem:[%s940] sm:$0xf]
        %v942 = vld [vmem:[%s940 + $0x4] sm:$0xf]
        %v943 = vld [vmem:[%s940 + $0x8] sm:$0xf]
        %v944 = vld [vmem:[%s940 + $0xc] sm:$0xf]
        %v945 = vld [vmem:[%s940 + $0x10] sm:$0xf]
        %v946 = vld [vmem:[%s940 + $0x14] sm:$0xf]
        %v947 = vld [vmem:[%s940 + $0x18] sm:$0xf]
        %v948 = vld [vmem:[%s940 + $0x1c] sm:$0xf]
        %v965 = vunpack.c.l.b16 %v924
        %v966 = vunpack.c.l.b16 %v925
        %v967 = vunpack.c.l.b16 %v926
        %v968 = vunpack.c.l.b16 %v927
        %v969 = vunpack.c.l.b16 %v928
        %v970 = vunpack.c.l.b16 %v929
        %v971 = vunpack.c.l.b16 %v930
        %v972 = vunpack.c.l.b16 %v931
        %v973 = vunpack.c.l.b16 %v932
        %v974 = vunpack.c.l.b16 %v933
        %v975 = vunpack.c.l.b16 %v934
        %v976 = vunpack.c.l.b16 %v935
        %v977 = vunpack.c.l.b16 %v936
        %v978 = vunpack.c.l.b16 %v937
        %v979 = vunpack.c.l.b16 %v938
        %v980 = vunpack.c.l.b16 %v939
        %v981 = vpack.c.b16 %v966, %v965
        %v982 = vpack.c.b16 %v968, %v967
        %v983 = vpack.c.b16 %v970, %v969
        %v984 = vpack.c.b16 %v972, %v971
        %v985 = vpack.c.b16 %v974, %v973
        %v986 = vpack.c.b16 %v976, %v975
        %v987 = vpack.c.b16 %v978, %v977
        %v988 = vpack.c.b16 %v980, %v979
        %v997 = vunpack.c.l.b16 %v941
        %v998 = vunpack.c.l.b16 %v942
        %v999 = vunpack.c.l.b16 %v943
        %v1000 = vunpack.c.l.b16 %v944
        %v1001 = vunpack.c.l.b16 %v945
        %v1002 = vunpack.c.l.b16 %v946
        %v1003 = vunpack.c.l.b16 %v947
        %v1004 = vunpack.c.l.b16 %v948
        %v1005 = vpack.c.b16 %v998, %v997
        %v1006 = vpack.c.b16 %v1000, %v999
        %v1007 = vpack.c.b16 %v1002, %v1001
        %v1008 = vpack.c.b16 %v1004, %v1003
        %vm1013 = vcmask 523264
        %v1015 = vsel %vm1013, %v981, 0
        %v1018 = vsel %vm1013, %v982, 0
        %v1021 = vsel %vm1013, %v983, 0
        %v1024 = vsel %vm1013, %v984, 0
        %v1027 = vsel %vm1013, %v985, 0
        %v1030 = vsel %vm1013, %v986, 0
        %v1033 = vsel %vm1013, %v987, 0
        %v1036 = vsel %vm1013, %v988, 0
        %1038 = vmatpush.bf16.msra.mxu0 0
        %1039 = vmatpush.bf16.msra.mxu0 0
        %1040 = vmatpush.bf16.msra.mxu0 0
        %1041 = vmatpush.bf16.msra.mxu0 0
        %1042 = vmatpush.bf16.msra.mxu0 %v1008
        %1043 = vmatpush.bf16.msra.mxu0 %v1007
        %1044 = vmatpush.bf16.msra.mxu0 %v1006
        %1045 = vmatpush.bf16.msra.mxu0 %v1005
        %1046 = vmatmul.bf16.gmra.mxu0 %v1015
        %v1047 = vpop.f32.mrf.mxu0
        %v1048 = vadd.f32 0.0, %v1047
        %v1049 = vpop.f32.mrf.mxu0
        %v1050 = vadd.f32 0.0, %v1049
        %1051 = vmatmul.bf16.gmra.mxu0 %v1018
        %v1052 = vpop.f32.mrf.mxu0
        %v1053 = vadd.f32 0.0, %v1052
        %v1054 = vpop.f32.mrf.mxu0
        %v1055 = vadd.f32 0.0, %v1054
        %1056 = vmatmul.bf16.gmra.mxu0 %v1021
        %v1057 = vpop.f32.mrf.mxu0
        %v1058 = vadd.f32 0.0, %v1057
        %v1059 = vpop.f32.mrf.mxu0
        %v1060 = vadd.f32 0.0, %v1059
        %1061 = vmatmul.bf16.gmra.mxu0 %v1024
        %v1062 = vpop.f32.mrf.mxu0
        %v1063 = vadd.f32 0.0, %v1062
        %v1064 = vpop.f32.mrf.mxu0
        %v1065 = vadd.f32 0.0, %v1064
        %1066 = vmatmul.bf16.gmra.mxu0 %v1027
        %v1067 = vpop.f32.mrf.mxu0
        %v1068 = vadd.f32 0.0, %v1067
        %v1069 = vpop.f32.mrf.mxu0
        %v1070 = vadd.f32 0.0, %v1069
        %1071 = vmatmul.bf16.gmra.mxu0 %v1030
        %v1072 = vpop.f32.mrf.mxu0
        %v1073 = vadd.f32 0.0, %v1072
        %v1074 = vpop.f32.mrf.mxu0
        %v1075 = vadd.f32 0.0, %v1074
        %1076 = vmatmul.bf16.gmra.mxu0 %v1033
        %v1077 = vpop.f32.mrf.mxu0
        %v1078 = vadd.f32 0.0, %v1077
        %v1079 = vpop.f32.mrf.mxu0
        %v1080 = vadd.f32 0.0, %v1079
        %1081 = vmatmul.bf16.gmra.mxu0 %v1036
        %v1082 = vpop.f32.mrf.mxu0
        %v1083 = vadd.f32 0.0, %v1082
        %v1084 = vpop.f32.mrf.mxu0
        %v1085 = vadd.f32 0.0, %v1084
        %1086 = vdwg.mxu0
        %v1103 = vunpack.c.l.b16 %v900
        %v1104 = vunpack.c.l.b16 %v901
        %v1105 = vunpack.c.l.b16 %v902
        %v1106 = vunpack.c.l.b16 %v903
        %v1107 = vunpack.c.l.b16 %v904
        %v1108 = vunpack.c.l.b16 %v905
        %v1109 = vunpack.c.l.b16 %v906
        %v1110 = vunpack.c.l.b16 %v907
        %v1111 = vunpack.c.l.b16 %v908
        %v1112 = vunpack.c.l.b16 %v909
        %v1113 = vunpack.c.l.b16 %v910
        %v1114 = vunpack.c.l.b16 %v911
        %v1115 = vunpack.c.l.b16 %v912
        %v1116 = vunpack.c.l.b16 %v913
        %v1117 = vunpack.c.l.b16 %v914
        %v1118 = vunpack.c.l.b16 %v915
        %v1119 = vpack.c.b16 %v1104, %v1103
        %v1120 = vpack.c.b16 %v1106, %v1105
        %v1121 = vpack.c.b16 %v1108, %v1107
        %v1122 = vpack.c.b16 %v1110, %v1109
        %v1123 = vpack.c.b16 %v1112, %v1111
        %v1124 = vpack.c.b16 %v1114, %v1113
        %v1125 = vpack.c.b16 %v1116, %v1115
        %v1126 = vpack.c.b16 %v1118, %v1117
        %v1135 = vunpack.c.l.b16 %v916
        %v1136 = vunpack.c.l.b16 %v917
        %v1137 = vunpack.c.l.b16 %v918
        %v1138 = vunpack.c.l.b16 %v919
        %v1139 = vunpack.c.l.b16 %v920
        %v1140 = vunpack.c.l.b16 %v921
        %v1141 = vunpack.c.l.b16 %v922
        %v1142 = vunpack.c.l.b16 %v923
        %v1143 = vpack.c.b16 %v1136, %v1135
        %v1144 = vpack.c.b16 %v1138, %v1137
        %v1145 = vpack.c.b16 %v1140, %v1139
        %v1146 = vpack.c.b16 %v1142, %v1141
        %v1152 = vsel %vm1013, %v1119, 0
        %v1155 = vsel %vm1013, %v1120, 0
        %v1158 = vsel %vm1013, %v1121, 0
        %v1161 = vsel %vm1013, %v1122, 0
        %v1164 = vsel %vm1013, %v1123, 0
        %v1167 = vsel %vm1013, %v1124, 0
        %v1170 = vsel %vm1013, %v1125, 0
        %v1173 = vsel %vm1013, %v1126, 0
        %1175 = vmatpush.bf16.msra.mxu0 0
        %1176 = vmatpush.bf16.msra.mxu0 0
        %1177 = vmatpush.bf16.msra.mxu0 0
        %1178 = vmatpush.bf16.msra.mxu0 0
        %1179 = vmatpush.bf16.msra.mxu0 %v1146
        %1180 = vmatpush.bf16.msra.mxu0 %v1145
        %1181 = vmatpush.bf16.msra.mxu0 %v1144
        %1182 = vmatpush.bf16.msra.mxu0 %v1143
        %1183 = vmatmul.bf16.gmra.mxu0 %v1152
        %v1184 = vpop.f32.mrf.mxu0
        %v1185 = vadd.f32 %v1048, %v1184
        %v1186 = vpop.f32.mrf.mxu0
        %v1187 = vadd.f32 %v1050, %v1186
        %1188 = vmatmul.bf16.gmra.mxu0 %v1155
        %v1189 = vpop.f32.mrf.mxu0
        %v1190 = vadd.f32 %v1053, %v1189
        %v1191 = vpop.f32.mrf.mxu0
        %v1192 = vadd.f32 %v1055, %v1191
        %1193 = vmatmul.bf16.gmra.mxu0 %v1158
        %v1194 = vpop.f32.mrf.mxu0
        %v1195 = vadd.f32 %v1058, %v1194
        %v1196 = vpop.f32.mrf.mxu0
        %v1197 = vadd.f32 %v1060, %v1196
        %1198 = vmatmul.bf16.gmra.mxu0 %v1161
        %v1199 = vpop.f32.mrf.mxu0
        %v1200 = vadd.f32 %v1063, %v1199
        %v1201 = vpop.f32.mrf.mxu0
        %v1202 = vadd.f32 %v1065, %v1201
        %1203 = vmatmul.bf16.gmra.mxu0 %v1164
        %v1204 = vpop.f32.mrf.mxu0
        %v1205 = vadd.f32 %v1068, %v1204
        %v1206 = vpop.f32.mrf.mxu0
        %v1207 = vadd.f32 %v1070, %v1206
        %1208 = vmatmul.bf16.gmra.mxu0 %v1167
        %v1209 = vpop.f32.mrf.mxu0
        %v1210 = vadd.f32 %v1073, %v1209
        %v1211 = vpop.f32.mrf.mxu0
        %v1212 = vadd.f32 %v1075, %v1211
        %1213 = vmatmul.bf16.gmra.mxu0 %v1170
        %v1214 = vpop.f32.mrf.mxu0
        %v1215 = vadd.f32 %v1078, %v1214
        %v1216 = vpop.f32.mrf.mxu0
        %v1217 = vadd.f32 %v1080, %v1216
        %1218 = vmatmul.bf16.gmra.mxu0 %v1173
        %v1219 = vpop.f32.mrf.mxu0
        %v1220 = vadd.f32 %v1083, %v1219
        %v1221 = vpop.f32.mrf.mxu0
        %v1222 = vadd.f32 %v1085, %v1221
        %1223 = vdwg.mxu0
        %v1224 = vld [vmem:[%s476] sm:$0xf]
        %v1225 = vld [vmem:[%s476 + $0x4] sm:$0xf]
        %v1226 = vld [vmem:[%s476 + $0x8] sm:$0xf]
        %v1227 = vld [vmem:[%s476 + $0xc] sm:$0xf]
        %v1228 = vld [vmem:[%s476 + $0x10] sm:$0xf]
        %v1229 = vld [vmem:[%s476 + $0x14] sm:$0xf]
        %v1230 = vld [vmem:[%s476 + $0x18] sm:$0xf]
        %v1231 = vld [vmem:[%s476 + $0x1c] sm:$0xf]
        %v1232 = vld [vmem:[%s476 + $0x20] sm:$0xf]
        %v1233 = vld [vmem:[%s476 + $0x24] sm:$0xf]
        %v1234 = vld [vmem:[%s476 + $0x28] sm:$0xf]
        %v1235 = vld [vmem:[%s476 + $0x2c] sm:$0xf]
        %v1236 = vld [vmem:[%s476 + $0x30] sm:$0xf]
        %v1237 = vld [vmem:[%s476 + $0x34] sm:$0xf]
        %v1238 = vld [vmem:[%s476 + $0x38] sm:$0xf]
        %v1239 = vld [vmem:[%s476 + $0x3c] sm:$0xf]
        %s1240 = scalar_lea.vmem [#allocation7], 64
        %v1241 = vld [vmem:[%s1240] sm:$0xf]
        %v1242 = vld [vmem:[%s1240 + $0x4] sm:$0xf]
        %v1243 = vld [vmem:[%s1240 + $0x8] sm:$0xf]
        %v1244 = vld [vmem:[%s1240 + $0xc] sm:$0xf]
        %v1245 = vld [vmem:[%s1240 + $0x10] sm:$0xf]
        %v1246 = vld [vmem:[%s1240 + $0x14] sm:$0xf]
        %v1247 = vld [vmem:[%s1240 + $0x18] sm:$0xf]
        %v1248 = vld [vmem:[%s1240 + $0x1c] sm:$0xf]
        %v1265 = vunpack.c.l.b16 %v1224
        %v1266 = vunpack.c.l.b16 %v1225
        %v1267 = vunpack.c.l.b16 %v1226
        %v1268 = vunpack.c.l.b16 %v1227
        %v1269 = vunpack.c.l.b16 %v1228
        %v1270 = vunpack.c.l.b16 %v1229
        %v1271 = vunpack.c.l.b16 %v1230
        %v1272 = vunpack.c.l.b16 %v1231
        %v1273 = vunpack.c.l.b16 %v1232
        %v1274 = vunpack.c.l.b16 %v1233
        %v1275 = vunpack.c.l.b16 %v1234
        %v1276 = vunpack.c.l.b16 %v1235
        %v1277 = vunpack.c.l.b16 %v1236
        %v1278 = vunpack.c.l.b16 %v1237
        %v1279 = vunpack.c.l.b16 %v1238
        %v1280 = vunpack.c.l.b16 %v1239
        %v1281 = vpack.c.b16 %v1266, %v1265
        %v1282 = vpack.c.b16 %v1268, %v1267
        %v1283 = vpack.c.b16 %v1270, %v1269
        %v1284 = vpack.c.b16 %v1272, %v1271
        %v1285 = vpack.c.b16 %v1274, %v1273
        %v1286 = vpack.c.b16 %v1276, %v1275
        %v1287 = vpack.c.b16 %v1278, %v1277
        %v1288 = vpack.c.b16 %v1280, %v1279
        %v1297 = vunpack.c.l.b16 %v1241
        %v1298 = vunpack.c.l.b16 %v1242
        %v1299 = vunpack.c.l.b16 %v1243
        %v1300 = vunpack.c.l.b16 %v1244
        %v1301 = vunpack.c.l.b16 %v1245
        %v1302 = vunpack.c.l.b16 %v1246
        %v1303 = vunpack.c.l.b16 %v1247
        %v1304 = vunpack.c.l.b16 %v1248
        %v1305 = vpack.c.b16 %v1298, %v1297
        %v1306 = vpack.c.b16 %v1300, %v1299
        %v1307 = vpack.c.b16 %v1302, %v1301
        %v1308 = vpack.c.b16 %v1304, %v1303
        %v1314 = vsel %vm1013, %v1281, 0
        %v1317 = vsel %vm1013, %v1282, 0
        %v1320 = vsel %vm1013, %v1283, 0
        %v1323 = vsel %vm1013, %v1284, 0
        %v1326 = vsel %vm1013, %v1285, 0
        %v1329 = vsel %vm1013, %v1286, 0
        %v1332 = vsel %vm1013, %v1287, 0
        %v1335 = vsel %vm1013, %v1288, 0
        %1337 = vmatpush.bf16.msra.mxu0 0
        %1338 = vmatpush.bf16.msra.mxu0 0
        %1339 = vmatpush.bf16.msra.mxu0 0
        %1340 = vmatpush.bf16.msra.mxu0 0
        %1341 = vmatpush.bf16.msra.mxu0 %v1308
        %1342 = vmatpush.bf16.msra.mxu0 %v1307
        %1343 = vmatpush.bf16.msra.mxu0 %v1306
        %1344 = vmatpush.bf16.msra.mxu0 %v1305
        %1345 = vmatmul.bf16.gmra.mxu0 %v1314
        %v1346 = vpop.f32.mrf.mxu0
        %v1347 = vadd.f32 0.0, %v1346
        %v1348 = vpop.f32.mrf.mxu0
        %v1349 = vadd.f32 0.0, %v1348
        %1350 = vmatmul.bf16.gmra.mxu0 %v1317
        %v1351 = vpop.f32.mrf.mxu0
        %v1352 = vadd.f32 0.0, %v1351
        %v1353 = vpop.f32.mrf.mxu0
        %v1354 = vadd.f32 0.0, %v1353
        %1355 = vmatmul.bf16.gmra.mxu0 %v1320
        %v1356 = vpop.f32.mrf.mxu0
        %v1357 = vadd.f32 0.0, %v1356
        %v1358 = vpop.f32.mrf.mxu0
        %v1359 = vadd.f32 0.0, %v1358
        %1360 = vmatmul.bf16.gmra.mxu0 %v1323
        %v1361 = vpop.f32.mrf.mxu0
        %v1362 = vadd.f32 0.0, %v1361
        %v1363 = vpop.f32.mrf.mxu0
        %v1364 = vadd.f32 0.0, %v1363
        %1365 = vmatmul.bf16.gmra.mxu0 %v1326
        %v1366 = vpop.f32.mrf.mxu0
        %v1367 = vadd.f32 0.0, %v1366
        %v1368 = vpop.f32.mrf.mxu0
        %v1369 = vadd.f32 0.0, %v1368
        %1370 = vmatmul.bf16.gmra.mxu0 %v1329
        %v1371 = vpop.f32.mrf.mxu0
        %v1372 = vadd.f32 0.0, %v1371
        %v1373 = vpop.f32.mrf.mxu0
        %v1374 = vadd.f32 0.0, %v1373
        %1375 = vmatmul.bf16.gmra.mxu0 %v1332
        %v1376 = vpop.f32.mrf.mxu0
        %v1377 = vadd.f32 0.0, %v1376
        %v1378 = vpop.f32.mrf.mxu0
        %v1379 = vadd.f32 0.0, %v1378
        %1380 = vmatmul.bf16.gmra.mxu0 %v1335
        %v1381 = vpop.f32.mrf.mxu0
        %v1382 = vadd.f32 0.0, %v1381
        %v1383 = vpop.f32.mrf.mxu0
        %v1384 = vadd.f32 0.0, %v1383
        %1385 = vdwg.mxu0
        %v1386 = vadd.f32 %v1185, %v1347
        %v1387 = vadd.f32 %v1187, %v1349
        %v1388 = vadd.f32 %v1190, %v1352
        %v1389 = vadd.f32 %v1192, %v1354
        %v1390 = vadd.f32 %v1195, %v1357
        %v1391 = vadd.f32 %v1197, %v1359
        %v1392 = vadd.f32 %v1200, %v1362
        %v1393 = vadd.f32 %v1202, %v1364
        %v1394 = vadd.f32 %v1205, %v1367
        %v1395 = vadd.f32 %v1207, %v1369
        %v1396 = vadd.f32 %v1210, %v1372
        %v1397 = vadd.f32 %v1212, %v1374
        %v1398 = vadd.f32 %v1215, %v1377
        %v1399 = vadd.f32 %v1217, %v1379
        %v1400 = vadd.f32 %v1220, %v1382
        %v1401 = vadd.f32 %v1222, %v1384
        %v1402 = vld [vmem:[#allocation2 + $0x8] sm:$0xf]
        %v1403 = vld [vmem:[#allocation2 + $0xc] sm:$0xf]
        %v1404 = vld [vmem:[#allocation2 + $0x10] sm:$0xf]
        %v1405 = vld [vmem:[#allocation2 + $0x14] sm:$0xf]
        %v1406 = vld [vmem:[#allocation2 + $0x18] sm:$0xf]
        %v1407 = vld [vmem:[#allocation2 + $0x1c] sm:$0xf]
        %v1408 = vld [vmem:[#allocation2 + $0x20] sm:$0xf]
        %v1409 = vld [vmem:[#allocation2 + $0x24] sm:$0xf]
        %v1410 = vld [vmem:[#allocation2 + $0x28] sm:$0xf]
        %v1411 = vld [vmem:[#allocation2 + $0x2c] sm:$0xf]
        %v1412 = vld [vmem:[#allocation2 + $0x30] sm:$0xf]
        %v1413 = vld [vmem:[#allocation2 + $0x34] sm:$0xf]
        %v1414 = vld [vmem:[#allocation2 + $0x38] sm:$0xf]
        %v1415 = vld [vmem:[#allocation2 + $0x3c] sm:$0xf]
        %v1416 = vld [vmem:[#allocation2 + $0x40] sm:$0xf]
        %v1417 = vld [vmem:[#allocation2 + $0x44] sm:$0xf]
        %s1418 = scalar_lea.vmem [#allocation7], 96
        %v1419 = vld [vmem:[%s1418] sm:$0xf]
        %v1420 = vld [vmem:[%s1418 + $0x4] sm:$0xf]
        %v1421 = vld [vmem:[%s1418 + $0x8] sm:$0xf]
        %v1422 = vld [vmem:[%s1418 + $0xc] sm:$0xf]
        %v1423 = vld [vmem:[%s1418 + $0x10] sm:$0xf]
        %v1424 = vld [vmem:[%s1418 + $0x14] sm:$0xf]
        %v1425 = vld [vmem:[%s1418 + $0x18] sm:$0xf]
        %v1426 = vld [vmem:[%s1418 + $0x1c] sm:$0xf]
        %v1443 = vunpack.c.l.b16 %v1402
        %v1444 = vunpack.c.l.b16 %v1403
        %v1445 = vunpack.c.l.b16 %v1404
        %v1446 = vunpack.c.l.b16 %v1405
        %v1447 = vunpack.c.l.b16 %v1406
        %v1448 = vunpack.c.l.b16 %v1407
        %v1449 = vunpack.c.l.b16 %v1408
        %v1450 = vunpack.c.l.b16 %v1409
        %v1451 = vunpack.c.l.b16 %v1410
        %v1452 = vunpack.c.l.b16 %v1411
        %v1453 = vunpack.c.l.b16 %v1412
        %v1454 = vunpack.c.l.b16 %v1413
        %v1455 = vunpack.c.l.b16 %v1414
        %v1456 = vunpack.c.l.b16 %v1415
        %v1457 = vunpack.c.l.b16 %v1416
        %v1458 = vunpack.c.l.b16 %v1417
        %v1459 = vpack.c.b16 %v1444, %v1443
        %v1460 = vpack.c.b16 %v1446, %v1445
        %v1461 = vpack.c.b16 %v1448, %v1447
        %v1462 = vpack.c.b16 %v1450, %v1449
        %v1463 = vpack.c.b16 %v1452, %v1451
        %v1464 = vpack.c.b16 %v1454, %v1453
        %v1465 = vpack.c.b16 %v1456, %v1455
        %v1466 = vpack.c.b16 %v1458, %v1457
        %v1475 = vunpack.c.l.b16 %v1419
        %v1476 = vunpack.c.l.b16 %v1420
        %v1477 = vunpack.c.l.b16 %v1421
        %v1478 = vunpack.c.l.b16 %v1422
        %v1479 = vunpack.c.l.b16 %v1423
        %v1480 = vunpack.c.l.b16 %v1424
        %v1481 = vunpack.c.l.b16 %v1425
        %v1482 = vunpack.c.l.b16 %v1426
        %v1483 = vpack.c.b16 %v1476, %v1475
        %v1484 = vpack.c.b16 %v1478, %v1477
        %v1485 = vpack.c.b16 %v1480, %v1479
        %v1486 = vpack.c.b16 %v1482, %v1481
        %v1492 = vsel %vm1013, %v1459, 0
        %v1495 = vsel %vm1013, %v1460, 0
        %v1498 = vsel %vm1013, %v1461, 0
        %v1501 = vsel %vm1013, %v1462, 0
        %v1504 = vsel %vm1013, %v1463, 0
        %v1507 = vsel %vm1013, %v1464, 0
        %v1510 = vsel %vm1013, %v1465, 0
        %v1513 = vsel %vm1013, %v1466, 0
        %1515 = vmatpush.bf16.msra.mxu0 0
        %1516 = vmatpush.bf16.msra.mxu0 0
        %1517 = vmatpush.bf16.msra.mxu0 0
        %1518 = vmatpush.bf16.msra.mxu0 0
        %1519 = vmatpush.bf16.msra.mxu0 %v1486
        %1520 = vmatpush.bf16.msra.mxu0 %v1485
        %1521 = vmatpush.bf16.msra.mxu0 %v1484
        %1522 = vmatpush.bf16.msra.mxu0 %v1483
        %1523 = vmatmul.bf16.gmra.mxu0 %v1492
        %v1524 = vpop.f32.mrf.mxu0
        %v1525 = vadd.f32 0.0, %v1524
        %v1526 = vpop.f32.mrf.mxu0
        %v1527 = vadd.f32 0.0, %v1526
        %1528 = vmatmul.bf16.gmra.mxu0 %v1495
        %v1529 = vpop.f32.mrf.mxu0
        %v1530 = vadd.f32 0.0, %v1529
        %v1531 = vpop.f32.mrf.mxu0
        %v1532 = vadd.f32 0.0, %v1531
        %1533 = vmatmul.bf16.gmra.mxu0 %v1498
        %v1534 = vpop.f32.mrf.mxu0
        %v1535 = vadd.f32 0.0, %v1534
        %v1536 = vpop.f32.mrf.mxu0
        %v1537 = vadd.f32 0.0, %v1536
        %1538 = vmatmul.bf16.gmra.mxu0 %v1501
        %v1539 = vpop.f32.mrf.mxu0
        %v1540 = vadd.f32 0.0, %v1539
        %v1541 = vpop.f32.mrf.mxu0
        %v1542 = vadd.f32 0.0, %v1541
        %1543 = vmatmul.bf16.gmra.mxu0 %v1504
        %v1544 = vpop.f32.mrf.mxu0
        %v1545 = vadd.f32 0.0, %v1544
        %v1546 = vpop.f32.mrf.mxu0
        %v1547 = vadd.f32 0.0, %v1546
        %1548 = vmatmul.bf16.gmra.mxu0 %v1507
        %v1549 = vpop.f32.mrf.mxu0
        %v1550 = vadd.f32 0.0, %v1549
        %v1551 = vpop.f32.mrf.mxu0
        %v1552 = vadd.f32 0.0, %v1551
        %1553 = vmatmul.bf16.gmra.mxu0 %v1510
        %v1554 = vpop.f32.mrf.mxu0
        %v1555 = vadd.f32 0.0, %v1554
        %v1556 = vpop.f32.mrf.mxu0
        %v1557 = vadd.f32 0.0, %v1556
        %1558 = vmatmul.bf16.gmra.mxu0 %v1513
        %v1559 = vpop.f32.mrf.mxu0
        %v1560 = vadd.f32 0.0, %v1559
        %v1561 = vpop.f32.mrf.mxu0
        %v1562 = vadd.f32 0.0, %v1561
        %1563 = vdwg.mxu0
        %v1564 = vadd.f32 %v1386, %v1525
        %v1565 = vadd.f32 %v1387, %v1527
        %v1566 = vadd.f32 %v1388, %v1530
        %v1567 = vadd.f32 %v1389, %v1532
        %v1568 = vadd.f32 %v1390, %v1535
        %v1569 = vadd.f32 %v1391, %v1537
        %v1570 = vadd.f32 %v1392, %v1540
        %v1571 = vadd.f32 %v1393, %v1542
        %v1572 = vadd.f32 %v1394, %v1545
        %v1573 = vadd.f32 %v1395, %v1547
        %v1574 = vadd.f32 %v1396, %v1550
        %v1575 = vadd.f32 %v1397, %v1552
        %v1576 = vadd.f32 %v1398, %v1555
        %v1577 = vadd.f32 %v1399, %v1557
        %v1578 = vadd.f32 %v1400, %v1560
        %v1579 = vadd.f32 %v1401, %v1562
        %v1580 = vld [vmem:[%s471 + $0x8] sm:$0xf]
        %v1581 = vld [vmem:[%s471 + $0xc] sm:$0xf]
        %v1582 = vld [vmem:[%s471 + $0x10] sm:$0xf]
        %v1583 = vld [vmem:[%s471 + $0x14] sm:$0xf]
        %v1584 = vld [vmem:[%s471 + $0x18] sm:$0xf]
        %v1585 = vld [vmem:[%s471 + $0x1c] sm:$0xf]
        %v1586 = vld [vmem:[%s471 + $0x20] sm:$0xf]
        %v1587 = vld [vmem:[%s471 + $0x24] sm:$0xf]
        %v1588 = vld [vmem:[%s471 + $0x28] sm:$0xf]
        %v1589 = vld [vmem:[%s471 + $0x2c] sm:$0xf]
        %v1590 = vld [vmem:[%s471 + $0x30] sm:$0xf]
        %v1591 = vld [vmem:[%s471 + $0x34] sm:$0xf]
        %v1592 = vld [vmem:[%s471 + $0x38] sm:$0xf]
        %v1593 = vld [vmem:[%s471 + $0x3c] sm:$0xf]
        %v1594 = vld [vmem:[%s471 + $0x40] sm:$0xf]
        %v1595 = vld [vmem:[%s471 + $0x44] sm:$0xf]
        %s1596 = scalar_lea.vmem [#allocation7], 128
        %v1597 = vld [vmem:[%s1596] sm:$0xf]
        %v1598 = vld [vmem:[%s1596 + $0x4] sm:$0xf]
        %v1599 = vld [vmem:[%s1596 + $0x8] sm:$0xf]
        %v1600 = vld [vmem:[%s1596 + $0xc] sm:$0xf]
        %v1601 = vld [vmem:[%s1596 + $0x10] sm:$0xf]
        %v1602 = vld [vmem:[%s1596 + $0x14] sm:$0xf]
        %v1603 = vld [vmem:[%s1596 + $0x18] sm:$0xf]
        %v1604 = vld [vmem:[%s1596 + $0x1c] sm:$0xf]
        %v1621 = vunpack.c.l.b16 %v1580
        %v1622 = vunpack.c.l.b16 %v1581
        %v1623 = vunpack.c.l.b16 %v1582
        %v1624 = vunpack.c.l.b16 %v1583
        %v1625 = vunpack.c.l.b16 %v1584
        %v1626 = vunpack.c.l.b16 %v1585
        %v1627 = vunpack.c.l.b16 %v1586
        %v1628 = vunpack.c.l.b16 %v1587
        %v1629 = vunpack.c.l.b16 %v1588
        %v1630 = vunpack.c.l.b16 %v1589
        %v1631 = vunpack.c.l.b16 %v1590
        %v1632 = vunpack.c.l.b16 %v1591
        %v1633 = vunpack.c.l.b16 %v1592
        %v1634 = vunpack.c.l.b16 %v1593
        %v1635 = vunpack.c.l.b16 %v1594
        %v1636 = vunpack.c.l.b16 %v1595
        %v1637 = vpack.c.b16 %v1622, %v1621
        %v1638 = vpack.c.b16 %v1624, %v1623
        %v1639 = vpack.c.b16 %v1626, %v1625
        %v1640 = vpack.c.b16 %v1628, %v1627
        %v1641 = vpack.c.b16 %v1630, %v1629
        %v1642 = vpack.c.b16 %v1632, %v1631
        %v1643 = vpack.c.b16 %v1634, %v1633
        %v1644 = vpack.c.b16 %v1636, %v1635
        %v1653 = vunpack.c.l.b16 %v1597
        %v1654 = vunpack.c.l.b16 %v1598
        %v1655 = vunpack.c.l.b16 %v1599
        %v1656 = vunpack.c.l.b16 %v1600
        %v1657 = vunpack.c.l.b16 %v1601
        %v1658 = vunpack.c.l.b16 %v1602
        %v1659 = vunpack.c.l.b16 %v1603
        %v1660 = vunpack.c.l.b16 %v1604
        %v1661 = vpack.c.b16 %v1654, %v1653
        %v1662 = vpack.c.b16 %v1656, %v1655
        %v1663 = vpack.c.b16 %v1658, %v1657
        %v1664 = vpack.c.b16 %v1660, %v1659
        %v1670 = vsel %vm1013, %v1637, 0
        %v1673 = vsel %vm1013, %v1638, 0
        %v1676 = vsel %vm1013, %v1639, 0
        %v1679 = vsel %vm1013, %v1640, 0
        %v1682 = vsel %vm1013, %v1641, 0
        %v1685 = vsel %vm1013, %v1642, 0
        %v1688 = vsel %vm1013, %v1643, 0
        %v1691 = vsel %vm1013, %v1644, 0
        %1693 = vmatpush.bf16.msra.mxu0 0
        %1694 = vmatpush.bf16.msra.mxu0 0
        %1695 = vmatpush.bf16.msra.mxu0 0
        %1696 = vmatpush.bf16.msra.mxu0 0
        %1697 = vmatpush.bf16.msra.mxu0 %v1664
        %1698 = vmatpush.bf16.msra.mxu0 %v1663
        %1699 = vmatpush.bf16.msra.mxu0 %v1662
        %1700 = vmatpush.bf16.msra.mxu0 %v1661
        %1701 = vmatmul.bf16.gmra.mxu0 %v1670
        %v1702 = vpop.f32.mrf.mxu0
        %v1703 = vadd.f32 0.0, %v1702
        %v1704 = vpop.f32.mrf.mxu0
        %v1705 = vadd.f32 0.0, %v1704
        %1706 = vmatmul.bf16.gmra.mxu0 %v1673
        %v1707 = vpop.f32.mrf.mxu0
        %v1708 = vadd.f32 0.0, %v1707
        %v1709 = vpop.f32.mrf.mxu0
        %v1710 = vadd.f32 0.0, %v1709
        %1711 = vmatmul.bf16.gmra.mxu0 %v1676
        %v1712 = vpop.f32.mrf.mxu0
        %v1713 = vadd.f32 0.0, %v1712
        %v1714 = vpop.f32.mrf.mxu0
        %v1715 = vadd.f32 0.0, %v1714
        %1716 = vmatmul.bf16.gmra.mxu0 %v1679
        %v1717 = vpop.f32.mrf.mxu0
        %v1718 = vadd.f32 0.0, %v1717
        %v1719 = vpop.f32.mrf.mxu0
        %v1720 = vadd.f32 0.0, %v1719
        %1721 = vmatmul.bf16.gmra.mxu0 %v1682
        %v1722 = vpop.f32.mrf.mxu0
        %v1723 = vadd.f32 0.0, %v1722
        %v1724 = vpop.f32.mrf.mxu0
        %v1725 = vadd.f32 0.0, %v1724
        %1726 = vmatmul.bf16.gmra.mxu0 %v1685
        %v1727 = vpop.f32.mrf.mxu0
        %v1728 = vadd.f32 0.0, %v1727
        %v1729 = vpop.f32.mrf.mxu0
        %v1730 = vadd.f32 0.0, %v1729
        %1731 = vmatmul.bf16.gmra.mxu0 %v1688
        %v1732 = vpop.f32.mrf.mxu0
        %v1733 = vadd.f32 0.0, %v1732
        %v1734 = vpop.f32.mrf.mxu0
        %v1735 = vadd.f32 0.0, %v1734
        %1736 = vmatmul.bf16.gmra.mxu0 %v1691
        %v1737 = vpop.f32.mrf.mxu0
        %v1738 = vadd.f32 0.0, %v1737
        %v1739 = vpop.f32.mrf.mxu0
        %v1740 = vadd.f32 0.0, %v1739
        %1741 = vdwg.mxu0
        %v1742 = vadd.f32 %v1564, %v1703
        %v1743 = vadd.f32 %v1565, %v1705
        %v1744 = vadd.f32 %v1566, %v1708
        %v1745 = vadd.f32 %v1567, %v1710
        %v1746 = vadd.f32 %v1568, %v1713
        %v1747 = vadd.f32 %v1569, %v1715
        %v1748 = vadd.f32 %v1570, %v1718
        %v1749 = vadd.f32 %v1571, %v1720
        %v1750 = vadd.f32 %v1572, %v1723
        %v1751 = vadd.f32 %v1573, %v1725
        %v1752 = vadd.f32 %v1574, %v1728
        %v1753 = vadd.f32 %v1575, %v1730
        %v1754 = vadd.f32 %v1576, %v1733
        %v1755 = vadd.f32 %v1577, %v1735
        %v1756 = vadd.f32 %v1578, %v1738
        %v1757 = vadd.f32 %v1579, %v1740
        %v1758 = vld [vmem:[%s476 + $0x8] sm:$0xf]
        %v1759 = vld [vmem:[%s476 + $0xc] sm:$0xf]
        %v1760 = vld [vmem:[%s476 + $0x10] sm:$0xf]
        %v1761 = vld [vmem:[%s476 + $0x14] sm:$0xf]
        %v1762 = vld [vmem:[%s476 + $0x18] sm:$0xf]
        %v1763 = vld [vmem:[%s476 + $0x1c] sm:$0xf]
        %v1764 = vld [vmem:[%s476 + $0x20] sm:$0xf]
        %v1765 = vld [vmem:[%s476 + $0x24] sm:$0xf]
        %v1766 = vld [vmem:[%s476 + $0x28] sm:$0xf]
        %v1767 = vld [vmem:[%s476 + $0x2c] sm:$0xf]
        %v1768 = vld [vmem:[%s476 + $0x30] sm:$0xf]
        %v1769 = vld [vmem:[%s476 + $0x34] sm:$0xf]
        %v1770 = vld [vmem:[%s476 + $0x38] sm:$0xf]
        %v1771 = vld [vmem:[%s476 + $0x3c] sm:$0xf]
        %v1772 = vld [vmem:[%s476 + $0x40] sm:$0xf]
        %v1773 = vld [vmem:[%s476 + $0x44] sm:$0xf]
        %s1774 = scalar_lea.vmem [#allocation7], 160
        %v1775 = vld [vmem:[%s1774] sm:$0xf]
        %v1776 = vld [vmem:[%s1774 + $0x4] sm:$0xf]
        %v1777 = vld [vmem:[%s1774 + $0x8] sm:$0xf]
        %v1778 = vld [vmem:[%s1774 + $0xc] sm:$0xf]
        %v1779 = vld [vmem:[%s1774 + $0x10] sm:$0xf]
        %v1780 = vld [vmem:[%s1774 + $0x14] sm:$0xf]
        %v1781 = vld [vmem:[%s1774 + $0x18] sm:$0xf]
        %v1782 = vld [vmem:[%s1774 + $0x1c] sm:$0xf]
        %v1799 = vunpack.c.l.b16 %v1758
        %v1800 = vunpack.c.l.b16 %v1759
        %v1801 = vunpack.c.l.b16 %v1760
        %v1802 = vunpack.c.l.b16 %v1761
        %v1803 = vunpack.c.l.b16 %v1762
        %v1804 = vunpack.c.l.b16 %v1763
        %v1805 = vunpack.c.l.b16 %v1764
        %v1806 = vunpack.c.l.b16 %v1765
        %v1807 = vunpack.c.l.b16 %v1766
        %v1808 = vunpack.c.l.b16 %v1767
        %v1809 = vunpack.c.l.b16 %v1768
        %v1810 = vunpack.c.l.b16 %v1769
        %v1811 = vunpack.c.l.b16 %v1770
        %v1812 = vunpack.c.l.b16 %v1771
        %v1813 = vunpack.c.l.b16 %v1772
        %v1814 = vunpack.c.l.b16 %v1773
        %v1815 = vpack.c.b16 %v1800, %v1799
        %v1816 = vpack.c.b16 %v1802, %v1801
        %v1817 = vpack.c.b16 %v1804, %v1803
        %v1818 = vpack.c.b16 %v1806, %v1805
        %v1819 = vpack.c.b16 %v1808, %v1807
        %v1820 = vpack.c.b16 %v1810, %v1809
        %v1821 = vpack.c.b16 %v1812, %v1811
        %v1822 = vpack.c.b16 %v1814, %v1813
        %v1831 = vunpack.c.l.b16 %v1775
        %v1832 = vunpack.c.l.b16 %v1776
        %v1833 = vunpack.c.l.b16 %v1777
        %v1834 = vunpack.c.l.b16 %v1778
        %v1835 = vunpack.c.l.b16 %v1779
        %v1836 = vunpack.c.l.b16 %v1780
        %v1837 = vunpack.c.l.b16 %v1781
        %v1838 = vunpack.c.l.b16 %v1782
        %v1839 = vpack.c.b16 %v1832, %v1831
        %v1840 = vpack.c.b16 %v1834, %v1833
        %v1841 = vpack.c.b16 %v1836, %v1835
        %v1842 = vpack.c.b16 %v1838, %v1837
        %v1848 = vsel %vm1013, %v1815, 0
        %v1851 = vsel %vm1013, %v1816, 0
        %v1854 = vsel %vm1013, %v1817, 0
        %v1857 = vsel %vm1013, %v1818, 0
        %v1860 = vsel %vm1013, %v1819, 0
        %v1863 = vsel %vm1013, %v1820, 0
        %v1866 = vsel %vm1013, %v1821, 0
        %v1869 = vsel %vm1013, %v1822, 0
        %1871 = vmatpush.bf16.msra.mxu0 0
        %1872 = vmatpush.bf16.msra.mxu0 0
        %1873 = vmatpush.bf16.msra.mxu0 0
        %1874 = vmatpush.bf16.msra.mxu0 0
        %1875 = vmatpush.bf16.msra.mxu0 %v1842
        %1876 = vmatpush.bf16.msra.mxu0 %v1841
        %1877 = vmatpush.bf16.msra.mxu0 %v1840
        %1878 = vmatpush.bf16.msra.mxu0 %v1839
        %1879 = vmatmul.bf16.gmra.mxu0 %v1848
        %v1880 = vpop.f32.mrf.mxu0
        %v1881 = vadd.f32 0.0, %v1880
        %v1882 = vpop.f32.mrf.mxu0
        %v1883 = vadd.f32 0.0, %v1882
        %1884 = vmatmul.bf16.gmra.mxu0 %v1851
        %v1885 = vpop.f32.mrf.mxu0
        %v1886 = vadd.f32 0.0, %v1885
        %v1887 = vpop.f32.mrf.mxu0
        %v1888 = vadd.f32 0.0, %v1887
        %1889 = vmatmul.bf16.gmra.mxu0 %v1854
        %v1890 = vpop.f32.mrf.mxu0
        %v1891 = vadd.f32 0.0, %v1890
        %v1892 = vpop.f32.mrf.mxu0
        %v1893 = vadd.f32 0.0, %v1892
        %1894 = vmatmul.bf16.gmra.mxu0 %v1857
        %v1895 = vpop.f32.mrf.mxu0
        %v1896 = vadd.f32 0.0, %v1895
        %v1897 = vpop.f32.mrf.mxu0
        %v1898 = vadd.f32 0.0, %v1897
        %1899 = vmatmul.bf16.gmra.mxu0 %v1860
        %v1900 = vpop.f32.mrf.mxu0
        %v1901 = vadd.f32 0.0, %v1900
        %v1902 = vpop.f32.mrf.mxu0
        %v1903 = vadd.f32 0.0, %v1902
        %1904 = vmatmul.bf16.gmra.mxu0 %v1863
        %v1905 = vpop.f32.mrf.mxu0
        %v1906 = vadd.f32 0.0, %v1905
        %v1907 = vpop.f32.mrf.mxu0
        %v1908 = vadd.f32 0.0, %v1907
        %1909 = vmatmul.bf16.gmra.mxu0 %v1866
        %v1910 = vpop.f32.mrf.mxu0
        %v1911 = vadd.f32 0.0, %v1910
        %v1912 = vpop.f32.mrf.mxu0
        %v1913 = vadd.f32 0.0, %v1912
        %1914 = vmatmul.bf16.gmra.mxu0 %v1869
        %v1915 = vpop.f32.mrf.mxu0
        %v1916 = vadd.f32 0.0, %v1915
        %v1917 = vpop.f32.mrf.mxu0
        %v1918 = vadd.f32 0.0, %v1917
        %1919 = vdwg.mxu0
        %v1920 = vadd.f32 %v1742, %v1881
        %v1921 = vadd.f32 %v1743, %v1883
        %v1922 = vadd.f32 %v1744, %v1886
        %v1923 = vadd.f32 %v1745, %v1888
        %v1924 = vadd.f32 %v1746, %v1891
        %v1925 = vadd.f32 %v1747, %v1893
        %v1926 = vadd.f32 %v1748, %v1896
        %v1927 = vadd.f32 %v1749, %v1898
        %v1928 = vadd.f32 %v1750, %v1901
        %v1929 = vadd.f32 %v1751, %v1903
        %v1930 = vadd.f32 %v1752, %v1906
        %v1931 = vadd.f32 %v1753, %v1908
        %v1932 = vadd.f32 %v1754, %v1911
        %v1933 = vadd.f32 %v1755, %v1913
        %v1934 = vadd.f32 %v1756, %v1916
        %v1935 = vadd.f32 %v1757, %v1918
        %v1936 = vld [vmem:[#allocation2 + $0x10] sm:$0xf]
        %v1937 = vld [vmem:[#allocation2 + $0x14] sm:$0xf]
        %v1938 = vld [vmem:[#allocation2 + $0x18] sm:$0xf]
        %v1939 = vld [vmem:[#allocation2 + $0x1c] sm:$0xf]
        %v1940 = vld [vmem:[#allocation2 + $0x20] sm:$0xf]
        %v1941 = vld [vmem:[#allocation2 + $0x24] sm:$0xf]
        %v1942 = vld [vmem:[#allocation2 + $0x28] sm:$0xf]
        %v1943 = vld [vmem:[#allocation2 + $0x2c] sm:$0xf]
        %v1944 = vld [vmem:[#allocation2 + $0x30] sm:$0xf]
        %v1945 = vld [vmem:[#allocation2 + $0x34] sm:$0xf]
        %v1946 = vld [vmem:[#allocation2 + $0x38] sm:$0xf]
        %v1947 = vld [vmem:[#allocation2 + $0x3c] sm:$0xf]
        %v1948 = vld [vmem:[#allocation2 + $0x40] sm:$0xf]
        %v1949 = vld [vmem:[#allocation2 + $0x44] sm:$0xf]
        %v1950 = vld [vmem:[#allocation2 + $0x48] sm:$0xf]
        %v1951 = vld [vmem:[#allocation2 + $0x4c] sm:$0xf]
        %s1952 = scalar_lea.vmem [#allocation7], 192
        %v1953 = vld [vmem:[%s1952] sm:$0xf]
        %v1954 = vld [vmem:[%s1952 + $0x4] sm:$0xf]
        %v1955 = vld [vmem:[%s1952 + $0x8] sm:$0xf]
        %v1956 = vld [vmem:[%s1952 + $0xc] sm:$0xf]
        %v1957 = vld [vmem:[%s1952 + $0x10] sm:$0xf]
        %v1958 = vld [vmem:[%s1952 + $0x14] sm:$0xf]
        %v1959 = vld [vmem:[%s1952 + $0x18] sm:$0xf]
        %v1960 = vld [vmem:[%s1952 + $0x1c] sm:$0xf]
        %v1977 = vunpack.c.l.b16 %v1936
        %v1978 = vunpack.c.l.b16 %v1937
        %v1979 = vunpack.c.l.b16 %v1938
        %v1980 = vunpack.c.l.b16 %v1939
        %v1981 = vunpack.c.l.b16 %v1940
        %v1982 = vunpack.c.l.b16 %v1941
        %v1983 = vunpack.c.l.b16 %v1942
        %v1984 = vunpack.c.l.b16 %v1943
        %v1985 = vunpack.c.l.b16 %v1944
        %v1986 = vunpack.c.l.b16 %v1945
        %v1987 = vunpack.c.l.b16 %v1946
        %v1988 = vunpack.c.l.b16 %v1947
        %v1989 = vunpack.c.l.b16 %v1948
        %v1990 = vunpack.c.l.b16 %v1949
        %v1991 = vunpack.c.l.b16 %v1950
        %v1992 = vunpack.c.l.b16 %v1951
        %v1993 = vpack.c.b16 %v1978, %v1977
        %v1994 = vpack.c.b16 %v1980, %v1979
        %v1995 = vpack.c.b16 %v1982, %v1981
        %v1996 = vpack.c.b16 %v1984, %v1983
        %v1997 = vpack.c.b16 %v1986, %v1985
        %v1998 = vpack.c.b16 %v1988, %v1987
        %v1999 = vpack.c.b16 %v1990, %v1989
        %v2000 = vpack.c.b16 %v1992, %v1991
        %v2009 = vunpack.c.l.b16 %v1953
        %v2010 = vunpack.c.l.b16 %v1954
        %v2011 = vunpack.c.l.b16 %v1955
        %v2012 = vunpack.c.l.b16 %v1956
        %v2013 = vunpack.c.l.b16 %v1957
        %v2014 = vunpack.c.l.b16 %v1958
        %v2015 = vunpack.c.l.b16 %v1959
        %v2016 = vunpack.c.l.b16 %v1960
        %v2017 = vpack.c.b16 %v2010, %v2009
        %v2018 = vpack.c.b16 %v2012, %v2011
        %v2019 = vpack.c.b16 %v2014, %v2013
        %v2020 = vpack.c.b16 %v2016, %v2015
        %v2026 = vsel %vm1013, %v1993, 0
        %v2029 = vsel %vm1013, %v1994, 0
        %v2032 = vsel %vm1013, %v1995, 0
        %v2035 = vsel %vm1013, %v1996, 0
        %v2038 = vsel %vm1013, %v1997, 0
        %v2041 = vsel %vm1013, %v1998, 0
        %v2044 = vsel %vm1013, %v1999, 0
        %v2047 = vsel %vm1013, %v2000, 0
        %2049 = vmatpush.bf16.msra.mxu0 0
        %2050 = vmatpush.bf16.msra.mxu0 0
        %2051 = vmatpush.bf16.msra.mxu0 0
        %2052 = vmatpush.bf16.msra.mxu0 0
        %2053 = vmatpush.bf16.msra.mxu0 %v2020
        %2054 = vmatpush.bf16.msra.mxu0 %v2019
        %2055 = vmatpush.bf16.msra.mxu0 %v2018
        %2056 = vmatpush.bf16.msra.mxu0 %v2017
        %2057 = vmatmul.bf16.gmra.mxu0 %v2026
        %v2058 = vpop.f32.mrf.mxu0
        %v2059 = vadd.f32 0.0, %v2058
        %v2060 = vpop.f32.mrf.mxu0
        %v2061 = vadd.f32 0.0, %v2060
        %2062 = vmatmul.bf16.gmra.mxu0 %v2029
        %v2063 = vpop.f32.mrf.mxu0
        %v2064 = vadd.f32 0.0, %v2063
        %v2065 = vpop.f32.mrf.mxu0
        %v2066 = vadd.f32 0.0, %v2065
        %2067 = vmatmul.bf16.gmra.mxu0 %v2032
        %v2068 = vpop.f32.mrf.mxu0
        %v2069 = vadd.f32 0.0, %v2068
        %v2070 = vpop.f32.mrf.mxu0
        %v2071 = vadd.f32 0.0, %v2070
        %2072 = vmatmul.bf16.gmra.mxu0 %v2035
        %v2073 = vpop.f32.mrf.mxu0
        %v2074 = vadd.f32 0.0, %v2073
        %v2075 = vpop.f32.mrf.mxu0
        %v2076 = vadd.f32 0.0, %v2075
        %2077 = vmatmul.bf16.gmra.mxu0 %v2038
        %v2078 = vpop.f32.mrf.mxu0
        %v2079 = vadd.f32 0.0, %v2078
        %v2080 = vpop.f32.mrf.mxu0
        %v2081 = vadd.f32 0.0, %v2080
        %2082 = vmatmul.bf16.gmra.mxu0 %v2041
        %v2083 = vpop.f32.mrf.mxu0
        %v2084 = vadd.f32 0.0, %v2083
        %v2085 = vpop.f32.mrf.mxu0
        %v2086 = vadd.f32 0.0, %v2085
        %2087 = vmatmul.bf16.gmra.mxu0 %v2044
        %v2088 = vpop.f32.mrf.mxu0
        %v2089 = vadd.f32 0.0, %v2088
        %v2090 = vpop.f32.mrf.mxu0
        %v2091 = vadd.f32 0.0, %v2090
        %2092 = vmatmul.bf16.gmra.mxu0 %v2047
        %v2093 = vpop.f32.mrf.mxu0
        %v2094 = vadd.f32 0.0, %v2093
        %v2095 = vpop.f32.mrf.mxu0
        %v2096 = vadd.f32 0.0, %v2095
        %2097 = vdwg.mxu0
        %v2098 = vadd.f32 %v1920, %v2059
        %v2099 = vadd.f32 %v1921, %v2061
        %v2100 = vadd.f32 %v1922, %v2064
        %v2101 = vadd.f32 %v1923, %v2066
        %v2102 = vadd.f32 %v1924, %v2069
        %v2103 = vadd.f32 %v1925, %v2071
        %v2104 = vadd.f32 %v1926, %v2074
        %v2105 = vadd.f32 %v1927, %v2076
        %v2106 = vadd.f32 %v1928, %v2079
        %v2107 = vadd.f32 %v1929, %v2081
        %v2108 = vadd.f32 %v1930, %v2084
        %v2109 = vadd.f32 %v1931, %v2086
        %v2110 = vadd.f32 %v1932, %v2089
        %v2111 = vadd.f32 %v1933, %v2091
        %v2112 = vadd.f32 %v1934, %v2094
        %v2113 = vadd.f32 %v1935, %v2096
        %v2114 = vld [vmem:[%s471 + $0x10] sm:$0xf]
        %v2115 = vld [vmem:[%s471 + $0x14] sm:$0xf]
        %v2116 = vld [vmem:[%s471 + $0x18] sm:$0xf]
        %v2117 = vld [vmem:[%s471 + $0x1c] sm:$0xf]
        %v2118 = vld [vmem:[%s471 + $0x20] sm:$0xf]
        %v2119 = vld [vmem:[%s471 + $0x24] sm:$0xf]
        %v2120 = vld [vmem:[%s471 + $0x28] sm:$0xf]
        %v2121 = vld [vmem:[%s471 + $0x2c] sm:$0xf]
        %v2122 = vld [vmem:[%s471 + $0x30] sm:$0xf]
        %v2123 = vld [vmem:[%s471 + $0x34] sm:$0xf]
        %v2124 = vld [vmem:[%s471 + $0x38] sm:$0xf]
        %v2125 = vld [vmem:[%s471 + $0x3c] sm:$0xf]
        %v2126 = vld [vmem:[%s471 + $0x40] sm:$0xf]
        %v2127 = vld [vmem:[%s471 + $0x44] sm:$0xf]
        %v2128 = vld [vmem:[%s471 + $0x48] sm:$0xf]
        %v2129 = vld [vmem:[%s471 + $0x4c] sm:$0xf]
        %s2130 = scalar_lea.vmem [#allocation7], 224
        %v2131 = vld [vmem:[%s2130] sm:$0xf]
        %v2132 = vld [vmem:[%s2130 + $0x4] sm:$0xf]
        %v2133 = vld [vmem:[%s2130 + $0x8] sm:$0xf]
        %v2134 = vld [vmem:[%s2130 + $0xc] sm:$0xf]
        %v2135 = vld [vmem:[%s2130 + $0x10] sm:$0xf]
        %v2136 = vld [vmem:[%s2130 + $0x14] sm:$0xf]
        %v2137 = vld [vmem:[%s2130 + $0x18] sm:$0xf]
        %v2138 = vld [vmem:[%s2130 + $0x1c] sm:$0xf]
        %v2155 = vunpack.c.l.b16 %v2114
        %v2156 = vunpack.c.l.b16 %v2115
        %v2157 = vunpack.c.l.b16 %v2116
        %v2158 = vunpack.c.l.b16 %v2117
        %v2159 = vunpack.c.l.b16 %v2118
        %v2160 = vunpack.c.l.b16 %v2119
        %v2161 = vunpack.c.l.b16 %v2120
        %v2162 = vunpack.c.l.b16 %v2121
        %v2163 = vunpack.c.l.b16 %v2122
        %v2164 = vunpack.c.l.b16 %v2123
        %v2165 = vunpack.c.l.b16 %v2124
        %v2166 = vunpack.c.l.b16 %v2125
        %v2167 = vunpack.c.l.b16 %v2126
        %v2168 = vunpack.c.l.b16 %v2127
        %v2169 = vunpack.c.l.b16 %v2128
        %v2170 = vunpack.c.l.b16 %v2129
        %v2171 = vpack.c.b16 %v2156, %v2155
        %v2172 = vpack.c.b16 %v2158, %v2157
        %v2173 = vpack.c.b16 %v2160, %v2159
        %v2174 = vpack.c.b16 %v2162, %v2161
        %v2175 = vpack.c.b16 %v2164, %v2163
        %v2176 = vpack.c.b16 %v2166, %v2165
        %v2177 = vpack.c.b16 %v2168, %v2167
        %v2178 = vpack.c.b16 %v2170, %v2169
        %v2187 = vunpack.c.l.b16 %v2131
        %v2188 = vunpack.c.l.b16 %v2132
        %v2189 = vunpack.c.l.b16 %v2133
        %v2190 = vunpack.c.l.b16 %v2134
        %v2191 = vunpack.c.l.b16 %v2135
        %v2192 = vunpack.c.l.b16 %v2136
        %v2193 = vunpack.c.l.b16 %v2137
        %v2194 = vunpack.c.l.b16 %v2138
        %v2195 = vpack.c.b16 %v2188, %v2187
        %v2196 = vpack.c.b16 %v2190, %v2189
        %v2197 = vpack.c.b16 %v2192, %v2191
        %v2198 = vpack.c.b16 %v2194, %v2193
        %v2204 = vsel %vm1013, %v2171, 0
        %v2207 = vsel %vm1013, %v2172, 0
        %v2210 = vsel %vm1013, %v2173, 0
        %v2213 = vsel %vm1013, %v2174, 0
        %v2216 = vsel %vm1013, %v2175, 0
        %v2219 = vsel %vm1013, %v2176, 0
        %v2222 = vsel %vm1013, %v2177, 0
        %v2225 = vsel %vm1013, %v2178, 0
        %2227 = vmatpush.bf16.msra.mxu0 0
        %2228 = vmatpush.bf16.msra.mxu0 0
        %2229 = vmatpush.bf16.msra.mxu0 0
        %2230 = vmatpush.bf16.msra.mxu0 0
        %2231 = vmatpush.bf16.msra.mxu0 %v2198
        %2232 = vmatpush.bf16.msra.mxu0 %v2197
        %2233 = vmatpush.bf16.msra.mxu0 %v2196
        %2234 = vmatpush.bf16.msra.mxu0 %v2195
        %2235 = vmatmul.bf16.gmra.mxu0 %v2204
        %v2236 = vpop.f32.mrf.mxu0
        %v2237 = vadd.f32 0.0, %v2236
        %v2238 = vpop.f32.mrf.mxu0
        %v2239 = vadd.f32 0.0, %v2238
        %2240 = vmatmul.bf16.gmra.mxu0 %v2207
        %v2241 = vpop.f32.mrf.mxu0
        %v2242 = vadd.f32 0.0, %v2241
        %v2243 = vpop.f32.mrf.mxu0
        %v2244 = vadd.f32 0.0, %v2243
        %2245 = vmatmul.bf16.gmra.mxu0 %v2210
        %v2246 = vpop.f32.mrf.mxu0
        %v2247 = vadd.f32 0.0, %v2246
        %v2248 = vpop.f32.mrf.mxu0
        %v2249 = vadd.f32 0.0, %v2248
        %2250 = vmatmul.bf16.gmra.mxu0 %v2213
        %v2251 = vpop.f32.mrf.mxu0
        %v2252 = vadd.f32 0.0, %v2251
        %v2253 = vpop.f32.mrf.mxu0
        %v2254 = vadd.f32 0.0, %v2253
        %2255 = vmatmul.bf16.gmra.mxu0 %v2216
        %v2256 = vpop.f32.mrf.mxu0
        %v2257 = vadd.f32 0.0, %v2256
        %v2258 = vpop.f32.mrf.mxu0
        %v2259 = vadd.f32 0.0, %v2258
        %2260 = vmatmul.bf16.gmra.mxu0 %v2219
        %v2261 = vpop.f32.mrf.mxu0
        %v2262 = vadd.f32 0.0, %v2261
        %v2263 = vpop.f32.mrf.mxu0
        %v2264 = vadd.f32 0.0, %v2263
        %2265 = vmatmul.bf16.gmra.mxu0 %v2222
        %v2266 = vpop.f32.mrf.mxu0
        %v2267 = vadd.f32 0.0, %v2266
        %v2268 = vpop.f32.mrf.mxu0
        %v2269 = vadd.f32 0.0, %v2268
        %2270 = vmatmul.bf16.gmra.mxu0 %v2225
        %v2271 = vpop.f32.mrf.mxu0
        %v2272 = vadd.f32 0.0, %v2271
        %v2273 = vpop.f32.mrf.mxu0
        %v2274 = vadd.f32 0.0, %v2273
        %2275 = vdwg.mxu0
        %v2276 = vadd.f32 %v2098, %v2237
        %v2277 = vadd.f32 %v2099, %v2239
        %v2278 = vadd.f32 %v2100, %v2242
        %v2279 = vadd.f32 %v2101, %v2244
        %v2280 = vadd.f32 %v2102, %v2247
        %v2281 = vadd.f32 %v2103, %v2249
        %v2282 = vadd.f32 %v2104, %v2252
        %v2283 = vadd.f32 %v2105, %v2254
        %v2284 = vadd.f32 %v2106, %v2257
        %v2285 = vadd.f32 %v2107, %v2259
        %v2286 = vadd.f32 %v2108, %v2262
        %v2287 = vadd.f32 %v2109, %v2264
        %v2288 = vadd.f32 %v2110, %v2267
        %v2289 = vadd.f32 %v2111, %v2269
        %v2290 = vadd.f32 %v2112, %v2272
        %v2291 = vadd.f32 %v2113, %v2274
        %v2292 = vld [vmem:[%s476 + $0x10] sm:$0xf]
        %v2293 = vld [vmem:[%s476 + $0x14] sm:$0xf]
        %v2294 = vld [vmem:[%s476 + $0x18] sm:$0xf]
        %v2295 = vld [vmem:[%s476 + $0x1c] sm:$0xf]
        %v2296 = vld [vmem:[%s476 + $0x20] sm:$0xf]
        %v2297 = vld [vmem:[%s476 + $0x24] sm:$0xf]
        %v2298 = vld [vmem:[%s476 + $0x28] sm:$0xf]
        %v2299 = vld [vmem:[%s476 + $0x2c] sm:$0xf]
        %v2300 = vld [vmem:[%s476 + $0x30] sm:$0xf]
        %v2301 = vld [vmem:[%s476 + $0x34] sm:$0xf]
        %v2302 = vld [vmem:[%s476 + $0x38] sm:$0xf]
        %v2303 = vld [vmem:[%s476 + $0x3c] sm:$0xf]
        %v2304 = vld [vmem:[%s476 + $0x40] sm:$0xf]
        %v2305 = vld [vmem:[%s476 + $0x44] sm:$0xf]
        %v2306 = vld [vmem:[%s476 + $0x48] sm:$0xf]
        %v2307 = vld [vmem:[%s476 + $0x4c] sm:$0xf]
        %s2308 = scalar_lea.vmem [#allocation7], 256
        %v2309 = vld [vmem:[%s2308] sm:$0xf]
        %v2310 = vld [vmem:[%s2308 + $0x4] sm:$0xf]
        %v2311 = vld [vmem:[%s2308 + $0x8] sm:$0xf]
        %v2312 = vld [vmem:[%s2308 + $0xc] sm:$0xf]
        %v2313 = vld [vmem:[%s2308 + $0x10] sm:$0xf]
        %v2314 = vld [vmem:[%s2308 + $0x14] sm:$0xf]
        %v2315 = vld [vmem:[%s2308 + $0x18] sm:$0xf]
        %v2316 = vld [vmem:[%s2308 + $0x1c] sm:$0xf]
        %v2333 = vunpack.c.l.b16 %v2292
        %v2334 = vunpack.c.l.b16 %v2293
        %v2335 = vunpack.c.l.b16 %v2294
        %v2336 = vunpack.c.l.b16 %v2295
        %v2337 = vunpack.c.l.b16 %v2296
        %v2338 = vunpack.c.l.b16 %v2297
        %v2339 = vunpack.c.l.b16 %v2298
        %v2340 = vunpack.c.l.b16 %v2299
        %v2341 = vunpack.c.l.b16 %v2300
        %v2342 = vunpack.c.l.b16 %v2301
        %v2343 = vunpack.c.l.b16 %v2302
        %v2344 = vunpack.c.l.b16 %v2303
        %v2345 = vunpack.c.l.b16 %v2304
        %v2346 = vunpack.c.l.b16 %v2305
        %v2347 = vunpack.c.l.b16 %v2306
        %v2348 = vunpack.c.l.b16 %v2307
        %v2349 = vpack.c.b16 %v2334, %v2333
        %v2350 = vpack.c.b16 %v2336, %v2335
        %v2351 = vpack.c.b16 %v2338, %v2337
        %v2352 = vpack.c.b16 %v2340, %v2339
        %v2353 = vpack.c.b16 %v2342, %v2341
        %v2354 = vpack.c.b16 %v2344, %v2343
        %v2355 = vpack.c.b16 %v2346, %v2345
        %v2356 = vpack.c.b16 %v2348, %v2347
        %v2365 = vunpack.c.l.b16 %v2309
        %v2366 = vunpack.c.l.b16 %v2310
        %v2367 = vunpack.c.l.b16 %v2311
        %v2368 = vunpack.c.l.b16 %v2312
        %v2369 = vunpack.c.l.b16 %v2313
        %v2370 = vunpack.c.l.b16 %v2314
        %v2371 = vunpack.c.l.b16 %v2315
        %v2372 = vunpack.c.l.b16 %v2316
        %v2373 = vpack.c.b16 %v2366, %v2365
        %v2374 = vpack.c.b16 %v2368, %v2367
        %v2375 = vpack.c.b16 %v2370, %v2369
        %v2376 = vpack.c.b16 %v2372, %v2371
        %v2382 = vsel %vm1013, %v2349, 0
        %v2385 = vsel %vm1013, %v2350, 0
        %v2388 = vsel %vm1013, %v2351, 0
        %v2391 = vsel %vm1013, %v2352, 0
        %v2394 = vsel %vm1013, %v2353, 0
        %v2397 = vsel %vm1013, %v2354, 0
        %v2400 = vsel %vm1013, %v2355, 0
        %v2403 = vsel %vm1013, %v2356, 0
        %2405 = vmatpush.bf16.msra.mxu0 0
        %2406 = vmatpush.bf16.msra.mxu0 0
        %2407 = vmatpush.bf16.msra.mxu0 0
        %2408 = vmatpush.bf16.msra.mxu0 0
        %2409 = vmatpush.bf16.msra.mxu0 %v2376
        %2410 = vmatpush.bf16.msra.mxu0 %v2375
        %2411 = vmatpush.bf16.msra.mxu0 %v2374
        %2412 = vmatpush.bf16.msra.mxu0 %v2373
        %2413 = vmatmul.bf16.gmra.mxu0 %v2382
        %v2414 = vpop.f32.mrf.mxu0
        %v2415 = vadd.f32 0.0, %v2414
        %v2416 = vpop.f32.mrf.mxu0
        %v2417 = vadd.f32 0.0, %v2416
        %2418 = vmatmul.bf16.gmra.mxu0 %v2385
        %v2419 = vpop.f32.mrf.mxu0
        %v2420 = vadd.f32 0.0, %v2419
        %v2421 = vpop.f32.mrf.mxu0
        %v2422 = vadd.f32 0.0, %v2421
        %2423 = vmatmul.bf16.gmra.mxu0 %v2388
        %v2424 = vpop.f32.mrf.mxu0
        %v2425 = vadd.f32 0.0, %v2424
        %v2426 = vpop.f32.mrf.mxu0
        %v2427 = vadd.f32 0.0, %v2426
        %2428 = vmatmul.bf16.gmra.mxu0 %v2391
        %v2429 = vpop.f32.mrf.mxu0
        %v2430 = vadd.f32 0.0, %v2429
        %v2431 = vpop.f32.mrf.mxu0
        %v2432 = vadd.f32 0.0, %v2431
        %2433 = vmatmul.bf16.gmra.mxu0 %v2394
        %v2434 = vpop.f32.mrf.mxu0
        %v2435 = vadd.f32 0.0, %v2434
        %v2436 = vpop.f32.mrf.mxu0
        %v2437 = vadd.f32 0.0, %v2436
        %2438 = vmatmul.bf16.gmra.mxu0 %v2397
        %v2439 = vpop.f32.mrf.mxu0
        %v2440 = vadd.f32 0.0, %v2439
        %v2441 = vpop.f32.mrf.mxu0
        %v2442 = vadd.f32 0.0, %v2441
        %2443 = vmatmul.bf16.gmra.mxu0 %v2400
        %v2444 = vpop.f32.mrf.mxu0
        %v2445 = vadd.f32 0.0, %v2444
        %v2446 = vpop.f32.mrf.mxu0
        %v2447 = vadd.f32 0.0, %v2446
        %2448 = vmatmul.bf16.gmra.mxu0 %v2403
        %v2449 = vpop.f32.mrf.mxu0
        %v2450 = vadd.f32 0.0, %v2449
        %v2451 = vpop.f32.mrf.mxu0
        %v2452 = vadd.f32 0.0, %v2451
        %2453 = vdwg.mxu0
        %v2454 = vadd.f32 %v2276, %v2415
        %v2455 = vadd.f32 %v2277, %v2417
        %v2456 = vadd.f32 %v2278, %v2420
        %v2457 = vadd.f32 %v2279, %v2422
        %v2458 = vadd.f32 %v2280, %v2425
        %v2459 = vadd.f32 %v2281, %v2427
        %v2460 = vadd.f32 %v2282, %v2430
        %v2461 = vadd.f32 %v2283, %v2432
        %v2462 = vadd.f32 %v2284, %v2435
        %v2463 = vadd.f32 %v2285, %v2437
        %v2464 = vadd.f32 %v2286, %v2440
        %v2465 = vadd.f32 %v2287, %v2442
        %v2466 = vadd.f32 %v2288, %v2445
        %v2467 = vadd.f32 %v2289, %v2447
        %v2468 = vadd.f32 %v2290, %v2450
        %v2469 = vadd.f32 %v2291, %v2452
        %2470 = vst.msk [vmem:[#allocation3] sm:$0xff] %vm1013, %v2454
        %2471 = vst.msk [vmem:[#allocation3 + $0x8] sm:$0xff] %vm1013, %v2455
        %2472 = vst.msk [vmem:[#allocation3 + $0x10] sm:$0xff] %vm1013, %v2456
        %2473 = vst.msk [vmem:[#allocation3 + $0x18] sm:$0xff] %vm1013, %v2457
        %2474 = vst.msk [vmem:[#allocation3 + $0x20] sm:$0xff] %vm1013, %v2458
        %2475 = vst.msk [vmem:[#allocation3 + $0x28] sm:$0xff] %vm1013, %v2459
        %2476 = vst.msk [vmem:[#allocation3 + $0x30] sm:$0xff] %vm1013, %v2460
        %2477 = vst.msk [vmem:[#allocation3 + $0x38] sm:$0xff] %vm1013, %v2461
        %2478 = vst.msk [vmem:[#allocation3 + $0x40] sm:$0xff] %vm1013, %v2462
        %2479 = vst.msk [vmem:[#allocation3 + $0x48] sm:$0xff] %vm1013, %v2463
        %2480 = vst.msk [vmem:[#allocation3 + $0x50] sm:$0xff] %vm1013, %v2464
        %2481 = vst.msk [vmem:[#allocation3 + $0x58] sm:$0xff] %vm1013, %v2465
        %2482 = vst.msk [vmem:[#allocation3 + $0x60] sm:$0xff] %vm1013, %v2466
        %2483 = vst.msk [vmem:[#allocation3 + $0x68] sm:$0xff] %vm1013, %v2467
        %2484 = vst.msk [vmem:[#allocation3 + $0x70] sm:$0xff] %vm1013, %v2468
        %2485 = vst.msk [vmem:[#allocation3 + $0x78] sm:$0xff] %vm1013, %v2469
        %v2486 = vsel %vm1013, %v2454, 0.0
        %v2487 = vsel %vm1013, %v2455, 0.0
        %v2488 = vadd.f32 %v2486, %v2487
        %v2489 = vsel %vm1013, %v2456, 0.0
        %v2490 = vadd.f32 %v2488, %v2489
        %v2491 = vsel %vm1013, %v2457, 0.0
        %v2492 = vadd.f32 %v2490, %v2491
        %v2493 = vsel %vm1013, %v2458, 0.0
        %v2494 = vadd.f32 %v2492, %v2493
        %v2495 = vsel %vm1013, %v2459, 0.0
        %v2496 = vadd.f32 %v2494, %v2495
        %v2497 = vsel %vm1013, %v2460, 0.0
        %v2498 = vadd.f32 %v2496, %v2497
        %v2499 = vsel %vm1013, %v2461, 0.0
        %v2500 = vadd.f32 %v2498, %v2499
        %v2501 = vsel %vm1013, %v2462, 0.0
        %v2502 = vadd.f32 %v2500, %v2501
        %v2503 = vsel %vm1013, %v2463, 0.0
        %v2504 = vadd.f32 %v2502, %v2503
        %v2505 = vsel %vm1013, %v2464, 0.0
        %v2506 = vadd.f32 %v2504, %v2505
        %v2507 = vsel %vm1013, %v2465, 0.0
        %v2508 = vadd.f32 %v2506, %v2507
        %v2509 = vsel %vm1013, %v2466, 0.0
        %v2510 = vadd.f32 %v2508, %v2509
        %v2511 = vsel %vm1013, %v2467, 0.0
        %v2512 = vadd.f32 %v2510, %v2511
        %v2513 = vsel %vm1013, %v2468, 0.0
        %v2514 = vadd.f32 %v2512, %v2513
        %v2515 = vsel %vm1013, %v2469, 0.0
        %v2516 = vadd.f32 %v2514, %v2515
        %v2517 = vrot.slane %v2516, 4
        %v2518 = vadd.f32 %v2516, %v2517
        %v2519 = vrot.slane %v2518, 2
        %v2520 = vadd.f32 %v2518, %v2519
        %v2521 = vrot.slane %v2520, 1
        %v2522 = vadd.f32 %v2520, %v2521
        %v2523 = vadd.f32 %v2522, 0.0
        %v2524 = vmul.f32 %v2454, %v2454
        %v2525 = vmul.f32 %v2455, %v2455
        %v2526 = vmul.f32 %v2456, %v2456
        %v2527 = vmul.f32 %v2457, %v2457
        %v2528 = vmul.f32 %v2458, %v2458
        %v2529 = vmul.f32 %v2459, %v2459
        %v2530 = vmul.f32 %v2460, %v2460
        %v2531 = vmul.f32 %v2461, %v2461
        %v2532 = vmul.f32 %v2462, %v2462
        %v2533 = vmul.f32 %v2463, %v2463
        %v2534 = vmul.f32 %v2464, %v2464
        %v2535 = vmul.f32 %v2465, %v2465
        %v2536 = vmul.f32 %v2466, %v2466
        %v2537 = vmul.f32 %v2467, %v2467
        %v2538 = vmul.f32 %v2468, %v2468
        %v2539 = vmul.f32 %v2469, %v2469
        %v2540 = vsel %vm1013, %v2524, 0.0
        %v2541 = vsel %vm1013, %v2525, 0.0
        %v2542 = vadd.f32 %v2540, %v2541
        %v2543 = vsel %vm1013, %v2526, 0.0
        %v2544 = vadd.f32 %v2542, %v2543
        %v2545 = vsel %vm1013, %v2527, 0.0
        %v2546 = vadd.f32 %v2544, %v2545
        %v2547 = vsel %vm1013, %v2528, 0.0
        %v2548 = vadd.f32 %v2546, %v2547
        %v2549 = vsel %vm1013, %v2529, 0.0
        %v2550 = vadd.f32 %v2548, %v2549
        %v2551 = vsel %vm1013, %v2530, 0.0
        %v2552 = vadd.f32 %v2550, %v2551
        %v2553 = vsel %vm1013, %v2531, 0.0
        %v2554 = vadd.f32 %v2552, %v2553
        %v2555 = vsel %vm1013, %v2532, 0.0
        %v2556 = vadd.f32 %v2554, %v2555
        %v2557 = vsel %vm1013, %v2533, 0.0
        %v2558 = vadd.f32 %v2556, %v2557
        %v2559 = vsel %vm1013, %v2534, 0.0
        %v2560 = vadd.f32 %v2558, %v2559
        %v2561 = vsel %vm1013, %v2535, 0.0
        %v2562 = vadd.f32 %v2560, %v2561
        %v2563 = vsel %vm1013, %v2536, 0.0
        %v2564 = vadd.f32 %v2562, %v2563
        %v2565 = vsel %vm1013, %v2537, 0.0
        %v2566 = vadd.f32 %v2564, %v2565
        %v2567 = vsel %vm1013, %v2538, 0.0
        %v2568 = vadd.f32 %v2566, %v2567
        %v2569 = vsel %vm1013, %v2539, 0.0
        %v2570 = vadd.f32 %v2568, %v2569
        %v2571 = vrot.slane %v2570, 4
        %v2572 = vadd.f32 %v2570, %v2571
        %v2573 = vrot.slane %v2572, 2
        %v2574 = vadd.f32 %v2572, %v2573
        %v2575 = vrot.slane %v2574, 1
        %v2576 = vadd.f32 %v2574, %v2575
        %v2577 = vadd.f32 %v2576, 0.0
        %v2578 = vld [vmem:[#allocation2 + $0x40] sm:$0xf]
        %v2579 = vld [vmem:[#allocation2 + $0x44] sm:$0xf]
        %v2580 = vld [vmem:[#allocation2 + $0x48] sm:$0xf]
        %v2581 = vld [vmem:[#allocation2 + $0x4c] sm:$0xf]
        %v2582 = vld [vmem:[#allocation2 + $0x50] sm:$0xf]
        %v2583 = vld [vmem:[#allocation2 + $0x54] sm:$0xf]
        %v2584 = vld [vmem:[#allocation2 + $0x58] sm:$0xf]
        %v2585 = vld [vmem:[#allocation2 + $0x5c] sm:$0xf]
        %v2586 = vld [vmem:[#allocation2 + $0x60] sm:$0xf]
        %v2587 = vld [vmem:[#allocation2 + $0x64] sm:$0xf]
        %v2588 = vld [vmem:[#allocation2 + $0x68] sm:$0xf]
        %v2589 = vld [vmem:[#allocation2 + $0x6c] sm:$0xf]
        %v2590 = vld [vmem:[#allocation2 + $0x70] sm:$0xf]
        %v2591 = vld [vmem:[#allocation2 + $0x74] sm:$0xf]
        %v2592 = vld [vmem:[#allocation2 + $0x78] sm:$0xf]
        %v2593 = vld [vmem:[#allocation2 + $0x7c] sm:$0xf]
        %v2594 = vld [vmem:[#allocation7] sm:$0xf]
        %v2595 = vld [vmem:[#allocation7 + $0x4] sm:$0xf]
        %v2596 = vld [vmem:[#allocation7 + $0x8] sm:$0xf]
        %v2597 = vld [vmem:[#allocation7 + $0xc] sm:$0xf]
        %v2598 = vld [vmem:[#allocation7 + $0x10] sm:$0xf]
        %v2599 = vld [vmem:[#allocation7 + $0x14] sm:$0xf]
        %v2600 = vld [vmem:[#allocation7 + $0x18] sm:$0xf]
        %v2601 = vld [vmem:[#allocation7 + $0x1c] sm:$0xf]
        %v2602 = vld [vmem:[%s471 + $0x40] sm:$0xf]
        %v2603 = vld [vmem:[%s471 + $0x44] sm:$0xf]
        %v2604 = vld [vmem:[%s471 + $0x48] sm:$0xf]
        %v2605 = vld [vmem:[%s471 + $0x4c] sm:$0xf]
        %v2606 = vld [vmem:[%s471 + $0x50] sm:$0xf]
        %v2607 = vld [vmem:[%s471 + $0x54] sm:$0xf]
        %v2608 = vld [vmem:[%s471 + $0x58] sm:$0xf]
        %v2609 = vld [vmem:[%s471 + $0x5c] sm:$0xf]
        %v2610 = vld [vmem:[%s471 + $0x60] sm:$0xf]
        %v2611 = vld [vmem:[%s471 + $0x64] sm:$0xf]
        %v2612 = vld [vmem:[%s471 + $0x68] sm:$0xf]
        %v2613 = vld [vmem:[%s471 + $0x6c] sm:$0xf]
        %v2614 = vld [vmem:[%s471 + $0x70] sm:$0xf]
        %v2615 = vld [vmem:[%s471 + $0x74] sm:$0xf]
        %v2616 = vld [vmem:[%s471 + $0x78] sm:$0xf]
        %v2617 = vld [vmem:[%s471 + $0x7c] sm:$0xf]
        %v2618 = vld [vmem:[%s940] sm:$0xf]
        %v2619 = vld [vmem:[%s940 + $0x4] sm:$0xf]
        %v2620 = vld [vmem:[%s940 + $0x8] sm:$0xf]
        %v2621 = vld [vmem:[%s940 + $0xc] sm:$0xf]
        %v2622 = vld [vmem:[%s940 + $0x10] sm:$0xf]
        %v2623 = vld [vmem:[%s940 + $0x14] sm:$0xf]
        %v2624 = vld [vmem:[%s940 + $0x18] sm:$0xf]
        %v2625 = vld [vmem:[%s940 + $0x1c] sm:$0xf]
        %v2642 = vunpack.c.l.b16 %v2602
        %v2643 = vunpack.c.l.b16 %v2603
        %v2644 = vunpack.c.l.b16 %v2604
        %v2645 = vunpack.c.l.b16 %v2605
        %v2646 = vunpack.c.l.b16 %v2606
        %v2647 = vunpack.c.l.b16 %v2607
        %v2648 = vunpack.c.l.b16 %v2608
        %v2649 = vunpack.c.l.b16 %v2609
        %v2650 = vunpack.c.l.b16 %v2610
        %v2651 = vunpack.c.l.b16 %v2611
        %v2652 = vunpack.c.l.b16 %v2612
        %v2653 = vunpack.c.l.b16 %v2613
        %v2654 = vunpack.c.l.b16 %v2614
        %v2655 = vunpack.c.l.b16 %v2615
        %v2656 = vunpack.c.l.b16 %v2616
        %v2657 = vunpack.c.l.b16 %v2617
        %v2658 = vpack.c.b16 %v2643, %v2642
        %v2659 = vpack.c.b16 %v2645, %v2644
        %v2660 = vpack.c.b16 %v2647, %v2646
        %v2661 = vpack.c.b16 %v2649, %v2648
        %v2662 = vpack.c.b16 %v2651, %v2650
        %v2663 = vpack.c.b16 %v2653, %v2652
        %v2664 = vpack.c.b16 %v2655, %v2654
        %v2665 = vpack.c.b16 %v2657, %v2656
        %v2674 = vunpack.c.l.b16 %v2618
        %v2675 = vunpack.c.l.b16 %v2619
        %v2676 = vunpack.c.l.b16 %v2620
        %v2677 = vunpack.c.l.b16 %v2621
        %v2678 = vunpack.c.l.b16 %v2622
        %v2679 = vunpack.c.l.b16 %v2623
        %v2680 = vunpack.c.l.b16 %v2624
        %v2681 = vunpack.c.l.b16 %v2625
        %v2682 = vpack.c.b16 %v2675, %v2674
        %v2683 = vpack.c.b16 %v2677, %v2676
        %v2684 = vpack.c.b16 %v2679, %v2678
        %v2685 = vpack.c.b16 %v2681, %v2680
        %v2691 = vsel %vm1013, %v2658, 0
        %v2694 = vsel %vm1013, %v2659, 0
        %v2697 = vsel %vm1013, %v2660, 0
        %v2700 = vsel %vm1013, %v2661, 0
        %v2703 = vsel %vm1013, %v2662, 0
        %v2706 = vsel %vm1013, %v2663, 0
        %v2709 = vsel %vm1013, %v2664, 0
        %v2712 = vsel %vm1013, %v2665, 0
        %2714 = vmatpush.bf16.msra.mxu0 0
        %2715 = vmatpush.bf16.msra.mxu0 0
        %2716 = vmatpush.bf16.msra.mxu0 0
        %2717 = vmatpush.bf16.msra.mxu0 0
        %2718 = vmatpush.bf16.msra.mxu0 %v2685
        %2719 = vmatpush.bf16.msra.mxu0 %v2684
        %2720 = vmatpush.bf16.msra.mxu0 %v2683
        %2721 = vmatpush.bf16.msra.mxu0 %v2682
        %2722 = vmatmul.bf16.gmra.mxu0 %v2691
        %v2723 = vpop.f32.mrf.mxu0
        %v2724 = vadd.f32 0.0, %v2723
        %v2725 = vpop.f32.mrf.mxu0
        %v2726 = vadd.f32 0.0, %v2725
        %2727 = vmatmul.bf16.gmra.mxu0 %v2694
        %v2728 = vpop.f32.mrf.mxu0
        %v2729 = vadd.f32 0.0, %v2728
        %v2730 = vpop.f32.mrf.mxu0
        %v2731 = vadd.f32 0.0, %v2730
        %2732 = vmatmul.bf16.gmra.mxu0 %v2697
        %v2733 = vpop.f32.mrf.mxu0
        %v2734 = vadd.f32 0.0, %v2733
        %v2735 = vpop.f32.mrf.mxu0
        %v2736 = vadd.f32 0.0, %v2735
        %2737 = vmatmul.bf16.gmra.mxu0 %v2700
        %v2738 = vpop.f32.mrf.mxu0
        %v2739 = vadd.f32 0.0, %v2738
        %v2740 = vpop.f32.mrf.mxu0
        %v2741 = vadd.f32 0.0, %v2740
        %2742 = vmatmul.bf16.gmra.mxu0 %v2703
        %v2743 = vpop.f32.mrf.mxu0
        %v2744 = vadd.f32 0.0, %v2743
        %v2745 = vpop.f32.mrf.mxu0
        %v2746 = vadd.f32 0.0, %v2745
        %2747 = vmatmul.bf16.gmra.mxu0 %v2706
        %v2748 = vpop.f32.mrf.mxu0
        %v2749 = vadd.f32 0.0, %v2748
        %v2750 = vpop.f32.mrf.mxu0
        %v2751 = vadd.f32 0.0, %v2750
        %2752 = vmatmul.bf16.gmra.mxu0 %v2709
        %v2753 = vpop.f32.mrf.mxu0
        %v2754 = vadd.f32 0.0, %v2753
        %v2755 = vpop.f32.mrf.mxu0
        %v2756 = vadd.f32 0.0, %v2755
        %2757 = vmatmul.bf16.gmra.mxu0 %v2712
        %v2758 = vpop.f32.mrf.mxu0
        %v2759 = vadd.f32 0.0, %v2758
        %v2760 = vpop.f32.mrf.mxu0
        %v2761 = vadd.f32 0.0, %v2760
        %2762 = vdwg.mxu0
        %v2779 = vunpack.c.l.b16 %v2578
        %v2780 = vunpack.c.l.b16 %v2579
        %v2781 = vunpack.c.l.b16 %v2580
        %v2782 = vunpack.c.l.b16 %v2581
        %v2783 = vunpack.c.l.b16 %v2582
        %v2784 = vunpack.c.l.b16 %v2583
        %v2785 = vunpack.c.l.b16 %v2584
        %v2786 = vunpack.c.l.b16 %v2585
        %v2787 = vunpack.c.l.b16 %v2586
        %v2788 = vunpack.c.l.b16 %v2587
        %v2789 = vunpack.c.l.b16 %v2588
        %v2790 = vunpack.c.l.b16 %v2589
        %v2791 = vunpack.c.l.b16 %v2590
        %v2792 = vunpack.c.l.b16 %v2591
        %v2793 = vunpack.c.l.b16 %v2592
        %v2794 = vunpack.c.l.b16 %v2593
        %v2795 = vpack.c.b16 %v2780, %v2779
        %v2796 = vpack.c.b16 %v2782, %v2781
        %v2797 = vpack.c.b16 %v2784, %v2783
        %v2798 = vpack.c.b16 %v2786, %v2785
        %v2799 = vpack.c.b16 %v2788, %v2787
        %v2800 = vpack.c.b16 %v2790, %v2789
        %v2801 = vpack.c.b16 %v2792, %v2791
        %v2802 = vpack.c.b16 %v2794, %v2793
        %v2811 = vunpack.c.l.b16 %v2594
        %v2812 = vunpack.c.l.b16 %v2595
        %v2813 = vunpack.c.l.b16 %v2596
        %v2814 = vunpack.c.l.b16 %v2597
        %v2815 = vunpack.c.l.b16 %v2598
        %v2816 = vunpack.c.l.b16 %v2599
        %v2817 = vunpack.c.l.b16 %v2600
        %v2818 = vunpack.c.l.b16 %v2601
        %v2819 = vpack.c.b16 %v2812, %v2811
        %v2820 = vpack.c.b16 %v2814, %v2813
        %v2821 = vpack.c.b16 %v2816, %v2815
        %v2822 = vpack.c.b16 %v2818, %v2817
        %v2828 = vsel %vm1013, %v2795, 0
        %v2831 = vsel %vm1013, %v2796, 0
        %v2834 = vsel %vm1013, %v2797, 0
        %v2837 = vsel %vm1013, %v2798, 0
        %v2840 = vsel %vm1013, %v2799, 0
        %v2843 = vsel %vm1013, %v2800, 0
        %v2846 = vsel %vm1013, %v2801, 0
        %v2849 = vsel %vm1013, %v2802, 0
        %2851 = vmatpush.bf16.msra.mxu0 0
        %2852 = vmatpush.bf16.msra.mxu0 0
        %2853 = vmatpush.bf16.msra.mxu0 0
        %2854 = vmatpush.bf16.msra.mxu0 0
        %2855 = vmatpush.bf16.msra.mxu0 %v2822
        %2856 = vmatpush.bf16.msra.mxu0 %v2821
        %2857 = vmatpush.bf16.msra.mxu0 %v2820
        %2858 = vmatpush.bf16.msra.mxu0 %v2819
        %2859 = vmatmul.bf16.gmra.mxu0 %v2828
        %v2860 = vpop.f32.mrf.mxu0
        %v2861 = vadd.f32 %v2724, %v2860
        %v2862 = vpop.f32.mrf.mxu0
        %v2863 = vadd.f32 %v2726, %v2862
        %2864 = vmatmul.bf16.gmra.mxu0 %v2831
        %v2865 = vpop.f32.mrf.mxu0
        %v2866 = vadd.f32 %v2729, %v2865
        %v2867 = vpop.f32.mrf.mxu0
        %v2868 = vadd.f32 %v2731, %v2867
        %2869 = vmatmul.bf16.gmra.mxu0 %v2834
        %v2870 = vpop.f32.mrf.mxu0
        %v2871 = vadd.f32 %v2734, %v2870
        %v2872 = vpop.f32.mrf.mxu0
        %v2873 = vadd.f32 %v2736, %v2872
        %2874 = vmatmul.bf16.gmra.mxu0 %v2837
        %v2875 = vpop.f32.mrf.mxu0
        %v2876 = vadd.f32 %v2739, %v2875
        %v2877 = vpop.f32.mrf.mxu0
        %v2878 = vadd.f32 %v2741, %v2877
        %2879 = vmatmul.bf16.gmra.mxu0 %v2840
        %v2880 = vpop.f32.mrf.mxu0
        %v2881 = vadd.f32 %v2744, %v2880
        %v2882 = vpop.f32.mrf.mxu0
        %v2883 = vadd.f32 %v2746, %v2882
        %2884 = vmatmul.bf16.gmra.mxu0 %v2843
        %v2885 = vpop.f32.mrf.mxu0
        %v2886 = vadd.f32 %v2749, %v2885
        %v2887 = vpop.f32.mrf.mxu0
        %v2888 = vadd.f32 %v2751, %v2887
        %2889 = vmatmul.bf16.gmra.mxu0 %v2846
        %v2890 = vpop.f32.mrf.mxu0
        %v2891 = vadd.f32 %v2754, %v2890
        %v2892 = vpop.f32.mrf.mxu0
        %v2893 = vadd.f32 %v2756, %v2892
        %2894 = vmatmul.bf16.gmra.mxu0 %v2849
        %v2895 = vpop.f32.mrf.mxu0
        %v2896 = vadd.f32 %v2759, %v2895
        %v2897 = vpop.f32.mrf.mxu0
        %v2898 = vadd.f32 %v2761, %v2897
        %2899 = vdwg.mxu0
        %v2900 = vld [vmem:[%s476 + $0x40] sm:$0xf]
        %v2901 = vld [vmem:[%s476 + $0x44] sm:$0xf]
        %v2902 = vld [vmem:[%s476 + $0x48] sm:$0xf]
        %v2903 = vld [vmem:[%s476 + $0x4c] sm:$0xf]
        %v2904 = vld [vmem:[%s476 + $0x50] sm:$0xf]
        %v2905 = vld [vmem:[%s476 + $0x54] sm:$0xf]
        %v2906 = vld [vmem:[%s476 + $0x58] sm:$0xf]
        %v2907 = vld [vmem:[%s476 + $0x5c] sm:$0xf]
        %v2908 = vld [vmem:[%s476 + $0x60] sm:$0xf]
        %v2909 = vld [vmem:[%s476 + $0x64] sm:$0xf]
        %v2910 = vld [vmem:[%s476 + $0x68] sm:$0xf]
        %v2911 = vld [vmem:[%s476 + $0x6c] sm:$0xf]
        %v2912 = vld [vmem:[%s476 + $0x70] sm:$0xf]
        %v2913 = vld [vmem:[%s476 + $0x74] sm:$0xf]
        %v2914 = vld [vmem:[%s476 + $0x78] sm:$0xf]
        %v2915 = vld [vmem:[%s476 + $0x7c] sm:$0xf]
        %v2916 = vld [vmem:[%s1240] sm:$0xf]
        %v2917 = vld [vmem:[%s1240 + $0x4] sm:$0xf]
        %v2918 = vld [vmem:[%s1240 + $0x8] sm:$0xf]
        %v2919 = vld [vmem:[%s1240 + $0xc] sm:$0xf]
        %v2920 = vld [vmem:[%s1240 + $0x10] sm:$0xf]
        %v2921 = vld [vmem:[%s1240 + $0x14] sm:$0xf]
        %v2922 = vld [vmem:[%s1240 + $0x18] sm:$0xf]
        %v2923 = vld [vmem:[%s1240 + $0x1c] sm:$0xf]
        %v2940 = vunpack.c.l.b16 %v2900
        %v2941 = vunpack.c.l.b16 %v2901
        %v2942 = vunpack.c.l.b16 %v2902
        %v2943 = vunpack.c.l.b16 %v2903
        %v2944 = vunpack.c.l.b16 %v2904
        %v2945 = vunpack.c.l.b16 %v2905
        %v2946 = vunpack.c.l.b16 %v2906
        %v2947 = vunpack.c.l.b16 %v2907
        %v2948 = vunpack.c.l.b16 %v2908
        %v2949 = vunpack.c.l.b16 %v2909
        %v2950 = vunpack.c.l.b16 %v2910
        %v2951 = vunpack.c.l.b16 %v2911
        %v2952 = vunpack.c.l.b16 %v2912
        %v2953 = vunpack.c.l.b16 %v2913
        %v2954 = vunpack.c.l.b16 %v2914
        %v2955 = vunpack.c.l.b16 %v2915
        %v2956 = vpack.c.b16 %v2941, %v2940
        %v2957 = vpack.c.b16 %v2943, %v2942
        %v2958 = vpack.c.b16 %v2945, %v2944
        %v2959 = vpack.c.b16 %v2947, %v2946
        %v2960 = vpack.c.b16 %v2949, %v2948
        %v2961 = vpack.c.b16 %v2951, %v2950
        %v2962 = vpack.c.b16 %v2953, %v2952
        %v2963 = vpack.c.b16 %v2955, %v2954
        %v2972 = vunpack.c.l.b16 %v2916
        %v2973 = vunpack.c.l.b16 %v2917
        %v2974 = vunpack.c.l.b16 %v2918
        %v2975 = vunpack.c.l.b16 %v2919
        %v2976 = vunpack.c.l.b16 %v2920
        %v2977 = vunpack.c.l.b16 %v2921
        %v2978 = vunpack.c.l.b16 %v2922
        %v2979 = vunpack.c.l.b16 %v2923
        %v2980 = vpack.c.b16 %v2973, %v2972
        %v2981 = vpack.c.b16 %v2975, %v2974
        %v2982 = vpack.c.b16 %v2977, %v2976
        %v2983 = vpack.c.b16 %v2979, %v2978
        %v2989 = vsel %vm1013, %v2956, 0
        %v2992 = vsel %vm1013, %v2957, 0
        %v2995 = vsel %vm1013, %v2958, 0
        %v2998 = vsel %vm1013, %v2959, 0
        %v3001 = vsel %vm1013, %v2960, 0
        %v3004 = vsel %vm1013, %v2961, 0
        %v3007 = vsel %vm1013, %v2962, 0
        %v3010 = vsel %vm1013, %v2963, 0
        %3012 = vmatpush.bf16.msra.mxu0 0
        %3013 = vmatpush.bf16.msra.mxu0 0
        %3014 = vmatpush.bf16.msra.mxu0 0
        %3015 = vmatpush.bf16.msra.mxu0 0
        %3016 = vmatpush.bf16.msra.mxu0 %v2983
        %3017 = vmatpush.bf16.msra.mxu0 %v2982
        %3018 = vmatpush.bf16.msra.mxu0 %v2981
        %3019 = vmatpush.bf16.msra.mxu0 %v2980
        %3020 = vmatmul.bf16.gmra.mxu0 %v2989
        %v3021 = vpop.f32.mrf.mxu0
        %v3022 = vadd.f32 0.0, %v3021
        %v3023 = vpop.f32.mrf.mxu0
        %v3024 = vadd.f32 0.0, %v3023
        %3025 = vmatmul.bf16.gmra.mxu0 %v2992
        %v3026 = vpop.f32.mrf.mxu0
        %v3027 = vadd.f32 0.0, %v3026
        %v3028 = vpop.f32.mrf.mxu0
        %v3029 = vadd.f32 0.0, %v3028
        %3030 = vmatmul.bf16.gmra.mxu0 %v2995
        %v3031 = vpop.f32.mrf.mxu0
        %v3032 = vadd.f32 0.0, %v3031
        %v3033 = vpop.f32.mrf.mxu0
        %v3034 = vadd.f32 0.0, %v3033
        %3035 = vmatmul.bf16.gmra.mxu0 %v2998
        %v3036 = vpop.f32.mrf.mxu0
        %v3037 = vadd.f32 0.0, %v3036
        %v3038 = vpop.f32.mrf.mxu0
        %v3039 = vadd.f32 0.0, %v3038
        %3040 = vmatmul.bf16.gmra.mxu0 %v3001
        %v3041 = vpop.f32.mrf.mxu0
        %v3042 = vadd.f32 0.0, %v3041
        %v3043 = vpop.f32.mrf.mxu0
        %v3044 = vadd.f32 0.0, %v3043
        %3045 = vmatmul.bf16.gmra.mxu0 %v3004
        %v3046 = vpop.f32.mrf.mxu0
        %v3047 = vadd.f32 0.0, %v3046
        %v3048 = vpop.f32.mrf.mxu0
        %v3049 = vadd.f32 0.0, %v3048
        %3050 = vmatmul.bf16.gmra.mxu0 %v3007
        %v3051 = vpop.f32.mrf.mxu0
        %v3052 = vadd.f32 0.0, %v3051
        %v3053 = vpop.f32.mrf.mxu0
        %v3054 = vadd.f32 0.0, %v3053
        %3055 = vmatmul.bf16.gmra.mxu0 %v3010
        %v3056 = vpop.f32.mrf.mxu0
        %v3057 = vadd.f32 0.0, %v3056
        %v3058 = vpop.f32.mrf.mxu0
        %v3059 = vadd.f32 0.0, %v3058
        %3060 = vdwg.mxu0
        %v3061 = vadd.f32 %v2861, %v3022
        %v3062 = vadd.f32 %v2863, %v3024
        %v3063 = vadd.f32 %v2866, %v3027
        %v3064 = vadd.f32 %v2868, %v3029
        %v3065 = vadd.f32 %v2871, %v3032
        %v3066 = vadd.f32 %v2873, %v3034
        %v3067 = vadd.f32 %v2876, %v3037
        %v3068 = vadd.f32 %v2878, %v3039
        %v3069 = vadd.f32 %v2881, %v3042
        %v3070 = vadd.f32 %v2883, %v3044
        %v3071 = vadd.f32 %v2886, %v3047
        %v3072 = vadd.f32 %v2888, %v3049
        %v3073 = vadd.f32 %v2891, %v3052
        %v3074 = vadd.f32 %v2893, %v3054
        %v3075 = vadd.f32 %v2896, %v3057
        %v3076 = vadd.f32 %v2898, %v3059
        %v3077 = vld [vmem:[#allocation2 + $0x48] sm:$0xf]
        %v3078 = vld [vmem:[#allocation2 + $0x4c] sm:$0xf]
        %v3079 = vld [vmem:[#allocation2 + $0x50] sm:$0xf]
        %v3080 = vld [vmem:[#allocation2 + $0x54] sm:$0xf]
        %v3081 = vld [vmem:[#allocation2 + $0x58] sm:$0xf]
        %v3082 = vld [vmem:[#allocation2 + $0x5c] sm:$0xf]
        %v3083 = vld [vmem:[#allocation2 + $0x60] sm:$0xf]
        %v3084 = vld [vmem:[#allocation2 + $0x64] sm:$0xf]
        %v3085 = vld [vmem:[#allocation2 + $0x68] sm:$0xf]
        %v3086 = vld [vmem:[#allocation2 + $0x6c] sm:$0xf]
        %v3087 = vld [vmem:[#allocation2 + $0x70] sm:$0xf]
        %v3088 = vld [vmem:[#allocation2 + $0x74] sm:$0xf]
        %v3089 = vld [vmem:[#allocation2 + $0x78] sm:$0xf]
        %v3090 = vld [vmem:[#allocation2 + $0x7c] sm:$0xf]
        %v3091 = vld [vmem:[#allocation2 + $0x80] sm:$0xf]
        %v3092 = vld [vmem:[#allocation2 + $0x84] sm:$0xf]
        %v3093 = vld [vmem:[%s1418] sm:$0xf]
        %v3094 = vld [vmem:[%s1418 + $0x4] sm:$0xf]
        %v3095 = vld [vmem:[%s1418 + $0x8] sm:$0xf]
        %v3096 = vld [vmem:[%s1418 + $0xc] sm:$0xf]
        %v3097 = vld [vmem:[%s1418 + $0x10] sm:$0xf]
        %v3098 = vld [vmem:[%s1418 + $0x14] sm:$0xf]
        %v3099 = vld [vmem:[%s1418 + $0x18] sm:$0xf]
        %v3100 = vld [vmem:[%s1418 + $0x1c] sm:$0xf]
        %v3117 = vunpack.c.l.b16 %v3077
        %v3118 = vunpack.c.l.b16 %v3078
        %v3119 = vunpack.c.l.b16 %v3079
        %v3120 = vunpack.c.l.b16 %v3080
        %v3121 = vunpack.c.l.b16 %v3081
        %v3122 = vunpack.c.l.b16 %v3082
        %v3123 = vunpack.c.l.b16 %v3083
        %v3124 = vunpack.c.l.b16 %v3084
        %v3125 = vunpack.c.l.b16 %v3085
        %v3126 = vunpack.c.l.b16 %v3086
        %v3127 = vunpack.c.l.b16 %v3087
        %v3128 = vunpack.c.l.b16 %v3088
        %v3129 = vunpack.c.l.b16 %v3089
        %v3130 = vunpack.c.l.b16 %v3090
        %v3131 = vunpack.c.l.b16 %v3091
        %v3132 = vunpack.c.l.b16 %v3092
        %v3133 = vpack.c.b16 %v3118, %v3117
        %v3134 = vpack.c.b16 %v3120, %v3119
        %v3135 = vpack.c.b16 %v3122, %v3121
        %v3136 = vpack.c.b16 %v3124, %v3123
        %v3137 = vpack.c.b16 %v3126, %v3125
        %v3138 = vpack.c.b16 %v3128, %v3127
        %v3139 = vpack.c.b16 %v3130, %v3129
        %v3140 = vpack.c.b16 %v3132, %v3131
        %v3149 = vunpack.c.l.b16 %v3093
        %v3150 = vunpack.c.l.b16 %v3094
        %v3151 = vunpack.c.l.b16 %v3095
        %v3152 = vunpack.c.l.b16 %v3096
        %v3153 = vunpack.c.l.b16 %v3097
        %v3154 = vunpack.c.l.b16 %v3098
        %v3155 = vunpack.c.l.b16 %v3099
        %v3156 = vunpack.c.l.b16 %v3100
        %v3157 = vpack.c.b16 %v3150, %v3149
        %v3158 = vpack.c.b16 %v3152, %v3151
        %v3159 = vpack.c.b16 %v3154, %v3153
        %v3160 = vpack.c.b16 %v3156, %v3155
        %v3166 = vsel %vm1013, %v3133, 0
        %v3169 = vsel %vm1013, %v3134, 0
        %v3172 = vsel %vm1013, %v3135, 0
        %v3175 = vsel %vm1013, %v3136, 0
        %v3178 = vsel %vm1013, %v3137, 0
        %v3181 = vsel %vm1013, %v3138, 0
        %v3184 = vsel %vm1013, %v3139, 0
        %v3187 = vsel %vm1013, %v3140, 0
        %3189 = vmatpush.bf16.msra.mxu0 0
        %3190 = vmatpush.bf16.msra.mxu0 0
        %3191 = vmatpush.bf16.msra.mxu0 0
        %3192 = vmatpush.bf16.msra.mxu0 0
        %3193 = vmatpush.bf16.msra.mxu0 %v3160
        %3194 = vmatpush.bf16.msra.mxu0 %v3159
        %3195 = vmatpush.bf16.msra.mxu0 %v3158
        %3196 = vmatpush.bf16.msra.mxu0 %v3157
        %3197 = vmatmul.bf16.gmra.mxu0 %v3166
        %v3198 = vpop.f32.mrf.mxu0
        %v3199 = vadd.f32 0.0, %v3198
        %v3200 = vpop.f32.mrf.mxu0
        %v3201 = vadd.f32 0.0, %v3200
        %3202 = vmatmul.bf16.gmra.mxu0 %v3169
        %v3203 = vpop.f32.mrf.mxu0
        %v3204 = vadd.f32 0.0, %v3203
        %v3205 = vpop.f32.mrf.mxu0
        %v3206 = vadd.f32 0.0, %v3205
        %3207 = vmatmul.bf16.gmra.mxu0 %v3172
        %v3208 = vpop.f32.mrf.mxu0
        %v3209 = vadd.f32 0.0, %v3208
        %v3210 = vpop.f32.mrf.mxu0
        %v3211 = vadd.f32 0.0, %v3210
        %3212 = vmatmul.bf16.gmra.mxu0 %v3175
        %v3213 = vpop.f32.mrf.mxu0
        %v3214 = vadd.f32 0.0, %v3213
        %v3215 = vpop.f32.mrf.mxu0
        %v3216 = vadd.f32 0.0, %v3215
        %3217 = vmatmul.bf16.gmra.mxu0 %v3178
        %v3218 = vpop.f32.mrf.mxu0
        %v3219 = vadd.f32 0.0, %v3218
        %v3220 = vpop.f32.mrf.mxu0
        %v3221 = vadd.f32 0.0, %v3220
        %3222 = vmatmul.bf16.gmra.mxu0 %v3181
        %v3223 = vpop.f32.mrf.mxu0
        %v3224 = vadd.f32 0.0, %v3223
        %v3225 = vpop.f32.mrf.mxu0
        %v3226 = vadd.f32 0.0, %v3225
        %3227 = vmatmul.bf16.gmra.mxu0 %v3184
        %v3228 = vpop.f32.mrf.mxu0
        %v3229 = vadd.f32 0.0, %v3228
        %v3230 = vpop.f32.mrf.mxu0
        %v3231 = vadd.f32 0.0, %v3230
        %3232 = vmatmul.bf16.gmra.mxu0 %v3187
        %v3233 = vpop.f32.mrf.mxu0
        %v3234 = vadd.f32 0.0, %v3233
        %v3235 = vpop.f32.mrf.mxu0
        %v3236 = vadd.f32 0.0, %v3235
        %3237 = vdwg.mxu0
        %v3238 = vadd.f32 %v3061, %v3199
        %v3239 = vadd.f32 %v3062, %v3201
        %v3240 = vadd.f32 %v3063, %v3204
        %v3241 = vadd.f32 %v3064, %v3206
        %v3242 = vadd.f32 %v3065, %v3209
        %v3243 = vadd.f32 %v3066, %v3211
        %v3244 = vadd.f32 %v3067, %v3214
        %v3245 = vadd.f32 %v3068, %v3216
        %v3246 = vadd.f32 %v3069, %v3219
        %v3247 = vadd.f32 %v3070, %v3221
        %v3248 = vadd.f32 %v3071, %v3224
        %v3249 = vadd.f32 %v3072, %v3226
        %v3250 = vadd.f32 %v3073, %v3229
        %v3251 = vadd.f32 %v3074, %v3231
        %v3252 = vadd.f32 %v3075, %v3234
        %v3253 = vadd.f32 %v3076, %v3236
        %v3254 = vld [vmem:[%s471 + $0x48] sm:$0xf]
        %v3255 = vld [vmem:[%s471 + $0x4c] sm:$0xf]
        %v3256 = vld [vmem:[%s471 + $0x50] sm:$0xf]
        %v3257 = vld [vmem:[%s471 + $0x54] sm:$0xf]
        %v3258 = vld [vmem:[%s471 + $0x58] sm:$0xf]
        %v3259 = vld [vmem:[%s471 + $0x5c] sm:$0xf]
        %v3260 = vld [vmem:[%s471 + $0x60] sm:$0xf]
        %v3261 = vld [vmem:[%s471 + $0x64] sm:$0xf]
        %v3262 = vld [vmem:[%s471 + $0x68] sm:$0xf]
        %v3263 = vld [vmem:[%s471 + $0x6c] sm:$0xf]
        %v3264 = vld [vmem:[%s471 + $0x70] sm:$0xf]
        %v3265 = vld [vmem:[%s471 + $0x74] sm:$0xf]
        %v3266 = vld [vmem:[%s471 + $0x78] sm:$0xf]
        %v3267 = vld [vmem:[%s471 + $0x7c] sm:$0xf]
        %v3268 = vld [vmem:[%s471 + $0x80] sm:$0xf]
        %v3269 = vld [vmem:[%s471 + $0x84] sm:$0xf]
        %v3270 = vld [vmem:[%s1596] sm:$0xf]
        %v3271 = vld [vmem:[%s1596 + $0x4] sm:$0xf]
        %v3272 = vld [vmem:[%s1596 + $0x8] sm:$0xf]
        %v3273 = vld [vmem:[%s1596 + $0xc] sm:$0xf]
        %v3274 = vld [vmem:[%s1596 + $0x10] sm:$0xf]
        %v3275 = vld [vmem:[%s1596 + $0x14] sm:$0xf]
        %v3276 = vld [vmem:[%s1596 + $0x18] sm:$0xf]
        %v3277 = vld [vmem:[%s1596 + $0x1c] sm:$0xf]
        %v3294 = vunpack.c.l.b16 %v3254
        %v3295 = vunpack.c.l.b16 %v3255
        %v3296 = vunpack.c.l.b16 %v3256
        %v3297 = vunpack.c.l.b16 %v3257
        %v3298 = vunpack.c.l.b16 %v3258
        %v3299 = vunpack.c.l.b16 %v3259
        %v3300 = vunpack.c.l.b16 %v3260
        %v3301 = vunpack.c.l.b16 %v3261
        %v3302 = vunpack.c.l.b16 %v3262
        %v3303 = vunpack.c.l.b16 %v3263
        %v3304 = vunpack.c.l.b16 %v3264
        %v3305 = vunpack.c.l.b16 %v3265
        %v3306 = vunpack.c.l.b16 %v3266
        %v3307 = vunpack.c.l.b16 %v3267
        %v3308 = vunpack.c.l.b16 %v3268
        %v3309 = vunpack.c.l.b16 %v3269
        %v3310 = vpack.c.b16 %v3295, %v3294
        %v3311 = vpack.c.b16 %v3297, %v3296
        %v3312 = vpack.c.b16 %v3299, %v3298
        %v3313 = vpack.c.b16 %v3301, %v3300
        %v3314 = vpack.c.b16 %v3303, %v3302
        %v3315 = vpack.c.b16 %v3305, %v3304
        %v3316 = vpack.c.b16 %v3307, %v3306
        %v3317 = vpack.c.b16 %v3309, %v3308
        %v3326 = vunpack.c.l.b16 %v3270
        %v3327 = vunpack.c.l.b16 %v3271
        %v3328 = vunpack.c.l.b16 %v3272
        %v3329 = vunpack.c.l.b16 %v3273
        %v3330 = vunpack.c.l.b16 %v3274
        %v3331 = vunpack.c.l.b16 %v3275
        %v3332 = vunpack.c.l.b16 %v3276
        %v3333 = vunpack.c.l.b16 %v3277
        %v3334 = vpack.c.b16 %v3327, %v3326
        %v3335 = vpack.c.b16 %v3329, %v3328
        %v3336 = vpack.c.b16 %v3331, %v3330
        %v3337 = vpack.c.b16 %v3333, %v3332
        %v3343 = vsel %vm1013, %v3310, 0
        %v3346 = vsel %vm1013, %v3311, 0
        %v3349 = vsel %vm1013, %v3312, 0
        %v3352 = vsel %vm1013, %v3313, 0
        %v3355 = vsel %vm1013, %v3314, 0
        %v3358 = vsel %vm1013, %v3315, 0
        %v3361 = vsel %vm1013, %v3316, 0
        %v3364 = vsel %vm1013, %v3317, 0
        %3366 = vmatpush.bf16.msra.mxu0 0
        %3367 = vmatpush.bf16.msra.mxu0 0
        %3368 = vmatpush.bf16.msra.mxu0 0
        %3369 = vmatpush.bf16.msra.mxu0 0
        %3370 = vmatpush.bf16.msra.mxu0 %v3337
        %3371 = vmatpush.bf16.msra.mxu0 %v3336
        %3372 = vmatpush.bf16.msra.mxu0 %v3335
        %3373 = vmatpush.bf16.msra.mxu0 %v3334
        %3374 = vmatmul.bf16.gmra.mxu0 %v3343
        %v3375 = vpop.f32.mrf.mxu0
        %v3376 = vadd.f32 0.0, %v3375
        %v3377 = vpop.f32.mrf.mxu0
        %v3378 = vadd.f32 0.0, %v3377
        %3379 = vmatmul.bf16.gmra.mxu0 %v3346
        %v3380 = vpop.f32.mrf.mxu0
        %v3381 = vadd.f32 0.0, %v3380
        %v3382 = vpop.f32.mrf.mxu0
        %v3383 = vadd.f32 0.0, %v3382
        %3384 = vmatmul.bf16.gmra.mxu0 %v3349
        %v3385 = vpop.f32.mrf.mxu0
        %v3386 = vadd.f32 0.0, %v3385
        %v3387 = vpop.f32.mrf.mxu0
        %v3388 = vadd.f32 0.0, %v3387
        %3389 = vmatmul.bf16.gmra.mxu0 %v3352
        %v3390 = vpop.f32.mrf.mxu0
        %v3391 = vadd.f32 0.0, %v3390
        %v3392 = vpop.f32.mrf.mxu0
        %v3393 = vadd.f32 0.0, %v3392
        %3394 = vmatmul.bf16.gmra.mxu0 %v3355
        %v3395 = vpop.f32.mrf.mxu0
        %v3396 = vadd.f32 0.0, %v3395
        %v3397 = vpop.f32.mrf.mxu0
        %v3398 = vadd.f32 0.0, %v3397
        %3399 = vmatmul.bf16.gmra.mxu0 %v3358
        %v3400 = vpop.f32.mrf.mxu0
        %v3401 = vadd.f32 0.0, %v3400
        %v3402 = vpop.f32.mrf.mxu0
        %v3403 = vadd.f32 0.0, %v3402
        %3404 = vmatmul.bf16.gmra.mxu0 %v3361
        %v3405 = vpop.f32.mrf.mxu0
        %v3406 = vadd.f32 0.0, %v3405
        %v3407 = vpop.f32.mrf.mxu0
        %v3408 = vadd.f32 0.0, %v3407
        %3409 = vmatmul.bf16.gmra.mxu0 %v3364
        %v3410 = vpop.f32.mrf.mxu0
        %v3411 = vadd.f32 0.0, %v3410
        %v3412 = vpop.f32.mrf.mxu0
        %v3413 = vadd.f32 0.0, %v3412
        %3414 = vdwg.mxu0
        %v3415 = vadd.f32 %v3238, %v3376
        %v3416 = vadd.f32 %v3239, %v3378
        %v3417 = vadd.f32 %v3240, %v3381
        %v3418 = vadd.f32 %v3241, %v3383
        %v3419 = vadd.f32 %v3242, %v3386
        %v3420 = vadd.f32 %v3243, %v3388
        %v3421 = vadd.f32 %v3244, %v3391
        %v3422 = vadd.f32 %v3245, %v3393
        %v3423 = vadd.f32 %v3246, %v3396
        %v3424 = vadd.f32 %v3247, %v3398
        %v3425 = vadd.f32 %v3248, %v3401
        %v3426 = vadd.f32 %v3249, %v3403
        %v3427 = vadd.f32 %v3250, %v3406
        %v3428 = vadd.f32 %v3251, %v3408
        %v3429 = vadd.f32 %v3252, %v3411
        %v3430 = vadd.f32 %v3253, %v3413
        %v3431 = vld [vmem:[%s476 + $0x48] sm:$0xf]
        %v3432 = vld [vmem:[%s476 + $0x4c] sm:$0xf]
        %v3433 = vld [vmem:[%s476 + $0x50] sm:$0xf]
        %v3434 = vld [vmem:[%s476 + $0x54] sm:$0xf]
        %v3435 = vld [vmem:[%s476 + $0x58] sm:$0xf]
        %v3436 = vld [vmem:[%s476 + $0x5c] sm:$0xf]
        %v3437 = vld [vmem:[%s476 + $0x60] sm:$0xf]
        %v3438 = vld [vmem:[%s476 + $0x64] sm:$0xf]
        %v3439 = vld [vmem:[%s476 + $0x68] sm:$0xf]
        %v3440 = vld [vmem:[%s476 + $0x6c] sm:$0xf]
        %v3441 = vld [vmem:[%s476 + $0x70] sm:$0xf]
        %v3442 = vld [vmem:[%s476 + $0x74] sm:$0xf]
        %v3443 = vld [vmem:[%s476 + $0x78] sm:$0xf]
        %v3444 = vld [vmem:[%s476 + $0x7c] sm:$0xf]
        %v3445 = vld [vmem:[%s476 + $0x80] sm:$0xf]
        %v3446 = vld [vmem:[%s476 + $0x84] sm:$0xf]
        %v3447 = vld [vmem:[%s1774] sm:$0xf]
        %v3448 = vld [vmem:[%s1774 + $0x4] sm:$0xf]
        %v3449 = vld [vmem:[%s1774 + $0x8] sm:$0xf]
        %v3450 = vld [vmem:[%s1774 + $0xc] sm:$0xf]
        %v3451 = vld [vmem:[%s1774 + $0x10] sm:$0xf]
        %v3452 = vld [vmem:[%s1774 + $0x14] sm:$0xf]
        %v3453 = vld [vmem:[%s1774 + $0x18] sm:$0xf]
        %v3454 = vld [vmem:[%s1774 + $0x1c] sm:$0xf]
        %v3471 = vunpack.c.l.b16 %v3431
        %v3472 = vunpack.c.l.b16 %v3432
        %v3473 = vunpack.c.l.b16 %v3433
        %v3474 = vunpack.c.l.b16 %v3434
        %v3475 = vunpack.c.l.b16 %v3435
        %v3476 = vunpack.c.l.b16 %v3436
        %v3477 = vunpack.c.l.b16 %v3437
        %v3478 = vunpack.c.l.b16 %v3438
        %v3479 = vunpack.c.l.b16 %v3439
        %v3480 = vunpack.c.l.b16 %v3440
        %v3481 = vunpack.c.l.b16 %v3441
        %v3482 = vunpack.c.l.b16 %v3442
        %v3483 = vunpack.c.l.b16 %v3443
        %v3484 = vunpack.c.l.b16 %v3444
        %v3485 = vunpack.c.l.b16 %v3445
        %v3486 = vunpack.c.l.b16 %v3446
        %v3487 = vpack.c.b16 %v3472, %v3471
        %v3488 = vpack.c.b16 %v3474, %v3473
        %v3489 = vpack.c.b16 %v3476, %v3475
        %v3490 = vpack.c.b16 %v3478, %v3477
        %v3491 = vpack.c.b16 %v3480, %v3479
        %v3492 = vpack.c.b16 %v3482, %v3481
        %v3493 = vpack.c.b16 %v3484, %v3483
        %v3494 = vpack.c.b16 %v3486, %v3485
        %v3503 = vunpack.c.l.b16 %v3447
        %v3504 = vunpack.c.l.b16 %v3448
        %v3505 = vunpack.c.l.b16 %v3449
        %v3506 = vunpack.c.l.b16 %v3450
        %v3507 = vunpack.c.l.b16 %v3451
        %v3508 = vunpack.c.l.b16 %v3452
        %v3509 = vunpack.c.l.b16 %v3453
        %v3510 = vunpack.c.l.b16 %v3454
        %v3511 = vpack.c.b16 %v3504, %v3503
        %v3512 = vpack.c.b16 %v3506, %v3505
        %v3513 = vpack.c.b16 %v3508, %v3507
        %v3514 = vpack.c.b16 %v3510, %v3509
        %v3520 = vsel %vm1013, %v3487, 0
        %v3523 = vsel %vm1013, %v3488, 0
        %v3526 = vsel %vm1013, %v3489, 0
        %v3529 = vsel %vm1013, %v3490, 0
        %v3532 = vsel %vm1013, %v3491, 0
        %v3535 = vsel %vm1013, %v3492, 0
        %v3538 = vsel %vm1013, %v3493, 0
        %v3541 = vsel %vm1013, %v3494, 0
        %3543 = vmatpush.bf16.msra.mxu0 0
        %3544 = vmatpush.bf16.msra.mxu0 0
        %3545 = vmatpush.bf16.msra.mxu0 0
        %3546 = vmatpush.bf16.msra.mxu0 0
        %3547 = vmatpush.bf16.msra.mxu0 %v3514
        %3548 = vmatpush.bf16.msra.mxu0 %v3513
        %3549 = vmatpush.bf16.msra.mxu0 %v3512
        %3550 = vmatpush.bf16.msra.mxu0 %v3511
        %3551 = vmatmul.bf16.gmra.mxu0 %v3520
        %v3552 = vpop.f32.mrf.mxu0
        %v3553 = vadd.f32 0.0, %v3552
        %v3554 = vpop.f32.mrf.mxu0
        %v3555 = vadd.f32 0.0, %v3554
        %3556 = vmatmul.bf16.gmra.mxu0 %v3523
        %v3557 = vpop.f32.mrf.mxu0
        %v3558 = vadd.f32 0.0, %v3557
        %v3559 = vpop.f32.mrf.mxu0
        %v3560 = vadd.f32 0.0, %v3559
        %3561 = vmatmul.bf16.gmra.mxu0 %v3526
        %v3562 = vpop.f32.mrf.mxu0
        %v3563 = vadd.f32 0.0, %v3562
        %v3564 = vpop.f32.mrf.mxu0
        %v3565 = vadd.f32 0.0, %v3564
        %3566 = vmatmul.bf16.gmra.mxu0 %v3529
        %v3567 = vpop.f32.mrf.mxu0
        %v3568 = vadd.f32 0.0, %v3567
        %v3569 = vpop.f32.mrf.mxu0
        %v3570 = vadd.f32 0.0, %v3569
        %3571 = vmatmul.bf16.gmra.mxu0 %v3532
        %v3572 = vpop.f32.mrf.mxu0
        %v3573 = vadd.f32 0.0, %v3572
        %v3574 = vpop.f32.mrf.mxu0
        %v3575 = vadd.f32 0.0, %v3574
        %3576 = vmatmul.bf16.gmra.mxu0 %v3535
        %v3577 = vpop.f32.mrf.mxu0
        %v3578 = vadd.f32 0.0, %v3577
        %v3579 = vpop.f32.mrf.mxu0
        %v3580 = vadd.f32 0.0, %v3579
        %3581 = vmatmul.bf16.gmra.mxu0 %v3538
        %v3582 = vpop.f32.mrf.mxu0
        %v3583 = vadd.f32 0.0, %v3582
        %v3584 = vpop.f32.mrf.mxu0
        %v3585 = vadd.f32 0.0, %v3584
        %3586 = vmatmul.bf16.gmra.mxu0 %v3541
        %v3587 = vpop.f32.mrf.mxu0
        %v3588 = vadd.f32 0.0, %v3587
        %v3589 = vpop.f32.mrf.mxu0
        %v3590 = vadd.f32 0.0, %v3589
        %3591 = vdwg.mxu0
        %v3592 = vadd.f32 %v3415, %v3553
        %v3593 = vadd.f32 %v3416, %v3555
        %v3594 = vadd.f32 %v3417, %v3558
        %v3595 = vadd.f32 %v3418, %v3560
        %v3596 = vadd.f32 %v3419, %v3563
        %v3597 = vadd.f32 %v3420, %v3565
        %v3598 = vadd.f32 %v3421, %v3568
        %v3599 = vadd.f32 %v3422, %v3570
        %v3600 = vadd.f32 %v3423, %v3573
        %v3601 = vadd.f32 %v3424, %v3575
        %v3602 = vadd.f32 %v3425, %v3578
        %v3603 = vadd.f32 %v3426, %v3580
        %v3604 = vadd.f32 %v3427, %v3583
        %v3605 = vadd.f32 %v3428, %v3585
        %v3606 = vadd.f32 %v3429, %v3588
        %v3607 = vadd.f32 %v3430, %v3590
        %v3608 = vld [vmem:[#allocation2 + $0x50] sm:$0xf]
        %v3609 = vld [vmem:[#allocation2 + $0x54] sm:$0xf]
        %v3610 = vld [vmem:[#allocation2 + $0x58] sm:$0xf]
        %v3611 = vld [vmem:[#allocation2 + $0x5c] sm:$0xf]
        %v3612 = vld [vmem:[#allocation2 + $0x60] sm:$0xf]
        %v3613 = vld [vmem:[#allocation2 + $0x64] sm:$0xf]
        %v3614 = vld [vmem:[#allocation2 + $0x68] sm:$0xf]
        %v3615 = vld [vmem:[#allocation2 + $0x6c] sm:$0xf]
        %v3616 = vld [vmem:[#allocation2 + $0x70] sm:$0xf]
        %v3617 = vld [vmem:[#allocation2 + $0x74] sm:$0xf]
        %v3618 = vld [vmem:[#allocation2 + $0x78] sm:$0xf]
        %v3619 = vld [vmem:[#allocation2 + $0x7c] sm:$0xf]
        %v3620 = vld [vmem:[#allocation2 + $0x80] sm:$0xf]
        %v3621 = vld [vmem:[#allocation2 + $0x84] sm:$0xf]
        %v3622 = vld [vmem:[#allocation2 + $0x88] sm:$0xf]
        %v3623 = vld [vmem:[#allocation2 + $0x8c] sm:$0xf]
        %v3624 = vld [vmem:[%s1952] sm:$0xf]
        %v3625 = vld [vmem:[%s1952 + $0x4] sm:$0xf]
        %v3626 = vld [vmem:[%s1952 + $0x8] sm:$0xf]
        %v3627 = vld [vmem:[%s1952 + $0xc] sm:$0xf]
        %v3628 = vld [vmem:[%s1952 + $0x10] sm:$0xf]
        %v3629 = vld [vmem:[%s1952 + $0x14] sm:$0xf]
        %v3630 = vld [vmem:[%s1952 + $0x18] sm:$0xf]
        %v3631 = vld [vmem:[%s1952 + $0x1c] sm:$0xf]
        %v3648 = vunpack.c.l.b16 %v3608
        %v3649 = vunpack.c.l.b16 %v3609
        %v3650 = vunpack.c.l.b16 %v3610
        %v3651 = vunpack.c.l.b16 %v3611
        %v3652 = vunpack.c.l.b16 %v3612
        %v3653 = vunpack.c.l.b16 %v3613
        %v3654 = vunpack.c.l.b16 %v3614
        %v3655 = vunpack.c.l.b16 %v3615
        %v3656 = vunpack.c.l.b16 %v3616
        %v3657 = vunpack.c.l.b16 %v3617
        %v3658 = vunpack.c.l.b16 %v3618
        %v3659 = vunpack.c.l.b16 %v3619
        %v3660 = vunpack.c.l.b16 %v3620
        %v3661 = vunpack.c.l.b16 %v3621
        %v3662 = vunpack.c.l.b16 %v3622
        %v3663 = vunpack.c.l.b16 %v3623
        %v3664 = vpack.c.b16 %v3649, %v3648
        %v3665 = vpack.c.b16 %v3651, %v3650
        %v3666 = vpack.c.b16 %v3653, %v3652
        %v3667 = vpack.c.b16 %v3655, %v3654
        %v3668 = vpack.c.b16 %v3657, %v3656
        %v3669 = vpack.c.b16 %v3659, %v3658
        %v3670 = vpack.c.b16 %v3661, %v3660
        %v3671 = vpack.c.b16 %v3663, %v3662
        %v3680 = vunpack.c.l.b16 %v3624
        %v3681 = vunpack.c.l.b16 %v3625
        %v3682 = vunpack.c.l.b16 %v3626
        %v3683 = vunpack.c.l.b16 %v3627
        %v3684 = vunpack.c.l.b16 %v3628
        %v3685 = vunpack.c.l.b16 %v3629
        %v3686 = vunpack.c.l.b16 %v3630
        %v3687 = vunpack.c.l.b16 %v3631
        %v3688 = vpack.c.b16 %v3681, %v3680
        %v3689 = vpack.c.b16 %v3683, %v3682
        %v3690 = vpack.c.b16 %v3685, %v3684
        %v3691 = vpack.c.b16 %v3687, %v3686
        %v3697 = vsel %vm1013, %v3664, 0
        %v3700 = vsel %vm1013, %v3665, 0
        %v3703 = vsel %vm1013, %v3666, 0
        %v3706 = vsel %vm1013, %v3667, 0
        %v3709 = vsel %vm1013, %v3668, 0
        %v3712 = vsel %vm1013, %v3669, 0
        %v3715 = vsel %vm1013, %v3670, 0
        %v3718 = vsel %vm1013, %v3671, 0
        %3720 = vmatpush.bf16.msra.mxu0 0
        %3721 = vmatpush.bf16.msra.mxu0 0
        %3722 = vmatpush.bf16.msra.mxu0 0
        %3723 = vmatpush.bf16.msra.mxu0 0
        %3724 = vmatpush.bf16.msra.mxu0 %v3691
        %3725 = vmatpush.bf16.msra.mxu0 %v3690
        %3726 = vmatpush.bf16.msra.mxu0 %v3689
        %3727 = vmatpush.bf16.msra.mxu0 %v3688
        %3728 = vmatmul.bf16.gmra.mxu0 %v3697
        %v3729 = vpop.f32.mrf.mxu0
        %v3730 = vadd.f32 0.0, %v3729
        %v3731 = vpop.f32.mrf.mxu0
        %v3732 = vadd.f32 0.0, %v3731
        %3733 = vmatmul.bf16.gmra.mxu0 %v3700
        %v3734 = vpop.f32.mrf.mxu0
        %v3735 = vadd.f32 0.0, %v3734
        %v3736 = vpop.f32.mrf.mxu0
        %v3737 = vadd.f32 0.0, %v3736
        %3738 = vmatmul.bf16.gmra.mxu0 %v3703
        %v3739 = vpop.f32.mrf.mxu0
        %v3740 = vadd.f32 0.0, %v3739
        %v3741 = vpop.f32.mrf.mxu0
        %v3742 = vadd.f32 0.0, %v3741
        %3743 = vmatmul.bf16.gmra.mxu0 %v3706
        %v3744 = vpop.f32.mrf.mxu0
        %v3745 = vadd.f32 0.0, %v3744
        %v3746 = vpop.f32.mrf.mxu0
        %v3747 = vadd.f32 0.0, %v3746
        %3748 = vmatmul.bf16.gmra.mxu0 %v3709
        %v3749 = vpop.f32.mrf.mxu0
        %v3750 = vadd.f32 0.0, %v3749
        %v3751 = vpop.f32.mrf.mxu0
        %v3752 = vadd.f32 0.0, %v3751
        %3753 = vmatmul.bf16.gmra.mxu0 %v3712
        %v3754 = vpop.f32.mrf.mxu0
        %v3755 = vadd.f32 0.0, %v3754
        %v3756 = vpop.f32.mrf.mxu0
        %v3757 = vadd.f32 0.0, %v3756
        %3758 = vmatmul.bf16.gmra.mxu0 %v3715
        %v3759 = vpop.f32.mrf.mxu0
        %v3760 = vadd.f32 0.0, %v3759
        %v3761 = vpop.f32.mrf.mxu0
        %v3762 = vadd.f32 0.0, %v3761
        %3763 = vmatmul.bf16.gmra.mxu0 %v3718
        %v3764 = vpop.f32.mrf.mxu0
        %v3765 = vadd.f32 0.0, %v3764
        %v3766 = vpop.f32.mrf.mxu0
        %v3767 = vadd.f32 0.0, %v3766
        %3768 = vdwg.mxu0
        %v3769 = vadd.f32 %v3592, %v3730
        %v3770 = vadd.f32 %v3593, %v3732
        %v3771 = vadd.f32 %v3594, %v3735
        %v3772 = vadd.f32 %v3595, %v3737
        %v3773 = vadd.f32 %v3596, %v3740
        %v3774 = vadd.f32 %v3597, %v3742
        %v3775 = vadd.f32 %v3598, %v3745
        %v3776 = vadd.f32 %v3599, %v3747
        %v3777 = vadd.f32 %v3600, %v3750
        %v3778 = vadd.f32 %v3601, %v3752
        %v3779 = vadd.f32 %v3602, %v3755
        %v3780 = vadd.f32 %v3603, %v3757
        %v3781 = vadd.f32 %v3604, %v3760
        %v3782 = vadd.f32 %v3605, %v3762
        %v3783 = vadd.f32 %v3606, %v3765
        %v3784 = vadd.f32 %v3607, %v3767
        %v3785 = vld [vmem:[%s471 + $0x50] sm:$0xf]
        %v3786 = vld [vmem:[%s471 + $0x54] sm:$0xf]
        %v3787 = vld [vmem:[%s471 + $0x58] sm:$0xf]
        %v3788 = vld [vmem:[%s471 + $0x5c] sm:$0xf]
        %v3789 = vld [vmem:[%s471 + $0x60] sm:$0xf]
        %v3790 = vld [vmem:[%s471 + $0x64] sm:$0xf]
        %v3791 = vld [vmem:[%s471 + $0x68] sm:$0xf]
        %v3792 = vld [vmem:[%s471 + $0x6c] sm:$0xf]
        %v3793 = vld [vmem:[%s471 + $0x70] sm:$0xf]
        %v3794 = vld [vmem:[%s471 + $0x74] sm:$0xf]
        %v3795 = vld [vmem:[%s471 + $0x78] sm:$0xf]
        %v3796 = vld [vmem:[%s471 + $0x7c] sm:$0xf]
        %v3797 = vld [vmem:[%s471 + $0x80] sm:$0xf]
        %v3798 = vld [vmem:[%s471 + $0x84] sm:$0xf]
        %v3799 = vld [vmem:[%s471 + $0x88] sm:$0xf]
        %v3800 = vld [vmem:[%s471 + $0x8c] sm:$0xf]
        %v3801 = vld [vmem:[%s2130] sm:$0xf]
        %v3802 = vld [vmem:[%s2130 + $0x4] sm:$0xf]
        %v3803 = vld [vmem:[%s2130 + $0x8] sm:$0xf]
        %v3804 = vld [vmem:[%s2130 + $0xc] sm:$0xf]
        %v3805 = vld [vmem:[%s2130 + $0x10] sm:$0xf]
        %v3806 = vld [vmem:[%s2130 + $0x14] sm:$0xf]
        %v3807 = vld [vmem:[%s2130 + $0x18] sm:$0xf]
        %v3808 = vld [vmem:[%s2130 + $0x1c] sm:$0xf]
        %v3825 = vunpack.c.l.b16 %v3785
        %v3826 = vunpack.c.l.b16 %v3786
        %v3827 = vunpack.c.l.b16 %v3787
        %v3828 = vunpack.c.l.b16 %v3788
        %v3829 = vunpack.c.l.b16 %v3789
        %v3830 = vunpack.c.l.b16 %v3790
        %v3831 = vunpack.c.l.b16 %v3791
        %v3832 = vunpack.c.l.b16 %v3792
        %v3833 = vunpack.c.l.b16 %v3793
        %v3834 = vunpack.c.l.b16 %v3794
        %v3835 = vunpack.c.l.b16 %v3795
        %v3836 = vunpack.c.l.b16 %v3796
        %v3837 = vunpack.c.l.b16 %v3797
        %v3838 = vunpack.c.l.b16 %v3798
        %v3839 = vunpack.c.l.b16 %v3799
        %v3840 = vunpack.c.l.b16 %v3800
        %v3841 = vpack.c.b16 %v3826, %v3825
        %v3842 = vpack.c.b16 %v3828, %v3827
        %v3843 = vpack.c.b16 %v3830, %v3829
        %v3844 = vpack.c.b16 %v3832, %v3831
        %v3845 = vpack.c.b16 %v3834, %v3833
        %v3846 = vpack.c.b16 %v3836, %v3835
        %v3847 = vpack.c.b16 %v3838, %v3837
        %v3848 = vpack.c.b16 %v3840, %v3839
        %v3857 = vunpack.c.l.b16 %v3801
        %v3858 = vunpack.c.l.b16 %v3802
        %v3859 = vunpack.c.l.b16 %v3803
        %v3860 = vunpack.c.l.b16 %v3804
        %v3861 = vunpack.c.l.b16 %v3805
        %v3862 = vunpack.c.l.b16 %v3806
        %v3863 = vunpack.c.l.b16 %v3807
        %v3864 = vunpack.c.l.b16 %v3808
        %v3865 = vpack.c.b16 %v3858, %v3857
        %v3866 = vpack.c.b16 %v3860, %v3859
        %v3867 = vpack.c.b16 %v3862, %v3861
        %v3868 = vpack.c.b16 %v3864, %v3863
        %v3874 = vsel %vm1013, %v3841, 0
        %v3877 = vsel %vm1013, %v3842, 0
        %v3880 = vsel %vm1013, %v3843, 0
        %v3883 = vsel %vm1013, %v3844, 0
        %v3886 = vsel %vm1013, %v3845, 0
        %v3889 = vsel %vm1013, %v3846, 0
        %v3892 = vsel %vm1013, %v3847, 0
        %v3895 = vsel %vm1013, %v3848, 0
        %3897 = vmatpush.bf16.msra.mxu0 0
        %3898 = vmatpush.bf16.msra.mxu0 0
        %3899 = vmatpush.bf16.msra.mxu0 0
        %3900 = vmatpush.bf16.msra.mxu0 0
        %3901 = vmatpush.bf16.msra.mxu0 %v3868
        %3902 = vmatpush.bf16.msra.mxu0 %v3867
        %3903 = vmatpush.bf16.msra.mxu0 %v3866
        %3904 = vmatpush.bf16.msra.mxu0 %v3865
        %3905 = vmatmul.bf16.gmra.mxu0 %v3874
        %v3906 = vpop.f32.mrf.mxu0
        %v3907 = vadd.f32 0.0, %v3906
        %v3908 = vpop.f32.mrf.mxu0
        %v3909 = vadd.f32 0.0, %v3908
        %3910 = vmatmul.bf16.gmra.mxu0 %v3877
        %v3911 = vpop.f32.mrf.mxu0
        %v3912 = vadd.f32 0.0, %v3911
        %v3913 = vpop.f32.mrf.mxu0
        %v3914 = vadd.f32 0.0, %v3913
        %3915 = vmatmul.bf16.gmra.mxu0 %v3880
        %v3916 = vpop.f32.mrf.mxu0
        %v3917 = vadd.f32 0.0, %v3916
        %v3918 = vpop.f32.mrf.mxu0
        %v3919 = vadd.f32 0.0, %v3918
        %3920 = vmatmul.bf16.gmra.mxu0 %v3883
        %v3921 = vpop.f32.mrf.mxu0
        %v3922 = vadd.f32 0.0, %v3921
        %v3923 = vpop.f32.mrf.mxu0
        %v3924 = vadd.f32 0.0, %v3923
        %3925 = vmatmul.bf16.gmra.mxu0 %v3886
        %v3926 = vpop.f32.mrf.mxu0
        %v3927 = vadd.f32 0.0, %v3926
        %v3928 = vpop.f32.mrf.mxu0
        %v3929 = vadd.f32 0.0, %v3928
        %3930 = vmatmul.bf16.gmra.mxu0 %v3889
        %v3931 = vpop.f32.mrf.mxu0
        %v3932 = vadd.f32 0.0, %v3931
        %v3933 = vpop.f32.mrf.mxu0
        %v3934 = vadd.f32 0.0, %v3933
        %3935 = vmatmul.bf16.gmra.mxu0 %v3892
        %v3936 = vpop.f32.mrf.mxu0
        %v3937 = vadd.f32 0.0, %v3936
        %v3938 = vpop.f32.mrf.mxu0
        %v3939 = vadd.f32 0.0, %v3938
        %3940 = vmatmul.bf16.gmra.mxu0 %v3895
        %v3941 = vpop.f32.mrf.mxu0
        %v3942 = vadd.f32 0.0, %v3941
        %v3943 = vpop.f32.mrf.mxu0
        %v3944 = vadd.f32 0.0, %v3943
        %3945 = vdwg.mxu0
        %v3946 = vadd.f32 %v3769, %v3907
        %v3947 = vadd.f32 %v3770, %v3909
        %v3948 = vadd.f32 %v3771, %v3912
        %v3949 = vadd.f32 %v3772, %v3914
        %v3950 = vadd.f32 %v3773, %v3917
        %v3951 = vadd.f32 %v3774, %v3919
        %v3952 = vadd.f32 %v3775, %v3922
        %v3953 = vadd.f32 %v3776, %v3924
        %v3954 = vadd.f32 %v3777, %v3927
        %v3955 = vadd.f32 %v3778, %v3929
        %v3956 = vadd.f32 %v3779, %v3932
        %v3957 = vadd.f32 %v3780, %v3934
        %v3958 = vadd.f32 %v3781, %v3937
        %v3959 = vadd.f32 %v3782, %v3939
        %v3960 = vadd.f32 %v3783, %v3942
        %v3961 = vadd.f32 %v3784, %v3944
        %v3962 = vld [vmem:[%s476 + $0x50] sm:$0xf]
        %v3963 = vld [vmem:[%s476 + $0x54] sm:$0xf]
        %v3964 = vld [vmem:[%s476 + $0x58] sm:$0xf]
        %v3965 = vld [vmem:[%s476 + $0x5c] sm:$0xf]
        %v3966 = vld [vmem:[%s476 + $0x60] sm:$0xf]
        %v3967 = vld [vmem:[%s476 + $0x64] sm:$0xf]
        %v3968 = vld [vmem:[%s476 + $0x68] sm:$0xf]
        %v3969 = vld [vmem:[%s476 + $0x6c] sm:$0xf]
        %v3970 = vld [vmem:[%s476 + $0x70] sm:$0xf]
        %v3971 = vld [vmem:[%s476 + $0x74] sm:$0xf]
        %v3972 = vld [vmem:[%s476 + $0x78] sm:$0xf]
        %v3973 = vld [vmem:[%s476 + $0x7c] sm:$0xf]
        %v3974 = vld [vmem:[%s476 + $0x80] sm:$0xf]
        %v3975 = vld [vmem:[%s476 + $0x84] sm:$0xf]
        %v3976 = vld [vmem:[%s476 + $0x88] sm:$0xf]
        %v3977 = vld [vmem:[%s476 + $0x8c] sm:$0xf]
        %v3978 = vld [vmem:[%s2308] sm:$0xf]
        %v3979 = vld [vmem:[%s2308 + $0x4] sm:$0xf]
        %v3980 = vld [vmem:[%s2308 + $0x8] sm:$0xf]
        %v3981 = vld [vmem:[%s2308 + $0xc] sm:$0xf]
        %v3982 = vld [vmem:[%s2308 + $0x10] sm:$0xf]
        %v3983 = vld [vmem:[%s2308 + $0x14] sm:$0xf]
        %v3984 = vld [vmem:[%s2308 + $0x18] sm:$0xf]
        %v3985 = vld [vmem:[%s2308 + $0x1c] sm:$0xf]
        %v4002 = vunpack.c.l.b16 %v3962
        %v4003 = vunpack.c.l.b16 %v3963
        %v4004 = vunpack.c.l.b16 %v3964
        %v4005 = vunpack.c.l.b16 %v3965
        %v4006 = vunpack.c.l.b16 %v3966
        %v4007 = vunpack.c.l.b16 %v3967
        %v4008 = vunpack.c.l.b16 %v3968
        %v4009 = vunpack.c.l.b16 %v3969
        %v4010 = vunpack.c.l.b16 %v3970
        %v4011 = vunpack.c.l.b16 %v3971
        %v4012 = vunpack.c.l.b16 %v3972
        %v4013 = vunpack.c.l.b16 %v3973
        %v4014 = vunpack.c.l.b16 %v3974
        %v4015 = vunpack.c.l.b16 %v3975
        %v4016 = vunpack.c.l.b16 %v3976
        %v4017 = vunpack.c.l.b16 %v3977
        %v4018 = vpack.c.b16 %v4003, %v4002
        %v4019 = vpack.c.b16 %v4005, %v4004
        %v4020 = vpack.c.b16 %v4007, %v4006
        %v4021 = vpack.c.b16 %v4009, %v4008
        %v4022 = vpack.c.b16 %v4011, %v4010
        %v4023 = vpack.c.b16 %v4013, %v4012
        %v4024 = vpack.c.b16 %v4015, %v4014
        %v4025 = vpack.c.b16 %v4017, %v4016
        %v4034 = vunpack.c.l.b16 %v3978
        %v4035 = vunpack.c.l.b16 %v3979
        %v4036 = vunpack.c.l.b16 %v3980
        %v4037 = vunpack.c.l.b16 %v3981
        %v4038 = vunpack.c.l.b16 %v3982
        %v4039 = vunpack.c.l.b16 %v3983
        %v4040 = vunpack.c.l.b16 %v3984
        %v4041 = vunpack.c.l.b16 %v3985
        %v4042 = vpack.c.b16 %v4035, %v4034
        %v4043 = vpack.c.b16 %v4037, %v4036
        %v4044 = vpack.c.b16 %v4039, %v4038
        %v4045 = vpack.c.b16 %v4041, %v4040
        %v4051 = vsel %vm1013, %v4018, 0
        %v4054 = vsel %vm1013, %v4019, 0
        %v4057 = vsel %vm1013, %v4020, 0
        %v4060 = vsel %vm1013, %v4021, 0
        %v4063 = vsel %vm1013, %v4022, 0
        %v4066 = vsel %vm1013, %v4023, 0
        %v4069 = vsel %vm1013, %v4024, 0
        %v4072 = vsel %vm1013, %v4025, 0
        %4074 = vmatpush.bf16.msra.mxu0 0
        %4075 = vmatpush.bf16.msra.mxu0 0
        %4076 = vmatpush.bf16.msra.mxu0 0
        %4077 = vmatpush.bf16.msra.mxu0 0
        %4078 = vmatpush.bf16.msra.mxu0 %v4045
        %4079 = vmatpush.bf16.msra.mxu0 %v4044
        %4080 = vmatpush.bf16.msra.mxu0 %v4043
        %4081 = vmatpush.bf16.msra.mxu0 %v4042
        %4082 = vmatmul.bf16.gmra.mxu0 %v4051
        %v4083 = vpop.f32.mrf.mxu0
        %v4084 = vadd.f32 0.0, %v4083
        %v4085 = vpop.f32.mrf.mxu0
        %v4086 = vadd.f32 0.0, %v4085
        %4087 = vmatmul.bf16.gmra.mxu0 %v4054
        %v4088 = vpop.f32.mrf.mxu0
        %v4089 = vadd.f32 0.0, %v4088
        %v4090 = vpop.f32.mrf.mxu0
        %v4091 = vadd.f32 0.0, %v4090
        %4092 = vmatmul.bf16.gmra.mxu0 %v4057
        %v4093 = vpop.f32.mrf.mxu0
        %v4094 = vadd.f32 0.0, %v4093
        %v4095 = vpop.f32.mrf.mxu0
        %v4096 = vadd.f32 0.0, %v4095
        %4097 = vmatmul.bf16.gmra.mxu0 %v4060
        %v4098 = vpop.f32.mrf.mxu0
        %v4099 = vadd.f32 0.0, %v4098
        %v4100 = vpop.f32.mrf.mxu0
        %v4101 = vadd.f32 0.0, %v4100
        %4102 = vmatmul.bf16.gmra.mxu0 %v4063
        %v4103 = vpop.f32.mrf.mxu0
        %v4104 = vadd.f32 0.0, %v4103
        %v4105 = vpop.f32.mrf.mxu0
        %v4106 = vadd.f32 0.0, %v4105
        %4107 = vmatmul.bf16.gmra.mxu0 %v4066
        %v4108 = vpop.f32.mrf.mxu0
        %v4109 = vadd.f32 0.0, %v4108
        %v4110 = vpop.f32.mrf.mxu0
        %v4111 = vadd.f32 0.0, %v4110
        %4112 = vmatmul.bf16.gmra.mxu0 %v4069
        %v4113 = vpop.f32.mrf.mxu0
        %v4114 = vadd.f32 0.0, %v4113
        %v4115 = vpop.f32.mrf.mxu0
        %v4116 = vadd.f32 0.0, %v4115
        %4117 = vmatmul.bf16.gmra.mxu0 %v4072
        %v4118 = vpop.f32.mrf.mxu0
        %v4119 = vadd.f32 0.0, %v4118
        %v4120 = vpop.f32.mrf.mxu0
        %v4121 = vadd.f32 0.0, %v4120
        %4122 = vdwg.mxu0
        %v4123 = vadd.f32 %v3946, %v4084
        %v4124 = vadd.f32 %v3947, %v4086
        %v4125 = vadd.f32 %v3948, %v4089
        %v4126 = vadd.f32 %v3949, %v4091
        %v4127 = vadd.f32 %v3950, %v4094
        %v4128 = vadd.f32 %v3951, %v4096
        %v4129 = vadd.f32 %v3952, %v4099
        %v4130 = vadd.f32 %v3953, %v4101
        %v4131 = vadd.f32 %v3954, %v4104
        %v4132 = vadd.f32 %v3955, %v4106
        %v4133 = vadd.f32 %v3956, %v4109
        %v4134 = vadd.f32 %v3957, %v4111
        %v4135 = vadd.f32 %v3958, %v4114
        %v4136 = vadd.f32 %v3959, %v4116
        %v4137 = vadd.f32 %v3960, %v4119
        %v4138 = vadd.f32 %v3961, %v4121
        %4139 = vst.msk [vmem:[#allocation3 + $0x80] sm:$0xff] %vm1013, %v4123
        %4140 = vst.msk [vmem:[#allocation3 + $0x88] sm:$0xff] %vm1013, %v4124
        %4141 = vst.msk [vmem:[#allocation3 + $0x90] sm:$0xff] %vm1013, %v4125
        %4142 = vst.msk [vmem:[#allocation3 + $0x98] sm:$0xff] %vm1013, %v4126
        %4143 = vst.msk [vmem:[#allocation3 + $0xa0] sm:$0xff] %vm1013, %v4127
        %4144 = vst.msk [vmem:[#allocation3 + $0xa8] sm:$0xff] %vm1013, %v4128
        %4145 = vst.msk [vmem:[#allocation3 + $0xb0] sm:$0xff] %vm1013, %v4129
        %4146 = vst.msk [vmem:[#allocation3 + $0xb8] sm:$0xff] %vm1013, %v4130
        %4147 = vst.msk [vmem:[#allocation3 + $0xc0] sm:$0xff] %vm1013, %v4131
        %4148 = vst.msk [vmem:[#allocation3 + $0xc8] sm:$0xff] %vm1013, %v4132
        %4149 = vst.msk [vmem:[#allocation3 + $0xd0] sm:$0xff] %vm1013, %v4133
        %4150 = vst.msk [vmem:[#allocation3 + $0xd8] sm:$0xff] %vm1013, %v4134
        %4151 = vst.msk [vmem:[#allocation3 + $0xe0] sm:$0xff] %vm1013, %v4135
        %4152 = vst.msk [vmem:[#allocation3 + $0xe8] sm:$0xff] %vm1013, %v4136
        %4153 = vst.msk [vmem:[#allocation3 + $0xf0] sm:$0xff] %vm1013, %v4137
        %4154 = vst.msk [vmem:[#allocation3 + $0xf8] sm:$0xff] %vm1013, %v4138
        %v4155 = vsel %vm1013, %v4123, 0.0
        %v4156 = vsel %vm1013, %v4124, 0.0
        %v4157 = vadd.f32 %v4155, %v4156
        %v4158 = vsel %vm1013, %v4125, 0.0
        %v4159 = vadd.f32 %v4157, %v4158
        %v4160 = vsel %vm1013, %v4126, 0.0
        %v4161 = vadd.f32 %v4159, %v4160
        %v4162 = vsel %vm1013, %v4127, 0.0
        %v4163 = vadd.f32 %v4161, %v4162
        %v4164 = vsel %vm1013, %v4128, 0.0
        %v4165 = vadd.f32 %v4163, %v4164
        %v4166 = vsel %vm1013, %v4129, 0.0
        %v4167 = vadd.f32 %v4165, %v4166
        %v4168 = vsel %vm1013, %v4130, 0.0
        %v4169 = vadd.f32 %v4167, %v4168
        %v4170 = vsel %vm1013, %v4131, 0.0
        %v4171 = vadd.f32 %v4169, %v4170
        %v4172 = vsel %vm1013, %v4132, 0.0
        %v4173 = vadd.f32 %v4171, %v4172
        %v4174 = vsel %vm1013, %v4133, 0.0
        %v4175 = vadd.f32 %v4173, %v4174
        %v4176 = vsel %vm1013, %v4134, 0.0
        %v4177 = vadd.f32 %v4175, %v4176
        %v4178 = vsel %vm1013, %v4135, 0.0
        %v4179 = vadd.f32 %v4177, %v4178
        %v4180 = vsel %vm1013, %v4136, 0.0
        %v4181 = vadd.f32 %v4179, %v4180
        %v4182 = vsel %vm1013, %v4137, 0.0
        %v4183 = vadd.f32 %v4181, %v4182
        %v4184 = vsel %vm1013, %v4138, 0.0
        %v4185 = vadd.f32 %v4183, %v4184
        %v4186 = vrot.slane %v4185, 4
        %v4187 = vadd.f32 %v4185, %v4186
        %v4188 = vrot.slane %v4187, 2
        %v4189 = vadd.f32 %v4187, %v4188
        %v4190 = vrot.slane %v4189, 1
        %v4191 = vadd.f32 %v4189, %v4190
        %v4192 = vadd.f32 %v2523, %v4191
        %v4193 = vmul.f32 %v4123, %v4123
        %v4194 = vmul.f32 %v4124, %v4124
        %v4195 = vmul.f32 %v4125, %v4125
        %v4196 = vmul.f32 %v4126, %v4126
        %v4197 = vmul.f32 %v4127, %v4127
        %v4198 = vmul.f32 %v4128, %v4128
        %v4199 = vmul.f32 %v4129, %v4129
        %v4200 = vmul.f32 %v4130, %v4130
        %v4201 = vmul.f32 %v4131, %v4131
        %v4202 = vmul.f32 %v4132, %v4132
        %v4203 = vmul.f32 %v4133, %v4133
        %v4204 = vmul.f32 %v4134, %v4134
        %v4205 = vmul.f32 %v4135, %v4135
        %v4206 = vmul.f32 %v4136, %v4136
        %v4207 = vmul.f32 %v4137, %v4137
        %v4208 = vmul.f32 %v4138, %v4138
        %v4209 = vsel %vm1013, %v4193, 0.0
        %v4210 = vsel %vm1013, %v4194, 0.0
        %v4211 = vadd.f32 %v4209, %v4210
        %v4212 = vsel %vm1013, %v4195, 0.0
        %v4213 = vadd.f32 %v4211, %v4212
        %v4214 = vsel %vm1013, %v4196, 0.0
        %v4215 = vadd.f32 %v4213, %v4214
        %v4216 = vsel %vm1013, %v4197, 0.0
        %v4217 = vadd.f32 %v4215, %v4216
        %v4218 = vsel %vm1013, %v4198, 0.0
        %v4219 = vadd.f32 %v4217, %v4218
        %v4220 = vsel %vm1013, %v4199, 0.0
        %v4221 = vadd.f32 %v4219, %v4220
        %v4222 = vsel %vm1013, %v4200, 0.0
        %v4223 = vadd.f32 %v4221, %v4222
        %v4224 = vsel %vm1013, %v4201, 0.0
        %v4225 = vadd.f32 %v4223, %v4224
        %v4226 = vsel %vm1013, %v4202, 0.0
        %v4227 = vadd.f32 %v4225, %v4226
        %v4228 = vsel %vm1013, %v4203, 0.0
        %v4229 = vadd.f32 %v4227, %v4228
        %v4230 = vsel %vm1013, %v4204, 0.0
        %v4231 = vadd.f32 %v4229, %v4230
        %v4232 = vsel %vm1013, %v4205, 0.0
        %v4233 = vadd.f32 %v4231, %v4232
        %v4234 = vsel %vm1013, %v4206, 0.0
        %v4235 = vadd.f32 %v4233, %v4234
        %v4236 = vsel %vm1013, %v4207, 0.0
        %v4237 = vadd.f32 %v4235, %v4236
        %v4238 = vsel %vm1013, %v4208, 0.0
        %v4239 = vadd.f32 %v4237, %v4238
        %v4240 = vrot.slane %v4239, 4
        %v4241 = vadd.f32 %v4239, %v4240
        %v4242 = vrot.slane %v4241, 2
        %v4243 = vadd.f32 %v4241, %v4242
        %v4244 = vrot.slane %v4243, 1
        %v4245 = vadd.f32 %v4243, %v4244
        %v4246 = vadd.f32 %v2577, %v4245
        %v4247 = vmul.f32 %v4192, 0.00390625
        %v4248 = vmul.f32 %v4246, 0.00390625
        %v4249 = vmul.f32 %v4247, %v4247
        %v4250 = vsub.f32 %v4248, %v4249
        %v4251 = vmax.f32 %v4250, 0.0
        %v4252 = vadd.f32 %v4251, 1e-05
        %v4253 = vrsqrt.pop %v4252
        %v4254 = vmul.f32 %v4253, %v4252
        %v4255 = vmul.f32 %v4254, %v4253
        %v4256 = vmul.f32 0.5, %v4255
        %v4257 = vsub.f32 1.5, %v4256
        %v4258 = vmul.f32 %v4253, %v4257
        %vm4259 = vweird.f32 %v4252
        %vm4260 = vweird.f32 %v4253
        %vm4261 = vmor %vm4259, %vm4260
        %v4262 = vsel %vm4261, %v4253, %v4258
        %v4263 = vld [vmem:[#allocation3] sm:$0xff]
        %v4264 = vld [vmem:[#allocation3 + $0x8] sm:$0xff]
        %v4265 = vld [vmem:[#allocation3 + $0x10] sm:$0xff]
        %v4266 = vld [vmem:[#allocation3 + $0x18] sm:$0xff]
        %v4267 = vld [vmem:[#allocation3 + $0x20] sm:$0xff]
        %v4268 = vld [vmem:[#allocation3 + $0x28] sm:$0xff]
        %v4269 = vld [vmem:[#allocation3 + $0x30] sm:$0xff]
        %v4270 = vld [vmem:[#allocation3 + $0x38] sm:$0xff]
        %v4271 = vld [vmem:[#allocation3 + $0x40] sm:$0xff]
        %v4272 = vld [vmem:[#allocation3 + $0x48] sm:$0xff]
        %v4273 = vld [vmem:[#allocation3 + $0x50] sm:$0xff]
        %v4274 = vld [vmem:[#allocation3 + $0x58] sm:$0xff]
        %v4275 = vld [vmem:[#allocation3 + $0x60] sm:$0xff]
        %v4276 = vld [vmem:[#allocation3 + $0x68] sm:$0xff]
        %v4277 = vld [vmem:[#allocation3 + $0x70] sm:$0xff]
        %v4278 = vld [vmem:[#allocation3 + $0x78] sm:$0xff]
        %v4279 = vsub.f32 %v4263, %v4247
        %v4280 = vsub.f32 %v4264, %v4247
        %v4281 = vsub.f32 %v4265, %v4247
        %v4282 = vsub.f32 %v4266, %v4247
        %v4283 = vsub.f32 %v4267, %v4247
        %v4284 = vsub.f32 %v4268, %v4247
        %v4285 = vsub.f32 %v4269, %v4247
        %v4286 = vsub.f32 %v4270, %v4247
        %v4287 = vsub.f32 %v4271, %v4247
        %v4288 = vsub.f32 %v4272, %v4247
        %v4289 = vsub.f32 %v4273, %v4247
        %v4290 = vsub.f32 %v4274, %v4247
        %v4291 = vsub.f32 %v4275, %v4247
        %v4292 = vsub.f32 %v4276, %v4247
        %v4293 = vsub.f32 %v4277, %v4247
        %v4294 = vsub.f32 %v4278, %v4247
        %v4295 = vmul.f32 %v4279, %v4262
        %v4296 = vmul.f32 %v4280, %v4262
        %v4297 = vmul.f32 %v4281, %v4262
        %v4298 = vmul.f32 %v4282, %v4262
        %v4299 = vmul.f32 %v4283, %v4262
        %v4300 = vmul.f32 %v4284, %v4262
        %v4301 = vmul.f32 %v4285, %v4262
        %v4302 = vmul.f32 %v4286, %v4262
        %v4303 = vmul.f32 %v4287, %v4262
        %v4304 = vmul.f32 %v4288, %v4262
        %v4305 = vmul.f32 %v4289, %v4262
        %v4306 = vmul.f32 %v4290, %v4262
        %v4307 = vmul.f32 %v4291, %v4262
        %v4308 = vmul.f32 %v4292, %v4262
        %v4309 = vmul.f32 %v4293, %v4262
        %v4310 = vmul.f32 %v4294, %v4262
        %v4311 = vmax.f32 %v4295, 0.0
        %v4312 = vmax.f32 %v4296, 0.0
        %v4313 = vmax.f32 %v4297, 0.0
        %v4314 = vmax.f32 %v4298, 0.0
        %v4315 = vmax.f32 %v4299, 0.0
        %v4316 = vmax.f32 %v4300, 0.0
        %v4317 = vmax.f32 %v4301, 0.0
        %v4318 = vmax.f32 %v4302, 0.0
        %v4319 = vmax.f32 %v4303, 0.0
        %v4320 = vmax.f32 %v4304, 0.0
        %v4321 = vmax.f32 %v4305, 0.0
        %v4322 = vmax.f32 %v4306, 0.0
        %v4323 = vmax.f32 %v4307, 0.0
        %v4324 = vmax.f32 %v4308, 0.0
        %v4325 = vmax.f32 %v4309, 0.0
        %v4326 = vmax.f32 %v4310, 0.0
        %v4327 = vpack.c.bf16 %v4311, %v4311
        %v4328 = vpack.c.bf16 %v4312, %v4312
        %v4329 = vpack.c.bf16 %v4313, %v4313
        %v4330 = vpack.c.bf16 %v4314, %v4314
        %v4331 = vpack.c.bf16 %v4315, %v4315
        %v4332 = vpack.c.bf16 %v4316, %v4316
        %v4333 = vpack.c.bf16 %v4317, %v4317
        %v4334 = vpack.c.bf16 %v4318, %v4318
        %v4335 = vpack.c.bf16 %v4319, %v4319
        %v4336 = vpack.c.bf16 %v4320, %v4320
        %v4337 = vpack.c.bf16 %v4321, %v4321
        %v4338 = vpack.c.bf16 %v4322, %v4322
        %v4339 = vpack.c.bf16 %v4323, %v4323
        %v4340 = vpack.c.bf16 %v4324, %v4324
        %v4341 = vpack.c.bf16 %v4325, %v4325
        %v4342 = vpack.c.bf16 %v4326, %v4326
        %4343 = vst.msk [vmem:[%s471 + $0x8] sm:$0xf] %vm466, %v4327
        %4344 = vst.msk [vmem:[%s471 + $0xc] sm:$0xf] %vm466, %v4328
        %4345 = vst.msk [vmem:[%s471 + $0x10] sm:$0xf] %vm466, %v4329
        %4346 = vst.msk [vmem:[%s471 + $0x14] sm:$0xf] %vm466, %v4330
        %4347 = vst.msk [vmem:[%s471 + $0x18] sm:$0xf] %vm466, %v4331
        %4348 = vst.msk [vmem:[%s471 + $0x1c] sm:$0xf] %vm466, %v4332
        %4349 = vst.msk [vmem:[%s471 + $0x20] sm:$0xf] %vm466, %v4333
        %4350 = vst.msk [vmem:[%s471 + $0x24] sm:$0xf] %vm466, %v4334
        %4351 = vst.msk [vmem:[%s471 + $0x28] sm:$0xf] %vm466, %v4335
        %4352 = vst.msk [vmem:[%s471 + $0x2c] sm:$0xf] %vm466, %v4336
        %4353 = vst.msk [vmem:[%s471 + $0x30] sm:$0xf] %vm466, %v4337
        %4354 = vst.msk [vmem:[%s471 + $0x34] sm:$0xf] %vm466, %v4338
        %4355 = vst.msk [vmem:[%s471 + $0x38] sm:$0xf] %vm466, %v4339
        %4356 = vst.msk [vmem:[%s471 + $0x3c] sm:$0xf] %vm466, %v4340
        %4357 = vst.msk [vmem:[%s471 + $0x40] sm:$0xf] %vm466, %v4341
        %4358 = vst.msk [vmem:[%s471 + $0x44] sm:$0xf] %vm466, %v4342
        %v4359 = vrot.slane %v4311, 7
        %v4360 = vrot.slane %v4312, 7
        %v4361 = vrot.slane %v4313, 7
        %v4362 = vrot.slane %v4314, 7
        %v4363 = vrot.slane %v4315, 7
        %v4364 = vrot.slane %v4316, 7
        %v4365 = vrot.slane %v4317, 7
        %v4366 = vrot.slane %v4318, 7
        %v4367 = vrot.slane %v4319, 7
        %v4368 = vrot.slane %v4320, 7
        %v4369 = vrot.slane %v4321, 7
        %v4370 = vrot.slane %v4322, 7
        %v4371 = vrot.slane %v4323, 7
        %v4372 = vrot.slane %v4324, 7
        %v4373 = vrot.slane %v4325, 7
        %v4374 = vrot.slane %v4326, 7
        %v4375 = vsel %vm545, %v4373, %v4374
        %v4376 = vsel %vm545, %v4372, %v4373
        %v4377 = vsel %vm545, %v4371, %v4372
        %v4378 = vsel %vm545, %v4370, %v4371
        %v4379 = vsel %vm545, %v4369, %v4370
        %v4380 = vsel %vm545, %v4368, %v4369
        %v4381 = vsel %vm545, %v4367, %v4368
        %v4382 = vsel %vm545, %v4366, %v4367
        %v4383 = vsel %vm545, %v4365, %v4366
        %v4384 = vsel %vm545, %v4364, %v4365
        %v4385 = vsel %vm545, %v4363, %v4364
        %v4386 = vsel %vm545, %v4362, %v4363
        %v4387 = vsel %vm545, %v4361, %v4362
        %v4388 = vsel %vm545, %v4360, %v4361
        %v4389 = vsel %vm545, %v4359, %v4360
        %v4390 = vsel %vm545, %v4374, %v4359
        %v4391 = vsel %vm434, 0.0, %v4390
        %v4392 = vsel %vm435, 0.0, %v4389
        %v4393 = vsel %vm436, 0.0, %v4388
        %v4394 = vsel %vm437, 0.0, %v4387
        %v4395 = vsel %vm438, 0.0, %v4386
        %v4396 = vsel %vm439, 0.0, %v4385
        %v4397 = vsel %vm440, 0.0, %v4384
        %v4398 = vsel %vm441, 0.0, %v4383
        %v4399 = vsel %vm442, 0.0, %v4382
        %v4400 = vsel %vm443, 0.0, %v4381
        %v4401 = vsel %vm444, 0.0, %v4380
        %v4402 = vsel %vm445, 0.0, %v4379
        %v4403 = vsel %vm446, 0.0, %v4378
        %v4404 = vsel %vm447, 0.0, %v4377
        %v4405 = vsel %vm448, 0.0, %v4376
        %v4406 = vsel %vm449, 0.0, %v4375
        %v4407 = vpack.c.bf16 %v4391, %v4391
        %v4408 = vpack.c.bf16 %v4392, %v4392
        %v4409 = vpack.c.bf16 %v4393, %v4393
        %v4410 = vpack.c.bf16 %v4394, %v4394
        %v4411 = vpack.c.bf16 %v4395, %v4395
        %v4412 = vpack.c.bf16 %v4396, %v4396
        %v4413 = vpack.c.bf16 %v4397, %v4397
        %v4414 = vpack.c.bf16 %v4398, %v4398
        %v4415 = vpack.c.bf16 %v4399, %v4399
        %v4416 = vpack.c.bf16 %v4400, %v4400
        %v4417 = vpack.c.bf16 %v4401, %v4401
        %v4418 = vpack.c.bf16 %v4402, %v4402
        %v4419 = vpack.c.bf16 %v4403, %v4403
        %v4420 = vpack.c.bf16 %v4404, %v4404
        %v4421 = vpack.c.bf16 %v4405, %v4405
        %v4422 = vpack.c.bf16 %v4406, %v4406
        %4423 = vst.msk [vmem:[#allocation2 + $0x8] sm:$0xf] %vm466, %v4407
        %4424 = vst.msk [vmem:[#allocation2 + $0xc] sm:$0xf] %vm466, %v4408
        %4425 = vst.msk [vmem:[#allocation2 + $0x10] sm:$0xf] %vm466, %v4409
        %4426 = vst.msk [vmem:[#allocation2 + $0x14] sm:$0xf] %vm466, %v4410
        %4427 = vst.msk [vmem:[#allocation2 + $0x18] sm:$0xf] %vm466, %v4411
        %4428 = vst.msk [vmem:[#allocation2 + $0x1c] sm:$0xf] %vm466, %v4412
        %4429 = vst.msk [vmem:[#allocation2 + $0x20] sm:$0xf] %vm466, %v4413
        %4430 = vst.msk [vmem:[#allocation2 + $0x24] sm:$0xf] %vm466, %v4414
        %4431 = vst.msk [vmem:[#allocation2 + $0x28] sm:$0xf] %vm466, %v4415
        %4432 = vst.msk [vmem:[#allocation2 + $0x2c] sm:$0xf] %vm466, %v4416
        %4433 = vst.msk [vmem:[#allocation2 + $0x30] sm:$0xf] %vm466, %v4417
        %4434 = vst.msk [vmem:[#allocation2 + $0x34] sm:$0xf] %vm466, %v4418
        %4435 = vst.msk [vmem:[#allocation2 + $0x38] sm:$0xf] %vm466, %v4419
        %4436 = vst.msk [vmem:[#allocation2 + $0x3c] sm:$0xf] %vm466, %v4420
        %4437 = vst.msk [vmem:[#allocation2 + $0x40] sm:$0xf] %vm466, %v4421
        %4438 = vst.msk [vmem:[#allocation2 + $0x44] sm:$0xf] %vm466, %v4422
        %v4439 = vrot.slane %v4311, 1
        %v4440 = vrot.slane %v4312, 1
        %v4441 = vrot.slane %v4313, 1
        %v4442 = vrot.slane %v4314, 1
        %v4443 = vrot.slane %v4315, 1
        %v4444 = vrot.slane %v4316, 1
        %v4445 = vrot.slane %v4317, 1
        %v4446 = vrot.slane %v4318, 1
        %v4447 = vrot.slane %v4319, 1
        %v4448 = vrot.slane %v4320, 1
        %v4449 = vrot.slane %v4321, 1
        %v4450 = vrot.slane %v4322, 1
        %v4451 = vrot.slane %v4323, 1
        %v4452 = vrot.slane %v4324, 1
        %v4453 = vrot.slane %v4325, 1
        %v4454 = vrot.slane %v4326, 1
        %v4455 = vsel %vm626, %v4453, %v4454
        %v4456 = vsel %vm626, %v4452, %v4453
        %v4457 = vsel %vm626, %v4451, %v4452
        %v4458 = vsel %vm626, %v4450, %v4451
        %v4459 = vsel %vm626, %v4449, %v4450
        %v4460 = vsel %vm626, %v4448, %v4449
        %v4461 = vsel %vm626, %v4447, %v4448
        %v4462 = vsel %vm626, %v4446, %v4447
        %v4463 = vsel %vm626, %v4445, %v4446
        %v4464 = vsel %vm626, %v4444, %v4445
        %v4465 = vsel %vm626, %v4443, %v4444
        %v4466 = vsel %vm626, %v4442, %v4443
        %v4467 = vsel %vm626, %v4441, %v4442
        %v4468 = vsel %vm626, %v4440, %v4441
        %v4469 = vsel %vm626, %v4439, %v4440
        %v4470 = vsel %vm626, %v4454, %v4439
        %v4471 = vsel %vm450, 0.0, %v4469
        %v4472 = vsel %vm451, 0.0, %v4468
        %v4473 = vsel %vm452, 0.0, %v4467
        %v4474 = vsel %vm453, 0.0, %v4466
        %v4475 = vsel %vm454, 0.0, %v4465
        %v4476 = vsel %vm455, 0.0, %v4464
        %v4477 = vsel %vm456, 0.0, %v4463
        %v4478 = vsel %vm457, 0.0, %v4462
        %v4479 = vsel %vm458, 0.0, %v4461
        %v4480 = vsel %vm459, 0.0, %v4460
        %v4481 = vsel %vm460, 0.0, %v4459
        %v4482 = vsel %vm461, 0.0, %v4458
        %v4483 = vsel %vm462, 0.0, %v4457
        %v4484 = vsel %vm463, 0.0, %v4456
        %v4485 = vsel %vm464, 0.0, %v4455
        %v4486 = vsel %vm465, 0.0, %v4470
        %v4487 = vpack.c.bf16 %v4471, %v4471
        %v4488 = vpack.c.bf16 %v4472, %v4472
        %v4489 = vpack.c.bf16 %v4473, %v4473
        %v4490 = vpack.c.bf16 %v4474, %v4474
        %v4491 = vpack.c.bf16 %v4475, %v4475
        %v4492 = vpack.c.bf16 %v4476, %v4476
        %v4493 = vpack.c.bf16 %v4477, %v4477
        %v4494 = vpack.c.bf16 %v4478, %v4478
        %v4495 = vpack.c.bf16 %v4479, %v4479
        %v4496 = vpack.c.bf16 %v4480, %v4480
        %v4497 = vpack.c.bf16 %v4481, %v4481
        %v4498 = vpack.c.bf16 %v4482, %v4482
        %v4499 = vpack.c.bf16 %v4483, %v4483
        %v4500 = vpack.c.bf16 %v4484, %v4484
        %v4501 = vpack.c.bf16 %v4485, %v4485
        %v4502 = vpack.c.bf16 %v4486, %v4486
        %4503 = vst.msk [vmem:[%s476 + $0x8] sm:$0xf] %vm466, %v4487
        %4504 = vst.msk [vmem:[%s476 + $0xc] sm:$0xf] %vm466, %v4488
        %4505 = vst.msk [vmem:[%s476 + $0x10] sm:$0xf] %vm466, %v4489
        %4506 = vst.msk [vmem:[%s476 + $0x14] sm:$0xf] %vm466, %v4490
        %4507 = vst.msk [vmem:[%s476 + $0x18] sm:$0xf] %vm466, %v4491
        %4508 = vst.msk [vmem:[%s476 + $0x1c] sm:$0xf] %vm466, %v4492
        %4509 = vst.msk [vmem:[%s476 + $0x20] sm:$0xf] %vm466, %v4493
        %4510 = vst.msk [vmem:[%s476 + $0x24] sm:$0xf] %vm466, %v4494
        %4511 = vst.msk [vmem:[%s476 + $0x28] sm:$0xf] %vm466, %v4495
        %4512 = vst.msk [vmem:[%s476 + $0x2c] sm:$0xf] %vm466, %v4496
        %4513 = vst.msk [vmem:[%s476 + $0x30] sm:$0xf] %vm466, %v4497
        %4514 = vst.msk [vmem:[%s476 + $0x34] sm:$0xf] %vm466, %v4498
        %4515 = vst.msk [vmem:[%s476 + $0x38] sm:$0xf] %vm466, %v4499
        %4516 = vst.msk [vmem:[%s476 + $0x3c] sm:$0xf] %vm466, %v4500
        %4517 = vst.msk [vmem:[%s476 + $0x40] sm:$0xf] %vm466, %v4501
        %4518 = vst.msk [vmem:[%s476 + $0x44] sm:$0xf] %vm466, %v4502
        %v4519 = vld [vmem:[#allocation3 + $0x80] sm:$0xff]
        %v4520 = vld [vmem:[#allocation3 + $0x88] sm:$0xff]
        %v4521 = vld [vmem:[#allocation3 + $0x90] sm:$0xff]
        %v4522 = vld [vmem:[#allocation3 + $0x98] sm:$0xff]
        %v4523 = vld [vmem:[#allocation3 + $0xa0] sm:$0xff]
        %v4524 = vld [vmem:[#allocation3 + $0xa8] sm:$0xff]
        %v4525 = vld [vmem:[#allocation3 + $0xb0] sm:$0xff]
        %v4526 = vld [vmem:[#allocation3 + $0xb8] sm:$0xff]
        %v4527 = vld [vmem:[#allocation3 + $0xc0] sm:$0xff]
        %v4528 = vld [vmem:[#allocation3 + $0xc8] sm:$0xff]
        %v4529 = vld [vmem:[#allocation3 + $0xd0] sm:$0xff]
        %v4530 = vld [vmem:[#allocation3 + $0xd8] sm:$0xff]
        %v4531 = vld [vmem:[#allocation3 + $0xe0] sm:$0xff]
        %v4532 = vld [vmem:[#allocation3 + $0xe8] sm:$0xff]
        %v4533 = vld [vmem:[#allocation3 + $0xf0] sm:$0xff]
        %v4534 = vld [vmem:[#allocation3 + $0xf8] sm:$0xff]
        %v4535 = vsub.f32 %v4519, %v4247
        %v4536 = vsub.f32 %v4520, %v4247
        %v4537 = vsub.f32 %v4521, %v4247
        %v4538 = vsub.f32 %v4522, %v4247
        %v4539 = vsub.f32 %v4523, %v4247
        %v4540 = vsub.f32 %v4524, %v4247
        %v4541 = vsub.f32 %v4525, %v4247
        %v4542 = vsub.f32 %v4526, %v4247
        %v4543 = vsub.f32 %v4527, %v4247
        %v4544 = vsub.f32 %v4528, %v4247
        %v4545 = vsub.f32 %v4529, %v4247
        %v4546 = vsub.f32 %v4530, %v4247
        %v4547 = vsub.f32 %v4531, %v4247
        %v4548 = vsub.f32 %v4532, %v4247
        %v4549 = vsub.f32 %v4533, %v4247
        %v4550 = vsub.f32 %v4534, %v4247
        %v4551 = vmul.f32 %v4535, %v4262
        %v4552 = vmul.f32 %v4536, %v4262
        %v4553 = vmul.f32 %v4537, %v4262
        %v4554 = vmul.f32 %v4538, %v4262
        %v4555 = vmul.f32 %v4539, %v4262
        %v4556 = vmul.f32 %v4540, %v4262
        %v4557 = vmul.f32 %v4541, %v4262
        %v4558 = vmul.f32 %v4542, %v4262
        %v4559 = vmul.f32 %v4543, %v4262
        %v4560 = vmul.f32 %v4544, %v4262
        %v4561 = vmul.f32 %v4545, %v4262
        %v4562 = vmul.f32 %v4546, %v4262
        %v4563 = vmul.f32 %v4547, %v4262
        %v4564 = vmul.f32 %v4548, %v4262
        %v4565 = vmul.f32 %v4549, %v4262
        %v4566 = vmul.f32 %v4550, %v4262
        %v4567 = vmax.f32 %v4551, 0.0
        %v4568 = vmax.f32 %v4552, 0.0
        %v4569 = vmax.f32 %v4553, 0.0
        %v4570 = vmax.f32 %v4554, 0.0
        %v4571 = vmax.f32 %v4555, 0.0
        %v4572 = vmax.f32 %v4556, 0.0
        %v4573 = vmax.f32 %v4557, 0.0
        %v4574 = vmax.f32 %v4558, 0.0
        %v4575 = vmax.f32 %v4559, 0.0
        %v4576 = vmax.f32 %v4560, 0.0
        %v4577 = vmax.f32 %v4561, 0.0
        %v4578 = vmax.f32 %v4562, 0.0
        %v4579 = vmax.f32 %v4563, 0.0
        %v4580 = vmax.f32 %v4564, 0.0
        %v4581 = vmax.f32 %v4565, 0.0
        %v4582 = vmax.f32 %v4566, 0.0
        %v4583 = vpack.c.bf16 %v4567, %v4567
        %v4584 = vpack.c.bf16 %v4568, %v4568
        %v4585 = vpack.c.bf16 %v4569, %v4569
        %v4586 = vpack.c.bf16 %v4570, %v4570
        %v4587 = vpack.c.bf16 %v4571, %v4571
        %v4588 = vpack.c.bf16 %v4572, %v4572
        %v4589 = vpack.c.bf16 %v4573, %v4573
        %v4590 = vpack.c.bf16 %v4574, %v4574
        %v4591 = vpack.c.bf16 %v4575, %v4575
        %v4592 = vpack.c.bf16 %v4576, %v4576
        %v4593 = vpack.c.bf16 %v4577, %v4577
        %v4594 = vpack.c.bf16 %v4578, %v4578
        %v4595 = vpack.c.bf16 %v4579, %v4579
        %v4596 = vpack.c.bf16 %v4580, %v4580
        %v4597 = vpack.c.bf16 %v4581, %v4581
        %v4598 = vpack.c.bf16 %v4582, %v4582
        %4599 = vst.msk [vmem:[%s471 + $0x48] sm:$0xf] %vm466, %v4583
        %4600 = vst.msk [vmem:[%s471 + $0x4c] sm:$0xf] %vm466, %v4584
        %4601 = vst.msk [vmem:[%s471 + $0x50] sm:$0xf] %vm466, %v4585
        %4602 = vst.msk [vmem:[%s471 + $0x54] sm:$0xf] %vm466, %v4586
        %4603 = vst.msk [vmem:[%s471 + $0x58] sm:$0xf] %vm466, %v4587
        %4604 = vst.msk [vmem:[%s471 + $0x5c] sm:$0xf] %vm466, %v4588
        %4605 = vst.msk [vmem:[%s471 + $0x60] sm:$0xf] %vm466, %v4589
        %4606 = vst.msk [vmem:[%s471 + $0x64] sm:$0xf] %vm466, %v4590
        %4607 = vst.msk [vmem:[%s471 + $0x68] sm:$0xf] %vm466, %v4591
        %4608 = vst.msk [vmem:[%s471 + $0x6c] sm:$0xf] %vm466, %v4592
        %4609 = vst.msk [vmem:[%s471 + $0x70] sm:$0xf] %vm466, %v4593
        %4610 = vst.msk [vmem:[%s471 + $0x74] sm:$0xf] %vm466, %v4594
        %4611 = vst.msk [vmem:[%s471 + $0x78] sm:$0xf] %vm466, %v4595
        %4612 = vst.msk [vmem:[%s471 + $0x7c] sm:$0xf] %vm466, %v4596
        %4613 = vst.msk [vmem:[%s471 + $0x80] sm:$0xf] %vm466, %v4597
        %4614 = vst.msk [vmem:[%s471 + $0x84] sm:$0xf] %vm466, %v4598
        %v4615 = vrot.slane %v4567, 7
        %v4616 = vrot.slane %v4568, 7
        %v4617 = vrot.slane %v4569, 7
        %v4618 = vrot.slane %v4570, 7
        %v4619 = vrot.slane %v4571, 7
        %v4620 = vrot.slane %v4572, 7
        %v4621 = vrot.slane %v4573, 7
        %v4622 = vrot.slane %v4574, 7
        %v4623 = vrot.slane %v4575, 7
        %v4624 = vrot.slane %v4576, 7
        %v4625 = vrot.slane %v4577, 7
        %v4626 = vrot.slane %v4578, 7
        %v4627 = vrot.slane %v4579, 7
        %v4628 = vrot.slane %v4580, 7
        %v4629 = vrot.slane %v4581, 7
        %v4630 = vrot.slane %v4582, 7
        %v4631 = vsel %vm545, %v4629, %v4630
        %v4632 = vsel %vm545, %v4628, %v4629
        %v4633 = vsel %vm545, %v4627, %v4628
        %v4634 = vsel %vm545, %v4626, %v4627
        %v4635 = vsel %vm545, %v4625, %v4626
        %v4636 = vsel %vm545, %v4624, %v4625
        %v4637 = vsel %vm545, %v4623, %v4624
        %v4638 = vsel %vm545, %v4622, %v4623
        %v4639 = vsel %vm545, %v4621, %v4622
        %v4640 = vsel %vm545, %v4620, %v4621
        %v4641 = vsel %vm545, %v4619, %v4620
        %v4642 = vsel %vm545, %v4618, %v4619
        %v4643 = vsel %vm545, %v4617, %v4618
        %v4644 = vsel %vm545, %v4616, %v4617
        %v4645 = vsel %vm545, %v4615, %v4616
        %v4646 = vsel %vm545, %v4630, %v4615
        %v4647 = vsel %vm434, 0.0, %v4646
        %v4648 = vsel %vm435, 0.0, %v4645
        %v4649 = vsel %vm436, 0.0, %v4644
        %v4650 = vsel %vm437, 0.0, %v4643
        %v4651 = vsel %vm438, 0.0, %v4642
        %v4652 = vsel %vm439, 0.0, %v4641
        %v4653 = vsel %vm440, 0.0, %v4640
        %v4654 = vsel %vm441, 0.0, %v4639
        %v4655 = vsel %vm442, 0.0, %v4638
        %v4656 = vsel %vm443, 0.0, %v4637
        %v4657 = vsel %vm444, 0.0, %v4636
        %v4658 = vsel %vm445, 0.0, %v4635
        %v4659 = vsel %vm446, 0.0, %v4634
        %v4660 = vsel %vm447, 0.0, %v4633
        %v4661 = vsel %vm448, 0.0, %v4632
        %v4662 = vsel %vm449, 0.0, %v4631
        %v4663 = vpack.c.bf16 %v4647, %v4647
        %v4664 = vpack.c.bf16 %v4648, %v4648
        %v4665 = vpack.c.bf16 %v4649, %v4649
        %v4666 = vpack.c.bf16 %v4650, %v4650
        %v4667 = vpack.c.bf16 %v4651, %v4651
        %v4668 = vpack.c.bf16 %v4652, %v4652
        %v4669 = vpack.c.bf16 %v4653, %v4653
        %v4670 = vpack.c.bf16 %v4654, %v4654
        %v4671 = vpack.c.bf16 %v4655, %v4655
        %v4672 = vpack.c.bf16 %v4656, %v4656
        %v4673 = vpack.c.bf16 %v4657, %v4657
        %v4674 = vpack.c.bf16 %v4658, %v4658
        %v4675 = vpack.c.bf16 %v4659, %v4659
        %v4676 = vpack.c.bf16 %v4660, %v4660
        %v4677 = vpack.c.bf16 %v4661, %v4661
        %v4678 = vpack.c.bf16 %v4662, %v4662
        %4679 = vst.msk [vmem:[#allocation2 + $0x48] sm:$0xf] %vm466, %v4663
        %4680 = vst.msk [vmem:[#allocation2 + $0x4c] sm:$0xf] %vm466, %v4664
        %4681 = vst.msk [vmem:[#allocation2 + $0x50] sm:$0xf] %vm466, %v4665
        %4682 = vst.msk [vmem:[#allocation2 + $0x54] sm:$0xf] %vm466, %v4666
        %4683 = vst.msk [vmem:[#allocation2 + $0x58] sm:$0xf] %vm466, %v4667
        %4684 = vst.msk [vmem:[#allocation2 + $0x5c] sm:$0xf] %vm466, %v4668
        %4685 = vst.msk [vmem:[#allocation2 + $0x60] sm:$0xf] %vm466, %v4669
        %4686 = vst.msk [vmem:[#allocation2 + $0x64] sm:$0xf] %vm466, %v4670
        %4687 = vst.msk [vmem:[#allocation2 + $0x68] sm:$0xf] %vm466, %v4671
        %4688 = vst.msk [vmem:[#allocation2 + $0x6c] sm:$0xf] %vm466, %v4672
        %4689 = vst.msk [vmem:[#allocation2 + $0x70] sm:$0xf] %vm466, %v4673
        %4690 = vst.msk [vmem:[#allocation2 + $0x74] sm:$0xf] %vm466, %v4674
        %4691 = vst.msk [vmem:[#allocation2 + $0x78] sm:$0xf] %vm466, %v4675
        %4692 = vst.msk [vmem:[#allocation2 + $0x7c] sm:$0xf] %vm466, %v4676
        %4693 = vst.msk [vmem:[#allocation2 + $0x80] sm:$0xf] %vm466, %v4677
        %4694 = vst.msk [vmem:[#allocation2 + $0x84] sm:$0xf] %vm466, %v4678
        %v4695 = vrot.slane %v4567, 1
        %v4696 = vrot.slane %v4568, 1
        %v4697 = vrot.slane %v4569, 1
        %v4698 = vrot.slane %v4570, 1
        %v4699 = vrot.slane %v4571, 1
        %v4700 = vrot.slane %v4572, 1
        %v4701 = vrot.slane %v4573, 1
        %v4702 = vrot.slane %v4574, 1
        %v4703 = vrot.slane %v4575, 1
        %v4704 = vrot.slane %v4576, 1
        %v4705 = vrot.slane %v4577, 1
        %v4706 = vrot.slane %v4578, 1
        %v4707 = vrot.slane %v4579, 1
        %v4708 = vrot.slane %v4580, 1
        %v4709 = vrot.slane %v4581, 1
        %v4710 = vrot.slane %v4582, 1
        %v4711 = vsel %vm626, %v4709, %v4710
        %v4712 = vsel %vm626, %v4708, %v4709
        %v4713 = vsel %vm626, %v4707, %v4708
        %v4714 = vsel %vm626, %v4706, %v4707
        %v4715 = vsel %vm626, %v4705, %v4706
        %v4716 = vsel %vm626, %v4704, %v4705
        %v4717 = vsel %vm626, %v4703, %v4704
        %v4718 = vsel %vm626, %v4702, %v4703
        %v4719 = vsel %vm626, %v4701, %v4702
        %v4720 = vsel %vm626, %v4700, %v4701
        %v4721 = vsel %vm626, %v4699, %v4700
        %v4722 = vsel %vm626, %v4698, %v4699
        %v4723 = vsel %vm626, %v4697, %v4698
        %v4724 = vsel %vm626, %v4696, %v4697
        %v4725 = vsel %vm626, %v4695, %v4696
        %v4726 = vsel %vm626, %v4710, %v4695
        %v4727 = vsel %vm450, 0.0, %v4725
        %v4728 = vsel %vm451, 0.0, %v4724
        %v4729 = vsel %vm452, 0.0, %v4723
        %v4730 = vsel %vm453, 0.0, %v4722
        %v4731 = vsel %vm454, 0.0, %v4721
        %v4732 = vsel %vm455, 0.0, %v4720
        %v4733 = vsel %vm456, 0.0, %v4719
        %v4734 = vsel %vm457, 0.0, %v4718
        %v4735 = vsel %vm458, 0.0, %v4717
        %v4736 = vsel %vm459, 0.0, %v4716
        %v4737 = vsel %vm460, 0.0, %v4715
        %v4738 = vsel %vm461, 0.0, %v4714
        %v4739 = vsel %vm462, 0.0, %v4713
        %v4740 = vsel %vm463, 0.0, %v4712
        %v4741 = vsel %vm464, 0.0, %v4711
        %v4742 = vsel %vm465, 0.0, %v4726
        %v4743 = vpack.c.bf16 %v4727, %v4727
        %v4744 = vpack.c.bf16 %v4728, %v4728
        %v4745 = vpack.c.bf16 %v4729, %v4729
        %v4746 = vpack.c.bf16 %v4730, %v4730
        %v4747 = vpack.c.bf16 %v4731, %v4731
        %v4748 = vpack.c.bf16 %v4732, %v4732
        %v4749 = vpack.c.bf16 %v4733, %v4733
        %v4750 = vpack.c.bf16 %v4734, %v4734
        %v4751 = vpack.c.bf16 %v4735, %v4735
        %v4752 = vpack.c.bf16 %v4736, %v4736
        %v4753 = vpack.c.bf16 %v4737, %v4737
        %v4754 = vpack.c.bf16 %v4738, %v4738
        %v4755 = vpack.c.bf16 %v4739, %v4739
        %v4756 = vpack.c.bf16 %v4740, %v4740
        %v4757 = vpack.c.bf16 %v4741, %v4741
        %v4758 = vpack.c.bf16 %v4742, %v4742
        %4759 = vst.msk [vmem:[%s476 + $0x48] sm:$0xf] %vm466, %v4743
        %4760 = vst.msk [vmem:[%s476 + $0x4c] sm:$0xf] %vm466, %v4744
        %4761 = vst.msk [vmem:[%s476 + $0x50] sm:$0xf] %vm466, %v4745
        %4762 = vst.msk [vmem:[%s476 + $0x54] sm:$0xf] %vm466, %v4746
        %4763 = vst.msk [vmem:[%s476 + $0x58] sm:$0xf] %vm466, %v4747
        %4764 = vst.msk [vmem:[%s476 + $0x5c] sm:$0xf] %vm466, %v4748
        %4765 = vst.msk [vmem:[%s476 + $0x60] sm:$0xf] %vm466, %v4749
        %4766 = vst.msk [vmem:[%s476 + $0x64] sm:$0xf] %vm466, %v4750
        %4767 = vst.msk [vmem:[%s476 + $0x68] sm:$0xf] %vm466, %v4751
        %4768 = vst.msk [vmem:[%s476 + $0x6c] sm:$0xf] %vm466, %v4752
        %4769 = vst.msk [vmem:[%s476 + $0x70] sm:$0xf] %vm466, %v4753
        %4770 = vst.msk [vmem:[%s476 + $0x74] sm:$0xf] %vm466, %v4754
        %4771 = vst.msk [vmem:[%s476 + $0x78] sm:$0xf] %vm466, %v4755
        %4772 = vst.msk [vmem:[%s476 + $0x7c] sm:$0xf] %vm466, %v4756
        %4773 = vst.msk [vmem:[%s476 + $0x80] sm:$0xf] %vm466, %v4757
        %4774 = vst.msk [vmem:[%s476 + $0x84] sm:$0xf] %vm466, %v4758
        %v4775 = vld [vmem:[#allocation2] sm:$0xf]
        %v4776 = vld [vmem:[#allocation2 + $0x4] sm:$0xf]
        %v4777 = vld [vmem:[#allocation2 + $0x8] sm:$0xf]
        %v4778 = vld [vmem:[#allocation2 + $0xc] sm:$0xf]
        %v4779 = vld [vmem:[#allocation2 + $0x10] sm:$0xf]
        %v4780 = vld [vmem:[#allocation2 + $0x14] sm:$0xf]
        %v4781 = vld [vmem:[#allocation2 + $0x18] sm:$0xf]
        %v4782 = vld [vmem:[#allocation2 + $0x1c] sm:$0xf]
        %v4783 = vld [vmem:[#allocation2 + $0x20] sm:$0xf]
        %v4784 = vld [vmem:[#allocation2 + $0x24] sm:$0xf]
        %v4785 = vld [vmem:[#allocation2 + $0x28] sm:$0xf]
        %v4786 = vld [vmem:[#allocation2 + $0x2c] sm:$0xf]
        %v4787 = vld [vmem:[#allocation2 + $0x30] sm:$0xf]
        %v4788 = vld [vmem:[#allocation2 + $0x34] sm:$0xf]
        %v4789 = vld [vmem:[#allocation2 + $0x38] sm:$0xf]
        %v4790 = vld [vmem:[#allocation2 + $0x3c] sm:$0xf]
        %v4791 = vld [vmem:[#allocation9] sm:$0xf]
        %v4792 = vld [vmem:[#allocation9 + $0x4] sm:$0xf]
        %v4793 = vld [vmem:[#allocation9 + $0x8] sm:$0xf]
        %v4794 = vld [vmem:[#allocation9 + $0xc] sm:$0xf]
        %v4795 = vld [vmem:[#allocation9 + $0x10] sm:$0xf]
        %v4796 = vld [vmem:[#allocation9 + $0x14] sm:$0xf]
        %v4797 = vld [vmem:[#allocation9 + $0x18] sm:$0xf]
        %v4798 = vld [vmem:[#allocation9 + $0x1c] sm:$0xf]
        %v4799 = vld [vmem:[%s471] sm:$0xf]
        %v4800 = vld [vmem:[%s471 + $0x4] sm:$0xf]
        %v4801 = vld [vmem:[%s471 + $0x8] sm:$0xf]
        %v4802 = vld [vmem:[%s471 + $0xc] sm:$0xf]
        %v4803 = vld [vmem:[%s471 + $0x10] sm:$0xf]
        %v4804 = vld [vmem:[%s471 + $0x14] sm:$0xf]
        %v4805 = vld [vmem:[%s471 + $0x18] sm:$0xf]
        %v4806 = vld [vmem:[%s471 + $0x1c] sm:$0xf]
        %v4807 = vld [vmem:[%s471 + $0x20] sm:$0xf]
        %v4808 = vld [vmem:[%s471 + $0x24] sm:$0xf]
        %v4809 = vld [vmem:[%s471 + $0x28] sm:$0xf]
        %v4810 = vld [vmem:[%s471 + $0x2c] sm:$0xf]
        %v4811 = vld [vmem:[%s471 + $0x30] sm:$0xf]
        %v4812 = vld [vmem:[%s471 + $0x34] sm:$0xf]
        %v4813 = vld [vmem:[%s471 + $0x38] sm:$0xf]
        %v4814 = vld [vmem:[%s471 + $0x3c] sm:$0xf]
        %s4815 = scalar_lea.vmem [#allocation9], 32
        %v4816 = vld [vmem:[%s4815] sm:$0xf]
        %v4817 = vld [vmem:[%s4815 + $0x4] sm:$0xf]
        %v4818 = vld [vmem:[%s4815 + $0x8] sm:$0xf]
        %v4819 = vld [vmem:[%s4815 + $0xc] sm:$0xf]
        %v4820 = vld [vmem:[%s4815 + $0x10] sm:$0xf]
        %v4821 = vld [vmem:[%s4815 + $0x14] sm:$0xf]
        %v4822 = vld [vmem:[%s4815 + $0x18] sm:$0xf]
        %v4823 = vld [vmem:[%s4815 + $0x1c] sm:$0xf]
        %v4840 = vunpack.c.l.b16 %v4799
        %v4841 = vunpack.c.l.b16 %v4800
        %v4842 = vunpack.c.l.b16 %v4801
        %v4843 = vunpack.c.l.b16 %v4802
        %v4844 = vunpack.c.l.b16 %v4803
        %v4845 = vunpack.c.l.b16 %v4804
        %v4846 = vunpack.c.l.b16 %v4805
        %v4847 = vunpack.c.l.b16 %v4806
        %v4848 = vunpack.c.l.b16 %v4807
        %v4849 = vunpack.c.l.b16 %v4808
        %v4850 = vunpack.c.l.b16 %v4809
        %v4851 = vunpack.c.l.b16 %v4810
        %v4852 = vunpack.c.l.b16 %v4811
        %v4853 = vunpack.c.l.b16 %v4812
        %v4854 = vunpack.c.l.b16 %v4813
        %v4855 = vunpack.c.l.b16 %v4814
        %v4856 = vpack.c.b16 %v4841, %v4840
        %v4857 = vpack.c.b16 %v4843, %v4842
        %v4858 = vpack.c.b16 %v4845, %v4844
        %v4859 = vpack.c.b16 %v4847, %v4846
        %v4860 = vpack.c.b16 %v4849, %v4848
        %v4861 = vpack.c.b16 %v4851, %v4850
        %v4862 = vpack.c.b16 %v4853, %v4852
        %v4863 = vpack.c.b16 %v4855, %v4854
        %v4872 = vunpack.c.l.b16 %v4816
        %v4873 = vunpack.c.l.b16 %v4817
        %v4874 = vunpack.c.l.b16 %v4818
        %v4875 = vunpack.c.l.b16 %v4819
        %v4876 = vunpack.c.l.b16 %v4820
        %v4877 = vunpack.c.l.b16 %v4821
        %v4878 = vunpack.c.l.b16 %v4822
        %v4879 = vunpack.c.l.b16 %v4823
        %v4880 = vpack.c.b16 %v4873, %v4872
        %v4881 = vpack.c.b16 %v4875, %v4874
        %v4882 = vpack.c.b16 %v4877, %v4876
        %v4883 = vpack.c.b16 %v4879, %v4878
        %v4889 = vsel %vm1013, %v4856, 0
        %v4892 = vsel %vm1013, %v4857, 0
        %v4895 = vsel %vm1013, %v4858, 0
        %v4898 = vsel %vm1013, %v4859, 0
        %v4901 = vsel %vm1013, %v4860, 0
        %v4904 = vsel %vm1013, %v4861, 0
        %v4907 = vsel %vm1013, %v4862, 0
        %v4910 = vsel %vm1013, %v4863, 0
        %4912 = vmatpush.bf16.msra.mxu0 0
        %4913 = vmatpush.bf16.msra.mxu0 0
        %4914 = vmatpush.bf16.msra.mxu0 0
        %4915 = vmatpush.bf16.msra.mxu0 0
        %4916 = vmatpush.bf16.msra.mxu0 %v4883
        %4917 = vmatpush.bf16.msra.mxu0 %v4882
        %4918 = vmatpush.bf16.msra.mxu0 %v4881
        %4919 = vmatpush.bf16.msra.mxu0 %v4880
        %4920 = vmatmul.bf16.gmra.mxu0 %v4889
        %v4921 = vpop.f32.mrf.mxu0
        %v4922 = vadd.f32 0.0, %v4921
        %v4923 = vpop.f32.mrf.mxu0
        %v4924 = vadd.f32 0.0, %v4923
        %4925 = vmatmul.bf16.gmra.mxu0 %v4892
        %v4926 = vpop.f32.mrf.mxu0
        %v4927 = vadd.f32 0.0, %v4926
        %v4928 = vpop.f32.mrf.mxu0
        %v4929 = vadd.f32 0.0, %v4928
        %4930 = vmatmul.bf16.gmra.mxu0 %v4895
        %v4931 = vpop.f32.mrf.mxu0
        %v4932 = vadd.f32 0.0, %v4931
        %v4933 = vpop.f32.mrf.mxu0
        %v4934 = vadd.f32 0.0, %v4933
        %4935 = vmatmul.bf16.gmra.mxu0 %v4898
        %v4936 = vpop.f32.mrf.mxu0
        %v4937 = vadd.f32 0.0, %v4936
        %v4938 = vpop.f32.mrf.mxu0
        %v4939 = vadd.f32 0.0, %v4938
        %4940 = vmatmul.bf16.gmra.mxu0 %v4901
        %v4941 = vpop.f32.mrf.mxu0
        %v4942 = vadd.f32 0.0, %v4941
        %v4943 = vpop.f32.mrf.mxu0
        %v4944 = vadd.f32 0.0, %v4943
        %4945 = vmatmul.bf16.gmra.mxu0 %v4904
        %v4946 = vpop.f32.mrf.mxu0
        %v4947 = vadd.f32 0.0, %v4946
        %v4948 = vpop.f32.mrf.mxu0
        %v4949 = vadd.f32 0.0, %v4948
        %4950 = vmatmul.bf16.gmra.mxu0 %v4907
        %v4951 = vpop.f32.mrf.mxu0
        %v4952 = vadd.f32 0.0, %v4951
        %v4953 = vpop.f32.mrf.mxu0
        %v4954 = vadd.f32 0.0, %v4953
        %4955 = vmatmul.bf16.gmra.mxu0 %v4910
        %v4956 = vpop.f32.mrf.mxu0
        %v4957 = vadd.f32 0.0, %v4956
        %v4958 = vpop.f32.mrf.mxu0
        %v4959 = vadd.f32 0.0, %v4958
        %4960 = vdwg.mxu0
        %v4977 = vunpack.c.l.b16 %v4775
        %v4978 = vunpack.c.l.b16 %v4776
        %v4979 = vunpack.c.l.b16 %v4777
        %v4980 = vunpack.c.l.b16 %v4778
        %v4981 = vunpack.c.l.b16 %v4779
        %v4982 = vunpack.c.l.b16 %v4780
        %v4983 = vunpack.c.l.b16 %v4781
        %v4984 = vunpack.c.l.b16 %v4782
        %v4985 = vunpack.c.l.b16 %v4783
        %v4986 = vunpack.c.l.b16 %v4784
        %v4987 = vunpack.c.l.b16 %v4785
        %v4988 = vunpack.c.l.b16 %v4786
        %v4989 = vunpack.c.l.b16 %v4787
        %v4990 = vunpack.c.l.b16 %v4788
        %v4991 = vunpack.c.l.b16 %v4789
        %v4992 = vunpack.c.l.b16 %v4790
        %v4993 = vpack.c.b16 %v4978, %v4977
        %v4994 = vpack.c.b16 %v4980, %v4979
        %v4995 = vpack.c.b16 %v4982, %v4981
        %v4996 = vpack.c.b16 %v4984, %v4983
        %v4997 = vpack.c.b16 %v4986, %v4985
        %v4998 = vpack.c.b16 %v4988, %v4987
        %v4999 = vpack.c.b16 %v4990, %v4989
        %v5000 = vpack.c.b16 %v4992, %v4991
        %v5009 = vunpack.c.l.b16 %v4791
        %v5010 = vunpack.c.l.b16 %v4792
        %v5011 = vunpack.c.l.b16 %v4793
        %v5012 = vunpack.c.l.b16 %v4794
        %v5013 = vunpack.c.l.b16 %v4795
        %v5014 = vunpack.c.l.b16 %v4796
        %v5015 = vunpack.c.l.b16 %v4797
        %v5016 = vunpack.c.l.b16 %v4798
        %v5017 = vpack.c.b16 %v5010, %v5009
        %v5018 = vpack.c.b16 %v5012, %v5011
        %v5019 = vpack.c.b16 %v5014, %v5013
        %v5020 = vpack.c.b16 %v5016, %v5015
        %v5026 = vsel %vm1013, %v4993, 0
        %v5029 = vsel %vm1013, %v4994, 0
        %v5032 = vsel %vm1013, %v4995, 0
        %v5035 = vsel %vm1013, %v4996, 0
        %v5038 = vsel %vm1013, %v4997, 0
        %v5041 = vsel %vm1013, %v4998, 0
        %v5044 = vsel %vm1013, %v4999, 0
        %v5047 = vsel %vm1013, %v5000, 0
        %5049 = vmatpush.bf16.msra.mxu0 0
        %5050 = vmatpush.bf16.msra.mxu0 0
        %5051 = vmatpush.bf16.msra.mxu0 0
        %5052 = vmatpush.bf16.msra.mxu0 0
        %5053 = vmatpush.bf16.msra.mxu0 %v5020
        %5054 = vmatpush.bf16.msra.mxu0 %v5019
        %5055 = vmatpush.bf16.msra.mxu0 %v5018
        %5056 = vmatpush.bf16.msra.mxu0 %v5017
        %5057 = vmatmul.bf16.gmra.mxu0 %v5026
        %v5058 = vpop.f32.mrf.mxu0
        %v5059 = vadd.f32 %v4922, %v5058
        %v5060 = vpop.f32.mrf.mxu0
        %v5061 = vadd.f32 %v4924, %v5060
        %5062 = vmatmul.bf16.gmra.mxu0 %v5029
        %v5063 = vpop.f32.mrf.mxu0
        %v5064 = vadd.f32 %v4927, %v5063
        %v5065 = vpop.f32.mrf.mxu0
        %v5066 = vadd.f32 %v4929, %v5065
        %5067 = vmatmul.bf16.gmra.mxu0 %v5032
        %v5068 = vpop.f32.mrf.mxu0
        %v5069 = vadd.f32 %v4932, %v5068
        %v5070 = vpop.f32.mrf.mxu0
        %v5071 = vadd.f32 %v4934, %v5070
        %5072 = vmatmul.bf16.gmra.mxu0 %v5035
        %v5073 = vpop.f32.mrf.mxu0
        %v5074 = vadd.f32 %v4937, %v5073
        %v5075 = vpop.f32.mrf.mxu0
        %v5076 = vadd.f32 %v4939, %v5075
        %5077 = vmatmul.bf16.gmra.mxu0 %v5038
        %v5078 = vpop.f32.mrf.mxu0
        %v5079 = vadd.f32 %v4942, %v5078
        %v5080 = vpop.f32.mrf.mxu0
        %v5081 = vadd.f32 %v4944, %v5080
        %5082 = vmatmul.bf16.gmra.mxu0 %v5041
        %v5083 = vpop.f32.mrf.mxu0
        %v5084 = vadd.f32 %v4947, %v5083
        %v5085 = vpop.f32.mrf.mxu0
        %v5086 = vadd.f32 %v4949, %v5085
        %5087 = vmatmul.bf16.gmra.mxu0 %v5044
        %v5088 = vpop.f32.mrf.mxu0
        %v5089 = vadd.f32 %v4952, %v5088
        %v5090 = vpop.f32.mrf.mxu0
        %v5091 = vadd.f32 %v4954, %v5090
        %5092 = vmatmul.bf16.gmra.mxu0 %v5047
        %v5093 = vpop.f32.mrf.mxu0
        %v5094 = vadd.f32 %v4957, %v5093
        %v5095 = vpop.f32.mrf.mxu0
        %v5096 = vadd.f32 %v4959, %v5095
        %5097 = vdwg.mxu0
        %v5098 = vld [vmem:[%s476] sm:$0xf]
        %v5099 = vld [vmem:[%s476 + $0x4] sm:$0xf]
        %v5100 = vld [vmem:[%s476 + $0x8] sm:$0xf]
        %v5101 = vld [vmem:[%s476 + $0xc] sm:$0xf]
        %v5102 = vld [vmem:[%s476 + $0x10] sm:$0xf]
        %v5103 = vld [vmem:[%s476 + $0x14] sm:$0xf]
        %v5104 = vld [vmem:[%s476 + $0x18] sm:$0xf]
        %v5105 = vld [vmem:[%s476 + $0x1c] sm:$0xf]
        %v5106 = vld [vmem:[%s476 + $0x20] sm:$0xf]
        %v5107 = vld [vmem:[%s476 + $0x24] sm:$0xf]
        %v5108 = vld [vmem:[%s476 + $0x28] sm:$0xf]
        %v5109 = vld [vmem:[%s476 + $0x2c] sm:$0xf]
        %v5110 = vld [vmem:[%s476 + $0x30] sm:$0xf]
        %v5111 = vld [vmem:[%s476 + $0x34] sm:$0xf]
        %v5112 = vld [vmem:[%s476 + $0x38] sm:$0xf]
        %v5113 = vld [vmem:[%s476 + $0x3c] sm:$0xf]
        %s5114 = scalar_lea.vmem [#allocation9], 64
        %v5115 = vld [vmem:[%s5114] sm:$0xf]
        %v5116 = vld [vmem:[%s5114 + $0x4] sm:$0xf]
        %v5117 = vld [vmem:[%s5114 + $0x8] sm:$0xf]
        %v5118 = vld [vmem:[%s5114 + $0xc] sm:$0xf]
        %v5119 = vld [vmem:[%s5114 + $0x10] sm:$0xf]
        %v5120 = vld [vmem:[%s5114 + $0x14] sm:$0xf]
        %v5121 = vld [vmem:[%s5114 + $0x18] sm:$0xf]
        %v5122 = vld [vmem:[%s5114 + $0x1c] sm:$0xf]
        %v5139 = vunpack.c.l.b16 %v5098
        %v5140 = vunpack.c.l.b16 %v5099
        %v5141 = vunpack.c.l.b16 %v5100
        %v5142 = vunpack.c.l.b16 %v5101
        %v5143 = vunpack.c.l.b16 %v5102
        %v5144 = vunpack.c.l.b16 %v5103
        %v5145 = vunpack.c.l.b16 %v5104
        %v5146 = vunpack.c.l.b16 %v5105
        %v5147 = vunpack.c.l.b16 %v5106
        %v5148 = vunpack.c.l.b16 %v5107
        %v5149 = vunpack.c.l.b16 %v5108
        %v5150 = vunpack.c.l.b16 %v5109
        %v5151 = vunpack.c.l.b16 %v5110
        %v5152 = vunpack.c.l.b16 %v5111
        %v5153 = vunpack.c.l.b16 %v5112
        %v5154 = vunpack.c.l.b16 %v5113
        %v5155 = vpack.c.b16 %v5140, %v5139
        %v5156 = vpack.c.b16 %v5142, %v5141
        %v5157 = vpack.c.b16 %v5144, %v5143
        %v5158 = vpack.c.b16 %v5146, %v5145
        %v5159 = vpack.c.b16 %v5148, %v5147
        %v5160 = vpack.c.b16 %v5150, %v5149
        %v5161 = vpack.c.b16 %v5152, %v5151
        %v5162 = vpack.c.b16 %v5154, %v5153
        %v5171 = vunpack.c.l.b16 %v5115
        %v5172 = vunpack.c.l.b16 %v5116
        %v5173 = vunpack.c.l.b16 %v5117
        %v5174 = vunpack.c.l.b16 %v5118
        %v5175 = vunpack.c.l.b16 %v5119
        %v5176 = vunpack.c.l.b16 %v5120
        %v5177 = vunpack.c.l.b16 %v5121
        %v5178 = vunpack.c.l.b16 %v5122
        %v5179 = vpack.c.b16 %v5172, %v5171
        %v5180 = vpack.c.b16 %v5174, %v5173
        %v5181 = vpack.c.b16 %v5176, %v5175
        %v5182 = vpack.c.b16 %v5178, %v5177
        %v5188 = vsel %vm1013, %v5155, 0
        %v5191 = vsel %vm1013, %v5156, 0
        %v5194 = vsel %vm1013, %v5157, 0
        %v5197 = vsel %vm1013, %v5158, 0
        %v5200 = vsel %vm1013, %v5159, 0
        %v5203 = vsel %vm1013, %v5160, 0
        %v5206 = vsel %vm1013, %v5161, 0
        %v5209 = vsel %vm1013, %v5162, 0
        %5211 = vmatpush.bf16.msra.mxu0 0
        %5212 = vmatpush.bf16.msra.mxu0 0
        %5213 = vmatpush.bf16.msra.mxu0 0
        %5214 = vmatpush.bf16.msra.mxu0 0
        %5215 = vmatpush.bf16.msra.mxu0 %v5182
        %5216 = vmatpush.bf16.msra.mxu0 %v5181
        %5217 = vmatpush.bf16.msra.mxu0 %v5180
        %5218 = vmatpush.bf16.msra.mxu0 %v5179
        %5219 = vmatmul.bf16.gmra.mxu0 %v5188
        %v5220 = vpop.f32.mrf.mxu0
        %v5221 = vadd.f32 0.0, %v5220
        %v5222 = vpop.f32.mrf.mxu0
        %v5223 = vadd.f32 0.0, %v5222
        %5224 = vmatmul.bf16.gmra.mxu0 %v5191
        %v5225 = vpop.f32.mrf.mxu0
        %v5226 = vadd.f32 0.0, %v5225
        %v5227 = vpop.f32.mrf.mxu0
        %v5228 = vadd.f32 0.0, %v5227
        %5229 = vmatmul.bf16.gmra.mxu0 %v5194
        %v5230 = vpop.f32.mrf.mxu0
        %v5231 = vadd.f32 0.0, %v5230
        %v5232 = vpop.f32.mrf.mxu0
        %v5233 = vadd.f32 0.0, %v5232
        %5234 = vmatmul.bf16.gmra.mxu0 %v5197
        %v5235 = vpop.f32.mrf.mxu0
        %v5236 = vadd.f32 0.0, %v5235
        %v5237 = vpop.f32.mrf.mxu0
        %v5238 = vadd.f32 0.0, %v5237
        %5239 = vmatmul.bf16.gmra.mxu0 %v5200
        %v5240 = vpop.f32.mrf.mxu0
        %v5241 = vadd.f32 0.0, %v5240
        %v5242 = vpop.f32.mrf.mxu0
        %v5243 = vadd.f32 0.0, %v5242
        %5244 = vmatmul.bf16.gmra.mxu0 %v5203
        %v5245 = vpop.f32.mrf.mxu0
        %v5246 = vadd.f32 0.0, %v5245
        %v5247 = vpop.f32.mrf.mxu0
        %v5248 = vadd.f32 0.0, %v5247
        %5249 = vmatmul.bf16.gmra.mxu0 %v5206
        %v5250 = vpop.f32.mrf.mxu0
        %v5251 = vadd.f32 0.0, %v5250
        %v5252 = vpop.f32.mrf.mxu0
        %v5253 = vadd.f32 0.0, %v5252
        %5254 = vmatmul.bf16.gmra.mxu0 %v5209
        %v5255 = vpop.f32.mrf.mxu0
        %v5256 = vadd.f32 0.0, %v5255
        %v5257 = vpop.f32.mrf.mxu0
        %v5258 = vadd.f32 0.0, %v5257
        %5259 = vdwg.mxu0
        %v5260 = vadd.f32 %v5059, %v5221
        %v5261 = vadd.f32 %v5061, %v5223
        %v5262 = vadd.f32 %v5064, %v5226
        %v5263 = vadd.f32 %v5066, %v5228
        %v5264 = vadd.f32 %v5069, %v5231
        %v5265 = vadd.f32 %v5071, %v5233
        %v5266 = vadd.f32 %v5074, %v5236
        %v5267 = vadd.f32 %v5076, %v5238
        %v5268 = vadd.f32 %v5079, %v5241
        %v5269 = vadd.f32 %v5081, %v5243
        %v5270 = vadd.f32 %v5084, %v5246
        %v5271 = vadd.f32 %v5086, %v5248
        %v5272 = vadd.f32 %v5089, %v5251
        %v5273 = vadd.f32 %v5091, %v5253
        %v5274 = vadd.f32 %v5094, %v5256
        %v5275 = vadd.f32 %v5096, %v5258
        %v5276 = vld [vmem:[#allocation2 + $0x8] sm:$0xf]
        %v5277 = vld [vmem:[#allocation2 + $0xc] sm:$0xf]
        %v5278 = vld [vmem:[#allocation2 + $0x10] sm:$0xf]
        %v5279 = vld [vmem:[#allocation2 + $0x14] sm:$0xf]
        %v5280 = vld [vmem:[#allocation2 + $0x18] sm:$0xf]
        %v5281 = vld [vmem:[#allocation2 + $0x1c] sm:$0xf]
        %v5282 = vld [vmem:[#allocation2 + $0x20] sm:$0xf]
        %v5283 = vld [vmem:[#allocation2 + $0x24] sm:$0xf]
        %v5284 = vld [vmem:[#allocation2 + $0x28] sm:$0xf]
        %v5285 = vld [vmem:[#allocation2 + $0x2c] sm:$0xf]
        %v5286 = vld [vmem:[#allocation2 + $0x30] sm:$0xf]
        %v5287 = vld [vmem:[#allocation2 + $0x34] sm:$0xf]
        %v5288 = vld [vmem:[#allocation2 + $0x38] sm:$0xf]
        %v5289 = vld [vmem:[#allocation2 + $0x3c] sm:$0xf]
        %v5290 = vld [vmem:[#allocation2 + $0x40] sm:$0xf]
        %v5291 = vld [vmem:[#allocation2 + $0x44] sm:$0xf]
        %s5292 = scalar_lea.vmem [#allocation9], 96
        %v5293 = vld [vmem:[%s5292] sm:$0xf]
        %v5294 = vld [vmem:[%s5292 + $0x4] sm:$0xf]
        %v5295 = vld [vmem:[%s5292 + $0x8] sm:$0xf]
        %v5296 = vld [vmem:[%s5292 + $0xc] sm:$0xf]
        %v5297 = vld [vmem:[%s5292 + $0x10] sm:$0xf]
        %v5298 = vld [vmem:[%s5292 + $0x14] sm:$0xf]
        %v5299 = vld [vmem:[%s5292 + $0x18] sm:$0xf]
        %v5300 = vld [vmem:[%s5292 + $0x1c] sm:$0xf]
        %v5317 = vunpack.c.l.b16 %v5276
        %v5318 = vunpack.c.l.b16 %v5277
        %v5319 = vunpack.c.l.b16 %v5278
        %v5320 = vunpack.c.l.b16 %v5279
        %v5321 = vunpack.c.l.b16 %v5280
        %v5322 = vunpack.c.l.b16 %v5281
        %v5323 = vunpack.c.l.b16 %v5282
        %v5324 = vunpack.c.l.b16 %v5283
        %v5325 = vunpack.c.l.b16 %v5284
        %v5326 = vunpack.c.l.b16 %v5285
        %v5327 = vunpack.c.l.b16 %v5286
        %v5328 = vunpack.c.l.b16 %v5287
        %v5329 = vunpack.c.l.b16 %v5288
        %v5330 = vunpack.c.l.b16 %v5289
        %v5331 = vunpack.c.l.b16 %v5290
        %v5332 = vunpack.c.l.b16 %v5291
        %v5333 = vpack.c.b16 %v5318, %v5317
        %v5334 = vpack.c.b16 %v5320, %v5319
        %v5335 = vpack.c.b16 %v5322, %v5321
        %v5336 = vpack.c.b16 %v5324, %v5323
        %v5337 = vpack.c.b16 %v5326, %v5325
        %v5338 = vpack.c.b16 %v5328, %v5327
        %v5339 = vpack.c.b16 %v5330, %v5329
        %v5340 = vpack.c.b16 %v5332, %v5331
        %v5349 = vunpack.c.l.b16 %v5293
        %v5350 = vunpack.c.l.b16 %v5294
        %v5351 = vunpack.c.l.b16 %v5295
        %v5352 = vunpack.c.l.b16 %v5296
        %v5353 = vunpack.c.l.b16 %v5297
        %v5354 = vunpack.c.l.b16 %v5298
        %v5355 = vunpack.c.l.b16 %v5299
        %v5356 = vunpack.c.l.b16 %v5300
        %v5357 = vpack.c.b16 %v5350, %v5349
        %v5358 = vpack.c.b16 %v5352, %v5351
        %v5359 = vpack.c.b16 %v5354, %v5353
        %v5360 = vpack.c.b16 %v5356, %v5355
        %v5366 = vsel %vm1013, %v5333, 0
        %v5369 = vsel %vm1013, %v5334, 0
        %v5372 = vsel %vm1013, %v5335, 0
        %v5375 = vsel %vm1013, %v5336, 0
        %v5378 = vsel %vm1013, %v5337, 0
        %v5381 = vsel %vm1013, %v5338, 0
        %v5384 = vsel %vm1013, %v5339, 0
        %v5387 = vsel %vm1013, %v5340, 0
        %5389 = vmatpush.bf16.msra.mxu0 0
        %5390 = vmatpush.bf16.msra.mxu0 0
        %5391 = vmatpush.bf16.msra.mxu0 0
        %5392 = vmatpush.bf16.msra.mxu0 0
        %5393 = vmatpush.bf16.msra.mxu0 %v5360
        %5394 = vmatpush.bf16.msra.mxu0 %v5359
        %5395 = vmatpush.bf16.msra.mxu0 %v5358
        %5396 = vmatpush.bf16.msra.mxu0 %v5357
        %5397 = vmatmul.bf16.gmra.mxu0 %v5366
        %v5398 = vpop.f32.mrf.mxu0
        %v5399 = vadd.f32 0.0, %v5398
        %v5400 = vpop.f32.mrf.mxu0
        %v5401 = vadd.f32 0.0, %v5400
        %5402 = vmatmul.bf16.gmra.mxu0 %v5369
        %v5403 = vpop.f32.mrf.mxu0
        %v5404 = vadd.f32 0.0, %v5403
        %v5405 = vpop.f32.mrf.mxu0
        %v5406 = vadd.f32 0.0, %v5405
        %5407 = vmatmul.bf16.gmra.mxu0 %v5372
        %v5408 = vpop.f32.mrf.mxu0
        %v5409 = vadd.f32 0.0, %v5408
        %v5410 = vpop.f32.mrf.mxu0
        %v5411 = vadd.f32 0.0, %v5410
        %5412 = vmatmul.bf16.gmra.mxu0 %v5375
        %v5413 = vpop.f32.mrf.mxu0
        %v5414 = vadd.f32 0.0, %v5413
        %v5415 = vpop.f32.mrf.mxu0
        %v5416 = vadd.f32 0.0, %v5415
        %5417 = vmatmul.bf16.gmra.mxu0 %v5378
        %v5418 = vpop.f32.mrf.mxu0
        %v5419 = vadd.f32 0.0, %v5418
        %v5420 = vpop.f32.mrf.mxu0
        %v5421 = vadd.f32 0.0, %v5420
        %5422 = vmatmul.bf16.gmra.mxu0 %v5381
        %v5423 = vpop.f32.mrf.mxu0
        %v5424 = vadd.f32 0.0, %v5423
        %v5425 = vpop.f32.mrf.mxu0
        %v5426 = vadd.f32 0.0, %v5425
        %5427 = vmatmul.bf16.gmra.mxu0 %v5384
        %v5428 = vpop.f32.mrf.mxu0
        %v5429 = vadd.f32 0.0, %v5428
        %v5430 = vpop.f32.mrf.mxu0
        %v5431 = vadd.f32 0.0, %v5430
        %5432 = vmatmul.bf16.gmra.mxu0 %v5387
        %v5433 = vpop.f32.mrf.mxu0
        %v5434 = vadd.f32 0.0, %v5433
        %v5435 = vpop.f32.mrf.mxu0
        %v5436 = vadd.f32 0.0, %v5435
        %5437 = vdwg.mxu0
        %v5438 = vadd.f32 %v5260, %v5399
        %v5439 = vadd.f32 %v5261, %v5401
        %v5440 = vadd.f32 %v5262, %v5404
        %v5441 = vadd.f32 %v5263, %v5406
        %v5442 = vadd.f32 %v5264, %v5409
        %v5443 = vadd.f32 %v5265, %v5411
        %v5444 = vadd.f32 %v5266, %v5414
        %v5445 = vadd.f32 %v5267, %v5416
        %v5446 = vadd.f32 %v5268, %v5419
        %v5447 = vadd.f32 %v5269, %v5421
        %v5448 = vadd.f32 %v5270, %v5424
        %v5449 = vadd.f32 %v5271, %v5426
        %v5450 = vadd.f32 %v5272, %v5429
        %v5451 = vadd.f32 %v5273, %v5431
        %v5452 = vadd.f32 %v5274, %v5434
        %v5453 = vadd.f32 %v5275, %v5436
        %v5454 = vld [vmem:[%s471 + $0x8] sm:$0xf]
        %v5455 = vld [vmem:[%s471 + $0xc] sm:$0xf]
        %v5456 = vld [vmem:[%s471 + $0x10] sm:$0xf]
        %v5457 = vld [vmem:[%s471 + $0x14] sm:$0xf]
        %v5458 = vld [vmem:[%s471 + $0x18] sm:$0xf]
        %v5459 = vld [vmem:[%s471 + $0x1c] sm:$0xf]
        %v5460 = vld [vmem:[%s471 + $0x20] sm:$0xf]
        %v5461 = vld [vmem:[%s471 + $0x24] sm:$0xf]
        %v5462 = vld [vmem:[%s471 + $0x28] sm:$0xf]
        %v5463 = vld [vmem:[%s471 + $0x2c] sm:$0xf]
        %v5464 = vld [vmem:[%s471 + $0x30] sm:$0xf]
        %v5465 = vld [vmem:[%s471 + $0x34] sm:$0xf]
        %v5466 = vld [vmem:[%s471 + $0x38] sm:$0xf]
        %v5467 = vld [vmem:[%s471 + $0x3c] sm:$0xf]
        %v5468 = vld [vmem:[%s471 + $0x40] sm:$0xf]
        %v5469 = vld [vmem:[%s471 + $0x44] sm:$0xf]
        %s5470 = scalar_lea.vmem [#allocation9], 128
        %v5471 = vld [vmem:[%s5470] sm:$0xf]
        %v5472 = vld [vmem:[%s5470 + $0x4] sm:$0xf]
        %v5473 = vld [vmem:[%s5470 + $0x8] sm:$0xf]
        %v5474 = vld [vmem:[%s5470 + $0xc] sm:$0xf]
        %v5475 = vld [vmem:[%s5470 + $0x10] sm:$0xf]
        %v5476 = vld [vmem:[%s5470 + $0x14] sm:$0xf]
        %v5477 = vld [vmem:[%s5470 + $0x18] sm:$0xf]
        %v5478 = vld [vmem:[%s5470 + $0x1c] sm:$0xf]
        %v5495 = vunpack.c.l.b16 %v5454
        %v5496 = vunpack.c.l.b16 %v5455
        %v5497 = vunpack.c.l.b16 %v5456
        %v5498 = vunpack.c.l.b16 %v5457
        %v5499 = vunpack.c.l.b16 %v5458
        %v5500 = vunpack.c.l.b16 %v5459
        %v5501 = vunpack.c.l.b16 %v5460
        %v5502 = vunpack.c.l.b16 %v5461
        %v5503 = vunpack.c.l.b16 %v5462
        %v5504 = vunpack.c.l.b16 %v5463
        %v5505 = vunpack.c.l.b16 %v5464
        %v5506 = vunpack.c.l.b16 %v5465
        %v5507 = vunpack.c.l.b16 %v5466
        %v5508 = vunpack.c.l.b16 %v5467
        %v5509 = vunpack.c.l.b16 %v5468
        %v5510 = vunpack.c.l.b16 %v5469
        %v5511 = vpack.c.b16 %v5496, %v5495
        %v5512 = vpack.c.b16 %v5498, %v5497
        %v5513 = vpack.c.b16 %v5500, %v5499
        %v5514 = vpack.c.b16 %v5502, %v5501
        %v5515 = vpack.c.b16 %v5504, %v5503
        %v5516 = vpack.c.b16 %v5506, %v5505
        %v5517 = vpack.c.b16 %v5508, %v5507
        %v5518 = vpack.c.b16 %v5510, %v5509
        %v5527 = vunpack.c.l.b16 %v5471
        %v5528 = vunpack.c.l.b16 %v5472
        %v5529 = vunpack.c.l.b16 %v5473
        %v5530 = vunpack.c.l.b16 %v5474
        %v5531 = vunpack.c.l.b16 %v5475
        %v5532 = vunpack.c.l.b16 %v5476
        %v5533 = vunpack.c.l.b16 %v5477
        %v5534 = vunpack.c.l.b16 %v5478
        %v5535 = vpack.c.b16 %v5528, %v5527
        %v5536 = vpack.c.b16 %v5530, %v5529
        %v5537 = vpack.c.b16 %v5532, %v5531
        %v5538 = vpack.c.b16 %v5534, %v5533
        %v5544 = vsel %vm1013, %v5511, 0
        %v5547 = vsel %vm1013, %v5512, 0
        %v5550 = vsel %vm1013, %v5513, 0
        %v5553 = vsel %vm1013, %v5514, 0
        %v5556 = vsel %vm1013, %v5515, 0
        %v5559 = vsel %vm1013, %v5516, 0
        %v5562 = vsel %vm1013, %v5517, 0
        %v5565 = vsel %vm1013, %v5518, 0
        %5567 = vmatpush.bf16.msra.mxu0 0
        %5568 = vmatpush.bf16.msra.mxu0 0
        %5569 = vmatpush.bf16.msra.mxu0 0
        %5570 = vmatpush.bf16.msra.mxu0 0
        %5571 = vmatpush.bf16.msra.mxu0 %v5538
        %5572 = vmatpush.bf16.msra.mxu0 %v5537
        %5573 = vmatpush.bf16.msra.mxu0 %v5536
        %5574 = vmatpush.bf16.msra.mxu0 %v5535
        %5575 = vmatmul.bf16.gmra.mxu0 %v5544
        %v5576 = vpop.f32.mrf.mxu0
        %v5577 = vadd.f32 0.0, %v5576
        %v5578 = vpop.f32.mrf.mxu0
        %v5579 = vadd.f32 0.0, %v5578
        %5580 = vmatmul.bf16.gmra.mxu0 %v5547
        %v5581 = vpop.f32.mrf.mxu0
        %v5582 = vadd.f32 0.0, %v5581
        %v5583 = vpop.f32.mrf.mxu0
        %v5584 = vadd.f32 0.0, %v5583
        %5585 = vmatmul.bf16.gmra.mxu0 %v5550
        %v5586 = vpop.f32.mrf.mxu0
        %v5587 = vadd.f32 0.0, %v5586
        %v5588 = vpop.f32.mrf.mxu0
        %v5589 = vadd.f32 0.0, %v5588
        %5590 = vmatmul.bf16.gmra.mxu0 %v5553
        %v5591 = vpop.f32.mrf.mxu0
        %v5592 = vadd.f32 0.0, %v5591
        %v5593 = vpop.f32.mrf.mxu0
        %v5594 = vadd.f32 0.0, %v5593
        %5595 = vmatmul.bf16.gmra.mxu0 %v5556
        %v5596 = vpop.f32.mrf.mxu0
        %v5597 = vadd.f32 0.0, %v5596
        %v5598 = vpop.f32.mrf.mxu0
        %v5599 = vadd.f32 0.0, %v5598
        %5600 = vmatmul.bf16.gmra.mxu0 %v5559
        %v5601 = vpop.f32.mrf.mxu0
        %v5602 = vadd.f32 0.0, %v5601
        %v5603 = vpop.f32.mrf.mxu0
        %v5604 = vadd.f32 0.0, %v5603
        %5605 = vmatmul.bf16.gmra.mxu0 %v5562
        %v5606 = vpop.f32.mrf.mxu0
        %v5607 = vadd.f32 0.0, %v5606
        %v5608 = vpop.f32.mrf.mxu0
        %v5609 = vadd.f32 0.0, %v5608
        %5610 = vmatmul.bf16.gmra.mxu0 %v5565
        %v5611 = vpop.f32.mrf.mxu0
        %v5612 = vadd.f32 0.0, %v5611
        %v5613 = vpop.f32.mrf.mxu0
        %v5614 = vadd.f32 0.0, %v5613
        %5615 = vdwg.mxu0
        %v5616 = vadd.f32 %v5438, %v5577
        %v5617 = vadd.f32 %v5439, %v5579
        %v5618 = vadd.f32 %v5440, %v5582
        %v5619 = vadd.f32 %v5441, %v5584
        %v5620 = vadd.f32 %v5442, %v5587
        %v5621 = vadd.f32 %v5443, %v5589
        %v5622 = vadd.f32 %v5444, %v5592
        %v5623 = vadd.f32 %v5445, %v5594
        %v5624 = vadd.f32 %v5446, %v5597
        %v5625 = vadd.f32 %v5447, %v5599
        %v5626 = vadd.f32 %v5448, %v5602
        %v5627 = vadd.f32 %v5449, %v5604
        %v5628 = vadd.f32 %v5450, %v5607
        %v5629 = vadd.f32 %v5451, %v5609
        %v5630 = vadd.f32 %v5452, %v5612
        %v5631 = vadd.f32 %v5453, %v5614
        %v5632 = vld [vmem:[%s476 + $0x8] sm:$0xf]
        %v5633 = vld [vmem:[%s476 + $0xc] sm:$0xf]
        %v5634 = vld [vmem:[%s476 + $0x10] sm:$0xf]
        %v5635 = vld [vmem:[%s476 + $0x14] sm:$0xf]
        %v5636 = vld [vmem:[%s476 + $0x18] sm:$0xf]
        %v5637 = vld [vmem:[%s476 + $0x1c] sm:$0xf]
        %v5638 = vld [vmem:[%s476 + $0x20] sm:$0xf]
        %v5639 = vld [vmem:[%s476 + $0x24] sm:$0xf]
        %v5640 = vld [vmem:[%s476 + $0x28] sm:$0xf]
        %v5641 = vld [vmem:[%s476 + $0x2c] sm:$0xf]
        %v5642 = vld [vmem:[%s476 + $0x30] sm:$0xf]
        %v5643 = vld [vmem:[%s476 + $0x34] sm:$0xf]
        %v5644 = vld [vmem:[%s476 + $0x38] sm:$0xf]
        %v5645 = vld [vmem:[%s476 + $0x3c] sm:$0xf]
        %v5646 = vld [vmem:[%s476 + $0x40] sm:$0xf]
        %v5647 = vld [vmem:[%s476 + $0x44] sm:$0xf]
        %s5648 = scalar_lea.vmem [#allocation9], 160
        %v5649 = vld [vmem:[%s5648] sm:$0xf]
        %v5650 = vld [vmem:[%s5648 + $0x4] sm:$0xf]
        %v5651 = vld [vmem:[%s5648 + $0x8] sm:$0xf]
        %v5652 = vld [vmem:[%s5648 + $0xc] sm:$0xf]
        %v5653 = vld [vmem:[%s5648 + $0x10] sm:$0xf]
        %v5654 = vld [vmem:[%s5648 + $0x14] sm:$0xf]
        %v5655 = vld [vmem:[%s5648 + $0x18] sm:$0xf]
        %v5656 = vld [vmem:[%s5648 + $0x1c] sm:$0xf]
        %v5673 = vunpack.c.l.b16 %v5632
        %v5674 = vunpack.c.l.b16 %v5633
        %v5675 = vunpack.c.l.b16 %v5634
        %v5676 = vunpack.c.l.b16 %v5635
        %v5677 = vunpack.c.l.b16 %v5636
        %v5678 = vunpack.c.l.b16 %v5637
        %v5679 = vunpack.c.l.b16 %v5638
        %v5680 = vunpack.c.l.b16 %v5639
        %v5681 = vunpack.c.l.b16 %v5640
        %v5682 = vunpack.c.l.b16 %v5641
        %v5683 = vunpack.c.l.b16 %v5642
        %v5684 = vunpack.c.l.b16 %v5643
        %v5685 = vunpack.c.l.b16 %v5644
        %v5686 = vunpack.c.l.b16 %v5645
        %v5687 = vunpack.c.l.b16 %v5646
        %v5688 = vunpack.c.l.b16 %v5647
        %v5689 = vpack.c.b16 %v5674, %v5673
        %v5690 = vpack.c.b16 %v5676, %v5675
        %v5691 = vpack.c.b16 %v5678, %v5677
        %v5692 = vpack.c.b16 %v5680, %v5679
        %v5693 = vpack.c.b16 %v5682, %v5681
        %v5694 = vpack.c.b16 %v5684, %v5683
        %v5695 = vpack.c.b16 %v5686, %v5685
        %v5696 = vpack.c.b16 %v5688, %v5687
        %v5705 = vunpack.c.l.b16 %v5649
        %v5706 = vunpack.c.l.b16 %v5650
        %v5707 = vunpack.c.l.b16 %v5651
        %v5708 = vunpack.c.l.b16 %v5652
        %v5709 = vunpack.c.l.b16 %v5653
        %v5710 = vunpack.c.l.b16 %v5654
        %v5711 = vunpack.c.l.b16 %v5655
        %v5712 = vunpack.c.l.b16 %v5656
        %v5713 = vpack.c.b16 %v5706, %v5705
        %v5714 = vpack.c.b16 %v5708, %v5707
        %v5715 = vpack.c.b16 %v5710, %v5709
        %v5716 = vpack.c.b16 %v5712, %v5711
        %v5722 = vsel %vm1013, %v5689, 0
        %v5725 = vsel %vm1013, %v5690, 0
        %v5728 = vsel %vm1013, %v5691, 0
        %v5731 = vsel %vm1013, %v5692, 0
        %v5734 = vsel %vm1013, %v5693, 0
        %v5737 = vsel %vm1013, %v5694, 0
        %v5740 = vsel %vm1013, %v5695, 0
        %v5743 = vsel %vm1013, %v5696, 0
        %5745 = vmatpush.bf16.msra.mxu0 0
        %5746 = vmatpush.bf16.msra.mxu0 0
        %5747 = vmatpush.bf16.msra.mxu0 0
        %5748 = vmatpush.bf16.msra.mxu0 0
        %5749 = vmatpush.bf16.msra.mxu0 %v5716
        %5750 = vmatpush.bf16.msra.mxu0 %v5715
        %5751 = vmatpush.bf16.msra.mxu0 %v5714
        %5752 = vmatpush.bf16.msra.mxu0 %v5713
        %5753 = vmatmul.bf16.gmra.mxu0 %v5722
        %v5754 = vpop.f32.mrf.mxu0
        %v5755 = vadd.f32 0.0, %v5754
        %v5756 = vpop.f32.mrf.mxu0
        %v5757 = vadd.f32 0.0, %v5756
        %5758 = vmatmul.bf16.gmra.mxu0 %v5725
        %v5759 = vpop.f32.mrf.mxu0
        %v5760 = vadd.f32 0.0, %v5759
        %v5761 = vpop.f32.mrf.mxu0
        %v5762 = vadd.f32 0.0, %v5761
        %5763 = vmatmul.bf16.gmra.mxu0 %v5728
        %v5764 = vpop.f32.mrf.mxu0
        %v5765 = vadd.f32 0.0, %v5764
        %v5766 = vpop.f32.mrf.mxu0
        %v5767 = vadd.f32 0.0, %v5766
        %5768 = vmatmul.bf16.gmra.mxu0 %v5731
        %v5769 = vpop.f32.mrf.mxu0
        %v5770 = vadd.f32 0.0, %v5769
        %v5771 = vpop.f32.mrf.mxu0
        %v5772 = vadd.f32 0.0, %v5771
        %5773 = vmatmul.bf16.gmra.mxu0 %v5734
        %v5774 = vpop.f32.mrf.mxu0
        %v5775 = vadd.f32 0.0, %v5774
        %v5776 = vpop.f32.mrf.mxu0
        %v5777 = vadd.f32 0.0, %v5776
        %5778 = vmatmul.bf16.gmra.mxu0 %v5737
        %v5779 = vpop.f32.mrf.mxu0
        %v5780 = vadd.f32 0.0, %v5779
        %v5781 = vpop.f32.mrf.mxu0
        %v5782 = vadd.f32 0.0, %v5781
        %5783 = vmatmul.bf16.gmra.mxu0 %v5740
        %v5784 = vpop.f32.mrf.mxu0
        %v5785 = vadd.f32 0.0, %v5784
        %v5786 = vpop.f32.mrf.mxu0
        %v5787 = vadd.f32 0.0, %v5786
        %5788 = vmatmul.bf16.gmra.mxu0 %v5743
        %v5789 = vpop.f32.mrf.mxu0
        %v5790 = vadd.f32 0.0, %v5789
        %v5791 = vpop.f32.mrf.mxu0
        %v5792 = vadd.f32 0.0, %v5791
        %5793 = vdwg.mxu0
        %v5794 = vadd.f32 %v5616, %v5755
        %v5795 = vadd.f32 %v5617, %v5757
        %v5796 = vadd.f32 %v5618, %v5760
        %v5797 = vadd.f32 %v5619, %v5762
        %v5798 = vadd.f32 %v5620, %v5765
        %v5799 = vadd.f32 %v5621, %v5767
        %v5800 = vadd.f32 %v5622, %v5770
        %v5801 = vadd.f32 %v5623, %v5772
        %v5802 = vadd.f32 %v5624, %v5775
        %v5803 = vadd.f32 %v5625, %v5777
        %v5804 = vadd.f32 %v5626, %v5780
        %v5805 = vadd.f32 %v5627, %v5782
        %v5806 = vadd.f32 %v5628, %v5785
        %v5807 = vadd.f32 %v5629, %v5787
        %v5808 = vadd.f32 %v5630, %v5790
        %v5809 = vadd.f32 %v5631, %v5792
        %v5810 = vld [vmem:[#allocation2 + $0x10] sm:$0xf]
        %v5811 = vld [vmem:[#allocation2 + $0x14] sm:$0xf]
        %v5812 = vld [vmem:[#allocation2 + $0x18] sm:$0xf]
        %v5813 = vld [vmem:[#allocation2 + $0x1c] sm:$0xf]
        %v5814 = vld [vmem:[#allocation2 + $0x20] sm:$0xf]
        %v5815 = vld [vmem:[#allocation2 + $0x24] sm:$0xf]
        %v5816 = vld [vmem:[#allocation2 + $0x28] sm:$0xf]
        %v5817 = vld [vmem:[#allocation2 + $0x2c] sm:$0xf]
        %v5818 = vld [vmem:[#allocation2 + $0x30] sm:$0xf]
        %v5819 = vld [vmem:[#allocation2 + $0x34] sm:$0xf]
        %v5820 = vld [vmem:[#allocation2 + $0x38] sm:$0xf]
        %v5821 = vld [vmem:[#allocation2 + $0x3c] sm:$0xf]
        %v5822 = vld [vmem:[#allocation2 + $0x40] sm:$0xf]
        %v5823 = vld [vmem:[#allocation2 + $0x44] sm:$0xf]
        %v5824 = vld [vmem:[#allocation2 + $0x48] sm:$0xf]
        %v5825 = vld [vmem:[#allocation2 + $0x4c] sm:$0xf]
        %s5826 = scalar_lea.vmem [#allocation9], 192
        %v5827 = vld [vmem:[%s5826] sm:$0xf]
        %v5828 = vld [vmem:[%s5826 + $0x4] sm:$0xf]
        %v5829 = vld [vmem:[%s5826 + $0x8] sm:$0xf]
        %v5830 = vld [vmem:[%s5826 + $0xc] sm:$0xf]
        %v5831 = vld [vmem:[%s5826 + $0x10] sm:$0xf]
        %v5832 = vld [vmem:[%s5826 + $0x14] sm:$0xf]
        %v5833 = vld [vmem:[%s5826 + $0x18] sm:$0xf]
        %v5834 = vld [vmem:[%s5826 + $0x1c] sm:$0xf]
        %v5851 = vunpack.c.l.b16 %v5810
        %v5852 = vunpack.c.l.b16 %v5811
        %v5853 = vunpack.c.l.b16 %v5812
        %v5854 = vunpack.c.l.b16 %v5813
        %v5855 = vunpack.c.l.b16 %v5814
        %v5856 = vunpack.c.l.b16 %v5815
        %v5857 = vunpack.c.l.b16 %v5816
        %v5858 = vunpack.c.l.b16 %v5817
        %v5859 = vunpack.c.l.b16 %v5818
        %v5860 = vunpack.c.l.b16 %v5819
        %v5861 = vunpack.c.l.b16 %v5820
        %v5862 = vunpack.c.l.b16 %v5821
        %v5863 = vunpack.c.l.b16 %v5822
        %v5864 = vunpack.c.l.b16 %v5823
        %v5865 = vunpack.c.l.b16 %v5824
        %v5866 = vunpack.c.l.b16 %v5825
        %v5867 = vpack.c.b16 %v5852, %v5851
        %v5868 = vpack.c.b16 %v5854, %v5853
        %v5869 = vpack.c.b16 %v5856, %v5855
        %v5870 = vpack.c.b16 %v5858, %v5857
        %v5871 = vpack.c.b16 %v5860, %v5859
        %v5872 = vpack.c.b16 %v5862, %v5861
        %v5873 = vpack.c.b16 %v5864, %v5863
        %v5874 = vpack.c.b16 %v5866, %v5865
        %v5883 = vunpack.c.l.b16 %v5827
        %v5884 = vunpack.c.l.b16 %v5828
        %v5885 = vunpack.c.l.b16 %v5829
        %v5886 = vunpack.c.l.b16 %v5830
        %v5887 = vunpack.c.l.b16 %v5831
        %v5888 = vunpack.c.l.b16 %v5832
        %v5889 = vunpack.c.l.b16 %v5833
        %v5890 = vunpack.c.l.b16 %v5834
        %v5891 = vpack.c.b16 %v5884, %v5883
        %v5892 = vpack.c.b16 %v5886, %v5885
        %v5893 = vpack.c.b16 %v5888, %v5887
        %v5894 = vpack.c.b16 %v5890, %v5889
        %v5900 = vsel %vm1013, %v5867, 0
        %v5903 = vsel %vm1013, %v5868, 0
        %v5906 = vsel %vm1013, %v5869, 0
        %v5909 = vsel %vm1013, %v5870, 0
        %v5912 = vsel %vm1013, %v5871, 0
        %v5915 = vsel %vm1013, %v5872, 0
        %v5918 = vsel %vm1013, %v5873, 0
        %v5921 = vsel %vm1013, %v5874, 0
        %5923 = vmatpush.bf16.msra.mxu0 0
        %5924 = vmatpush.bf16.msra.mxu0 0
        %5925 = vmatpush.bf16.msra.mxu0 0
        %5926 = vmatpush.bf16.msra.mxu0 0
        %5927 = vmatpush.bf16.msra.mxu0 %v5894
        %5928 = vmatpush.bf16.msra.mxu0 %v5893
        %5929 = vmatpush.bf16.msra.mxu0 %v5892
        %5930 = vmatpush.bf16.msra.mxu0 %v5891
        %5931 = vmatmul.bf16.gmra.mxu0 %v5900
        %v5932 = vpop.f32.mrf.mxu0
        %v5933 = vadd.f32 0.0, %v5932
        %v5934 = vpop.f32.mrf.mxu0
        %v5935 = vadd.f32 0.0, %v5934
        %5936 = vmatmul.bf16.gmra.mxu0 %v5903
        %v5937 = vpop.f32.mrf.mxu0
        %v5938 = vadd.f32 0.0, %v5937
        %v5939 = vpop.f32.mrf.mxu0
        %v5940 = vadd.f32 0.0, %v5939
        %5941 = vmatmul.bf16.gmra.mxu0 %v5906
        %v5942 = vpop.f32.mrf.mxu0
        %v5943 = vadd.f32 0.0, %v5942
        %v5944 = vpop.f32.mrf.mxu0
        %v5945 = vadd.f32 0.0, %v5944
        %5946 = vmatmul.bf16.gmra.mxu0 %v5909
        %v5947 = vpop.f32.mrf.mxu0
        %v5948 = vadd.f32 0.0, %v5947
        %v5949 = vpop.f32.mrf.mxu0
        %v5950 = vadd.f32 0.0, %v5949
        %5951 = vmatmul.bf16.gmra.mxu0 %v5912
        %v5952 = vpop.f32.mrf.mxu0
        %v5953 = vadd.f32 0.0, %v5952
        %v5954 = vpop.f32.mrf.mxu0
        %v5955 = vadd.f32 0.0, %v5954
        %5956 = vmatmul.bf16.gmra.mxu0 %v5915
        %v5957 = vpop.f32.mrf.mxu0
        %v5958 = vadd.f32 0.0, %v5957
        %v5959 = vpop.f32.mrf.mxu0
        %v5960 = vadd.f32 0.0, %v5959
        %5961 = vmatmul.bf16.gmra.mxu0 %v5918
        %v5962 = vpop.f32.mrf.mxu0
        %v5963 = vadd.f32 0.0, %v5962
        %v5964 = vpop.f32.mrf.mxu0
        %v5965 = vadd.f32 0.0, %v5964
        %5966 = vmatmul.bf16.gmra.mxu0 %v5921
        %v5967 = vpop.f32.mrf.mxu0
        %v5968 = vadd.f32 0.0, %v5967
        %v5969 = vpop.f32.mrf.mxu0
        %v5970 = vadd.f32 0.0, %v5969
        %5971 = vdwg.mxu0
        %v5972 = vadd.f32 %v5794, %v5933
        %v5973 = vadd.f32 %v5795, %v5935
        %v5974 = vadd.f32 %v5796, %v5938
        %v5975 = vadd.f32 %v5797, %v5940
        %v5976 = vadd.f32 %v5798, %v5943
        %v5977 = vadd.f32 %v5799, %v5945
        %v5978 = vadd.f32 %v5800, %v5948
        %v5979 = vadd.f32 %v5801, %v5950
        %v5980 = vadd.f32 %v5802, %v5953
        %v5981 = vadd.f32 %v5803, %v5955
        %v5982 = vadd.f32 %v5804, %v5958
        %v5983 = vadd.f32 %v5805, %v5960
        %v5984 = vadd.f32 %v5806, %v5963
        %v5985 = vadd.f32 %v5807, %v5965
        %v5986 = vadd.f32 %v5808, %v5968
        %v5987 = vadd.f32 %v5809, %v5970
        %v5988 = vld [vmem:[%s471 + $0x10] sm:$0xf]
        %v5989 = vld [vmem:[%s471 + $0x14] sm:$0xf]
        %v5990 = vld [vmem:[%s471 + $0x18] sm:$0xf]
        %v5991 = vld [vmem:[%s471 + $0x1c] sm:$0xf]
        %v5992 = vld [vmem:[%s471 + $0x20] sm:$0xf]
        %v5993 = vld [vmem:[%s471 + $0x24] sm:$0xf]
        %v5994 = vld [vmem:[%s471 + $0x28] sm:$0xf]
        %v5995 = vld [vmem:[%s471 + $0x2c] sm:$0xf]
        %v5996 = vld [vmem:[%s471 + $0x30] sm:$0xf]
        %v5997 = vld [vmem:[%s471 + $0x34] sm:$0xf]
        %v5998 = vld [vmem:[%s471 + $0x38] sm:$0xf]
        %v5999 = vld [vmem:[%s471 + $0x3c] sm:$0xf]
        %v6000 = vld [vmem:[%s471 + $0x40] sm:$0xf]
        %v6001 = vld [vmem:[%s471 + $0x44] sm:$0xf]
        %v6002 = vld [vmem:[%s471 + $0x48] sm:$0xf]
        %v6003 = vld [vmem:[%s471 + $0x4c] sm:$0xf]
        %s6004 = scalar_lea.vmem [#allocation9], 224
        %v6005 = vld [vmem:[%s6004] sm:$0xf]
        %v6006 = vld [vmem:[%s6004 + $0x4] sm:$0xf]
        %v6007 = vld [vmem:[%s6004 + $0x8] sm:$0xf]
        %v6008 = vld [vmem:[%s6004 + $0xc] sm:$0xf]
        %v6009 = vld [vmem:[%s6004 + $0x10] sm:$0xf]
        %v6010 = vld [vmem:[%s6004 + $0x14] sm:$0xf]
        %v6011 = vld [vmem:[%s6004 + $0x18] sm:$0xf]
        %v6012 = vld [vmem:[%s6004 + $0x1c] sm:$0xf]
        %v6029 = vunpack.c.l.b16 %v5988
        %v6030 = vunpack.c.l.b16 %v5989
        %v6031 = vunpack.c.l.b16 %v5990
        %v6032 = vunpack.c.l.b16 %v5991
        %v6033 = vunpack.c.l.b16 %v5992
        %v6034 = vunpack.c.l.b16 %v5993
        %v6035 = vunpack.c.l.b16 %v5994
        %v6036 = vunpack.c.l.b16 %v5995
        %v6037 = vunpack.c.l.b16 %v5996
        %v6038 = vunpack.c.l.b16 %v5997
        %v6039 = vunpack.c.l.b16 %v5998
        %v6040 = vunpack.c.l.b16 %v5999
        %v6041 = vunpack.c.l.b16 %v6000
        %v6042 = vunpack.c.l.b16 %v6001
        %v6043 = vunpack.c.l.b16 %v6002
        %v6044 = vunpack.c.l.b16 %v6003
        %v6045 = vpack.c.b16 %v6030, %v6029
        %v6046 = vpack.c.b16 %v6032, %v6031
        %v6047 = vpack.c.b16 %v6034, %v6033
        %v6048 = vpack.c.b16 %v6036, %v6035
        %v6049 = vpack.c.b16 %v6038, %v6037
        %v6050 = vpack.c.b16 %v6040, %v6039
        %v6051 = vpack.c.b16 %v6042, %v6041
        %v6052 = vpack.c.b16 %v6044, %v6043
        %v6061 = vunpack.c.l.b16 %v6005
        %v6062 = vunpack.c.l.b16 %v6006
        %v6063 = vunpack.c.l.b16 %v6007
        %v6064 = vunpack.c.l.b16 %v6008
        %v6065 = vunpack.c.l.b16 %v6009
        %v6066 = vunpack.c.l.b16 %v6010
        %v6067 = vunpack.c.l.b16 %v6011
        %v6068 = vunpack.c.l.b16 %v6012
        %v6069 = vpack.c.b16 %v6062, %v6061
        %v6070 = vpack.c.b16 %v6064, %v6063
        %v6071 = vpack.c.b16 %v6066, %v6065
        %v6072 = vpack.c.b16 %v6068, %v6067
        %v6078 = vsel %vm1013, %v6045, 0
        %v6081 = vsel %vm1013, %v6046, 0
        %v6084 = vsel %vm1013, %v6047, 0
        %v6087 = vsel %vm1013, %v6048, 0
        %v6090 = vsel %vm1013, %v6049, 0
        %v6093 = vsel %vm1013, %v6050, 0
        %v6096 = vsel %vm1013, %v6051, 0
        %v6099 = vsel %vm1013, %v6052, 0
        %6101 = vmatpush.bf16.msra.mxu0 0
        %6102 = vmatpush.bf16.msra.mxu0 0
        %6103 = vmatpush.bf16.msra.mxu0 0
        %6104 = vmatpush.bf16.msra.mxu0 0
        %6105 = vmatpush.bf16.msra.mxu0 %v6072
        %6106 = vmatpush.bf16.msra.mxu0 %v6071
        %6107 = vmatpush.bf16.msra.mxu0 %v6070
        %6108 = vmatpush.bf16.msra.mxu0 %v6069
        %6109 = vmatmul.bf16.gmra.mxu0 %v6078
        %v6110 = vpop.f32.mrf.mxu0
        %v6111 = vadd.f32 0.0, %v6110
        %v6112 = vpop.f32.mrf.mxu0
        %v6113 = vadd.f32 0.0, %v6112
        %6114 = vmatmul.bf16.gmra.mxu0 %v6081
        %v6115 = vpop.f32.mrf.mxu0
        %v6116 = vadd.f32 0.0, %v6115
        %v6117 = vpop.f32.mrf.mxu0
        %v6118 = vadd.f32 0.0, %v6117
        %6119 = vmatmul.bf16.gmra.mxu0 %v6084
        %v6120 = vpop.f32.mrf.mxu0
        %v6121 = vadd.f32 0.0, %v6120
        %v6122 = vpop.f32.mrf.mxu0
        %v6123 = vadd.f32 0.0, %v6122
        %6124 = vmatmul.bf16.gmra.mxu0 %v6087
        %v6125 = vpop.f32.mrf.mxu0
        %v6126 = vadd.f32 0.0, %v6125
        %v6127 = vpop.f32.mrf.mxu0
        %v6128 = vadd.f32 0.0, %v6127
        %6129 = vmatmul.bf16.gmra.mxu0 %v6090
        %v6130 = vpop.f32.mrf.mxu0
        %v6131 = vadd.f32 0.0, %v6130
        %v6132 = vpop.f32.mrf.mxu0
        %v6133 = vadd.f32 0.0, %v6132
        %6134 = vmatmul.bf16.gmra.mxu0 %v6093
        %v6135 = vpop.f32.mrf.mxu0
        %v6136 = vadd.f32 0.0, %v6135
        %v6137 = vpop.f32.mrf.mxu0
        %v6138 = vadd.f32 0.0, %v6137
        %6139 = vmatmul.bf16.gmra.mxu0 %v6096
        %v6140 = vpop.f32.mrf.mxu0
        %v6141 = vadd.f32 0.0, %v6140
        %v6142 = vpop.f32.mrf.mxu0
        %v6143 = vadd.f32 0.0, %v6142
        %6144 = vmatmul.bf16.gmra.mxu0 %v6099
        %v6145 = vpop.f32.mrf.mxu0
        %v6146 = vadd.f32 0.0, %v6145
        %v6147 = vpop.f32.mrf.mxu0
        %v6148 = vadd.f32 0.0, %v6147
        %6149 = vdwg.mxu0
        %v6150 = vadd.f32 %v5972, %v6111
        %v6151 = vadd.f32 %v5973, %v6113
        %v6152 = vadd.f32 %v5974, %v6116
        %v6153 = vadd.f32 %v5975, %v6118
        %v6154 = vadd.f32 %v5976, %v6121
        %v6155 = vadd.f32 %v5977, %v6123
        %v6156 = vadd.f32 %v5978, %v6126
        %v6157 = vadd.f32 %v5979, %v6128
        %v6158 = vadd.f32 %v5980, %v6131
        %v6159 = vadd.f32 %v5981, %v6133
        %v6160 = vadd.f32 %v5982, %v6136
        %v6161 = vadd.f32 %v5983, %v6138
        %v6162 = vadd.f32 %v5984, %v6141
        %v6163 = vadd.f32 %v5985, %v6143
        %v6164 = vadd.f32 %v5986, %v6146
        %v6165 = vadd.f32 %v5987, %v6148
        %v6166 = vld [vmem:[%s476 + $0x10] sm:$0xf]
        %v6167 = vld [vmem:[%s476 + $0x14] sm:$0xf]
        %v6168 = vld [vmem:[%s476 + $0x18] sm:$0xf]
        %v6169 = vld [vmem:[%s476 + $0x1c] sm:$0xf]
        %v6170 = vld [vmem:[%s476 + $0x20] sm:$0xf]
        %v6171 = vld [vmem:[%s476 + $0x24] sm:$0xf]
        %v6172 = vld [vmem:[%s476 + $0x28] sm:$0xf]
        %v6173 = vld [vmem:[%s476 + $0x2c] sm:$0xf]
        %v6174 = vld [vmem:[%s476 + $0x30] sm:$0xf]
        %v6175 = vld [vmem:[%s476 + $0x34] sm:$0xf]
        %v6176 = vld [vmem:[%s476 + $0x38] sm:$0xf]
        %v6177 = vld [vmem:[%s476 + $0x3c] sm:$0xf]
        %v6178 = vld [vmem:[%s476 + $0x40] sm:$0xf]
        %v6179 = vld [vmem:[%s476 + $0x44] sm:$0xf]
        %v6180 = vld [vmem:[%s476 + $0x48] sm:$0xf]
        %v6181 = vld [vmem:[%s476 + $0x4c] sm:$0xf]
        %s6182 = scalar_lea.vmem [#allocation9], 256
        %v6183 = vld [vmem:[%s6182] sm:$0xf]
        %v6184 = vld [vmem:[%s6182 + $0x4] sm:$0xf]
        %v6185 = vld [vmem:[%s6182 + $0x8] sm:$0xf]
        %v6186 = vld [vmem:[%s6182 + $0xc] sm:$0xf]
        %v6187 = vld [vmem:[%s6182 + $0x10] sm:$0xf]
        %v6188 = vld [vmem:[%s6182 + $0x14] sm:$0xf]
        %v6189 = vld [vmem:[%s6182 + $0x18] sm:$0xf]
        %v6190 = vld [vmem:[%s6182 + $0x1c] sm:$0xf]
        %v6207 = vunpack.c.l.b16 %v6166
        %v6208 = vunpack.c.l.b16 %v6167
        %v6209 = vunpack.c.l.b16 %v6168
        %v6210 = vunpack.c.l.b16 %v6169
        %v6211 = vunpack.c.l.b16 %v6170
        %v6212 = vunpack.c.l.b16 %v6171
        %v6213 = vunpack.c.l.b16 %v6172
        %v6214 = vunpack.c.l.b16 %v6173
        %v6215 = vunpack.c.l.b16 %v6174
        %v6216 = vunpack.c.l.b16 %v6175
        %v6217 = vunpack.c.l.b16 %v6176
        %v6218 = vunpack.c.l.b16 %v6177
        %v6219 = vunpack.c.l.b16 %v6178
        %v6220 = vunpack.c.l.b16 %v6179
        %v6221 = vunpack.c.l.b16 %v6180
        %v6222 = vunpack.c.l.b16 %v6181
        %v6223 = vpack.c.b16 %v6208, %v6207
        %v6224 = vpack.c.b16 %v6210, %v6209
        %v6225 = vpack.c.b16 %v6212, %v6211
        %v6226 = vpack.c.b16 %v6214, %v6213
        %v6227 = vpack.c.b16 %v6216, %v6215
        %v6228 = vpack.c.b16 %v6218, %v6217
        %v6229 = vpack.c.b16 %v6220, %v6219
        %v6230 = vpack.c.b16 %v6222, %v6221
        %v6239 = vunpack.c.l.b16 %v6183
        %v6240 = vunpack.c.l.b16 %v6184
        %v6241 = vunpack.c.l.b16 %v6185
        %v6242 = vunpack.c.l.b16 %v6186
        %v6243 = vunpack.c.l.b16 %v6187
        %v6244 = vunpack.c.l.b16 %v6188
        %v6245 = vunpack.c.l.b16 %v6189
        %v6246 = vunpack.c.l.b16 %v6190
        %v6247 = vpack.c.b16 %v6240, %v6239
        %v6248 = vpack.c.b16 %v6242, %v6241
        %v6249 = vpack.c.b16 %v6244, %v6243
        %v6250 = vpack.c.b16 %v6246, %v6245
        %v6256 = vsel %vm1013, %v6223, 0
        %v6259 = vsel %vm1013, %v6224, 0
        %v6262 = vsel %vm1013, %v6225, 0
        %v6265 = vsel %vm1013, %v6226, 0
        %v6268 = vsel %vm1013, %v6227, 0
        %v6271 = vsel %vm1013, %v6228, 0
        %v6274 = vsel %vm1013, %v6229, 0
        %v6277 = vsel %vm1013, %v6230, 0
        %6279 = vmatpush.bf16.msra.mxu0 0
        %6280 = vmatpush.bf16.msra.mxu0 0
        %6281 = vmatpush.bf16.msra.mxu0 0
        %6282 = vmatpush.bf16.msra.mxu0 0
        %6283 = vmatpush.bf16.msra.mxu0 %v6250
        %6284 = vmatpush.bf16.msra.mxu0 %v6249
        %6285 = vmatpush.bf16.msra.mxu0 %v6248
        %6286 = vmatpush.bf16.msra.mxu0 %v6247
        %6287 = vmatmul.bf16.gmra.mxu0 %v6256
        %v6288 = vpop.f32.mrf.mxu0
        %v6289 = vadd.f32 0.0, %v6288
        %v6290 = vpop.f32.mrf.mxu0
        %v6291 = vadd.f32 0.0, %v6290
        %6292 = vmatmul.bf16.gmra.mxu0 %v6259
        %v6293 = vpop.f32.mrf.mxu0
        %v6294 = vadd.f32 0.0, %v6293
        %v6295 = vpop.f32.mrf.mxu0
        %v6296 = vadd.f32 0.0, %v6295
        %6297 = vmatmul.bf16.gmra.mxu0 %v6262
        %v6298 = vpop.f32.mrf.mxu0
        %v6299 = vadd.f32 0.0, %v6298
        %v6300 = vpop.f32.mrf.mxu0
        %v6301 = vadd.f32 0.0, %v6300
        %6302 = vmatmul.bf16.gmra.mxu0 %v6265
        %v6303 = vpop.f32.mrf.mxu0
        %v6304 = vadd.f32 0.0, %v6303
        %v6305 = vpop.f32.mrf.mxu0
        %v6306 = vadd.f32 0.0, %v6305
        %6307 = vmatmul.bf16.gmra.mxu0 %v6268
        %v6308 = vpop.f32.mrf.mxu0
        %v6309 = vadd.f32 0.0, %v6308
        %v6310 = vpop.f32.mrf.mxu0
        %v6311 = vadd.f32 0.0, %v6310
        %6312 = vmatmul.bf16.gmra.mxu0 %v6271
        %v6313 = vpop.f32.mrf.mxu0
        %v6314 = vadd.f32 0.0, %v6313
        %v6315 = vpop.f32.mrf.mxu0
        %v6316 = vadd.f32 0.0, %v6315
        %6317 = vmatmul.bf16.gmra.mxu0 %v6274
        %v6318 = vpop.f32.mrf.mxu0
        %v6319 = vadd.f32 0.0, %v6318
        %v6320 = vpop.f32.mrf.mxu0
        %v6321 = vadd.f32 0.0, %v6320
        %6322 = vmatmul.bf16.gmra.mxu0 %v6277
        %v6323 = vpop.f32.mrf.mxu0
        %v6324 = vadd.f32 0.0, %v6323
        %v6325 = vpop.f32.mrf.mxu0
        %v6326 = vadd.f32 0.0, %v6325
        %6327 = vdwg.mxu0
        %v6328 = vadd.f32 %v6150, %v6289
        %v6329 = vadd.f32 %v6151, %v6291
        %v6330 = vadd.f32 %v6152, %v6294
        %v6331 = vadd.f32 %v6153, %v6296
        %v6332 = vadd.f32 %v6154, %v6299
        %v6333 = vadd.f32 %v6155, %v6301
        %v6334 = vadd.f32 %v6156, %v6304
        %v6335 = vadd.f32 %v6157, %v6306
        %v6336 = vadd.f32 %v6158, %v6309
        %v6337 = vadd.f32 %v6159, %v6311
        %v6338 = vadd.f32 %v6160, %v6314
        %v6339 = vadd.f32 %v6161, %v6316
        %v6340 = vadd.f32 %v6162, %v6319
        %v6341 = vadd.f32 %v6163, %v6321
        %v6342 = vadd.f32 %v6164, %v6324
        %v6343 = vadd.f32 %v6165, %v6326
        %6344 = vst.msk [vmem:[#allocation3] sm:$0xff] %vm1013, %v6328
        %6345 = vst.msk [vmem:[#allocation3 + $0x8] sm:$0xff] %vm1013, %v6329
        %6346 = vst.msk [vmem:[#allocation3 + $0x10] sm:$0xff] %vm1013, %v6330
        %6347 = vst.msk [vmem:[#allocation3 + $0x18] sm:$0xff] %vm1013, %v6331
        %6348 = vst.msk [vmem:[#allocation3 + $0x20] sm:$0xff] %vm1013, %v6332
        %6349 = vst.msk [vmem:[#allocation3 + $0x28] sm:$0xff] %vm1013, %v6333
        %6350 = vst.msk [vmem:[#allocation3 + $0x30] sm:$0xff] %vm1013, %v6334
        %6351 = vst.msk [vmem:[#allocation3 + $0x38] sm:$0xff] %vm1013, %v6335
        %6352 = vst.msk [vmem:[#allocation3 + $0x40] sm:$0xff] %vm1013, %v6336
        %6353 = vst.msk [vmem:[#allocation3 + $0x48] sm:$0xff] %vm1013, %v6337
        %6354 = vst.msk [vmem:[#allocation3 + $0x50] sm:$0xff] %vm1013, %v6338
        %6355 = vst.msk [vmem:[#allocation3 + $0x58] sm:$0xff] %vm1013, %v6339
        %6356 = vst.msk [vmem:[#allocation3 + $0x60] sm:$0xff] %vm1013, %v6340
        %6357 = vst.msk [vmem:[#allocation3 + $0x68] sm:$0xff] %vm1013, %v6341
        %6358 = vst.msk [vmem:[#allocation3 + $0x70] sm:$0xff] %vm1013, %v6342
        %6359 = vst.msk [vmem:[#allocation3 + $0x78] sm:$0xff] %vm1013, %v6343
        %v6360 = vsel %vm1013, %v6328, 0.0
        %v6361 = vsel %vm1013, %v6329, 0.0
        %v6362 = vadd.f32 %v6360, %v6361
        %v6363 = vsel %vm1013, %v6330, 0.0
        %v6364 = vadd.f32 %v6362, %v6363
        %v6365 = vsel %vm1013, %v6331, 0.0
        %v6366 = vadd.f32 %v6364, %v6365
        %v6367 = vsel %vm1013, %v6332, 0.0
        %v6368 = vadd.f32 %v6366, %v6367
        %v6369 = vsel %vm1013, %v6333, 0.0
        %v6370 = vadd.f32 %v6368, %v6369
        %v6371 = vsel %vm1013, %v6334, 0.0
        %v6372 = vadd.f32 %v6370, %v6371
        %v6373 = vsel %vm1013, %v6335, 0.0
        %v6374 = vadd.f32 %v6372, %v6373
        %v6375 = vsel %vm1013, %v6336, 0.0
        %v6376 = vadd.f32 %v6374, %v6375
        %v6377 = vsel %vm1013, %v6337, 0.0
        %v6378 = vadd.f32 %v6376, %v6377
        %v6379 = vsel %vm1013, %v6338, 0.0
        %v6380 = vadd.f32 %v6378, %v6379
        %v6381 = vsel %vm1013, %v6339, 0.0
        %v6382 = vadd.f32 %v6380, %v6381
        %v6383 = vsel %vm1013, %v6340, 0.0
        %v6384 = vadd.f32 %v6382, %v6383
        %v6385 = vsel %vm1013, %v6341, 0.0
        %v6386 = vadd.f32 %v6384, %v6385
        %v6387 = vsel %vm1013, %v6342, 0.0
        %v6388 = vadd.f32 %v6386, %v6387
        %v6389 = vsel %vm1013, %v6343, 0.0
        %v6390 = vadd.f32 %v6388, %v6389
        %v6391 = vrot.slane %v6390, 4
        %v6392 = vadd.f32 %v6390, %v6391
        %v6393 = vrot.slane %v6392, 2
        %v6394 = vadd.f32 %v6392, %v6393
        %v6395 = vrot.slane %v6394, 1
        %v6396 = vadd.f32 %v6394, %v6395
        %v6397 = vadd.f32 %v6396, 0.0
        %v6398 = vmul.f32 %v6328, %v6328
        %v6399 = vmul.f32 %v6329, %v6329
        %v6400 = vmul.f32 %v6330, %v6330
        %v6401 = vmul.f32 %v6331, %v6331
        %v6402 = vmul.f32 %v6332, %v6332
        %v6403 = vmul.f32 %v6333, %v6333
        %v6404 = vmul.f32 %v6334, %v6334
        %v6405 = vmul.f32 %v6335, %v6335
        %v6406 = vmul.f32 %v6336, %v6336
        %v6407 = vmul.f32 %v6337, %v6337
        %v6408 = vmul.f32 %v6338, %v6338
        %v6409 = vmul.f32 %v6339, %v6339
        %v6410 = vmul.f32 %v6340, %v6340
        %v6411 = vmul.f32 %v6341, %v6341
        %v6412 = vmul.f32 %v6342, %v6342
        %v6413 = vmul.f32 %v6343, %v6343
        %v6414 = vsel %vm1013, %v6398, 0.0
        %v6415 = vsel %vm1013, %v6399, 0.0
        %v6416 = vadd.f32 %v6414, %v6415
        %v6417 = vsel %vm1013, %v6400, 0.0
        %v6418 = vadd.f32 %v6416, %v6417
        %v6419 = vsel %vm1013, %v6401, 0.0
        %v6420 = vadd.f32 %v6418, %v6419
        %v6421 = vsel %vm1013, %v6402, 0.0
        %v6422 = vadd.f32 %v6420, %v6421
        %v6423 = vsel %vm1013, %v6403, 0.0
        %v6424 = vadd.f32 %v6422, %v6423
        %v6425 = vsel %vm1013, %v6404, 0.0
        %v6426 = vadd.f32 %v6424, %v6425
        %v6427 = vsel %vm1013, %v6405, 0.0
        %v6428 = vadd.f32 %v6426, %v6427
        %v6429 = vsel %vm1013, %v6406, 0.0
        %v6430 = vadd.f32 %v6428, %v6429
        %v6431 = vsel %vm1013, %v6407, 0.0
        %v6432 = vadd.f32 %v6430, %v6431
        %v6433 = vsel %vm1013, %v6408, 0.0
        %v6434 = vadd.f32 %v6432, %v6433
        %v6435 = vsel %vm1013, %v6409, 0.0
        %v6436 = vadd.f32 %v6434, %v6435
        %v6437 = vsel %vm1013, %v6410, 0.0
        %v6438 = vadd.f32 %v6436, %v6437
        %v6439 = vsel %vm1013, %v6411, 0.0
        %v6440 = vadd.f32 %v6438, %v6439
        %v6441 = vsel %vm1013, %v6412, 0.0
        %v6442 = vadd.f32 %v6440, %v6441
        %v6443 = vsel %vm1013, %v6413, 0.0
        %v6444 = vadd.f32 %v6442, %v6443
        %v6445 = vrot.slane %v6444, 4
        %v6446 = vadd.f32 %v6444, %v6445
        %v6447 = vrot.slane %v6446, 2
        %v6448 = vadd.f32 %v6446, %v6447
        %v6449 = vrot.slane %v6448, 1
        %v6450 = vadd.f32 %v6448, %v6449
        %v6451 = vadd.f32 %v6450, 0.0
        %v6452 = vld [vmem:[#allocation2 + $0x40] sm:$0xf]
        %v6453 = vld [vmem:[#allocation2 + $0x44] sm:$0xf]
        %v6454 = vld [vmem:[#allocation2 + $0x48] sm:$0xf]
        %v6455 = vld [vmem:[#allocation2 + $0x4c] sm:$0xf]
        %v6456 = vld [vmem:[#allocation2 + $0x50] sm:$0xf]
        %v6457 = vld [vmem:[#allocation2 + $0x54] sm:$0xf]
        %v6458 = vld [vmem:[#allocation2 + $0x58] sm:$0xf]
        %v6459 = vld [vmem:[#allocation2 + $0x5c] sm:$0xf]
        %v6460 = vld [vmem:[#allocation2 + $0x60] sm:$0xf]
        %v6461 = vld [vmem:[#allocation2 + $0x64] sm:$0xf]
        %v6462 = vld [vmem:[#allocation2 + $0x68] sm:$0xf]
        %v6463 = vld [vmem:[#allocation2 + $0x6c] sm:$0xf]
        %v6464 = vld [vmem:[#allocation2 + $0x70] sm:$0xf]
        %v6465 = vld [vmem:[#allocation2 + $0x74] sm:$0xf]
        %v6466 = vld [vmem:[#allocation2 + $0x78] sm:$0xf]
        %v6467 = vld [vmem:[#allocation2 + $0x7c] sm:$0xf]
        %v6468 = vld [vmem:[#allocation9] sm:$0xf]
        %v6469 = vld [vmem:[#allocation9 + $0x4] sm:$0xf]
        %v6470 = vld [vmem:[#allocation9 + $0x8] sm:$0xf]
        %v6471 = vld [vmem:[#allocation9 + $0xc] sm:$0xf]
        %v6472 = vld [vmem:[#allocation9 + $0x10] sm:$0xf]
        %v6473 = vld [vmem:[#allocation9 + $0x14] sm:$0xf]
        %v6474 = vld [vmem:[#allocation9 + $0x18] sm:$0xf]
        %v6475 = vld [vmem:[#allocation9 + $0x1c] sm:$0xf]
        %v6476 = vld [vmem:[%s471 + $0x40] sm:$0xf]
        %v6477 = vld [vmem:[%s471 + $0x44] sm:$0xf]
        %v6478 = vld [vmem:[%s471 + $0x48] sm:$0xf]
        %v6479 = vld [vmem:[%s471 + $0x4c] sm:$0xf]
        %v6480 = vld [vmem:[%s471 + $0x50] sm:$0xf]
        %v6481 = vld [vmem:[%s471 + $0x54] sm:$0xf]
        %v6482 = vld [vmem:[%s471 + $0x58] sm:$0xf]
        %v6483 = vld [vmem:[%s471 + $0x5c] sm:$0xf]
        %v6484 = vld [vmem:[%s471 + $0x60] sm:$0xf]
        %v6485 = vld [vmem:[%s471 + $0x64] sm:$0xf]
        %v6486 = vld [vmem:[%s471 + $0x68] sm:$0xf]
        %v6487 = vld [vmem:[%s471 + $0x6c] sm:$0xf]
        %v6488 = vld [vmem:[%s471 + $0x70] sm:$0xf]
        %v6489 = vld [vmem:[%s471 + $0x74] sm:$0xf]
        %v6490 = vld [vmem:[%s471 + $0x78] sm:$0xf]
        %v6491 = vld [vmem:[%s471 + $0x7c] sm:$0xf]
        %v6492 = vld [vmem:[%s4815] sm:$0xf]
        %v6493 = vld [vmem:[%s4815 + $0x4] sm:$0xf]
        %v6494 = vld [vmem:[%s4815 + $0x8] sm:$0xf]
        %v6495 = vld [vmem:[%s4815 + $0xc] sm:$0xf]
        %v6496 = vld [vmem:[%s4815 + $0x10] sm:$0xf]
        %v6497 = vld [vmem:[%s4815 + $0x14] sm:$0xf]
        %v6498 = vld [vmem:[%s4815 + $0x18] sm:$0xf]
        %v6499 = vld [vmem:[%s4815 + $0x1c] sm:$0xf]
        %v6516 = vunpack.c.l.b16 %v6476
        %v6517 = vunpack.c.l.b16 %v6477
        %v6518 = vunpack.c.l.b16 %v6478
        %v6519 = vunpack.c.l.b16 %v6479
        %v6520 = vunpack.c.l.b16 %v6480
        %v6521 = vunpack.c.l.b16 %v6481
        %v6522 = vunpack.c.l.b16 %v6482
        %v6523 = vunpack.c.l.b16 %v6483
        %v6524 = vunpack.c.l.b16 %v6484
        %v6525 = vunpack.c.l.b16 %v6485
        %v6526 = vunpack.c.l.b16 %v6486
        %v6527 = vunpack.c.l.b16 %v6487
        %v6528 = vunpack.c.l.b16 %v6488
        %v6529 = vunpack.c.l.b16 %v6489
        %v6530 = vunpack.c.l.b16 %v6490
        %v6531 = vunpack.c.l.b16 %v6491
        %v6532 = vpack.c.b16 %v6517, %v6516
        %v6533 = vpack.c.b16 %v6519, %v6518
        %v6534 = vpack.c.b16 %v6521, %v6520
        %v6535 = vpack.c.b16 %v6523, %v6522
        %v6536 = vpack.c.b16 %v6525, %v6524
        %v6537 = vpack.c.b16 %v6527, %v6526
        %v6538 = vpack.c.b16 %v6529, %v6528
        %v6539 = vpack.c.b16 %v6531, %v6530
        %v6548 = vunpack.c.l.b16 %v6492
        %v6549 = vunpack.c.l.b16 %v6493
        %v6550 = vunpack.c.l.b16 %v6494
        %v6551 = vunpack.c.l.b16 %v6495
        %v6552 = vunpack.c.l.b16 %v6496
        %v6553 = vunpack.c.l.b16 %v6497
        %v6554 = vunpack.c.l.b16 %v6498
        %v6555 = vunpack.c.l.b16 %v6499
        %v6556 = vpack.c.b16 %v6549, %v6548
        %v6557 = vpack.c.b16 %v6551, %v6550
        %v6558 = vpack.c.b16 %v6553, %v6552
        %v6559 = vpack.c.b16 %v6555, %v6554
        %v6565 = vsel %vm1013, %v6532, 0
        %v6568 = vsel %vm1013, %v6533, 0
        %v6571 = vsel %vm1013, %v6534, 0
        %v6574 = vsel %vm1013, %v6535, 0
        %v6577 = vsel %vm1013, %v6536, 0
        %v6580 = vsel %vm1013, %v6537, 0
        %v6583 = vsel %vm1013, %v6538, 0
        %v6586 = vsel %vm1013, %v6539, 0
        %6588 = vmatpush.bf16.msra.mxu0 0
        %6589 = vmatpush.bf16.msra.mxu0 0
        %6590 = vmatpush.bf16.msra.mxu0 0
        %6591 = vmatpush.bf16.msra.mxu0 0
        %6592 = vmatpush.bf16.msra.mxu0 %v6559
        %6593 = vmatpush.bf16.msra.mxu0 %v6558
        %6594 = vmatpush.bf16.msra.mxu0 %v6557
        %6595 = vmatpush.bf16.msra.mxu0 %v6556
        %6596 = vmatmul.bf16.gmra.mxu0 %v6565
        %v6597 = vpop.f32.mrf.mxu0
        %v6598 = vadd.f32 0.0, %v6597
        %v6599 = vpop.f32.mrf.mxu0
        %v6600 = vadd.f32 0.0, %v6599
        %6601 = vmatmul.bf16.gmra.mxu0 %v6568
        %v6602 = vpop.f32.mrf.mxu0
        %v6603 = vadd.f32 0.0, %v6602
        %v6604 = vpop.f32.mrf.mxu0
        %v6605 = vadd.f32 0.0, %v6604
        %6606 = vmatmul.bf16.gmra.mxu0 %v6571
        %v6607 = vpop.f32.mrf.mxu0
        %v6608 = vadd.f32 0.0, %v6607
        %v6609 = vpop.f32.mrf.mxu0
        %v6610 = vadd.f32 0.0, %v6609
        %6611 = vmatmul.bf16.gmra.mxu0 %v6574
        %v6612 = vpop.f32.mrf.mxu0
        %v6613 = vadd.f32 0.0, %v6612
        %v6614 = vpop.f32.mrf.mxu0
        %v6615 = vadd.f32 0.0, %v6614
        %6616 = vmatmul.bf16.gmra.mxu0 %v6577
        %v6617 = vpop.f32.mrf.mxu0
        %v6618 = vadd.f32 0.0, %v6617
        %v6619 = vpop.f32.mrf.mxu0
        %v6620 = vadd.f32 0.0, %v6619
        %6621 = vmatmul.bf16.gmra.mxu0 %v6580
        %v6622 = vpop.f32.mrf.mxu0
        %v6623 = vadd.f32 0.0, %v6622
        %v6624 = vpop.f32.mrf.mxu0
        %v6625 = vadd.f32 0.0, %v6624
        %6626 = vmatmul.bf16.gmra.mxu0 %v6583
        %v6627 = vpop.f32.mrf.mxu0
        %v6628 = vadd.f32 0.0, %v6627
        %v6629 = vpop.f32.mrf.mxu0
        %v6630 = vadd.f32 0.0, %v6629
        %6631 = vmatmul.bf16.gmra.mxu0 %v6586
        %v6632 = vpop.f32.mrf.mxu0
        %v6633 = vadd.f32 0.0, %v6632
        %v6634 = vpop.f32.mrf.mxu0
        %v6635 = vadd.f32 0.0, %v6634
        %6636 = vdwg.mxu0
        %v6653 = vunpack.c.l.b16 %v6452
        %v6654 = vunpack.c.l.b16 %v6453
        %v6655 = vunpack.c.l.b16 %v6454
        %v6656 = vunpack.c.l.b16 %v6455
        %v6657 = vunpack.c.l.b16 %v6456
        %v6658 = vunpack.c.l.b16 %v6457
        %v6659 = vunpack.c.l.b16 %v6458
        %v6660 = vunpack.c.l.b16 %v6459
        %v6661 = vunpack.c.l.b16 %v6460
        %v6662 = vunpack.c.l.b16 %v6461
        %v6663 = vunpack.c.l.b16 %v6462
        %v6664 = vunpack.c.l.b16 %v6463
        %v6665 = vunpack.c.l.b16 %v6464
        %v6666 = vunpack.c.l.b16 %v6465
        %v6667 = vunpack.c.l.b16 %v6466
        %v6668 = vunpack.c.l.b16 %v6467
        %v6669 = vpack.c.b16 %v6654, %v6653
        %v6670 = vpack.c.b16 %v6656, %v6655
        %v6671 = vpack.c.b16 %v6658, %v6657
        %v6672 = vpack.c.b16 %v6660, %v6659
        %v6673 = vpack.c.b16 %v6662, %v6661
        %v6674 = vpack.c.b16 %v6664, %v6663
        %v6675 = vpack.c.b16 %v6666, %v6665
        %v6676 = vpack.c.b16 %v6668, %v6667
        %v6685 = vunpack.c.l.b16 %v6468
        %v6686 = vunpack.c.l.b16 %v6469
        %v6687 = vunpack.c.l.b16 %v6470
        %v6688 = vunpack.c.l.b16 %v6471
        %v6689 = vunpack.c.l.b16 %v6472
        %v6690 = vunpack.c.l.b16 %v6473
        %v6691 = vunpack.c.l.b16 %v6474
        %v6692 = vunpack.c.l.b16 %v6475
        %v6693 = vpack.c.b16 %v6686, %v6685
        %v6694 = vpack.c.b16 %v6688, %v6687
        %v6695 = vpack.c.b16 %v6690, %v6689
        %v6696 = vpack.c.b16 %v6692, %v6691
        %v6702 = vsel %vm1013, %v6669, 0
        %v6705 = vsel %vm1013, %v6670, 0
        %v6708 = vsel %vm1013, %v6671, 0
        %v6711 = vsel %vm1013, %v6672, 0
        %v6714 = vsel %vm1013, %v6673, 0
        %v6717 = vsel %vm1013, %v6674, 0
        %v6720 = vsel %vm1013, %v6675, 0
        %v6723 = vsel %vm1013, %v6676, 0
        %6725 = vmatpush.bf16.msra.mxu0 0
        %6726 = vmatpush.bf16.msra.mxu0 0
        %6727 = vmatpush.bf16.msra.mxu0 0
        %6728 = vmatpush.bf16.msra.mxu0 0
        %6729 = vmatpush.bf16.msra.mxu0 %v6696
        %6730 = vmatpush.bf16.msra.mxu0 %v6695
        %6731 = vmatpush.bf16.msra.mxu0 %v6694
        %6732 = vmatpush.bf16.msra.mxu0 %v6693
        %6733 = vmatmul.bf16.gmra.mxu0 %v6702
        %v6734 = vpop.f32.mrf.mxu0
        %v6735 = vadd.f32 %v6598, %v6734
        %v6736 = vpop.f32.mrf.mxu0
        %v6737 = vadd.f32 %v6600, %v6736
        %6738 = vmatmul.bf16.gmra.mxu0 %v6705
        %v6739 = vpop.f32.mrf.mxu0
        %v6740 = vadd.f32 %v6603, %v6739
        %v6741 = vpop.f32.mrf.mxu0
        %v6742 = vadd.f32 %v6605, %v6741
        %6743 = vmatmul.bf16.gmra.mxu0 %v6708
        %v6744 = vpop.f32.mrf.mxu0
        %v6745 = vadd.f32 %v6608, %v6744
        %v6746 = vpop.f32.mrf.mxu0
        %v6747 = vadd.f32 %v6610, %v6746
        %6748 = vmatmul.bf16.gmra.mxu0 %v6711
        %v6749 = vpop.f32.mrf.mxu0
        %v6750 = vadd.f32 %v6613, %v6749
        %v6751 = vpop.f32.mrf.mxu0
        %v6752 = vadd.f32 %v6615, %v6751
        %6753 = vmatmul.bf16.gmra.mxu0 %v6714
        %v6754 = vpop.f32.mrf.mxu0
        %v6755 = vadd.f32 %v6618, %v6754
        %v6756 = vpop.f32.mrf.mxu0
        %v6757 = vadd.f32 %v6620, %v6756
        %6758 = vmatmul.bf16.gmra.mxu0 %v6717
        %v6759 = vpop.f32.mrf.mxu0
        %v6760 = vadd.f32 %v6623, %v6759
        %v6761 = vpop.f32.mrf.mxu0
        %v6762 = vadd.f32 %v6625, %v6761
        %6763 = vmatmul.bf16.gmra.mxu0 %v6720
        %v6764 = vpop.f32.mrf.mxu0
        %v6765 = vadd.f32 %v6628, %v6764
        %v6766 = vpop.f32.mrf.mxu0
        %v6767 = vadd.f32 %v6630, %v6766
        %6768 = vmatmul.bf16.gmra.mxu0 %v6723
        %v6769 = vpop.f32.mrf.mxu0
        %v6770 = vadd.f32 %v6633, %v6769
        %v6771 = vpop.f32.mrf.mxu0
        %v6772 = vadd.f32 %v6635, %v6771
        %6773 = vdwg.mxu0
        %v6774 = vld [vmem:[%s476 + $0x40] sm:$0xf]
        %v6775 = vld [vmem:[%s476 + $0x44] sm:$0xf]
        %v6776 = vld [vmem:[%s476 + $0x48] sm:$0xf]
        %v6777 = vld [vmem:[%s476 + $0x4c] sm:$0xf]
        %v6778 = vld [vmem:[%s476 + $0x50] sm:$0xf]
        %v6779 = vld [vmem:[%s476 + $0x54] sm:$0xf]
        %v6780 = vld [vmem:[%s476 + $0x58] sm:$0xf]
        %v6781 = vld [vmem:[%s476 + $0x5c] sm:$0xf]
        %v6782 = vld [vmem:[%s476 + $0x60] sm:$0xf]
        %v6783 = vld [vmem:[%s476 + $0x64] sm:$0xf]
        %v6784 = vld [vmem:[%s476 + $0x68] sm:$0xf]
        %v6785 = vld [vmem:[%s476 + $0x6c] sm:$0xf]
        %v6786 = vld [vmem:[%s476 + $0x70] sm:$0xf]
        %v6787 = vld [vmem:[%s476 + $0x74] sm:$0xf]
        %v6788 = vld [vmem:[%s476 + $0x78] sm:$0xf]
        %v6789 = vld [vmem:[%s476 + $0x7c] sm:$0xf]
        %v6790 = vld [vmem:[%s5114] sm:$0xf]
        %v6791 = vld [vmem:[%s5114 + $0x4] sm:$0xf]
        %v6792 = vld [vmem:[%s5114 + $0x8] sm:$0xf]
        %v6793 = vld [vmem:[%s5114 + $0xc] sm:$0xf]
        %v6794 = vld [vmem:[%s5114 + $0x10] sm:$0xf]
        %v6795 = vld [vmem:[%s5114 + $0x14] sm:$0xf]
        %v6796 = vld [vmem:[%s5114 + $0x18] sm:$0xf]
        %v6797 = vld [vmem:[%s5114 + $0x1c] sm:$0xf]
        %v6814 = vunpack.c.l.b16 %v6774
        %v6815 = vunpack.c.l.b16 %v6775
        %v6816 = vunpack.c.l.b16 %v6776
        %v6817 = vunpack.c.l.b16 %v6777
        %v6818 = vunpack.c.l.b16 %v6778
        %v6819 = vunpack.c.l.b16 %v6779
        %v6820 = vunpack.c.l.b16 %v6780
        %v6821 = vunpack.c.l.b16 %v6781
        %v6822 = vunpack.c.l.b16 %v6782
        %v6823 = vunpack.c.l.b16 %v6783
        %v6824 = vunpack.c.l.b16 %v6784
        %v6825 = vunpack.c.l.b16 %v6785
        %v6826 = vunpack.c.l.b16 %v6786
        %v6827 = vunpack.c.l.b16 %v6787
        %v6828 = vunpack.c.l.b16 %v6788
        %v6829 = vunpack.c.l.b16 %v6789
        %v6830 = vpack.c.b16 %v6815, %v6814
        %v6831 = vpack.c.b16 %v6817, %v6816
        %v6832 = vpack.c.b16 %v6819, %v6818
        %v6833 = vpack.c.b16 %v6821, %v6820
        %v6834 = vpack.c.b16 %v6823, %v6822
        %v6835 = vpack.c.b16 %v6825, %v6824
        %v6836 = vpack.c.b16 %v6827, %v6826
        %v6837 = vpack.c.b16 %v6829, %v6828
        %v6846 = vunpack.c.l.b16 %v6790
        %v6847 = vunpack.c.l.b16 %v6791
        %v6848 = vunpack.c.l.b16 %v6792
        %v6849 = vunpack.c.l.b16 %v6793
        %v6850 = vunpack.c.l.b16 %v6794
        %v6851 = vunpack.c.l.b16 %v6795
        %v6852 = vunpack.c.l.b16 %v6796
        %v6853 = vunpack.c.l.b16 %v6797
        %v6854 = vpack.c.b16 %v6847, %v6846
        %v6855 = vpack.c.b16 %v6849, %v6848
        %v6856 = vpack.c.b16 %v6851, %v6850
        %v6857 = vpack.c.b16 %v6853, %v6852
        %v6863 = vsel %vm1013, %v6830, 0
        %v6866 = vsel %vm1013, %v6831, 0
        %v6869 = vsel %vm1013, %v6832, 0
        %v6872 = vsel %vm1013, %v6833, 0
        %v6875 = vsel %vm1013, %v6834, 0
        %v6878 = vsel %vm1013, %v6835, 0
        %v6881 = vsel %vm1013, %v6836, 0
        %v6884 = vsel %vm1013, %v6837, 0
        %6886 = vmatpush.bf16.msra.mxu0 0
        %6887 = vmatpush.bf16.msra.mxu0 0
        %6888 = vmatpush.bf16.msra.mxu0 0
        %6889 = vmatpush.bf16.msra.mxu0 0
        %6890 = vmatpush.bf16.msra.mxu0 %v6857
        %6891 = vmatpush.bf16.msra.mxu0 %v6856
        %6892 = vmatpush.bf16.msra.mxu0 %v6855
        %6893 = vmatpush.bf16.msra.mxu0 %v6854
        %6894 = vmatmul.bf16.gmra.mxu0 %v6863
        %v6895 = vpop.f32.mrf.mxu0
        %v6896 = vadd.f32 0.0, %v6895
        %v6897 = vpop.f32.mrf.mxu0
        %v6898 = vadd.f32 0.0, %v6897
        %6899 = vmatmul.bf16.gmra.mxu0 %v6866
        %v6900 = vpop.f32.mrf.mxu0
        %v6901 = vadd.f32 0.0, %v6900
        %v6902 = vpop.f32.mrf.mxu0
        %v6903 = vadd.f32 0.0, %v6902
        %6904 = vmatmul.bf16.gmra.mxu0 %v6869
        %v6905 = vpop.f32.mrf.mxu0
        %v6906 = vadd.f32 0.0, %v6905
        %v6907 = vpop.f32.mrf.mxu0
        %v6908 = vadd.f32 0.0, %v6907
        %6909 = vmatmul.bf16.gmra.mxu0 %v6872
        %v6910 = vpop.f32.mrf.mxu0
        %v6911 = vadd.f32 0.0, %v6910
        %v6912 = vpop.f32.mrf.mxu0
        %v6913 = vadd.f32 0.0, %v6912
        %6914 = vmatmul.bf16.gmra.mxu0 %v6875
        %v6915 = vpop.f32.mrf.mxu0
        %v6916 = vadd.f32 0.0, %v6915
        %v6917 = vpop.f32.mrf.mxu0
        %v6918 = vadd.f32 0.0, %v6917
        %6919 = vmatmul.bf16.gmra.mxu0 %v6878
        %v6920 = vpop.f32.mrf.mxu0
        %v6921 = vadd.f32 0.0, %v6920
        %v6922 = vpop.f32.mrf.mxu0
        %v6923 = vadd.f32 0.0, %v6922
        %6924 = vmatmul.bf16.gmra.mxu0 %v6881
        %v6925 = vpop.f32.mrf.mxu0
        %v6926 = vadd.f32 0.0, %v6925
        %v6927 = vpop.f32.mrf.mxu0
        %v6928 = vadd.f32 0.0, %v6927
        %6929 = vmatmul.bf16.gmra.mxu0 %v6884
        %v6930 = vpop.f32.mrf.mxu0
        %v6931 = vadd.f32 0.0, %v6930
        %v6932 = vpop.f32.mrf.mxu0
        %v6933 = vadd.f32 0.0, %v6932
        %6934 = vdwg.mxu0
        %v6935 = vadd.f32 %v6735, %v6896
        %v6936 = vadd.f32 %v6737, %v6898
        %v6937 = vadd.f32 %v6740, %v6901
        %v6938 = vadd.f32 %v6742, %v6903
        %v6939 = vadd.f32 %v6745, %v6906
        %v6940 = vadd.f32 %v6747, %v6908
        %v6941 = vadd.f32 %v6750, %v6911
        %v6942 = vadd.f32 %v6752, %v6913
        %v6943 = vadd.f32 %v6755, %v6916
        %v6944 = vadd.f32 %v6757, %v6918
        %v6945 = vadd.f32 %v6760, %v6921
        %v6946 = vadd.f32 %v6762, %v6923
        %v6947 = vadd.f32 %v6765, %v6926
        %v6948 = vadd.f32 %v6767, %v6928
        %v6949 = vadd.f32 %v6770, %v6931
        %v6950 = vadd.f32 %v6772, %v6933
        %v6951 = vld [vmem:[#allocation2 + $0x48] sm:$0xf]
        %v6952 = vld [vmem:[#allocation2 + $0x4c] sm:$0xf]
        %v6953 = vld [vmem:[#allocation2 + $0x50] sm:$0xf]
        %v6954 = vld [vmem:[#allocation2 + $0x54] sm:$0xf]
        %v6955 = vld [vmem:[#allocation2 + $0x58] sm:$0xf]
        %v6956 = vld [vmem:[#allocation2 + $0x5c] sm:$0xf]
        %v6957 = vld [vmem:[#allocation2 + $0x60] sm:$0xf]
        %v6958 = vld [vmem:[#allocation2 + $0x64] sm:$0xf]
        %v6959 = vld [vmem:[#allocation2 + $0x68] sm:$0xf]
        %v6960 = vld [vmem:[#allocation2 + $0x6c] sm:$0xf]
        %v6961 = vld [vmem:[#allocation2 + $0x70] sm:$0xf]
        %v6962 = vld [vmem:[#allocation2 + $0x74] sm:$0xf]
        %v6963 = vld [vmem:[#allocation2 + $0x78] sm:$0xf]
        %v6964 = vld [vmem:[#allocation2 + $0x7c] sm:$0xf]
        %v6965 = vld [vmem:[#allocation2 + $0x80] sm:$0xf]
        %v6966 = vld [vmem:[#allocation2 + $0x84] sm:$0xf]
        %v6967 = vld [vmem:[%s5292] sm:$0xf]
        %v6968 = vld [vmem:[%s5292 + $0x4] sm:$0xf]
        %v6969 = vld [vmem:[%s5292 + $0x8] sm:$0xf]
        %v6970 = vld [vmem:[%s5292 + $0xc] sm:$0xf]
        %v6971 = vld [vmem:[%s5292 + $0x10] sm:$0xf]
        %v6972 = vld [vmem:[%s5292 + $0x14] sm:$0xf]
        %v6973 = vld [vmem:[%s5292 + $0x18] sm:$0xf]
        %v6974 = vld [vmem:[%s5292 + $0x1c] sm:$0xf]
        %v6991 = vunpack.c.l.b16 %v6951
        %v6992 = vunpack.c.l.b16 %v6952
        %v6993 = vunpack.c.l.b16 %v6953
        %v6994 = vunpack.c.l.b16 %v6954
        %v6995 = vunpack.c.l.b16 %v6955
        %v6996 = vunpack.c.l.b16 %v6956
        %v6997 = vunpack.c.l.b16 %v6957
        %v6998 = vunpack.c.l.b16 %v6958
        %v6999 = vunpack.c.l.b16 %v6959
        %v7000 = vunpack.c.l.b16 %v6960
        %v7001 = vunpack.c.l.b16 %v6961
        %v7002 = vunpack.c.l.b16 %v6962
        %v7003 = vunpack.c.l.b16 %v6963
        %v7004 = vunpack.c.l.b16 %v6964
        %v7005 = vunpack.c.l.b16 %v6965
        %v7006 = vunpack.c.l.b16 %v6966
        %v7007 = vpack.c.b16 %v6992, %v6991
        %v7008 = vpack.c.b16 %v6994, %v6993
        %v7009 = vpack.c.b16 %v6996, %v6995
        %v7010 = vpack.c.b16 %v6998, %v6997
        %v7011 = vpack.c.b16 %v7000, %v6999
        %v7012 = vpack.c.b16 %v7002, %v7001
        %v7013 = vpack.c.b16 %v7004, %v7003
        %v7014 = vpack.c.b16 %v7006, %v7005
        %v7023 = vunpack.c.l.b16 %v6967
        %v7024 = vunpack.c.l.b16 %v6968
        %v7025 = vunpack.c.l.b16 %v6969
        %v7026 = vunpack.c.l.b16 %v6970
        %v7027 = vunpack.c.l.b16 %v6971
        %v7028 = vunpack.c.l.b16 %v6972
        %v7029 = vunpack.c.l.b16 %v6973
        %v7030 = vunpack.c.l.b16 %v6974
        %v7031 = vpack.c.b16 %v7024, %v7023
        %v7032 = vpack.c.b16 %v7026, %v7025
        %v7033 = vpack.c.b16 %v7028, %v7027
        %v7034 = vpack.c.b16 %v7030, %v7029
        %v7040 = vsel %vm1013, %v7007, 0
        %v7043 = vsel %vm1013, %v7008, 0
        %v7046 = vsel %vm1013, %v7009, 0
        %v7049 = vsel %vm1013, %v7010, 0
        %v7052 = vsel %vm1013, %v7011, 0
        %v7055 = vsel %vm1013, %v7012, 0
        %v7058 = vsel %vm1013, %v7013, 0
        %v7061 = vsel %vm1013, %v7014, 0
        %7063 = vmatpush.bf16.msra.mxu0 0
        %7064 = vmatpush.bf16.msra.mxu0 0
        %7065 = vmatpush.bf16.msra.mxu0 0
        %7066 = vmatpush.bf16.msra.mxu0 0
        %7067 = vmatpush.bf16.msra.mxu0 %v7034
        %7068 = vmatpush.bf16.msra.mxu0 %v7033
        %7069 = vmatpush.bf16.msra.mxu0 %v7032
        %7070 = vmatpush.bf16.msra.mxu0 %v7031
        %7071 = vmatmul.bf16.gmra.mxu0 %v7040
        %v7072 = vpop.f32.mrf.mxu0
        %v7073 = vadd.f32 0.0, %v7072
        %v7074 = vpop.f32.mrf.mxu0
        %v7075 = vadd.f32 0.0, %v7074
        %7076 = vmatmul.bf16.gmra.mxu0 %v7043
        %v7077 = vpop.f32.mrf.mxu0
        %v7078 = vadd.f32 0.0, %v7077
        %v7079 = vpop.f32.mrf.mxu0
        %v7080 = vadd.f32 0.0, %v7079
        %7081 = vmatmul.bf16.gmra.mxu0 %v7046
        %v7082 = vpop.f32.mrf.mxu0
        %v7083 = vadd.f32 0.0, %v7082
        %v7084 = vpop.f32.mrf.mxu0
        %v7085 = vadd.f32 0.0, %v7084
        %7086 = vmatmul.bf16.gmra.mxu0 %v7049
        %v7087 = vpop.f32.mrf.mxu0
        %v7088 = vadd.f32 0.0, %v7087
        %v7089 = vpop.f32.mrf.mxu0
        %v7090 = vadd.f32 0.0, %v7089
        %7091 = vmatmul.bf16.gmra.mxu0 %v7052
        %v7092 = vpop.f32.mrf.mxu0
        %v7093 = vadd.f32 0.0, %v7092
        %v7094 = vpop.f32.mrf.mxu0
        %v7095 = vadd.f32 0.0, %v7094
        %7096 = vmatmul.bf16.gmra.mxu0 %v7055
        %v7097 = vpop.f32.mrf.mxu0
        %v7098 = vadd.f32 0.0, %v7097
        %v7099 = vpop.f32.mrf.mxu0
        %v7100 = vadd.f32 0.0, %v7099
        %7101 = vmatmul.bf16.gmra.mxu0 %v7058
        %v7102 = vpop.f32.mrf.mxu0
        %v7103 = vadd.f32 0.0, %v7102
        %v7104 = vpop.f32.mrf.mxu0
        %v7105 = vadd.f32 0.0, %v7104
        %7106 = vmatmul.bf16.gmra.mxu0 %v7061
        %v7107 = vpop.f32.mrf.mxu0
        %v7108 = vadd.f32 0.0, %v7107
        %v7109 = vpop.f32.mrf.mxu0
        %v7110 = vadd.f32 0.0, %v7109
        %7111 = vdwg.mxu0
        %v7112 = vadd.f32 %v6935, %v7073
        %v7113 = vadd.f32 %v6936, %v7075
        %v7114 = vadd.f32 %v6937, %v7078
        %v7115 = vadd.f32 %v6938, %v7080
        %v7116 = vadd.f32 %v6939, %v7083
        %v7117 = vadd.f32 %v6940, %v7085
        %v7118 = vadd.f32 %v6941, %v7088
        %v7119 = vadd.f32 %v6942, %v7090
        %v7120 = vadd.f32 %v6943, %v7093
        %v7121 = vadd.f32 %v6944, %v7095
        %v7122 = vadd.f32 %v6945, %v7098
        %v7123 = vadd.f32 %v6946, %v7100
        %v7124 = vadd.f32 %v6947, %v7103
        %v7125 = vadd.f32 %v6948, %v7105
        %v7126 = vadd.f32 %v6949, %v7108
        %v7127 = vadd.f32 %v6950, %v7110
        %v7128 = vld [vmem:[%s471 + $0x48] sm:$0xf]
        %v7129 = vld [vmem:[%s471 + $0x4c] sm:$0xf]
        %v7130 = vld [vmem:[%s471 + $0x50] sm:$0xf]
        %v7131 = vld [vmem:[%s471 + $0x54] sm:$0xf]
        %v7132 = vld [vmem:[%s471 + $0x58] sm:$0xf]
        %v7133 = vld [vmem:[%s471 + $0x5c] sm:$0xf]
        %v7134 = vld [vmem:[%s471 + $0x60] sm:$0xf]
        %v7135 = vld [vmem:[%s471 + $0x64] sm:$0xf]
        %v7136 = vld [vmem:[%s471 + $0x68] sm:$0xf]
        %v7137 = vld [vmem:[%s471 + $0x6c] sm:$0xf]
        %v7138 = vld [vmem:[%s471 + $0x70] sm:$0xf]
        %v7139 = vld [vmem:[%s471 + $0x74] sm:$0xf]
        %v7140 = vld [vmem:[%s471 + $0x78] sm:$0xf]
        %v7141 = vld [vmem:[%s471 + $0x7c] sm:$0xf]
        %v7142 = vld [vmem:[%s471 + $0x80] sm:$0xf]
        %v7143 = vld [vmem:[%s471 + $0x84] sm:$0xf]
        %v7144 = vld [vmem:[%s5470] sm:$0xf]
        %v7145 = vld [vmem:[%s5470 + $0x4] sm:$0xf]
        %v7146 = vld [vmem:[%s5470 + $0x8] sm:$0xf]
        %v7147 = vld [vmem:[%s5470 + $0xc] sm:$0xf]
        %v7148 = vld [vmem:[%s5470 + $0x10] sm:$0xf]
        %v7149 = vld [vmem:[%s5470 + $0x14] sm:$0xf]
        %v7150 = vld [vmem:[%s5470 + $0x18] sm:$0xf]
        %v7151 = vld [vmem:[%s5470 + $0x1c] sm:$0xf]
        %v7168 = vunpack.c.l.b16 %v7128
        %v7169 = vunpack.c.l.b16 %v7129
        %v7170 = vunpack.c.l.b16 %v7130
        %v7171 = vunpack.c.l.b16 %v7131
        %v7172 = vunpack.c.l.b16 %v7132
        %v7173 = vunpack.c.l.b16 %v7133
        %v7174 = vunpack.c.l.b16 %v7134
        %v7175 = vunpack.c.l.b16 %v7135
        %v7176 = vunpack.c.l.b16 %v7136
        %v7177 = vunpack.c.l.b16 %v7137
        %v7178 = vunpack.c.l.b16 %v7138
        %v7179 = vunpack.c.l.b16 %v7139
        %v7180 = vunpack.c.l.b16 %v7140
        %v7181 = vunpack.c.l.b16 %v7141
        %v7182 = vunpack.c.l.b16 %v7142
        %v7183 = vunpack.c.l.b16 %v7143
        %v7184 = vpack.c.b16 %v7169, %v7168
        %v7185 = vpack.c.b16 %v7171, %v7170
        %v7186 = vpack.c.b16 %v7173, %v7172
        %v7187 = vpack.c.b16 %v7175, %v7174
        %v7188 = vpack.c.b16 %v7177, %v7176
        %v7189 = vpack.c.b16 %v7179, %v7178
        %v7190 = vpack.c.b16 %v7181, %v7180
        %v7191 = vpack.c.b16 %v7183, %v7182
        %v7200 = vunpack.c.l.b16 %v7144
        %v7201 = vunpack.c.l.b16 %v7145
        %v7202 = vunpack.c.l.b16 %v7146
        %v7203 = vunpack.c.l.b16 %v7147
        %v7204 = vunpack.c.l.b16 %v7148
        %v7205 = vunpack.c.l.b16 %v7149
        %v7206 = vunpack.c.l.b16 %v7150
        %v7207 = vunpack.c.l.b16 %v7151
        %v7208 = vpack.c.b16 %v7201, %v7200
        %v7209 = vpack.c.b16 %v7203, %v7202
        %v7210 = vpack.c.b16 %v7205, %v7204
        %v7211 = vpack.c.b16 %v7207, %v7206
        %v7217 = vsel %vm1013, %v7184, 0
        %v7220 = vsel %vm1013, %v7185, 0
        %v7223 = vsel %vm1013, %v7186, 0
        %v7226 = vsel %vm1013, %v7187, 0
        %v7229 = vsel %vm1013, %v7188, 0
        %v7232 = vsel %vm1013, %v7189, 0
        %v7235 = vsel %vm1013, %v7190, 0
        %v7238 = vsel %vm1013, %v7191, 0
        %7240 = vmatpush.bf16.msra.mxu0 0
        %7241 = vmatpush.bf16.msra.mxu0 0
        %7242 = vmatpush.bf16.msra.mxu0 0
        %7243 = vmatpush.bf16.msra.mxu0 0
        %7244 = vmatpush.bf16.msra.mxu0 %v7211
        %7245 = vmatpush.bf16.msra.mxu0 %v7210
        %7246 = vmatpush.bf16.msra.mxu0 %v7209
        %7247 = vmatpush.bf16.msra.mxu0 %v7208
        %7248 = vmatmul.bf16.gmra.mxu0 %v7217
        %v7249 = vpop.f32.mrf.mxu0
        %v7250 = vadd.f32 0.0, %v7249
        %v7251 = vpop.f32.mrf.mxu0
        %v7252 = vadd.f32 0.0, %v7251
        %7253 = vmatmul.bf16.gmra.mxu0 %v7220
        %v7254 = vpop.f32.mrf.mxu0
        %v7255 = vadd.f32 0.0, %v7254
        %v7256 = vpop.f32.mrf.mxu0
        %v7257 = vadd.f32 0.0, %v7256
        %7258 = vmatmul.bf16.gmra.mxu0 %v7223
        %v7259 = vpop.f32.mrf.mxu0
        %v7260 = vadd.f32 0.0, %v7259
        %v7261 = vpop.f32.mrf.mxu0
        %v7262 = vadd.f32 0.0, %v7261
        %7263 = vmatmul.bf16.gmra.mxu0 %v7226
        %v7264 = vpop.f32.mrf.mxu0
        %v7265 = vadd.f32 0.0, %v7264
        %v7266 = vpop.f32.mrf.mxu0
        %v7267 = vadd.f32 0.0, %v7266
        %7268 = vmatmul.bf16.gmra.mxu0 %v7229
        %v7269 = vpop.f32.mrf.mxu0
        %v7270 = vadd.f32 0.0, %v7269
        %v7271 = vpop.f32.mrf.mxu0
        %v7272 = vadd.f32 0.0, %v7271
        %7273 = vmatmul.bf16.gmra.mxu0 %v7232
        %v7274 = vpop.f32.mrf.mxu0
        %v7275 = vadd.f32 0.0, %v7274
        %v7276 = vpop.f32.mrf.mxu0
        %v7277 = vadd.f32 0.0, %v7276
        %7278 = vmatmul.bf16.gmra.mxu0 %v7235
        %v7279 = vpop.f32.mrf.mxu0
        %v7280 = vadd.f32 0.0, %v7279
        %v7281 = vpop.f32.mrf.mxu0
        %v7282 = vadd.f32 0.0, %v7281
        %7283 = vmatmul.bf16.gmra.mxu0 %v7238
        %v7284 = vpop.f32.mrf.mxu0
        %v7285 = vadd.f32 0.0, %v7284
        %v7286 = vpop.f32.mrf.mxu0
        %v7287 = vadd.f32 0.0, %v7286
        %7288 = vdwg.mxu0
        %v7289 = vadd.f32 %v7112, %v7250
        %v7290 = vadd.f32 %v7113, %v7252
        %v7291 = vadd.f32 %v7114, %v7255
        %v7292 = vadd.f32 %v7115, %v7257
        %v7293 = vadd.f32 %v7116, %v7260
        %v7294 = vadd.f32 %v7117, %v7262
        %v7295 = vadd.f32 %v7118, %v7265
        %v7296 = vadd.f32 %v7119, %v7267
        %v7297 = vadd.f32 %v7120, %v7270
        %v7298 = vadd.f32 %v7121, %v7272
        %v7299 = vadd.f32 %v7122, %v7275
        %v7300 = vadd.f32 %v7123, %v7277
        %v7301 = vadd.f32 %v7124, %v7280
        %v7302 = vadd.f32 %v7125, %v7282
        %v7303 = vadd.f32 %v7126, %v7285
        %v7304 = vadd.f32 %v7127, %v7287
        %v7305 = vld [vmem:[%s476 + $0x48] sm:$0xf]
        %v7306 = vld [vmem:[%s476 + $0x4c] sm:$0xf]
        %v7307 = vld [vmem:[%s476 + $0x50] sm:$0xf]
        %v7308 = vld [vmem:[%s476 + $0x54] sm:$0xf]
        %v7309 = vld [vmem:[%s476 + $0x58] sm:$0xf]
        %v7310 = vld [vmem:[%s476 + $0x5c] sm:$0xf]
        %v7311 = vld [vmem:[%s476 + $0x60] sm:$0xf]
        %v7312 = vld [vmem:[%s476 + $0x64] sm:$0xf]
        %v7313 = vld [vmem:[%s476 + $0x68] sm:$0xf]
        %v7314 = vld [vmem:[%s476 + $0x6c] sm:$0xf]
        %v7315 = vld [vmem:[%s476 + $0x70] sm:$0xf]
        %v7316 = vld [vmem:[%s476 + $0x74] sm:$0xf]
        %v7317 = vld [vmem:[%s476 + $0x78] sm:$0xf]
        %v7318 = vld [vmem:[%s476 + $0x7c] sm:$0xf]
        %v7319 = vld [vmem:[%s476 + $0x80] sm:$0xf]
        %v7320 = vld [vmem:[%s476 + $0x84] sm:$0xf]
        %v7321 = vld [vmem:[%s5648] sm:$0xf]
        %v7322 = vld [vmem:[%s5648 + $0x4] sm:$0xf]
        %v7323 = vld [vmem:[%s5648 + $0x8] sm:$0xf]
        %v7324 = vld [vmem:[%s5648 + $0xc] sm:$0xf]
        %v7325 = vld [vmem:[%s5648 + $0x10] sm:$0xf]
        %v7326 = vld [vmem:[%s5648 + $0x14] sm:$0xf]
        %v7327 = vld [vmem:[%s5648 + $0x18] sm:$0xf]
        %v7328 = vld [vmem:[%s5648 + $0x1c] sm:$0xf]
        %v7345 = vunpack.c.l.b16 %v7305
        %v7346 = vunpack.c.l.b16 %v7306
        %v7347 = vunpack.c.l.b16 %v7307
        %v7348 = vunpack.c.l.b16 %v7308
        %v7349 = vunpack.c.l.b16 %v7309
        %v7350 = vunpack.c.l.b16 %v7310
        %v7351 = vunpack.c.l.b16 %v7311
        %v7352 = vunpack.c.l.b16 %v7312
        %v7353 = vunpack.c.l.b16 %v7313
        %v7354 = vunpack.c.l.b16 %v7314
        %v7355 = vunpack.c.l.b16 %v7315
        %v7356 = vunpack.c.l.b16 %v7316
        %v7357 = vunpack.c.l.b16 %v7317
        %v7358 = vunpack.c.l.b16 %v7318
        %v7359 = vunpack.c.l.b16 %v7319
        %v7360 = vunpack.c.l.b16 %v7320
        %v7361 = vpack.c.b16 %v7346, %v7345
        %v7362 = vpack.c.b16 %v7348, %v7347
        %v7363 = vpack.c.b16 %v7350, %v7349
        %v7364 = vpack.c.b16 %v7352, %v7351
        %v7365 = vpack.c.b16 %v7354, %v7353
        %v7366 = vpack.c.b16 %v7356, %v7355
        %v7367 = vpack.c.b16 %v7358, %v7357
        %v7368 = vpack.c.b16 %v7360, %v7359
        %v7377 = vunpack.c.l.b16 %v7321
        %v7378 = vunpack.c.l.b16 %v7322
        %v7379 = vunpack.c.l.b16 %v7323
        %v7380 = vunpack.c.l.b16 %v7324
        %v7381 = vunpack.c.l.b16 %v7325
        %v7382 = vunpack.c.l.b16 %v7326
        %v7383 = vunpack.c.l.b16 %v7327
        %v7384 = vunpack.c.l.b16 %v7328
        %v7385 = vpack.c.b16 %v7378, %v7377
        %v7386 = vpack.c.b16 %v7380, %v7379
        %v7387 = vpack.c.b16 %v7382, %v7381
        %v7388 = vpack.c.b16 %v7384, %v7383
        %v7394 = vsel %vm1013, %v7361, 0
        %v7397 = vsel %vm1013, %v7362, 0
        %v7400 = vsel %vm1013, %v7363, 0
        %v7403 = vsel %vm1013, %v7364, 0
        %v7406 = vsel %vm1013, %v7365, 0
        %v7409 = vsel %vm1013, %v7366, 0
        %v7412 = vsel %vm1013, %v7367, 0
        %v7415 = vsel %vm1013, %v7368, 0
        %7417 = vmatpush.bf16.msra.mxu0 0
        %7418 = vmatpush.bf16.msra.mxu0 0
        %7419 = vmatpush.bf16.msra.mxu0 0
        %7420 = vmatpush.bf16.msra.mxu0 0
        %7421 = vmatpush.bf16.msra.mxu0 %v7388
        %7422 = vmatpush.bf16.msra.mxu0 %v7387
        %7423 = vmatpush.bf16.msra.mxu0 %v7386
        %7424 = vmatpush.bf16.msra.mxu0 %v7385
        %7425 = vmatmul.bf16.gmra.mxu0 %v7394
        %v7426 = vpop.f32.mrf.mxu0
        %v7427 = vadd.f32 0.0, %v7426
        %v7428 = vpop.f32.mrf.mxu0
        %v7429 = vadd.f32 0.0, %v7428
        %7430 = vmatmul.bf16.gmra.mxu0 %v7397
        %v7431 = vpop.f32.mrf.mxu0
        %v7432 = vadd.f32 0.0, %v7431
        %v7433 = vpop.f32.mrf.mxu0
        %v7434 = vadd.f32 0.0, %v7433
        %7435 = vmatmul.bf16.gmra.mxu0 %v7400
        %v7436 = vpop.f32.mrf.mxu0
        %v7437 = vadd.f32 0.0, %v7436
        %v7438 = vpop.f32.mrf.mxu0
        %v7439 = vadd.f32 0.0, %v7438
        %7440 = vmatmul.bf16.gmra.mxu0 %v7403
        %v7441 = vpop.f32.mrf.mxu0
        %v7442 = vadd.f32 0.0, %v7441
        %v7443 = vpop.f32.mrf.mxu0
        %v7444 = vadd.f32 0.0, %v7443
        %7445 = vmatmul.bf16.gmra.mxu0 %v7406
        %v7446 = vpop.f32.mrf.mxu0
        %v7447 = vadd.f32 0.0, %v7446
        %v7448 = vpop.f32.mrf.mxu0
        %v7449 = vadd.f32 0.0, %v7448
        %7450 = vmatmul.bf16.gmra.mxu0 %v7409
        %v7451 = vpop.f32.mrf.mxu0
        %v7452 = vadd.f32 0.0, %v7451
        %v7453 = vpop.f32.mrf.mxu0
        %v7454 = vadd.f32 0.0, %v7453
        %7455 = vmatmul.bf16.gmra.mxu0 %v7412
        %v7456 = vpop.f32.mrf.mxu0
        %v7457 = vadd.f32 0.0, %v7456
        %v7458 = vpop.f32.mrf.mxu0
        %v7459 = vadd.f32 0.0, %v7458
        %7460 = vmatmul.bf16.gmra.mxu0 %v7415
        %v7461 = vpop.f32.mrf.mxu0
        %v7462 = vadd.f32 0.0, %v7461
        %v7463 = vpop.f32.mrf.mxu0
        %v7464 = vadd.f32 0.0, %v7463
        %7465 = vdwg.mxu0
        %v7466 = vadd.f32 %v7289, %v7427
        %v7467 = vadd.f32 %v7290, %v7429
        %v7468 = vadd.f32 %v7291, %v7432
        %v7469 = vadd.f32 %v7292, %v7434
        %v7470 = vadd.f32 %v7293, %v7437
        %v7471 = vadd.f32 %v7294, %v7439
        %v7472 = vadd.f32 %v7295, %v7442
        %v7473 = vadd.f32 %v7296, %v7444
        %v7474 = vadd.f32 %v7297, %v7447
        %v7475 = vadd.f32 %v7298, %v7449
        %v7476 = vadd.f32 %v7299, %v7452
        %v7477 = vadd.f32 %v7300, %v7454
        %v7478 = vadd.f32 %v7301, %v7457
        %v7479 = vadd.f32 %v7302, %v7459
        %v7480 = vadd.f32 %v7303, %v7462
        %v7481 = vadd.f32 %v7304, %v7464
        %v7482 = vld [vmem:[#allocation2 + $0x50] sm:$0xf]
        %v7483 = vld [vmem:[#allocation2 + $0x54] sm:$0xf]
        %v7484 = vld [vmem:[#allocation2 + $0x58] sm:$0xf]
        %v7485 = vld [vmem:[#allocation2 + $0x5c] sm:$0xf]
        %v7486 = vld [vmem:[#allocation2 + $0x60] sm:$0xf]
        %v7487 = vld [vmem:[#allocation2 + $0x64] sm:$0xf]
        %v7488 = vld [vmem:[#allocation2 + $0x68] sm:$0xf]
        %v7489 = vld [vmem:[#allocation2 + $0x6c] sm:$0xf]
        %v7490 = vld [vmem:[#allocation2 + $0x70] sm:$0xf]
        %v7491 = vld [vmem:[#allocation2 + $0x74] sm:$0xf]
        %v7492 = vld [vmem:[#allocation2 + $0x78] sm:$0xf]
        %v7493 = vld [vmem:[#allocation2 + $0x7c] sm:$0xf]
        %v7494 = vld [vmem:[#allocation2 + $0x80] sm:$0xf]
        %v7495 = vld [vmem:[#allocation2 + $0x84] sm:$0xf]
        %v7496 = vld [vmem:[#allocation2 + $0x88] sm:$0xf]
        %v7497 = vld [vmem:[#allocation2 + $0x8c] sm:$0xf]
        %v7498 = vld [vmem:[%s5826] sm:$0xf]
        %v7499 = vld [vmem:[%s5826 + $0x4] sm:$0xf]
        %v7500 = vld [vmem:[%s5826 + $0x8] sm:$0xf]
        %v7501 = vld [vmem:[%s5826 + $0xc] sm:$0xf]
        %v7502 = vld [vmem:[%s5826 + $0x10] sm:$0xf]
        %v7503 = vld [vmem:[%s5826 + $0x14] sm:$0xf]
        %v7504 = vld [vmem:[%s5826 + $0x18] sm:$0xf]
        %v7505 = vld [vmem:[%s5826 + $0x1c] sm:$0xf]
        %v7522 = vunpack.c.l.b16 %v7482
        %v7523 = vunpack.c.l.b16 %v7483
        %v7524 = vunpack.c.l.b16 %v7484
        %v7525 = vunpack.c.l.b16 %v7485
        %v7526 = vunpack.c.l.b16 %v7486
        %v7527 = vunpack.c.l.b16 %v7487
        %v7528 = vunpack.c.l.b16 %v7488
        %v7529 = vunpack.c.l.b16 %v7489
        %v7530 = vunpack.c.l.b16 %v7490
        %v7531 = vunpack.c.l.b16 %v7491
        %v7532 = vunpack.c.l.b16 %v7492
        %v7533 = vunpack.c.l.b16 %v7493
        %v7534 = vunpack.c.l.b16 %v7494
        %v7535 = vunpack.c.l.b16 %v7495
        %v7536 = vunpack.c.l.b16 %v7496
        %v7537 = vunpack.c.l.b16 %v7497
        %v7538 = vpack.c.b16 %v7523, %v7522
        %v7539 = vpack.c.b16 %v7525, %v7524
        %v7540 = vpack.c.b16 %v7527, %v7526
        %v7541 = vpack.c.b16 %v7529, %v7528
        %v7542 = vpack.c.b16 %v7531, %v7530
        %v7543 = vpack.c.b16 %v7533, %v7532
        %v7544 = vpack.c.b16 %v7535, %v7534
        %v7545 = vpack.c.b16 %v7537, %v7536
        %v7554 = vunpack.c.l.b16 %v7498
        %v7555 = vunpack.c.l.b16 %v7499
        %v7556 = vunpack.c.l.b16 %v7500
        %v7557 = vunpack.c.l.b16 %v7501
        %v7558 = vunpack.c.l.b16 %v7502
        %v7559 = vunpack.c.l.b16 %v7503
        %v7560 = vunpack.c.l.b16 %v7504
        %v7561 = vunpack.c.l.b16 %v7505
        %v7562 = vpack.c.b16 %v7555, %v7554
        %v7563 = vpack.c.b16 %v7557, %v7556
        %v7564 = vpack.c.b16 %v7559, %v7558
        %v7565 = vpack.c.b16 %v7561, %v7560
        %v7571 = vsel %vm1013, %v7538, 0
        %v7574 = vsel %vm1013, %v7539, 0
        %v7577 = vsel %vm1013, %v7540, 0
        %v7580 = vsel %vm1013, %v7541, 0
        %v7583 = vsel %vm1013, %v7542, 0
        %v7586 = vsel %vm1013, %v7543, 0
        %v7589 = vsel %vm1013, %v7544, 0
        %v7592 = vsel %vm1013, %v7545, 0
        %7594 = vmatpush.bf16.msra.mxu0 0
        %7595 = vmatpush.bf16.msra.mxu0 0
        %7596 = vmatpush.bf16.msra.mxu0 0
        %7597 = vmatpush.bf16.msra.mxu0 0
        %7598 = vmatpush.bf16.msra.mxu0 %v7565
        %7599 = vmatpush.bf16.msra.mxu0 %v7564
        %7600 = vmatpush.bf16.msra.mxu0 %v7563
        %7601 = vmatpush.bf16.msra.mxu0 %v7562
        %7602 = vmatmul.bf16.gmra.mxu0 %v7571
        %v7603 = vpop.f32.mrf.mxu0
        %v7604 = vadd.f32 0.0, %v7603
        %v7605 = vpop.f32.mrf.mxu0
        %v7606 = vadd.f32 0.0, %v7605
        %7607 = vmatmul.bf16.gmra.mxu0 %v7574
        %v7608 = vpop.f32.mrf.mxu0
        %v7609 = vadd.f32 0.0, %v7608
        %v7610 = vpop.f32.mrf.mxu0
        %v7611 = vadd.f32 0.0, %v7610
        %7612 = vmatmul.bf16.gmra.mxu0 %v7577
        %v7613 = vpop.f32.mrf.mxu0
        %v7614 = vadd.f32 0.0, %v7613
        %v7615 = vpop.f32.mrf.mxu0
        %v7616 = vadd.f32 0.0, %v7615
        %7617 = vmatmul.bf16.gmra.mxu0 %v7580
        %v7618 = vpop.f32.mrf.mxu0
        %v7619 = vadd.f32 0.0, %v7618
        %v7620 = vpop.f32.mrf.mxu0
        %v7621 = vadd.f32 0.0, %v7620
        %7622 = vmatmul.bf16.gmra.mxu0 %v7583
        %v7623 = vpop.f32.mrf.mxu0
        %v7624 = vadd.f32 0.0, %v7623
        %v7625 = vpop.f32.mrf.mxu0
        %v7626 = vadd.f32 0.0, %v7625
        %7627 = vmatmul.bf16.gmra.mxu0 %v7586
        %v7628 = vpop.f32.mrf.mxu0
        %v7629 = vadd.f32 0.0, %v7628
        %v7630 = vpop.f32.mrf.mxu0
        %v7631 = vadd.f32 0.0, %v7630
        %7632 = vmatmul.bf16.gmra.mxu0 %v7589
        %v7633 = vpop.f32.mrf.mxu0
        %v7634 = vadd.f32 0.0, %v7633
        %v7635 = vpop.f32.mrf.mxu0
        %v7636 = vadd.f32 0.0, %v7635
        %7637 = vmatmul.bf16.gmra.mxu0 %v7592
        %v7638 = vpop.f32.mrf.mxu0
        %v7639 = vadd.f32 0.0, %v7638
        %v7640 = vpop.f32.mrf.mxu0
        %v7641 = vadd.f32 0.0, %v7640
        %7642 = vdwg.mxu0
        %v7643 = vadd.f32 %v7466, %v7604
        %v7644 = vadd.f32 %v7467, %v7606
        %v7645 = vadd.f32 %v7468, %v7609
        %v7646 = vadd.f32 %v7469, %v7611
        %v7647 = vadd.f32 %v7470, %v7614
        %v7648 = vadd.f32 %v7471, %v7616
        %v7649 = vadd.f32 %v7472, %v7619
        %v7650 = vadd.f32 %v7473, %v7621
        %v7651 = vadd.f32 %v7474, %v7624
        %v7652 = vadd.f32 %v7475, %v7626
        %v7653 = vadd.f32 %v7476, %v7629
        %v7654 = vadd.f32 %v7477, %v7631
        %v7655 = vadd.f32 %v7478, %v7634
        %v7656 = vadd.f32 %v7479, %v7636
        %v7657 = vadd.f32 %v7480, %v7639
        %v7658 = vadd.f32 %v7481, %v7641
        %v7659 = vld [vmem:[%s471 + $0x50] sm:$0xf]
        %v7660 = vld [vmem:[%s471 + $0x54] sm:$0xf]
        %v7661 = vld [vmem:[%s471 + $0x58] sm:$0xf]
        %v7662 = vld [vmem:[%s471 + $0x5c] sm:$0xf]
        %v7663 = vld [vmem:[%s471 + $0x60] sm:$0xf]
        %v7664 = vld [vmem:[%s471 + $0x64] sm:$0xf]
        %v7665 = vld [vmem:[%s471 + $0x68] sm:$0xf]
        %v7666 = vld [vmem:[%s471 + $0x6c] sm:$0xf]
        %v7667 = vld [vmem:[%s471 + $0x70] sm:$0xf]
        %v7668 = vld [vmem:[%s471 + $0x74] sm:$0xf]
        %v7669 = vld [vmem:[%s471 + $0x78] sm:$0xf]
        %v7670 = vld [vmem:[%s471 + $0x7c] sm:$0xf]
        %v7671 = vld [vmem:[%s471 + $0x80] sm:$0xf]
        %v7672 = vld [vmem:[%s471 + $0x84] sm:$0xf]
        %v7673 = vld [vmem:[%s471 + $0x88] sm:$0xf]
        %v7674 = vld [vmem:[%s471 + $0x8c] sm:$0xf]
        %v7675 = vld [vmem:[%s6004] sm:$0xf]
        %v7676 = vld [vmem:[%s6004 + $0x4] sm:$0xf]
        %v7677 = vld [vmem:[%s6004 + $0x8] sm:$0xf]
        %v7678 = vld [vmem:[%s6004 + $0xc] sm:$0xf]
        %v7679 = vld [vmem:[%s6004 + $0x10] sm:$0xf]
        %v7680 = vld [vmem:[%s6004 + $0x14] sm:$0xf]
        %v7681 = vld [vmem:[%s6004 + $0x18] sm:$0xf]
        %v7682 = vld [vmem:[%s6004 + $0x1c] sm:$0xf]
        %v7699 = vunpack.c.l.b16 %v7659
        %v7700 = vunpack.c.l.b16 %v7660
        %v7701 = vunpack.c.l.b16 %v7661
        %v7702 = vunpack.c.l.b16 %v7662
        %v7703 = vunpack.c.l.b16 %v7663
        %v7704 = vunpack.c.l.b16 %v7664
        %v7705 = vunpack.c.l.b16 %v7665
        %v7706 = vunpack.c.l.b16 %v7666
        %v7707 = vunpack.c.l.b16 %v7667
        %v7708 = vunpack.c.l.b16 %v7668
        %v7709 = vunpack.c.l.b16 %v7669
        %v7710 = vunpack.c.l.b16 %v7670
        %v7711 = vunpack.c.l.b16 %v7671
        %v7712 = vunpack.c.l.b16 %v7672
        %v7713 = vunpack.c.l.b16 %v7673
        %v7714 = vunpack.c.l.b16 %v7674
        %v7715 = vpack.c.b16 %v7700, %v7699
        %v7716 = vpack.c.b16 %v7702, %v7701
        %v7717 = vpack.c.b16 %v7704, %v7703
        %v7718 = vpack.c.b16 %v7706, %v7705
        %v7719 = vpack.c.b16 %v7708, %v7707
        %v7720 = vpack.c.b16 %v7710, %v7709
        %v7721 = vpack.c.b16 %v7712, %v7711
        %v7722 = vpack.c.b16 %v7714, %v7713
        %v7731 = vunpack.c.l.b16 %v7675
        %v7732 = vunpack.c.l.b16 %v7676
        %v7733 = vunpack.c.l.b16 %v7677
        %v7734 = vunpack.c.l.b16 %v7678
        %v7735 = vunpack.c.l.b16 %v7679
        %v7736 = vunpack.c.l.b16 %v7680
        %v7737 = vunpack.c.l.b16 %v7681
        %v7738 = vunpack.c.l.b16 %v7682
        %v7739 = vpack.c.b16 %v7732, %v7731
        %v7740 = vpack.c.b16 %v7734, %v7733
        %v7741 = vpack.c.b16 %v7736, %v7735
        %v7742 = vpack.c.b16 %v7738, %v7737
        %v7748 = vsel %vm1013, %v7715, 0
        %v7751 = vsel %vm1013, %v7716, 0
        %v7754 = vsel %vm1013, %v7717, 0
        %v7757 = vsel %vm1013, %v7718, 0
        %v7760 = vsel %vm1013, %v7719, 0
        %v7763 = vsel %vm1013, %v7720, 0
        %v7766 = vsel %vm1013, %v7721, 0
        %v7769 = vsel %vm1013, %v7722, 0
        %7771 = vmatpush.bf16.msra.mxu0 0
        %7772 = vmatpush.bf16.msra.mxu0 0
        %7773 = vmatpush.bf16.msra.mxu0 0
        %7774 = vmatpush.bf16.msra.mxu0 0
        %7775 = vmatpush.bf16.msra.mxu0 %v7742
        %7776 = vmatpush.bf16.msra.mxu0 %v7741
        %7777 = vmatpush.bf16.msra.mxu0 %v7740
        %7778 = vmatpush.bf16.msra.mxu0 %v7739
        %7779 = vmatmul.bf16.gmra.mxu0 %v7748
        %v7780 = vpop.f32.mrf.mxu0
        %v7781 = vadd.f32 0.0, %v7780
        %v7782 = vpop.f32.mrf.mxu0
        %v7783 = vadd.f32 0.0, %v7782
        %7784 = vmatmul.bf16.gmra.mxu0 %v7751
        %v7785 = vpop.f32.mrf.mxu0
        %v7786 = vadd.f32 0.0, %v7785
        %v7787 = vpop.f32.mrf.mxu0
        %v7788 = vadd.f32 0.0, %v7787
        %7789 = vmatmul.bf16.gmra.mxu0 %v7754
        %v7790 = vpop.f32.mrf.mxu0
        %v7791 = vadd.f32 0.0, %v7790
        %v7792 = vpop.f32.mrf.mxu0
        %v7793 = vadd.f32 0.0, %v7792
        %7794 = vmatmul.bf16.gmra.mxu0 %v7757
        %v7795 = vpop.f32.mrf.mxu0
        %v7796 = vadd.f32 0.0, %v7795
        %v7797 = vpop.f32.mrf.mxu0
        %v7798 = vadd.f32 0.0, %v7797
        %7799 = vmatmul.bf16.gmra.mxu0 %v7760
        %v7800 = vpop.f32.mrf.mxu0
        %v7801 = vadd.f32 0.0, %v7800
        %v7802 = vpop.f32.mrf.mxu0
        %v7803 = vadd.f32 0.0, %v7802
        %7804 = vmatmul.bf16.gmra.mxu0 %v7763
        %v7805 = vpop.f32.mrf.mxu0
        %v7806 = vadd.f32 0.0, %v7805
        %v7807 = vpop.f32.mrf.mxu0
        %v7808 = vadd.f32 0.0, %v7807
        %7809 = vmatmul.bf16.gmra.mxu0 %v7766
        %v7810 = vpop.f32.mrf.mxu0
        %v7811 = vadd.f32 0.0, %v7810
        %v7812 = vpop.f32.mrf.mxu0
        %v7813 = vadd.f32 0.0, %v7812
        %7814 = vmatmul.bf16.gmra.mxu0 %v7769
        %v7815 = vpop.f32.mrf.mxu0
        %v7816 = vadd.f32 0.0, %v7815
        %v7817 = vpop.f32.mrf.mxu0
        %v7818 = vadd.f32 0.0, %v7817
        %7819 = vdwg.mxu0
        %v7820 = vadd.f32 %v7643, %v7781
        %v7821 = vadd.f32 %v7644, %v7783
        %v7822 = vadd.f32 %v7645, %v7786
        %v7823 = vadd.f32 %v7646, %v7788
        %v7824 = vadd.f32 %v7647, %v7791
        %v7825 = vadd.f32 %v7648, %v7793
        %v7826 = vadd.f32 %v7649, %v7796
        %v7827 = vadd.f32 %v7650, %v7798
        %v7828 = vadd.f32 %v7651, %v7801
        %v7829 = vadd.f32 %v7652, %v7803
        %v7830 = vadd.f32 %v7653, %v7806
        %v7831 = vadd.f32 %v7654, %v7808
        %v7832 = vadd.f32 %v7655, %v7811
        %v7833 = vadd.f32 %v7656, %v7813
        %v7834 = vadd.f32 %v7657, %v7816
        %v7835 = vadd.f32 %v7658, %v7818
        %v7836 = vld [vmem:[%s476 + $0x50] sm:$0xf]
        %v7837 = vld [vmem:[%s476 + $0x54] sm:$0xf]
        %v7838 = vld [vmem:[%s476 + $0x58] sm:$0xf]
        %v7839 = vld [vmem:[%s476 + $0x5c] sm:$0xf]
        %v7840 = vld [vmem:[%s476 + $0x60] sm:$0xf]
        %v7841 = vld [vmem:[%s476 + $0x64] sm:$0xf]
        %v7842 = vld [vmem:[%s476 + $0x68] sm:$0xf]
        %v7843 = vld [vmem:[%s476 + $0x6c] sm:$0xf]
        %v7844 = vld [vmem:[%s476 + $0x70] sm:$0xf]
        %v7845 = vld [vmem:[%s476 + $0x74] sm:$0xf]
        %v7846 = vld [vmem:[%s476 + $0x78] sm:$0xf]
        %v7847 = vld [vmem:[%s476 + $0x7c] sm:$0xf]
        %v7848 = vld [vmem:[%s476 + $0x80] sm:$0xf]
        %v7849 = vld [vmem:[%s476 + $0x84] sm:$0xf]
        %v7850 = vld [vmem:[%s476 + $0x88] sm:$0xf]
        %v7851 = vld [vmem:[%s476 + $0x8c] sm:$0xf]
        %v7852 = vld [vmem:[%s6182] sm:$0xf]
        %v7853 = vld [vmem:[%s6182 + $0x4] sm:$0xf]
        %v7854 = vld [vmem:[%s6182 + $0x8] sm:$0xf]
        %v7855 = vld [vmem:[%s6182 + $0xc] sm:$0xf]
        %v7856 = vld [vmem:[%s6182 + $0x10] sm:$0xf]
        %v7857 = vld [vmem:[%s6182 + $0x14] sm:$0xf]
        %v7858 = vld [vmem:[%s6182 + $0x18] sm:$0xf]
        %v7859 = vld [vmem:[%s6182 + $0x1c] sm:$0xf]
        %v7876 = vunpack.c.l.b16 %v7836
        %v7877 = vunpack.c.l.b16 %v7837
        %v7878 = vunpack.c.l.b16 %v7838
        %v7879 = vunpack.c.l.b16 %v7839
        %v7880 = vunpack.c.l.b16 %v7840
        %v7881 = vunpack.c.l.b16 %v7841
        %v7882 = vunpack.c.l.b16 %v7842
        %v7883 = vunpack.c.l.b16 %v7843
        %v7884 = vunpack.c.l.b16 %v7844
        %v7885 = vunpack.c.l.b16 %v7845
        %v7886 = vunpack.c.l.b16 %v7846
        %v7887 = vunpack.c.l.b16 %v7847
        %v7888 = vunpack.c.l.b16 %v7848
        %v7889 = vunpack.c.l.b16 %v7849
        %v7890 = vunpack.c.l.b16 %v7850
        %v7891 = vunpack.c.l.b16 %v7851
        %v7892 = vpack.c.b16 %v7877, %v7876
        %v7893 = vpack.c.b16 %v7879, %v7878
        %v7894 = vpack.c.b16 %v7881, %v7880
        %v7895 = vpack.c.b16 %v7883, %v7882
        %v7896 = vpack.c.b16 %v7885, %v7884
        %v7897 = vpack.c.b16 %v7887, %v7886
        %v7898 = vpack.c.b16 %v7889, %v7888
        %v7899 = vpack.c.b16 %v7891, %v7890
        %v7908 = vunpack.c.l.b16 %v7852
        %v7909 = vunpack.c.l.b16 %v7853
        %v7910 = vunpack.c.l.b16 %v7854
        %v7911 = vunpack.c.l.b16 %v7855
        %v7912 = vunpack.c.l.b16 %v7856
        %v7913 = vunpack.c.l.b16 %v7857
        %v7914 = vunpack.c.l.b16 %v7858
        %v7915 = vunpack.c.l.b16 %v7859
        %v7916 = vpack.c.b16 %v7909, %v7908
        %v7917 = vpack.c.b16 %v7911, %v7910
        %v7918 = vpack.c.b16 %v7913, %v7912
        %v7919 = vpack.c.b16 %v7915, %v7914
        %v7925 = vsel %vm1013, %v7892, 0
        %v7928 = vsel %vm1013, %v7893, 0
        %v7931 = vsel %vm1013, %v7894, 0
        %v7934 = vsel %vm1013, %v7895, 0
        %v7937 = vsel %vm1013, %v7896, 0
        %v7940 = vsel %vm1013, %v7897, 0
        %v7943 = vsel %vm1013, %v7898, 0
        %v7946 = vsel %vm1013, %v7899, 0
        %7948 = vmatpush.bf16.msra.mxu0 0
        %7949 = vmatpush.bf16.msra.mxu0 0
        %7950 = vmatpush.bf16.msra.mxu0 0
        %7951 = vmatpush.bf16.msra.mxu0 0
        %7952 = vmatpush.bf16.msra.mxu0 %v7919
        %7953 = vmatpush.bf16.msra.mxu0 %v7918
        %7954 = vmatpush.bf16.msra.mxu0 %v7917
        %7955 = vmatpush.bf16.msra.mxu0 %v7916
        %7956 = vmatmul.bf16.gmra.mxu0 %v7925
        %v7957 = vpop.f32.mrf.mxu0
        %v7958 = vadd.f32 0.0, %v7957
        %v7959 = vpop.f32.mrf.mxu0
        %v7960 = vadd.f32 0.0, %v7959
        %7961 = vmatmul.bf16.gmra.mxu0 %v7928
        %v7962 = vpop.f32.mrf.mxu0
        %v7963 = vadd.f32 0.0, %v7962
        %v7964 = vpop.f32.mrf.mxu0
        %v7965 = vadd.f32 0.0, %v7964
        %7966 = vmatmul.bf16.gmra.mxu0 %v7931
        %v7967 = vpop.f32.mrf.mxu0
        %v7968 = vadd.f32 0.0, %v7967
        %v7969 = vpop.f32.mrf.mxu0
        %v7970 = vadd.f32 0.0, %v7969
        %7971 = vmatmul.bf16.gmra.mxu0 %v7934
        %v7972 = vpop.f32.mrf.mxu0
        %v7973 = vadd.f32 0.0, %v7972
        %v7974 = vpop.f32.mrf.mxu0
        %v7975 = vadd.f32 0.0, %v7974
        %7976 = vmatmul.bf16.gmra.mxu0 %v7937
        %v7977 = vpop.f32.mrf.mxu0
        %v7978 = vadd.f32 0.0, %v7977
        %v7979 = vpop.f32.mrf.mxu0
        %v7980 = vadd.f32 0.0, %v7979
        %7981 = vmatmul.bf16.gmra.mxu0 %v7940
        %v7982 = vpop.f32.mrf.mxu0
        %v7983 = vadd.f32 0.0, %v7982
        %v7984 = vpop.f32.mrf.mxu0
        %v7985 = vadd.f32 0.0, %v7984
        %7986 = vmatmul.bf16.gmra.mxu0 %v7943
        %v7987 = vpop.f32.mrf.mxu0
        %v7988 = vadd.f32 0.0, %v7987
        %v7989 = vpop.f32.mrf.mxu0
        %v7990 = vadd.f32 0.0, %v7989
        %7991 = vmatmul.bf16.gmra.mxu0 %v7946
        %v7992 = vpop.f32.mrf.mxu0
        %v7993 = vadd.f32 0.0, %v7992
        %v7994 = vpop.f32.mrf.mxu0
        %v7995 = vadd.f32 0.0, %v7994
        %7996 = vdwg.mxu0
        %v7997 = vadd.f32 %v7820, %v7958
        %v7998 = vadd.f32 %v7821, %v7960
        %v7999 = vadd.f32 %v7822, %v7963
        %v8000 = vadd.f32 %v7823, %v7965
        %v8001 = vadd.f32 %v7824, %v7968
        %v8002 = vadd.f32 %v7825, %v7970
        %v8003 = vadd.f32 %v7826, %v7973
        %v8004 = vadd.f32 %v7827, %v7975
        %v8005 = vadd.f32 %v7828, %v7978
        %v8006 = vadd.f32 %v7829, %v7980
        %v8007 = vadd.f32 %v7830, %v7983
        %v8008 = vadd.f32 %v7831, %v7985
        %v8009 = vadd.f32 %v7832, %v7988
        %v8010 = vadd.f32 %v7833, %v7990
        %v8011 = vadd.f32 %v7834, %v7993
        %v8012 = vadd.f32 %v7835, %v7995
        %8013 = vst.msk [vmem:[#allocation3 + $0x80] sm:$0xff] %vm1013, %v7997
        %8014 = vst.msk [vmem:[#allocation3 + $0x88] sm:$0xff] %vm1013, %v7998
        %8015 = vst.msk [vmem:[#allocation3 + $0x90] sm:$0xff] %vm1013, %v7999
        %8016 = vst.msk [vmem:[#allocation3 + $0x98] sm:$0xff] %vm1013, %v8000
        %8017 = vst.msk [vmem:[#allocation3 + $0xa0] sm:$0xff] %vm1013, %v8001
        %8018 = vst.msk [vmem:[#allocation3 + $0xa8] sm:$0xff] %vm1013, %v8002
        %8019 = vst.msk [vmem:[#allocation3 + $0xb0] sm:$0xff] %vm1013, %v8003
        %8020 = vst.msk [vmem:[#allocation3 + $0xb8] sm:$0xff] %vm1013, %v8004
        %8021 = vst.msk [vmem:[#allocation3 + $0xc0] sm:$0xff] %vm1013, %v8005
        %8022 = vst.msk [vmem:[#allocation3 + $0xc8] sm:$0xff] %vm1013, %v8006
        %8023 = vst.msk [vmem:[#allocation3 + $0xd0] sm:$0xff] %vm1013, %v8007
        %8024 = vst.msk [vmem:[#allocation3 + $0xd8] sm:$0xff] %vm1013, %v8008
        %8025 = vst.msk [vmem:[#allocation3 + $0xe0] sm:$0xff] %vm1013, %v8009
        %8026 = vst.msk [vmem:[#allocation3 + $0xe8] sm:$0xff] %vm1013, %v8010
        %8027 = vst.msk [vmem:[#allocation3 + $0xf0] sm:$0xff] %vm1013, %v8011
        %8028 = vst.msk [vmem:[#allocation3 + $0xf8] sm:$0xff] %vm1013, %v8012
        %v8029 = vsel %vm1013, %v7997, 0.0
        %v8030 = vsel %vm1013, %v7998, 0.0
        %v8031 = vadd.f32 %v8029, %v8030
        %v8032 = vsel %vm1013, %v7999, 0.0
        %v8033 = vadd.f32 %v8031, %v8032
        %v8034 = vsel %vm1013, %v8000, 0.0
        %v8035 = vadd.f32 %v8033, %v8034
        %v8036 = vsel %vm1013, %v8001, 0.0
        %v8037 = vadd.f32 %v8035, %v8036
        %v8038 = vsel %vm1013, %v8002, 0.0
        %v8039 = vadd.f32 %v8037, %v8038
        %v8040 = vsel %vm1013, %v8003, 0.0
        %v8041 = vadd.f32 %v8039, %v8040
        %v8042 = vsel %vm1013, %v8004, 0.0
        %v8043 = vadd.f32 %v8041, %v8042
        %v8044 = vsel %vm1013, %v8005, 0.0
        %v8045 = vadd.f32 %v8043, %v8044
        %v8046 = vsel %vm1013, %v8006, 0.0
        %v8047 = vadd.f32 %v8045, %v8046
        %v8048 = vsel %vm1013, %v8007, 0.0
        %v8049 = vadd.f32 %v8047, %v8048
        %v8050 = vsel %vm1013, %v8008, 0.0
        %v8051 = vadd.f32 %v8049, %v8050
        %v8052 = vsel %vm1013, %v8009, 0.0
        %v8053 = vadd.f32 %v8051, %v8052
        %v8054 = vsel %vm1013, %v8010, 0.0
        %v8055 = vadd.f32 %v8053, %v8054
        %v8056 = vsel %vm1013, %v8011, 0.0
        %v8057 = vadd.f32 %v8055, %v8056
        %v8058 = vsel %vm1013, %v8012, 0.0
        %v8059 = vadd.f32 %v8057, %v8058
        %v8060 = vrot.slane %v8059, 4
        %v8061 = vadd.f32 %v8059, %v8060
        %v8062 = vrot.slane %v8061, 2
        %v8063 = vadd.f32 %v8061, %v8062
        %v8064 = vrot.slane %v8063, 1
        %v8065 = vadd.f32 %v8063, %v8064
        %v8066 = vadd.f32 %v6397, %v8065
        %v8067 = vmul.f32 %v7997, %v7997
        %v8068 = vmul.f32 %v7998, %v7998
        %v8069 = vmul.f32 %v7999, %v7999
        %v8070 = vmul.f32 %v8000, %v8000
        %v8071 = vmul.f32 %v8001, %v8001
        %v8072 = vmul.f32 %v8002, %v8002
        %v8073 = vmul.f32 %v8003, %v8003
        %v8074 = vmul.f32 %v8004, %v8004
        %v8075 = vmul.f32 %v8005, %v8005
        %v8076 = vmul.f32 %v8006, %v8006
        %v8077 = vmul.f32 %v8007, %v8007
        %v8078 = vmul.f32 %v8008, %v8008
        %v8079 = vmul.f32 %v8009, %v8009
        %v8080 = vmul.f32 %v8010, %v8010
        %v8081 = vmul.f32 %v8011, %v8011
        %v8082 = vmul.f32 %v8012, %v8012
        %v8083 = vsel %vm1013, %v8067, 0.0
        %v8084 = vsel %vm1013, %v8068, 0.0
        %v8085 = vadd.f32 %v8083, %v8084
        %v8086 = vsel %vm1013, %v8069, 0.0
        %v8087 = vadd.f32 %v8085, %v8086
        %v8088 = vsel %vm1013, %v8070, 0.0
        %v8089 = vadd.f32 %v8087, %v8088
        %v8090 = vsel %vm1013, %v8071, 0.0
        %v8091 = vadd.f32 %v8089, %v8090
        %v8092 = vsel %vm1013, %v8072, 0.0
        %v8093 = vadd.f32 %v8091, %v8092
        %v8094 = vsel %vm1013, %v8073, 0.0
        %v8095 = vadd.f32 %v8093, %v8094
        %v8096 = vsel %vm1013, %v8074, 0.0
        %v8097 = vadd.f32 %v8095, %v8096
        %v8098 = vsel %vm1013, %v8075, 0.0
        %v8099 = vadd.f32 %v8097, %v8098
        %v8100 = vsel %vm1013, %v8076, 0.0
        %v8101 = vadd.f32 %v8099, %v8100
        %v8102 = vsel %vm1013, %v8077, 0.0
        %v8103 = vadd.f32 %v8101, %v8102
        %v8104 = vsel %vm1013, %v8078, 0.0
        %v8105 = vadd.f32 %v8103, %v8104
        %v8106 = vsel %vm1013, %v8079, 0.0
        %v8107 = vadd.f32 %v8105, %v8106
        %v8108 = vsel %vm1013, %v8080, 0.0
        %v8109 = vadd.f32 %v8107, %v8108
        %v8110 = vsel %vm1013, %v8081, 0.0
        %v8111 = vadd.f32 %v8109, %v8110
        %v8112 = vsel %vm1013, %v8082, 0.0
        %v8113 = vadd.f32 %v8111, %v8112
        %v8114 = vrot.slane %v8113, 4
        %v8115 = vadd.f32 %v8113, %v8114
        %v8116 = vrot.slane %v8115, 2
        %v8117 = vadd.f32 %v8115, %v8116
        %v8118 = vrot.slane %v8117, 1
        %v8119 = vadd.f32 %v8117, %v8118
        %v8120 = vadd.f32 %v6451, %v8119
        %v8121 = vmul.f32 %v8066, 0.00390625
        %v8122 = vmul.f32 %v8120, 0.00390625
        %v8123 = vmul.f32 %v8121, %v8121
        %v8124 = vsub.f32 %v8122, %v8123
        %v8125 = vmax.f32 %v8124, 0.0
        %v8126 = vadd.f32 %v8125, 1e-05
        %v8127 = vrsqrt.pop %v8126
        %v8128 = vmul.f32 %v8127, %v8126
        %v8129 = vmul.f32 %v8128, %v8127
        %v8130 = vmul.f32 0.5, %v8129
        %v8131 = vsub.f32 1.5, %v8130
        %v8132 = vmul.f32 %v8127, %v8131
        %vm8133 = vweird.f32 %v8126
        %vm8134 = vweird.f32 %v8127
        %vm8135 = vmor %vm8133, %vm8134
        %v8136 = vsel %vm8135, %v8127, %v8132
        %v8137 = vld [vmem:[#allocation3] sm:$0xff]
        %v8138 = vld [vmem:[#allocation3 + $0x8] sm:$0xff]
        %v8139 = vld [vmem:[#allocation3 + $0x10] sm:$0xff]
        %v8140 = vld [vmem:[#allocation3 + $0x18] sm:$0xff]
        %v8141 = vld [vmem:[#allocation3 + $0x20] sm:$0xff]
        %v8142 = vld [vmem:[#allocation3 + $0x28] sm:$0xff]
        %v8143 = vld [vmem:[#allocation3 + $0x30] sm:$0xff]
        %v8144 = vld [vmem:[#allocation3 + $0x38] sm:$0xff]
        %v8145 = vld [vmem:[#allocation3 + $0x40] sm:$0xff]
        %v8146 = vld [vmem:[#allocation3 + $0x48] sm:$0xff]
        %v8147 = vld [vmem:[#allocation3 + $0x50] sm:$0xff]
        %v8148 = vld [vmem:[#allocation3 + $0x58] sm:$0xff]
        %v8149 = vld [vmem:[#allocation3 + $0x60] sm:$0xff]
        %v8150 = vld [vmem:[#allocation3 + $0x68] sm:$0xff]
        %v8151 = vld [vmem:[#allocation3 + $0x70] sm:$0xff]
        %v8152 = vld [vmem:[#allocation3 + $0x78] sm:$0xff]
        %v8153 = vsub.f32 %v8137, %v8121
        %v8154 = vsub.f32 %v8138, %v8121
        %v8155 = vsub.f32 %v8139, %v8121
        %v8156 = vsub.f32 %v8140, %v8121
        %v8157 = vsub.f32 %v8141, %v8121
        %v8158 = vsub.f32 %v8142, %v8121
        %v8159 = vsub.f32 %v8143, %v8121
        %v8160 = vsub.f32 %v8144, %v8121
        %v8161 = vsub.f32 %v8145, %v8121
        %v8162 = vsub.f32 %v8146, %v8121
        %v8163 = vsub.f32 %v8147, %v8121
        %v8164 = vsub.f32 %v8148, %v8121
        %v8165 = vsub.f32 %v8149, %v8121
        %v8166 = vsub.f32 %v8150, %v8121
        %v8167 = vsub.f32 %v8151, %v8121
        %v8168 = vsub.f32 %v8152, %v8121
        %v8169 = vmul.f32 %v8153, %v8136
        %v8170 = vmul.f32 %v8154, %v8136
        %v8171 = vmul.f32 %v8155, %v8136
        %v8172 = vmul.f32 %v8156, %v8136
        %v8173 = vmul.f32 %v8157, %v8136
        %v8174 = vmul.f32 %v8158, %v8136
        %v8175 = vmul.f32 %v8159, %v8136
        %v8176 = vmul.f32 %v8160, %v8136
        %v8177 = vmul.f32 %v8161, %v8136
        %v8178 = vmul.f32 %v8162, %v8136
        %v8179 = vmul.f32 %v8163, %v8136
        %v8180 = vmul.f32 %v8164, %v8136
        %v8181 = vmul.f32 %v8165, %v8136
        %v8182 = vmul.f32 %v8166, %v8136
        %v8183 = vmul.f32 %v8167, %v8136
        %v8184 = vmul.f32 %v8168, %v8136
        %v8185 = vld [vmem:[%s190] sm:$0xff]
        %v8186 = vld [vmem:[%s190 + $0x8] sm:$0xff]
        %v8187 = vld [vmem:[%s190 + $0x10] sm:$0xff]
        %v8188 = vld [vmem:[%s190 + $0x18] sm:$0xff]
        %v8189 = vld [vmem:[%s190 + $0x20] sm:$0xff]
        %v8190 = vld [vmem:[%s190 + $0x28] sm:$0xff]
        %v8191 = vld [vmem:[%s190 + $0x30] sm:$0xff]
        %v8192 = vld [vmem:[%s190 + $0x38] sm:$0xff]
        %v8193 = vld [vmem:[%s190 + $0x40] sm:$0xff]
        %v8194 = vld [vmem:[%s190 + $0x48] sm:$0xff]
        %v8195 = vld [vmem:[%s190 + $0x50] sm:$0xff]
        %v8196 = vld [vmem:[%s190 + $0x58] sm:$0xff]
        %v8197 = vld [vmem:[%s190 + $0x60] sm:$0xff]
        %v8198 = vld [vmem:[%s190 + $0x68] sm:$0xff]
        %v8199 = vld [vmem:[%s190 + $0x70] sm:$0xff]
        %v8200 = vld [vmem:[%s190 + $0x78] sm:$0xff]
        %v8201 = vadd.f32 %v8169, %v8185
        %v8202 = vadd.f32 %v8170, %v8186
        %v8203 = vadd.f32 %v8171, %v8187
        %v8204 = vadd.f32 %v8172, %v8188
        %v8205 = vadd.f32 %v8173, %v8189
        %v8206 = vadd.f32 %v8174, %v8190
        %v8207 = vadd.f32 %v8175, %v8191
        %v8208 = vadd.f32 %v8176, %v8192
        %v8209 = vadd.f32 %v8177, %v8193
        %v8210 = vadd.f32 %v8178, %v8194
        %v8211 = vadd.f32 %v8179, %v8195
        %v8212 = vadd.f32 %v8180, %v8196
        %v8213 = vadd.f32 %v8181, %v8197
        %v8214 = vadd.f32 %v8182, %v8198
        %v8215 = vadd.f32 %v8183, %v8199
        %v8216 = vadd.f32 %v8184, %v8200
        %8217 = vst.msk [vmem:[%s223] sm:$0xff] %vm1013, %v8201
        %8218 = vst.msk [vmem:[%s223 + $0x8] sm:$0xff] %vm1013, %v8202
        %8219 = vst.msk [vmem:[%s223 + $0x10] sm:$0xff] %vm1013, %v8203
        %8220 = vst.msk [vmem:[%s223 + $0x18] sm:$0xff] %vm1013, %v8204
        %8221 = vst.msk [vmem:[%s223 + $0x20] sm:$0xff] %vm1013, %v8205
        %8222 = vst.msk [vmem:[%s223 + $0x28] sm:$0xff] %vm1013, %v8206
        %8223 = vst.msk [vmem:[%s223 + $0x30] sm:$0xff] %vm1013, %v8207
        %8224 = vst.msk [vmem:[%s223 + $0x38] sm:$0xff] %vm1013, %v8208
        %8225 = vst.msk [vmem:[%s223 + $0x40] sm:$0xff] %vm1013, %v8209
        %8226 = vst.msk [vmem:[%s223 + $0x48] sm:$0xff] %vm1013, %v8210
        %8227 = vst.msk [vmem:[%s223 + $0x50] sm:$0xff] %vm1013, %v8211
        %8228 = vst.msk [vmem:[%s223 + $0x58] sm:$0xff] %vm1013, %v8212
        %8229 = vst.msk [vmem:[%s223 + $0x60] sm:$0xff] %vm1013, %v8213
        %8230 = vst.msk [vmem:[%s223 + $0x68] sm:$0xff] %vm1013, %v8214
        %8231 = vst.msk [vmem:[%s223 + $0x70] sm:$0xff] %vm1013, %v8215
        %8232 = vst.msk [vmem:[%s223 + $0x78] sm:$0xff] %vm1013, %v8216
        %v8233 = vld [vmem:[#allocation3 + $0x80] sm:$0xff]
        %v8234 = vld [vmem:[#allocation3 + $0x88] sm:$0xff]
        %v8235 = vld [vmem:[#allocation3 + $0x90] sm:$0xff]
        %v8236 = vld [vmem:[#allocation3 + $0x98] sm:$0xff]
        %v8237 = vld [vmem:[#allocation3 + $0xa0] sm:$0xff]
        %v8238 = vld [vmem:[#allocation3 + $0xa8] sm:$0xff]
        %v8239 = vld [vmem:[#allocation3 + $0xb0] sm:$0xff]
        %v8240 = vld [vmem:[#allocation3 + $0xb8] sm:$0xff]
        %v8241 = vld [vmem:[#allocation3 + $0xc0] sm:$0xff]
        %v8242 = vld [vmem:[#allocation3 + $0xc8] sm:$0xff]
        %v8243 = vld [vmem:[#allocation3 + $0xd0] sm:$0xff]
        %v8244 = vld [vmem:[#allocation3 + $0xd8] sm:$0xff]
        %v8245 = vld [vmem:[#allocation3 + $0xe0] sm:$0xff]
        %v8246 = vld [vmem:[#allocation3 + $0xe8] sm:$0xff]
        %v8247 = vld [vmem:[#allocation3 + $0xf0] sm:$0xff]
        %v8248 = vld [vmem:[#allocation3 + $0xf8] sm:$0xff]
        %v8249 = vsub.f32 %v8233, %v8121
        %v8250 = vsub.f32 %v8234, %v8121
        %v8251 = vsub.f32 %v8235, %v8121
        %v8252 = vsub.f32 %v8236, %v8121
        %v8253 = vsub.f32 %v8237, %v8121
        %v8254 = vsub.f32 %v8238, %v8121
        %v8255 = vsub.f32 %v8239, %v8121
        %v8256 = vsub.f32 %v8240, %v8121
        %v8257 = vsub.f32 %v8241, %v8121
        %v8258 = vsub.f32 %v8242, %v8121
        %v8259 = vsub.f32 %v8243, %v8121
        %v8260 = vsub.f32 %v8244, %v8121
        %v8261 = vsub.f32 %v8245, %v8121
        %v8262 = vsub.f32 %v8246, %v8121
        %v8263 = vsub.f32 %v8247, %v8121
        %v8264 = vsub.f32 %v8248, %v8121
        %v8265 = vmul.f32 %v8249, %v8136
        %v8266 = vmul.f32 %v8250, %v8136
        %v8267 = vmul.f32 %v8251, %v8136
        %v8268 = vmul.f32 %v8252, %v8136
        %v8269 = vmul.f32 %v8253, %v8136
        %v8270 = vmul.f32 %v8254, %v8136
        %v8271 = vmul.f32 %v8255, %v8136
        %v8272 = vmul.f32 %v8256, %v8136
        %v8273 = vmul.f32 %v8257, %v8136
        %v8274 = vmul.f32 %v8258, %v8136
        %v8275 = vmul.f32 %v8259, %v8136
        %v8276 = vmul.f32 %v8260, %v8136
        %v8277 = vmul.f32 %v8261, %v8136
        %v8278 = vmul.f32 %v8262, %v8136
        %v8279 = vmul.f32 %v8263, %v8136
        %v8280 = vmul.f32 %v8264, %v8136
        %v8281 = vld [vmem:[%s691] sm:$0xff]
        %v8282 = vld [vmem:[%s691 + $0x8] sm:$0xff]
        %v8283 = vld [vmem:[%s691 + $0x10] sm:$0xff]
        %v8284 = vld [vmem:[%s691 + $0x18] sm:$0xff]
        %v8285 = vld [vmem:[%s691 + $0x20] sm:$0xff]
        %v8286 = vld [vmem:[%s691 + $0x28] sm:$0xff]
        %v8287 = vld [vmem:[%s691 + $0x30] sm:$0xff]
        %v8288 = vld [vmem:[%s691 + $0x38] sm:$0xff]
        %v8289 = vld [vmem:[%s691 + $0x40] sm:$0xff]
        %v8290 = vld [vmem:[%s691 + $0x48] sm:$0xff]
        %v8291 = vld [vmem:[%s691 + $0x50] sm:$0xff]
        %v8292 = vld [vmem:[%s691 + $0x58] sm:$0xff]
        %v8293 = vld [vmem:[%s691 + $0x60] sm:$0xff]
        %v8294 = vld [vmem:[%s691 + $0x68] sm:$0xff]
        %v8295 = vld [vmem:[%s691 + $0x70] sm:$0xff]
        %v8296 = vld [vmem:[%s691 + $0x78] sm:$0xff]
        %v8297 = vadd.f32 %v8265, %v8281
        %v8298 = vadd.f32 %v8266, %v8282
        %v8299 = vadd.f32 %v8267, %v8283
        %v8300 = vadd.f32 %v8268, %v8284
        %v8301 = vadd.f32 %v8269, %v8285
        %v8302 = vadd.f32 %v8270, %v8286
        %v8303 = vadd.f32 %v8271, %v8287
        %v8304 = vadd.f32 %v8272, %v8288
        %v8305 = vadd.f32 %v8273, %v8289
        %v8306 = vadd.f32 %v8274, %v8290
        %v8307 = vadd.f32 %v8275, %v8291
        %v8308 = vadd.f32 %v8276, %v8292
        %v8309 = vadd.f32 %v8277, %v8293
        %v8310 = vadd.f32 %v8278, %v8294
        %v8311 = vadd.f32 %v8279, %v8295
        %v8312 = vadd.f32 %v8280, %v8296
        %s8313 = scalar_lea.vmem %s223, 128 [#allocation10]
        %8314 = vst.msk [vmem:[%s8313] sm:$0xff] %vm1013, %v8297
        %8315 = vst.msk [vmem:[%s8313 + $0x8] sm:$0xff] %vm1013, %v8298
        %8316 = vst.msk [vmem:[%s8313 + $0x10] sm:$0xff] %vm1013, %v8299
        %8317 = vst.msk [vmem:[%s8313 + $0x18] sm:$0xff] %vm1013, %v8300
        %8318 = vst.msk [vmem:[%s8313 + $0x20] sm:$0xff] %vm1013, %v8301
        %8319 = vst.msk [vmem:[%s8313 + $0x28] sm:$0xff] %vm1013, %v8302
        %8320 = vst.msk [vmem:[%s8313 + $0x30] sm:$0xff] %vm1013, %v8303
        %8321 = vst.msk [vmem:[%s8313 + $0x38] sm:$0xff] %vm1013, %v8304
        %8322 = vst.msk [vmem:[%s8313 + $0x40] sm:$0xff] %vm1013, %v8305
        %8323 = vst.msk [vmem:[%s8313 + $0x48] sm:$0xff] %vm1013, %v8306
        %8324 = vst.msk [vmem:[%s8313 + $0x50] sm:$0xff] %vm1013, %v8307
        %8325 = vst.msk [vmem:[%s8313 + $0x58] sm:$0xff] %vm1013, %v8308
        %8326 = vst.msk [vmem:[%s8313 + $0x60] sm:$0xff] %vm1013, %v8309
        %8327 = vst.msk [vmem:[%s8313 + $0x68] sm:$0xff] %vm1013, %v8310
        %8328 = vst.msk [vmem:[%s8313 + $0x70] sm:$0xff] %vm1013, %v8311
        %8329 = vst.msk [vmem:[%s8313 + $0x78] sm:$0xff] %vm1013, %v8312
        %s8330 = sand.u32 %s97, 1
        %s8331 = scalar_lea.sflag [#allocation6], %s8330
        %s8332 = sand.u32 %s97, 1
        %s8333 = smul.addr %s8332, 256
        %s8334 = scalar_lea.vmem [#allocation10], %s8333
        // Predicated region
        $region45: #{tpu_custom_call.1} parent=31 // pred_check
          %p8335 = pneg %p107
        $region46: #{tpu_custom_call.1} parent=31 // pred_check_branch
          %8337 = sbr.rel (%p8335) target = $region48
        $region47: #{tpu_custom_call.1} parent=31 // pred_region
          %8339 = vsyncadd %s8331, 0
          %s8340 = smul.addr %s21, 32
          %s8341 = smul.addr %s8340, 8
          %s8342 = scalar_lea.hbm %s3, %s8341
          %s8343 = sshll.u32 %s8334, 4
          %s8344 = int_to_ptr.vmem [resolvable:$true] %s8343
          %s8345 = sshll.u32 %s8342, 4
          %s8346 = int_to_ptr.hbm [resolvable:$true] %s8345
          %8351 = dma.vmem_to_hbm [thread:$0]  %s8344, 4096, %s8346, %s8331, 128, 128, 8
        $region48: #{tpu_custom_call.1} parent=31 // pred_fallthru
          _
      $region32: #{tpu_custom_call.1} parent=5 // pred_fallthru
        _
      %p8352 = scmp.le.s32.totalorder 2, %s16
      // Predicated region
      $region49: #{tpu_custom_call.1} parent=5 // pred_check
        %p8353 = pneg %p8352
      $region50: #{tpu_custom_call.1} parent=5 // pred_check_branch
        %8355 = sbr.rel (%p8353) target = $region52
      $region51: #{tpu_custom_call.1} parent=5 // pred_region
        %s8356 = ssub.s32 %s16, 2
        // Predicated region
        $region53: #{tpu_custom_call.1} parent=51 // pred_check
          %p8357 = pneg %p113
        $region54: #{tpu_custom_call.1} parent=51 // pred_check_branch
          %8359 = sbr.rel (%p8357) target = $region56
        $region55: #{tpu_custom_call.1} parent=51 // pred_region
          %s8360 = sand.u32 %s98, 1
          %s8361 = scalar_lea.sflag [#allocation6], %s8360
          %s8362 = sand.u32 %s98, 1
          %s8363 = smul.addr %s8362, 256
          %s8364 = scalar_lea.vmem [#allocation10], %s8363
          %8366 = dma.done %s8361, 4096
        $region56: #{tpu_custom_call.1} parent=51 // pred_fallthru
          _
      $region52: #{tpu_custom_call.1} parent=5 // pred_fallthru
        _
    $region6: #{tpu_custom_call.1} parent=1 // loop_footer
      %s20 = sadd.s32 1, %s16
    $region7: #{tpu_custom_call.1} parent=1 // loop_footer_branch
      %15 = sbr.rel target = $region3
    $region8: #{tpu_custom_call.1} parent=1 // loop_exit
      _
    %8367 = vsyncpa [#allocation5], 1
    %s8368 = scalar_lea.sflag [#allocation5], 1
    %8369 = vsyncpa %s8368, 1
    %8370 = vsyncpa [#allocation8], 1
    %8371 = vsyncpa [#allocation6], 1
    %s8372 = scalar_lea.sflag [#allocation6], 1
    %8373 = vsyncpa %s8372, 1

</llo_original>
